<compile_context>
chip_gen: v6e
topology: v6e:2x2x1
jax: 0.10.0
libtpu: 0.0.40
codegen_flags: <defaults>
</compile_context>

<pallas_src>
import functools

import jax
import jax.numpy as jnp
from jax.experimental import pallas as pl
from jax.experimental.pallas import tpu as pltpu

D_MODEL = 128
NHEAD = 8
HEAD_DIM = D_MODEL // NHEAD          # 16
DIM_FF = 2048                        # PyTorch default dim_feedforward
LN_EPS = 1e-5
_NEG_INF = -1e30


def _layernorm(y, gamma, beta):
    mu = jnp.mean(y, axis=-1, keepdims=True)
    var = jnp.mean(jnp.square(y - mu), axis=-1, keepdims=True)
    return (y - mu) * jax.lax.rsqrt(var + LN_EPS) * gamma + beta


def _default_target_rows():
    """256 matmul rows on 256-wide-MXU chips (v6e/v7x), 128 on older generations."""
    try:
        kind = jax.devices()[0].device_kind.lower()
        if any(t in kind for t in ("v2", "v3", "v4", "v5")):
            return 128
        return 256
    except Exception:
        return 128


def _transformer_kernel(
    x_ref, mask_ref,
    w_emb_ref, b_emb_ref,
    w_in_ref, b_in_ref,          # packed q/k/v projection [128, 384] (bf16, q-scale folded)
    w_out_ref, b_out_ref,        # attention output proj   [128, 128] (bf16)
    g1_ref, bt1_ref,             # layernorm1
    w1_ref, b1_ref,              # FFN linear1 [128, 2048] (bf16)
    w2_ref, b2_ref,              # FFN linear2 [2048, 128] (bf16)
    g2_ref, bt2_ref,             # layernorm2
    w_fc_ref, b_fc_ref,          # classifier  [128, C_pad] (bf16)
    out_ref,
    *, gb_blk, seq_len, att_rows,
):
    f32 = jnp.float32
    bf16 = jnp.bfloat16
    M = gb_blk * seq_len
    n_sub = M // att_rows
    input_dim = x_ref.shape[-1]

    # ---- stack the gb_blk independent sequences into one [M, input_dim] slab ----
    x = x_ref[...].reshape(M, input_dim).astype(bf16)

    # ---- embedding ----
    emb = jnp.dot(x, w_emb_ref[...], preferred_element_type=f32) + b_emb_ref[...]

    # ---- packed qkv projection (1/sqrt(head_dim) already folded into the q columns) ----
    qkv = jnp.dot(emb.astype(bf16), w_in_ref[...],
                  preferred_element_type=f32) + b_in_ref[...]
    q = qkv[:, 0:D_MODEL].astype(bf16)
    k = qkv[:, D_MODEL:2 * D_MODEL].astype(bf16)
    v = qkv[:, 2 * D_MODEL:3 * D_MODEL].astype(bf16)

    # precomputed block-diagonal additive bias (0 within a group, -1e30 across groups)
    mask = mask_ref[...]                                              # [att_rows, att_rows] f32

    # ---- multi-head self-attention on <=128-row sub-blocks, heads unrolled ----
    ctx_blocks = []
    for sb in range(n_sub):
        r0 = sb * att_rows
        heads = []
        for h in range(NHEAD):
            lo = h * HEAD_DIM
            qh = q[r0:r0 + att_rows, lo:lo + HEAD_DIM]
            kh = k[r0:r0 + att_rows, lo:lo + HEAD_DIM]
            vh = v[r0:r0 + att_rows, lo:lo + HEAD_DIM]
            s = jax.lax.dot_general(qh, kh, (((1,), (1,)), ((), ())),
                                    preferred_element_type=f32)       # [att, att] f32
            s = s + mask
            s = s - jnp.max(s, axis=-1, keepdims=True)
            p = jnp.exp(s)
            recip = pl.reciprocal(jnp.sum(p, axis=-1, keepdims=True), approx=True)  # EUP
            ctx_h = jnp.dot(p.astype(bf16), vh,
                            preferred_element_type=f32) * recip       # [att, 16]
            heads.append(ctx_h.astype(bf16))
        ctx_blocks.append(jnp.concatenate(heads, axis=-1))            # [att, 128] bf16
    ctx = ctx_blocks[0] if n_sub == 1 else jnp.concatenate(ctx_blocks, axis=0)

    attn = jnp.dot(ctx, w_out_ref[...], preferred_element_type=f32) + b_out_ref[...]

    # ---- residual + layernorm1 (norm_first=False) ----
    y = _layernorm(emb + attn, g1_ref[...], bt1_ref[...])

    # ---- feed-forward (ReLU) ----
    h1 = jnp.maximum(
        jnp.dot(y.astype(bf16), w1_ref[...], preferred_element_type=f32) + b1_ref[...],
        0.0)
    h2 = jnp.dot(h1.astype(bf16), w2_ref[...],
                 preferred_element_type=f32) + b2_ref[...]

    # ---- residual + layernorm2 ----
    z = _layernorm(y + h2, g2_ref[...], bt2_ref[...])

    # ---- classifier head (lane-padded, bf16 writeback) ----
    out = jnp.dot(z.astype(bf16), w_fc_ref[...],
                  preferred_element_type=f32) + b_fc_ref[...]
    out_ref[...] = out.astype(out_ref.dtype).reshape(out_ref.shape)


def transformer_forward(x, params, target_rows=None):
    """x: [B, input_dim] (one sequence, PyTorch interface) or [G, B, input_dim]."""
    single = (x.ndim == 2)
    if single:
        x = x[None]
    G, B, input_dim = x.shape

    if target_rows is None:
        target_rows = _default_target_rows()

    cdiv = lambda a, b: -(-a // b)

    # ---- pad classifier width to a lane-dense 128 multiple ----
    C = params["w_fc"].shape[1]
    C_PAD = max(128, cdiv(C, 128) * 128)
    w_fc = jnp.pad(params["w_fc"], ((0, 0), (0, C_PAD - C)))
    b_fc = jnp.pad(params["b_fc"], ((0, 0), (0, C_PAD - C)))

    # ---- fold 1/sqrt(head_dim) into the q columns of the packed qkv projection ----
    # (0.25 is a power of two -> exact in bf16; deletes an [M,128] multiply per grid step)
    scale = 1.0 / (HEAD_DIM ** 0.5)
    col_scale = jnp.concatenate(
        [jnp.full((D_MODEL,), scale, jnp.float32),
         jnp.ones((2 * D_MODEL,), jnp.float32)])
    w_in = (params["w_in"].astype(jnp.float32) * col_scale).astype(params["w_in"].dtype)
    b_in = params["b_in"] * col_scale

    # ---- rows per grid step ----
    gb_blk = max(1, min(G, target_rows // max(B, 1)))
    # avoid a single grid step (no DMA/compute overlap, idles one v7x TensorCore)
    while gb_blk > 1 and cdiv(G, gb_blk) < 2:
        gb_blk //= 2
    # prefer >= 4 steps (2 per TensorCore on v7x) as long as the matmul slab stays >= 128 rows
    while gb_blk > 1 and gb_blk * B > 128 and cdiv(G, gb_blk) < 4:
        gb_blk //= 2

    G_pad = cdiv(G, gb_blk) * gb_blk
    if G_pad != G:
        x = jnp.pad(x, ((0, G_pad - G), (0, 0), (0, 0)))
    n_steps = G_pad // gb_blk
    M = gb_blk * B

    # attention sub-block rows: keep the [rows,rows] masked softmax at <=128 rows even when
    # the dense-matmul slab M is larger (v6e/v7x M=256 path).
    if M > 128 and M % 128 == 0 and 128 % B == 0:
        att_rows = 128
    else:
        att_rows = M

    # ---- precomputed block-diagonal additive mask bias (constant index_map -> VMEM-resident) ----
    gid = jnp.arange(att_rows, dtype=jnp.int32) // B
    mask_bias = jnp.where(gid[:, None] == gid[None, :], 0.0, _NEG_INF).astype(jnp.float32)

    args = [
        x, mask_bias,
        params["w_emb"], params["b_emb"],
        w_in, b_in,
        params["w_out"], params["b_out"],
        params["g1"], params["bt1"],
        params["w1"], params["b1"],
        params["w2"], params["b2"],
        params["g2"], params["bt2"],
        w_fc, b_fc,
    ]

    # x is pipelined over the grid; mask + weights use constant index_maps (fetched once,
    # VMEM-resident across all grid steps).
    in_specs = [pl.BlockSpec((gb_blk, B, input_dim), lambda g: (g, 0, 0))]
    in_specs += [pl.BlockSpec(a.shape, lambda g: (0, 0)) for a in args[1:]]

    kernel = functools.partial(_transformer_kernel,
                               gb_blk=gb_blk, seq_len=B, att_rows=att_rows)

    out = pl.pallas_call(
        kernel,
        out_shape=jax.ShapeDtypeStruct((G_pad, B, C_PAD), jnp.bfloat16),
        grid=(n_steps,),
        in_specs=in_specs,
        out_specs=pl.BlockSpec((gb_blk, B, C_PAD), lambda g: (g, 0, 0)),
        compiler_params=pltpu.CompilerParams(
            dimension_semantics=("parallel",),
            vmem_limit_bytes=32 << 20,
        ),
    )(*args)

    out = out[:G, :, :C].astype(jnp.float32)
    return out[0] if single else out


def init_params(key, input_dim, num_classes):
    ks = jax.random.split(key, 8)
    f32 = jnp.float32
    bf16 = jnp.bfloat16

    def rnd(k, shape, scale):
        return (jax.random.normal(k, shape, dtype=f32) * scale).astype(bf16)

    return {
        # embedding Linear(input_dim, 128), stored transposed [in, out], bf16
        "w_emb": rnd(ks[0], (input_dim, D_MODEL), 0.05),
        "b_emb": jnp.zeros((1, D_MODEL), f32),
        # MHA in_proj (q,k,v packed) [128, 384] bf16
        "w_in": rnd(ks[1], (D_MODEL, 3 * D_MODEL), 0.05),
        "b_in": jax.random.normal(ks[2], (1, 3 * D_MODEL), f32) * 0.01,
        # MHA out_proj [128, 128] bf16
        "w_out": rnd(ks[3], (D_MODEL, D_MODEL), 0.05),
        "b_out": jnp.zeros((1, D_MODEL), f32),
        # layernorm1
        "g1": jnp.ones((1, D_MODEL), f32),
        "bt1": jnp.zeros((1, D_MODEL), f32),
        # FFN linear1 / linear2, bf16
        "w1": rnd(ks[4], (D_MODEL, DIM_FF), 0.03),
        "b1": jax.random.normal(ks[5], (1, DIM_FF), f32) * 0.01,
        "w2": rnd(ks[6], (DIM_FF, D_MODEL), 0.03),
        "b2": jnp.zeros((1, D_MODEL), f32),
        # layernorm2
        "g2": jnp.ones((1, D_MODEL), f32),
        "bt2": jnp.zeros((1, D_MODEL), f32),
        # fc_out Linear(128, num_classes), bf16
        "w_fc": rnd(ks[7], (D_MODEL, num_classes), 0.05),
        "b_fc": jnp.zeros((1, num_classes), f32),
    }


def _bdot(a, b):
    return jnp.dot(a.astype(jnp.bfloat16), b.astype(jnp.bfloat16),
                   preferred_element_type=jnp.float32)


def reference_forward(x, p):
    """Pure-JAX reference (PyTorch eval-mode forward, bf16 weights / f32 accumulation)."""
    single = (x.ndim == 2)
    if single:
        x = x[None]

    def one_group(xg):
        B = xg.shape[0]
        emb = _bdot(xg, p["w_emb"]) + p["b_emb"]
        qkv = _bdot(emb, p["w_in"]) + p["b_in"]
        q, k, v = jnp.split(qkv, 3, axis=-1)
        qh = q.reshape(B, NHEAD, HEAD_DIM).transpose(1, 0, 2)
        kh = k.reshape(B, NHEAD, HEAD_DIM).transpose(1, 0, 2)
        vh = v.reshape(B, NHEAD, HEAD_DIM).transpose(1, 0, 2)
        s = jnp.einsum("hqd,hkd->hqk",
                       qh.astype(jnp.bfloat16), kh.astype(jnp.bfloat16),
                       preferred_element_type=jnp.float32) / (HEAD_DIM ** 0.5)
        pa = jax.nn.softmax(s, axis=-1)
        ctx = jnp.einsum("hqk,hkd->hqd",
                         pa.astype(jnp.bfloat16), vh.astype(jnp.bfloat16),
                         preferred_element_type=jnp.float32)
        ctx = ctx.transpose(1, 0, 2).reshape(B, D_MODEL)
        attn = _bdot(ctx, p["w_out"]) + p["b_out"]

        def ln(y, g, b):
            mu = jnp.mean(y, -1, keepdims=True)
            var = jnp.mean((y - mu) ** 2, -1, keepdims=True)
            return (y - mu) / jnp.sqrt(var + LN_EPS) * g + b

        y = ln(emb + attn, p["g1"], p["bt1"])
        h = _bdot(jnp.maximum(_bdot(y, p["w1"]) + p["b1"], 0.0), p["w2"]) + p["b2"]
        z = ln(y + h, p["g2"], p["bt2"])
        return _bdot(z, p["w_fc"]) + p["b_fc"]

    out = jax.vmap(one_group)(x)
    return out[0] if single else out


if __name__ == "__main__":
    B = 8              # per-sequence length (= attention axis, per PyTorch semantics)
    G = 32             # independent sequences processed in one kernel launch
    INPUT_DIM = 64     # flattened spectral-matrix size (e.g. 8 x 8)
    NUM_CLASSES = 4

    key = jax.random.PRNGKey(0)
    kx, kp = jax.random.split(key)
    x = jax.random.normal(kx, (G, B, INPUT_DIM), dtype=jnp.float32)
    params = init_params(kp, INPUT_DIM, NUM_CLASSES)

    out = jax.block_until_ready(transformer_forward(x, params))
    assert out.shape == (G, B, NUM_CLASSES)

    ref = reference_forward(x, params)
    assert jnp.allclose(out, ref, atol=2e-2, rtol=2e-2), "mismatch vs JAX reference"

    # also exercise the original single-sequence PyTorch interface
    out1 = jax.block_until_ready(transformer_forward(x[0], params))
    assert out1.shape == (B, NUM_CLASSES)
    assert jnp.allclose(out1, ref[0], atol=2e-2, rtol=2e-2), "single-sequence mismatch"

    print("KERNEL_OK")
</pallas_src>

<mosaic_0001>
module attributes {stable_mosaic.version = 11 : i64} {
  func.func @_transformer_kernel(%arg0: i32, %arg1: memref<16x8x64xf32, #tpu.memory_space<vmem>>, %arg2: memref<128x128xf32, #tpu.memory_space<vmem>>, %arg3: memref<64x128xbf16, #tpu.memory_space<vmem>>, %arg4: memref<1x128xf32, #tpu.memory_space<vmem>>, %arg5: memref<128x384xbf16, #tpu.memory_space<vmem>>, %arg6: memref<1x384xf32, #tpu.memory_space<vmem>>, %arg7: memref<128x128xbf16, #tpu.memory_space<vmem>>, %arg8: memref<1x128xf32, #tpu.memory_space<vmem>>, %arg9: memref<1x128xf32, #tpu.memory_space<vmem>>, %arg10: memref<1x128xf32, #tpu.memory_space<vmem>>, %arg11: memref<128x2048xbf16, #tpu.memory_space<vmem>>, %arg12: memref<1x2048xf32, #tpu.memory_space<vmem>>, %arg13: memref<2048x128xbf16, #tpu.memory_space<vmem>>, %arg14: memref<1x128xf32, #tpu.memory_space<vmem>>, %arg15: memref<1x128xf32, #tpu.memory_space<vmem>>, %arg16: memref<1x128xf32, #tpu.memory_space<vmem>>, %arg17: memref<128x128xbf16, #tpu.memory_space<vmem>>, %arg18: memref<1x128xf32, #tpu.memory_space<vmem>>, %arg19: memref<16x8x128xbf16, #tpu.memory_space<vmem>>) attributes {dimension_semantics = [#tpu.dimension_semantics<parallel>], iteration_bounds = array<i64: 2>, scalar_prefetch = 0 : i64, scratch_operands = 0 : i64, tpu.core_type = #tpu.core_type<tc>, window_params = [{transform_indices = @transform_0, window_bounds = array<i64: 16, 8, 64>}, {pipeline_mode = #tpu.pipeline_mode<synchronous>, transform_indices = @transform_1, window_bounds = array<i64: 128, 128>}, {pipeline_mode = #tpu.pipeline_mode<synchronous>, transform_indices = @transform_2, window_bounds = array<i64: 64, 128>}, {pipeline_mode = #tpu.pipeline_mode<synchronous>, transform_indices = @transform_3, window_bounds = array<i64: 1, 128>}, {pipeline_mode = #tpu.pipeline_mode<synchronous>, transform_indices = @transform_4, window_bounds = array<i64: 128, 384>}, {pipeline_mode = #tpu.pipeline_mode<synchronous>, transform_indices = @transform_5, window_bounds = array<i64: 1, 384>}, {pipeline_mode = #tpu.pipeline_mode<synchronous>, transform_indices = @transform_6, window_bounds = array<i64: 128, 128>}, {pipeline_mode = #tpu.pipeline_mode<synchronous>, transform_indices = @transform_7, window_bounds = array<i64: 1, 128>}, {pipeline_mode = #tpu.pipeline_mode<synchronous>, transform_indices = @transform_8, window_bounds = array<i64: 1, 128>}, {pipeline_mode = #tpu.pipeline_mode<synchronous>, transform_indices = @transform_9, window_bounds = array<i64: 1, 128>}, {pipeline_mode = #tpu.pipeline_mode<synchronous>, transform_indices = @transform_10, window_bounds = array<i64: 128, 2048>}, {pipeline_mode = #tpu.pipeline_mode<synchronous>, transform_indices = @transform_11, window_bounds = array<i64: 1, 2048>}, {pipeline_mode = #tpu.pipeline_mode<synchronous>, transform_indices = @transform_12, window_bounds = array<i64: 2048, 128>}, {pipeline_mode = #tpu.pipeline_mode<synchronous>, transform_indices = @transform_13, window_bounds = array<i64: 1, 128>}, {pipeline_mode = #tpu.pipeline_mode<synchronous>, transform_indices = @transform_14, window_bounds = array<i64: 1, 128>}, {pipeline_mode = #tpu.pipeline_mode<synchronous>, transform_indices = @transform_15, window_bounds = array<i64: 1, 128>}, {pipeline_mode = #tpu.pipeline_mode<synchronous>, transform_indices = @transform_16, window_bounds = array<i64: 128, 128>}, {pipeline_mode = #tpu.pipeline_mode<synchronous>, transform_indices = @transform_17, window_bounds = array<i64: 1, 128>}, {transform_indices = @transform_18, window_bounds = array<i64: 16, 8, 128>}]} {
    %c0 = arith.constant 0 : index
    %c0_0 = arith.constant 0 : index
    %c0_1 = arith.constant 0 : index
    %0 = vector.load %arg1[%c0, %c0_0, %c0_1] : memref<16x8x64xf32, #tpu.memory_space<vmem>>, vector<16x8x64xf32>
    %1 = vector.shape_cast %0 : vector<16x8x64xf32> to vector<128x64xf32>
    %2 = arith.truncf %1 : vector<128x64xf32> to vector<128x64xbf16>
    %c0_2 = arith.constant 0 : index
    %c0_3 = arith.constant 0 : index
    %3 = vector.load %arg3[%c0_2, %c0_3] : memref<64x128xbf16, #tpu.memory_space<vmem>>, vector<64x128xbf16>
    %cst = arith.constant dense<0.000000e+00> : vector<128x128xf32>
    %4 = tpu.matmul %2, %3, %cst {dimension_numbers = #tpu.dot_dimension_numbers<[1], [0], [0], [1], [0, 0, 1, 1], [], []>} : vector<128x64xbf16>, vector<64x128xbf16>, vector<128x128xf32> -> vector<128x128xf32>
    %c0_4 = arith.constant 0 : index
    %c0_5 = arith.constant 0 : index
    %5 = vector.load %arg4[%c0_4, %c0_5] : memref<1x128xf32, #tpu.memory_space<vmem>>, vector<1x128xf32>
    %6 = vector.broadcast %5 : vector<1x128xf32> to vector<128x128xf32>
    %7 = arith.addf %4, %6 : vector<128x128xf32>
    %8 = arith.truncf %7 : vector<128x128xf32> to vector<128x128xbf16>
    %c0_6 = arith.constant 0 : index
    %c0_7 = arith.constant 0 : index
    %9 = vector.load %arg5[%c0_6, %c0_7] : memref<128x384xbf16, #tpu.memory_space<vmem>>, vector<128x384xbf16>
    %cst_8 = arith.constant dense<0.000000e+00> : vector<128x384xf32>
    %10 = tpu.matmul %8, %9, %cst_8 {dimension_numbers = #tpu.dot_dimension_numbers<[1], [0], [0], [1], [0, 0, 1, 1], [], []>} : vector<128x128xbf16>, vector<128x384xbf16>, vector<128x384xf32> -> vector<128x384xf32>
    %c0_9 = arith.constant 0 : index
    %c0_10 = arith.constant 0 : index
    %11 = vector.load %arg6[%c0_9, %c0_10] : memref<1x384xf32, #tpu.memory_space<vmem>>, vector<1x384xf32>
    %12 = vector.broadcast %11 : vector<1x384xf32> to vector<128x384xf32>
    %13 = arith.addf %10, %12 : vector<128x384xf32>
    %14 = vector.extract_strided_slice %13 {offsets = [0, 0], sizes = [128, 128], strides = [1, 1]} : vector<128x384xf32> to vector<128x128xf32>
    %15 = arith.truncf %14 : vector<128x128xf32> to vector<128x128xbf16>
    %16 = vector.extract_strided_slice %13 {offsets = [0, 128], sizes = [128, 128], strides = [1, 1]} : vector<128x384xf32> to vector<128x128xf32>
    %17 = arith.truncf %16 : vector<128x128xf32> to vector<128x128xbf16>
    %18 = vector.extract_strided_slice %13 {offsets = [0, 256], sizes = [128, 128], strides = [1, 1]} : vector<128x384xf32> to vector<128x128xf32>
    %19 = arith.truncf %18 : vector<128x128xf32> to vector<128x128xbf16>
    %c0_11 = arith.constant 0 : index
    %c0_12 = arith.constant 0 : index
    %20 = vector.load %arg2[%c0_11, %c0_12] : memref<128x128xf32, #tpu.memory_space<vmem>>, vector<128x128xf32>
    %21 = vector.extract_strided_slice %15 {offsets = [0, 0], sizes = [128, 16], strides = [1, 1]} : vector<128x128xbf16> to vector<128x16xbf16>
    %22 = vector.extract_strided_slice %17 {offsets = [0, 0], sizes = [128, 16], strides = [1, 1]} : vector<128x128xbf16> to vector<128x16xbf16>
    %23 = vector.extract_strided_slice %19 {offsets = [0, 0], sizes = [128, 16], strides = [1, 1]} : vector<128x128xbf16> to vector<128x16xbf16>
    %cst_13 = arith.constant dense<0.000000e+00> : vector<128x128xf32>
    %24 = tpu.matmul %21, %22, %cst_13 {dimension_numbers = #tpu.dot_dimension_numbers<[1], [1], [0], [0], [0, 0, 1, 0], [], []>} : vector<128x16xbf16>, vector<128x16xbf16>, vector<128x128xf32> -> vector<128x128xf32>
    %25 = arith.addf %24, %20 : vector<128x128xf32>
    %cst_14 = arith.constant dense<0xFF800000> : vector<128xf32>
    %26 = vector.multi_reduction <maximumf>, %25, %cst_14 [1] : vector<128x128xf32> to vector<128xf32>
    %27 = vector.shape_cast %26 : vector<128xf32> to vector<128x1xf32>
    %28 = vector.broadcast %27 : vector<128x1xf32> to vector<128x128xf32>
    %29 = arith.subf %25, %28 : vector<128x128xf32>
    %30 = math.exp %29 : vector<128x128xf32>
    %cst_15 = arith.constant dense<0.000000e+00> : vector<128xf32>
    %31 = vector.multi_reduction <add>, %30, %cst_15 [1] : vector<128x128xf32> to vector<128xf32>
    %32 = vector.shape_cast %31 : vector<128xf32> to vector<128x1xf32>
    %33 = tpu.reciprocal %32 {approx = true} : vector<128x1xf32> -> vector<128x1xf32>
    %34 = arith.truncf %30 : vector<128x128xf32> to vector<128x128xbf16>
    %cst_16 = arith.constant dense<0.000000e+00> : vector<128x16xf32>
    %35 = tpu.matmul %34, %23, %cst_16 {dimension_numbers = #tpu.dot_dimension_numbers<[1], [0], [0], [1], [0, 0, 1, 1], [], []>} : vector<128x128xbf16>, vector<128x16xbf16>, vector<128x16xf32> -> vector<128x16xf32>
    %36 = vector.broadcast %33 : vector<128x1xf32> to vector<128x16xf32>
    %37 = arith.mulf %35, %36 : vector<128x16xf32>
    %38 = arith.truncf %37 : vector<128x16xf32> to vector<128x16xbf16>
    %39 = vector.extract_strided_slice %15 {offsets = [0, 16], sizes = [128, 16], strides = [1, 1]} : vector<128x128xbf16> to vector<128x16xbf16>
    %40 = vector.extract_strided_slice %17 {offsets = [0, 16], sizes = [128, 16], strides = [1, 1]} : vector<128x128xbf16> to vector<128x16xbf16>
    %41 = vector.extract_strided_slice %19 {offsets = [0, 16], sizes = [128, 16], strides = [1, 1]} : vector<128x128xbf16> to vector<128x16xbf16>
    %cst_17 = arith.constant dense<0.000000e+00> : vector<128x128xf32>
    %42 = tpu.matmul %39, %40, %cst_17 {dimension_numbers = #tpu.dot_dimension_numbers<[1], [1], [0], [0], [0, 0, 1, 0], [], []>} : vector<128x16xbf16>, vector<128x16xbf16>, vector<128x128xf32> -> vector<128x128xf32>
    %43 = arith.addf %42, %20 : vector<128x128xf32>
    %cst_18 = arith.constant dense<0xFF800000> : vector<128xf32>
    %44 = vector.multi_reduction <maximumf>, %43, %cst_18 [1] : vector<128x128xf32> to vector<128xf32>
    %45 = vector.shape_cast %44 : vector<128xf32> to vector<128x1xf32>
    %46 = vector.broadcast %45 : vector<128x1xf32> to vector<128x128xf32>
    %47 = arith.subf %43, %46 : vector<128x128xf32>
    %48 = math.exp %47 : vector<128x128xf32>
    %cst_19 = arith.constant dense<0.000000e+00> : vector<128xf32>
    %49 = vector.multi_reduction <add>, %48, %cst_19 [1] : vector<128x128xf32> to vector<128xf32>
    %50 = vector.shape_cast %49 : vector<128xf32> to vector<128x1xf32>
    %51 = tpu.reciprocal %50 {approx = true} : vector<128x1xf32> -> vector<128x1xf32>
    %52 = arith.truncf %48 : vector<128x128xf32> to vector<128x128xbf16>
    %cst_20 = arith.constant dense<0.000000e+00> : vector<128x16xf32>
    %53 = tpu.matmul %52, %41, %cst_20 {dimension_numbers = #tpu.dot_dimension_numbers<[1], [0], [0], [1], [0, 0, 1, 1], [], []>} : vector<128x128xbf16>, vector<128x16xbf16>, vector<128x16xf32> -> vector<128x16xf32>
    %54 = vector.broadcast %51 : vector<128x1xf32> to vector<128x16xf32>
    %55 = arith.mulf %53, %54 : vector<128x16xf32>
    %56 = arith.truncf %55 : vector<128x16xf32> to vector<128x16xbf16>
    %57 = vector.extract_strided_slice %15 {offsets = [0, 32], sizes = [128, 16], strides = [1, 1]} : vector<128x128xbf16> to vector<128x16xbf16>
    %58 = vector.extract_strided_slice %17 {offsets = [0, 32], sizes = [128, 16], strides = [1, 1]} : vector<128x128xbf16> to vector<128x16xbf16>
    %59 = vector.extract_strided_slice %19 {offsets = [0, 32], sizes = [128, 16], strides = [1, 1]} : vector<128x128xbf16> to vector<128x16xbf16>
    %cst_21 = arith.constant dense<0.000000e+00> : vector<128x128xf32>
    %60 = tpu.matmul %57, %58, %cst_21 {dimension_numbers = #tpu.dot_dimension_numbers<[1], [1], [0], [0], [0, 0, 1, 0], [], []>} : vector<128x16xbf16>, vector<128x16xbf16>, vector<128x128xf32> -> vector<128x128xf32>
    %61 = arith.addf %60, %20 : vector<128x128xf32>
    %cst_22 = arith.constant dense<0xFF800000> : vector<128xf32>
    %62 = vector.multi_reduction <maximumf>, %61, %cst_22 [1] : vector<128x128xf32> to vector<128xf32>
    %63 = vector.shape_cast %62 : vector<128xf32> to vector<128x1xf32>
    %64 = vector.broadcast %63 : vector<128x1xf32> to vector<128x128xf32>
    %65 = arith.subf %61, %64 : vector<128x128xf32>
    %66 = math.exp %65 : vector<128x128xf32>
    %cst_23 = arith.constant dense<0.000000e+00> : vector<128xf32>
    %67 = vector.multi_reduction <add>, %66, %cst_23 [1] : vector<128x128xf32> to vector<128xf32>
    %68 = vector.shape_cast %67 : vector<128xf32> to vector<128x1xf32>
    %69 = tpu.reciprocal %68 {approx = true} : vector<128x1xf32> -> vector<128x1xf32>
    %70 = arith.truncf %66 : vector<128x128xf32> to vector<128x128xbf16>
    %cst_24 = arith.constant dense<0.000000e+00> : vector<128x16xf32>
    %71 = tpu.matmul %70, %59, %cst_24 {dimension_numbers = #tpu.dot_dimension_numbers<[1], [0], [0], [1], [0, 0, 1, 1], [], []>} : vector<128x128xbf16>, vector<128x16xbf16>, vector<128x16xf32> -> vector<128x16xf32>
    %72 = vector.broadcast %69 : vector<128x1xf32> to vector<128x16xf32>
    %73 = arith.mulf %71, %72 : vector<128x16xf32>
    %74 = arith.truncf %73 : vector<128x16xf32> to vector<128x16xbf16>
    %75 = vector.extract_strided_slice %15 {offsets = [0, 48], sizes = [128, 16], strides = [1, 1]} : vector<128x128xbf16> to vector<128x16xbf16>
    %76 = vector.extract_strided_slice %17 {offsets = [0, 48], sizes = [128, 16], strides = [1, 1]} : vector<128x128xbf16> to vector<128x16xbf16>
    %77 = vector.extract_strided_slice %19 {offsets = [0, 48], sizes = [128, 16], strides = [1, 1]} : vector<128x128xbf16> to vector<128x16xbf16>
    %cst_25 = arith.constant dense<0.000000e+00> : vector<128x128xf32>
    %78 = tpu.matmul %75, %76, %cst_25 {dimension_numbers = #tpu.dot_dimension_numbers<[1], [1], [0], [0], [0, 0, 1, 0], [], []>} : vector<128x16xbf16>, vector<128x16xbf16>, vector<128x128xf32> -> vector<128x128xf32>
    %79 = arith.addf %78, %20 : vector<128x128xf32>
    %cst_26 = arith.constant dense<0xFF800000> : vector<128xf32>
    %80 = vector.multi_reduction <maximumf>, %79, %cst_26 [1] : vector<128x128xf32> to vector<128xf32>
    %81 = vector.shape_cast %80 : vector<128xf32> to vector<128x1xf32>
    %82 = vector.broadcast %81 : vector<128x1xf32> to vector<128x128xf32>
    %83 = arith.subf %79, %82 : vector<128x128xf32>
    %84 = math.exp %83 : vector<128x128xf32>
    %cst_27 = arith.constant dense<0.000000e+00> : vector<128xf32>
    %85 = vector.multi_reduction <add>, %84, %cst_27 [1] : vector<128x128xf32> to vector<128xf32>
    %86 = vector.shape_cast %85 : vector<128xf32> to vector<128x1xf32>
    %87 = tpu.reciprocal %86 {approx = true} : vector<128x1xf32> -> vector<128x1xf32>
    %88 = arith.truncf %84 : vector<128x128xf32> to vector<128x128xbf16>
    %cst_28 = arith.constant dense<0.000000e+00> : vector<128x16xf32>
    %89 = tpu.matmul %88, %77, %cst_28 {dimension_numbers = #tpu.dot_dimension_numbers<[1], [0], [0], [1], [0, 0, 1, 1], [], []>} : vector<128x128xbf16>, vector<128x16xbf16>, vector<128x16xf32> -> vector<128x16xf32>
    %90 = vector.broadcast %87 : vector<128x1xf32> to vector<128x16xf32>
    %91 = arith.mulf %89, %90 : vector<128x16xf32>
    %92 = arith.truncf %91 : vector<128x16xf32> to vector<128x16xbf16>
    %93 = vector.extract_strided_slice %15 {offsets = [0, 64], sizes = [128, 16], strides = [1, 1]} : vector<128x128xbf16> to vector<128x16xbf16>
    %94 = vector.extract_strided_slice %17 {offsets = [0, 64], sizes = [128, 16], strides = [1, 1]} : vector<128x128xbf16> to vector<128x16xbf16>
    %95 = vector.extract_strided_slice %19 {offsets = [0, 64], sizes = [128, 16], strides = [1, 1]} : vector<128x128xbf16> to vector<128x16xbf16>
    %cst_29 = arith.constant dense<0.000000e+00> : vector<128x128xf32>
    %96 = tpu.matmul %93, %94, %cst_29 {dimension_numbers = #tpu.dot_dimension_numbers<[1], [1], [0], [0], [0, 0, 1, 0], [], []>} : vector<128x16xbf16>, vector<128x16xbf16>, vector<128x128xf32> -> vector<128x128xf32>
    %97 = arith.addf %96, %20 : vector<128x128xf32>
    %cst_30 = arith.constant dense<0xFF800000> : vector<128xf32>
    %98 = vector.multi_reduction <maximumf>, %97, %cst_30 [1] : vector<128x128xf32> to vector<128xf32>
    %99 = vector.shape_cast %98 : vector<128xf32> to vector<128x1xf32>
    %100 = vector.broadcast %99 : vector<128x1xf32> to vector<128x128xf32>
    %101 = arith.subf %97, %100 : vector<128x128xf32>
    %102 = math.exp %101 : vector<128x128xf32>
    %cst_31 = arith.constant dense<0.000000e+00> : vector<128xf32>
    %103 = vector.multi_reduction <add>, %102, %cst_31 [1] : vector<128x128xf32> to vector<128xf32>
    %104 = vector.shape_cast %103 : vector<128xf32> to vector<128x1xf32>
    %105 = tpu.reciprocal %104 {approx = true} : vector<128x1xf32> -> vector<128x1xf32>
    %106 = arith.truncf %102 : vector<128x128xf32> to vector<128x128xbf16>
    %cst_32 = arith.constant dense<0.000000e+00> : vector<128x16xf32>
    %107 = tpu.matmul %106, %95, %cst_32 {dimension_numbers = #tpu.dot_dimension_numbers<[1], [0], [0], [1], [0, 0, 1, 1], [], []>} : vector<128x128xbf16>, vector<128x16xbf16>, vector<128x16xf32> -> vector<128x16xf32>
    %108 = vector.broadcast %105 : vector<128x1xf32> to vector<128x16xf32>
    %109 = arith.mulf %107, %108 : vector<128x16xf32>
    %110 = arith.truncf %109 : vector<128x16xf32> to vector<128x16xbf16>
    %111 = vector.extract_strided_slice %15 {offsets = [0, 80], sizes = [128, 16], strides = [1, 1]} : vector<128x128xbf16> to vector<128x16xbf16>
    %112 = vector.extract_strided_slice %17 {offsets = [0, 80], sizes = [128, 16], strides = [1, 1]} : vector<128x128xbf16> to vector<128x16xbf16>
    %113 = vector.extract_strided_slice %19 {offsets = [0, 80], sizes = [128, 16], strides = [1, 1]} : vector<128x128xbf16> to vector<128x16xbf16>
    %cst_33 = arith.constant dense<0.000000e+00> : vector<128x128xf32>
    %114 = tpu.matmul %111, %112, %cst_33 {dimension_numbers = #tpu.dot_dimension_numbers<[1], [1], [0], [0], [0, 0, 1, 0], [], []>} : vector<128x16xbf16>, vector<128x16xbf16>, vector<128x128xf32> -> vector<128x128xf32>
    %115 = arith.addf %114, %20 : vector<128x128xf32>
    %cst_34 = arith.constant dense<0xFF800000> : vector<128xf32>
    %116 = vector.multi_reduction <maximumf>, %115, %cst_34 [1] : vector<128x128xf32> to vector<128xf32>
    %117 = vector.shape_cast %116 : vector<128xf32> to vector<128x1xf32>
    %118 = vector.broadcast %117 : vector<128x1xf32> to vector<128x128xf32>
    %119 = arith.subf %115, %118 : vector<128x128xf32>
    %120 = math.exp %119 : vector<128x128xf32>
    %cst_35 = arith.constant dense<0.000000e+00> : vector<128xf32>
    %121 = vector.multi_reduction <add>, %120, %cst_35 [1] : vector<128x128xf32> to vector<128xf32>
    %122 = vector.shape_cast %121 : vector<128xf32> to vector<128x1xf32>
    %123 = tpu.reciprocal %122 {approx = true} : vector<128x1xf32> -> vector<128x1xf32>
    %124 = arith.truncf %120 : vector<128x128xf32> to vector<128x128xbf16>
    %cst_36 = arith.constant dense<0.000000e+00> : vector<128x16xf32>
    %125 = tpu.matmul %124, %113, %cst_36 {dimension_numbers = #tpu.dot_dimension_numbers<[1], [0], [0], [1], [0, 0, 1, 1], [], []>} : vector<128x128xbf16>, vector<128x16xbf16>, vector<128x16xf32> -> vector<128x16xf32>
    %126 = vector.broadcast %123 : vector<128x1xf32> to vector<128x16xf32>
    %127 = arith.mulf %125, %126 : vector<128x16xf32>
    %128 = arith.truncf %127 : vector<128x16xf32> to vector<128x16xbf16>
    %129 = vector.extract_strided_slice %15 {offsets = [0, 96], sizes = [128, 16], strides = [1, 1]} : vector<128x128xbf16> to vector<128x16xbf16>
    %130 = vector.extract_strided_slice %17 {offsets = [0, 96], sizes = [128, 16], strides = [1, 1]} : vector<128x128xbf16> to vector<128x16xbf16>
    %131 = vector.extract_strided_slice %19 {offsets = [0, 96], sizes = [128, 16], strides = [1, 1]} : vector<128x128xbf16> to vector<128x16xbf16>
    %cst_37 = arith.constant dense<0.000000e+00> : vector<128x128xf32>
    %132 = tpu.matmul %129, %130, %cst_37 {dimension_numbers = #tpu.dot_dimension_numbers<[1], [1], [0], [0], [0, 0, 1, 0], [], []>} : vector<128x16xbf16>, vector<128x16xbf16>, vector<128x128xf32> -> vector<128x128xf32>
    %133 = arith.addf %132, %20 : vector<128x128xf32>
    %cst_38 = arith.constant dense<0xFF800000> : vector<128xf32>
    %134 = vector.multi_reduction <maximumf>, %133, %cst_38 [1] : vector<128x128xf32> to vector<128xf32>
    %135 = vector.shape_cast %134 : vector<128xf32> to vector<128x1xf32>
    %136 = vector.broadcast %135 : vector<128x1xf32> to vector<128x128xf32>
    %137 = arith.subf %133, %136 : vector<128x128xf32>
    %138 = math.exp %137 : vector<128x128xf32>
    %cst_39 = arith.constant dense<0.000000e+00> : vector<128xf32>
    %139 = vector.multi_reduction <add>, %138, %cst_39 [1] : vector<128x128xf32> to vector<128xf32>
    %140 = vector.shape_cast %139 : vector<128xf32> to vector<128x1xf32>
    %141 = tpu.reciprocal %140 {approx = true} : vector<128x1xf32> -> vector<128x1xf32>
    %142 = arith.truncf %138 : vector<128x128xf32> to vector<128x128xbf16>
    %cst_40 = arith.constant dense<0.000000e+00> : vector<128x16xf32>
    %143 = tpu.matmul %142, %131, %cst_40 {dimension_numbers = #tpu.dot_dimension_numbers<[1], [0], [0], [1], [0, 0, 1, 1], [], []>} : vector<128x128xbf16>, vector<128x16xbf16>, vector<128x16xf32> -> vector<128x16xf32>
    %144 = vector.broadcast %141 : vector<128x1xf32> to vector<128x16xf32>
    %145 = arith.mulf %143, %144 : vector<128x16xf32>
    %146 = arith.truncf %145 : vector<128x16xf32> to vector<128x16xbf16>
    %147 = vector.extract_strided_slice %15 {offsets = [0, 112], sizes = [128, 16], strides = [1, 1]} : vector<128x128xbf16> to vector<128x16xbf16>
    %148 = vector.extract_strided_slice %17 {offsets = [0, 112], sizes = [128, 16], strides = [1, 1]} : vector<128x128xbf16> to vector<128x16xbf16>
    %149 = vector.extract_strided_slice %19 {offsets = [0, 112], sizes = [128, 16], strides = [1, 1]} : vector<128x128xbf16> to vector<128x16xbf16>
    %cst_41 = arith.constant dense<0.000000e+00> : vector<128x128xf32>
    %150 = tpu.matmul %147, %148, %cst_41 {dimension_numbers = #tpu.dot_dimension_numbers<[1], [1], [0], [0], [0, 0, 1, 0], [], []>} : vector<128x16xbf16>, vector<128x16xbf16>, vector<128x128xf32> -> vector<128x128xf32>
    %151 = arith.addf %150, %20 : vector<128x128xf32>
    %cst_42 = arith.constant dense<0xFF800000> : vector<128xf32>
    %152 = vector.multi_reduction <maximumf>, %151, %cst_42 [1] : vector<128x128xf32> to vector<128xf32>
    %153 = vector.shape_cast %152 : vector<128xf32> to vector<128x1xf32>
    %154 = vector.broadcast %153 : vector<128x1xf32> to vector<128x128xf32>
    %155 = arith.subf %151, %154 : vector<128x128xf32>
    %156 = math.exp %155 : vector<128x128xf32>
    %cst_43 = arith.constant dense<0.000000e+00> : vector<128xf32>
    %157 = vector.multi_reduction <add>, %156, %cst_43 [1] : vector<128x128xf32> to vector<128xf32>
    %158 = vector.shape_cast %157 : vector<128xf32> to vector<128x1xf32>
    %159 = tpu.reciprocal %158 {approx = true} : vector<128x1xf32> -> vector<128x1xf32>
    %160 = arith.truncf %156 : vector<128x128xf32> to vector<128x128xbf16>
    %cst_44 = arith.constant dense<0.000000e+00> : vector<128x16xf32>
    %161 = tpu.matmul %160, %149, %cst_44 {dimension_numbers = #tpu.dot_dimension_numbers<[1], [0], [0], [1], [0, 0, 1, 1], [], []>} : vector<128x128xbf16>, vector<128x16xbf16>, vector<128x16xf32> -> vector<128x16xf32>
    %162 = vector.broadcast %159 : vector<128x1xf32> to vector<128x16xf32>
    %163 = arith.mulf %161, %162 : vector<128x16xf32>
    %164 = arith.truncf %163 : vector<128x16xf32> to vector<128x16xbf16>
    %165 = tpu.concatenate %38, %56, %74, %92, %110, %128, %146, %164 in 1 : vector<128x16xbf16>, vector<128x16xbf16>, vector<128x16xbf16>, vector<128x16xbf16>, vector<128x16xbf16>, vector<128x16xbf16>, vector<128x16xbf16>, vector<128x16xbf16> -> vector<128x128xbf16>
    %c0_45 = arith.constant 0 : index
    %c0_46 = arith.constant 0 : index
    %166 = vector.load %arg7[%c0_45, %c0_46] : memref<128x128xbf16, #tpu.memory_space<vmem>>, vector<128x128xbf16>
    %cst_47 = arith.constant dense<0.000000e+00> : vector<128x128xf32>
    %167 = tpu.matmul %165, %166, %cst_47 {dimension_numbers = #tpu.dot_dimension_numbers<[1], [0], [0], [1], [0, 0, 1, 1], [], []>} : vector<128x128xbf16>, vector<128x128xbf16>, vector<128x128xf32> -> vector<128x128xf32>
    %c0_48 = arith.constant 0 : index
    %c0_49 = arith.constant 0 : index
    %168 = vector.load %arg8[%c0_48, %c0_49] : memref<1x128xf32, #tpu.memory_space<vmem>>, vector<1x128xf32>
    %169 = vector.broadcast %168 : vector<1x128xf32> to vector<128x128xf32>
    %170 = arith.addf %167, %169 : vector<128x128xf32>
    %171 = arith.addf %7, %170 : vector<128x128xf32>
    %c0_50 = arith.constant 0 : index
    %c0_51 = arith.constant 0 : index
    %172 = vector.load %arg9[%c0_50, %c0_51] : memref<1x128xf32, #tpu.memory_space<vmem>>, vector<1x128xf32>
    %c0_52 = arith.constant 0 : index
    %c0_53 = arith.constant 0 : index
    %173 = vector.load %arg10[%c0_52, %c0_53] : memref<1x128xf32, #tpu.memory_space<vmem>>, vector<1x128xf32>
    %cst_54 = arith.constant dense<0.000000e+00> : vector<128xf32>
    %174 = vector.multi_reduction <add>, %171, %cst_54 [1] : vector<128x128xf32> to vector<128xf32>
    %175 = vector.shape_cast %174 : vector<128xf32> to vector<128x1xf32>
    %cst_55 = arith.constant 1.280000e+02 : f32
    %176 = vector.broadcast %cst_55 : f32 to vector<128x1xf32>
    %177 = arith.divf %175, %176 : vector<128x1xf32>
    %178 = vector.broadcast %177 : vector<128x1xf32> to vector<128x128xf32>
    %179 = arith.subf %171, %178 : vector<128x128xf32>
    %180 = arith.mulf %179, %179 : vector<128x128xf32>
    %cst_56 = arith.constant dense<0.000000e+00> : vector<128xf32>
    %181 = vector.multi_reduction <add>, %180, %cst_56 [1] : vector<128x128xf32> to vector<128xf32>
    %182 = vector.shape_cast %181 : vector<128xf32> to vector<128x1xf32>
    %cst_57 = arith.constant 1.280000e+02 : f32
    %183 = vector.broadcast %cst_57 : f32 to vector<128x1xf32>
    %184 = arith.divf %182, %183 : vector<128x1xf32>
    %185 = vector.broadcast %177 : vector<128x1xf32> to vector<128x128xf32>
    %186 = arith.subf %171, %185 : vector<128x128xf32>
    %cst_58 = arith.constant 9.99999974E-6 : f32
    %187 = vector.broadcast %cst_58 : f32 to vector<128x1xf32>
    %188 = arith.addf %184, %187 : vector<128x1xf32>
    %189 = math.rsqrt %188 : vector<128x1xf32>
    %190 = vector.broadcast %189 : vector<128x1xf32> to vector<128x128xf32>
    %191 = arith.mulf %186, %190 : vector<128x128xf32>
    %192 = vector.broadcast %172 : vector<1x128xf32> to vector<128x128xf32>
    %193 = arith.mulf %191, %192 : vector<128x128xf32>
    %194 = vector.broadcast %173 : vector<1x128xf32> to vector<128x128xf32>
    %195 = arith.addf %193, %194 : vector<128x128xf32>
    %196 = arith.truncf %195 : vector<128x128xf32> to vector<128x128xbf16>
    %c0_59 = arith.constant 0 : index
    %c0_60 = arith.constant 0 : index
    %197 = vector.load %arg11[%c0_59, %c0_60] : memref<128x2048xbf16, #tpu.memory_space<vmem>>, vector<128x2048xbf16>
    %cst_61 = arith.constant dense<0.000000e+00> : vector<128x2048xf32>
    %198 = tpu.matmul %196, %197, %cst_61 {dimension_numbers = #tpu.dot_dimension_numbers<[1], [0], [0], [1], [0, 0, 1, 1], [], []>} : vector<128x128xbf16>, vector<128x2048xbf16>, vector<128x2048xf32> -> vector<128x2048xf32>
    %c0_62 = arith.constant 0 : index
    %c0_63 = arith.constant 0 : index
    %199 = vector.load %arg12[%c0_62, %c0_63] : memref<1x2048xf32, #tpu.memory_space<vmem>>, vector<1x2048xf32>
    %200 = vector.broadcast %199 : vector<1x2048xf32> to vector<128x2048xf32>
    %201 = arith.addf %198, %200 : vector<128x2048xf32>
    %cst_64 = arith.constant 0.000000e+00 : f32
    %202 = vector.broadcast %cst_64 : f32 to vector<128x2048xf32>
    %203 = arith.maximumf %201, %202 : vector<128x2048xf32>
    %204 = arith.truncf %203 : vector<128x2048xf32> to vector<128x2048xbf16>
    %c0_65 = arith.constant 0 : index
    %c0_66 = arith.constant 0 : index
    %205 = vector.load %arg13[%c0_65, %c0_66] : memref<2048x128xbf16, #tpu.memory_space<vmem>>, vector<2048x128xbf16>
    %cst_67 = arith.constant dense<0.000000e+00> : vector<128x128xf32>
    %206 = tpu.matmul %204, %205, %cst_67 {dimension_numbers = #tpu.dot_dimension_numbers<[1], [0], [0], [1], [0, 0, 1, 1], [], []>} : vector<128x2048xbf16>, vector<2048x128xbf16>, vector<128x128xf32> -> vector<128x128xf32>
    %c0_68 = arith.constant 0 : index
    %c0_69 = arith.constant 0 : index
    %207 = vector.load %arg14[%c0_68, %c0_69] : memref<1x128xf32, #tpu.memory_space<vmem>>, vector<1x128xf32>
    %208 = vector.broadcast %207 : vector<1x128xf32> to vector<128x128xf32>
    %209 = arith.addf %206, %208 : vector<128x128xf32>
    %210 = arith.addf %195, %209 : vector<128x128xf32>
    %c0_70 = arith.constant 0 : index
    %c0_71 = arith.constant 0 : index
    %211 = vector.load %arg15[%c0_70, %c0_71] : memref<1x128xf32, #tpu.memory_space<vmem>>, vector<1x128xf32>
    %c0_72 = arith.constant 0 : index
    %c0_73 = arith.constant 0 : index
    %212 = vector.load %arg16[%c0_72, %c0_73] : memref<1x128xf32, #tpu.memory_space<vmem>>, vector<1x128xf32>
    %cst_74 = arith.constant dense<0.000000e+00> : vector<128xf32>
    %213 = vector.multi_reduction <add>, %210, %cst_74 [1] : vector<128x128xf32> to vector<128xf32>
    %214 = vector.shape_cast %213 : vector<128xf32> to vector<128x1xf32>
    %cst_75 = arith.constant 1.280000e+02 : f32
    %215 = vector.broadcast %cst_75 : f32 to vector<128x1xf32>
    %216 = arith.divf %214, %215 : vector<128x1xf32>
    %217 = vector.broadcast %216 : vector<128x1xf32> to vector<128x128xf32>
    %218 = arith.subf %210, %217 : vector<128x128xf32>
    %219 = arith.mulf %218, %218 : vector<128x128xf32>
    %cst_76 = arith.constant dense<0.000000e+00> : vector<128xf32>
    %220 = vector.multi_reduction <add>, %219, %cst_76 [1] : vector<128x128xf32> to vector<128xf32>
    %221 = vector.shape_cast %220 : vector<128xf32> to vector<128x1xf32>
    %cst_77 = arith.constant 1.280000e+02 : f32
    %222 = vector.broadcast %cst_77 : f32 to vector<128x1xf32>
    %223 = arith.divf %221, %222 : vector<128x1xf32>
    %224 = vector.broadcast %216 : vector<128x1xf32> to vector<128x128xf32>
    %225 = arith.subf %210, %224 : vector<128x128xf32>
    %cst_78 = arith.constant 9.99999974E-6 : f32
    %226 = vector.broadcast %cst_78 : f32 to vector<128x1xf32>
    %227 = arith.addf %223, %226 : vector<128x1xf32>
    %228 = math.rsqrt %227 : vector<128x1xf32>
    %229 = vector.broadcast %228 : vector<128x1xf32> to vector<128x128xf32>
    %230 = arith.mulf %225, %229 : vector<128x128xf32>
    %231 = vector.broadcast %211 : vector<1x128xf32> to vector<128x128xf32>
    %232 = arith.mulf %230, %231 : vector<128x128xf32>
    %233 = vector.broadcast %212 : vector<1x128xf32> to vector<128x128xf32>
    %234 = arith.addf %232, %233 : vector<128x128xf32>
    %235 = arith.truncf %234 : vector<128x128xf32> to vector<128x128xbf16>
    %c0_79 = arith.constant 0 : index
    %c0_80 = arith.constant 0 : index
    %236 = vector.load %arg17[%c0_79, %c0_80] : memref<128x128xbf16, #tpu.memory_space<vmem>>, vector<128x128xbf16>
    %cst_81 = arith.constant dense<0.000000e+00> : vector<128x128xf32>
    %237 = tpu.matmul %235, %236, %cst_81 {dimension_numbers = #tpu.dot_dimension_numbers<[1], [0], [0], [1], [0, 0, 1, 1], [], []>} : vector<128x128xbf16>, vector<128x128xbf16>, vector<128x128xf32> -> vector<128x128xf32>
    %c0_82 = arith.constant 0 : index
    %c0_83 = arith.constant 0 : index
    %238 = vector.load %arg18[%c0_82, %c0_83] : memref<1x128xf32, #tpu.memory_space<vmem>>, vector<1x128xf32>
    %239 = vector.broadcast %238 : vector<1x128xf32> to vector<128x128xf32>
    %240 = arith.addf %237, %239 : vector<128x128xf32>
    %241 = arith.truncf %240 : vector<128x128xf32> to vector<128x128xbf16>
    %242 = vector.shape_cast %241 : vector<128x128xbf16> to vector<16x8x128xbf16>
    %c0_84 = arith.constant 0 : index
    %c0_85 = arith.constant 0 : index
    %c0_86 = arith.constant 0 : index
    %243 = vector.load %arg19[%c0_84, %c0_85, %c0_86] : memref<16x8x128xbf16, #tpu.memory_space<vmem>>, vector<16x8x128xbf16>
    tpu.vector_store %arg19[%c0_84, %c0_85, %c0_86], %242 {strides = array<i32>} : memref<16x8x128xbf16, #tpu.memory_space<vmem>>, vector<16x8x128xbf16>,
    return
  }
  func.func @transform_0(%arg0: i32) -> (i32, i32, i32) {
    %c0_i32 = arith.constant 0 : i32
    %c0_i32_0 = arith.constant 0 : i32
    %c0_i32_1 = arith.constant 0 : i32
    return %arg0, %c0_i32, %c0_i32_0 : i32, i32, i32
  }
  func.func @transform_1(%arg0: i32) -> (i32, i32) {
    %c0_i32 = arith.constant 0 : i32
    %c0_i32_0 = arith.constant 0 : i32
    %c0_i32_1 = arith.constant 0 : i32
    return %c0_i32, %c0_i32_0 : i32, i32
  }
  func.func @transform_2(%arg0: i32) -> (i32, i32) {
    %c0_i32 = arith.constant 0 : i32
    %c0_i32_0 = arith.constant 0 : i32
    %c0_i32_1 = arith.constant 0 : i32
    return %c0_i32, %c0_i32_0 : i32, i32
  }
  func.func @transform_3(%arg0: i32) -> (i32, i32) {
    %c0_i32 = arith.constant 0 : i32
    %c0_i32_0 = arith.constant 0 : i32
    %c0_i32_1 = arith.constant 0 : i32
    return %c0_i32, %c0_i32_0 : i32, i32
  }
  func.func @transform_4(%arg0: i32) -> (i32, i32) {
    %c0_i32 = arith.constant 0 : i32
    %c0_i32_0 = arith.constant 0 : i32
    %c0_i32_1 = arith.constant 0 : i32
    return %c0_i32, %c0_i32_0 : i32, i32
  }
  func.func @transform_5(%arg0: i32) -> (i32, i32) {
    %c0_i32 = arith.constant 0 : i32
    %c0_i32_0 = arith.constant 0 : i32
    %c0_i32_1 = arith.constant 0 : i32
    return %c0_i32, %c0_i32_0 : i32, i32
  }
  func.func @transform_6(%arg0: i32) -> (i32, i32) {
    %c0_i32 = arith.constant 0 : i32
    %c0_i32_0 = arith.constant 0 : i32
    %c0_i32_1 = arith.constant 0 : i32
    return %c0_i32, %c0_i32_0 : i32, i32
  }
  func.func @transform_7(%arg0: i32) -> (i32, i32) {
    %c0_i32 = arith.constant 0 : i32
    %c0_i32_0 = arith.constant 0 : i32
    %c0_i32_1 = arith.constant 0 : i32
    return %c0_i32, %c0_i32_0 : i32, i32
  }
  func.func @transform_8(%arg0: i32) -> (i32, i32) {
    %c0_i32 = arith.constant 0 : i32
    %c0_i32_0 = arith.constant 0 : i32
    %c0_i32_1 = arith.constant 0 : i32
    return %c0_i32, %c0_i32_0 : i32, i32
  }
  func.func @transform_9(%arg0: i32) -> (i32, i32) {
    %c0_i32 = arith.constant 0 : i32
    %c0_i32_0 = arith.constant 0 : i32
    %c0_i32_1 = arith.constant 0 : i32
    return %c0_i32, %c0_i32_0 : i32, i32
  }
  func.func @transform_10(%arg0: i32) -> (i32, i32) {
    %c0_i32 = arith.constant 0 : i32
    %c0_i32_0 = arith.constant 0 : i32
    %c0_i32_1 = arith.constant 0 : i32
    return %c0_i32, %c0_i32_0 : i32, i32
  }
  func.func @transform_11(%arg0: i32) -> (i32, i32) {
    %c0_i32 = arith.constant 0 : i32
    %c0_i32_0 = arith.constant 0 : i32
    %c0_i32_1 = arith.constant 0 : i32
    return %c0_i32, %c0_i32_0 : i32, i32
  }
  func.func @transform_12(%arg0: i32) -> (i32, i32) {
    %c0_i32 = arith.constant 0 : i32
    %c0_i32_0 = arith.constant 0 : i32
    %c0_i32_1 = arith.constant 0 : i32
    return %c0_i32, %c0_i32_0 : i32, i32
  }
  func.func @transform_13(%arg0: i32) -> (i32, i32) {
    %c0_i32 = arith.constant 0 : i32
    %c0_i32_0 = arith.constant 0 : i32
    %c0_i32_1 = arith.constant 0 : i32
    return %c0_i32, %c0_i32_0 : i32, i32
  }
  func.func @transform_14(%arg0: i32) -> (i32, i32) {
    %c0_i32 = arith.constant 0 : i32
    %c0_i32_0 = arith.constant 0 : i32
    %c0_i32_1 = arith.constant 0 : i32
    return %c0_i32, %c0_i32_0 : i32, i32
  }
  func.func @transform_15(%arg0: i32) -> (i32, i32) {
    %c0_i32 = arith.constant 0 : i32
    %c0_i32_0 = arith.constant 0 : i32
    %c0_i32_1 = arith.constant 0 : i32
    return %c0_i32, %c0_i32_0 : i32, i32
  }
  func.func @transform_16(%arg0: i32) -> (i32, i32) {
    %c0_i32 = arith.constant 0 : i32
    %c0_i32_0 = arith.constant 0 : i32
    %c0_i32_1 = arith.constant 0 : i32
    return %c0_i32, %c0_i32_0 : i32, i32
  }
  func.func @transform_17(%arg0: i32) -> (i32, i32) {
    %c0_i32 = arith.constant 0 : i32
    %c0_i32_0 = arith.constant 0 : i32
    %c0_i32_1 = arith.constant 0 : i32
    return %c0_i32, %c0_i32_0 : i32, i32
  }
  func.func @transform_18(%arg0: i32) -> (i32, i32, i32) {
    %c0_i32 = arith.constant 0 : i32
    %c0_i32_0 = arith.constant 0 : i32
    %c0_i32_1 = arith.constant 0 : i32
    return %arg0, %c0_i32, %c0_i32_0 : i32, i32, i32
  }
}

</mosaic_0001>

<llo_original>
// kernel: tpu_custom_call.1
$region0: #{tpu_custom_call.1}
  #allocation0 [shape = 'u32[]', space=smem, size = 0x4, offset = 0x4, fixed_abs, tag = 'smem constant byte address 0x4 - core index']
  #allocation1 [shape = 'u32[144,128]{1,0:T(1,128)}', space=vmem, size = 0x12000, scoped, tag = 'internal scratch']
  %s0 = inlined_call_operand.hbm [shape: f32[32,8,64], index: 0, kind: input, shape index: {}]
  %s1 = inlined_call_operand.hbm [shape: f32[128,128], index: 1, kind: input, shape index: {}]
  %s2 = inlined_call_operand.hbm [shape: bf16[64,128], index: 2, kind: input, shape index: {}]
  %s3 = inlined_call_operand.vmem [shape: f32[1,128], index: 3, kind: input, shape index: {}]
  %s4 = inlined_call_operand.hbm [shape: bf16[128,384], index: 4, kind: input, shape index: {}]
  %s5 = inlined_call_operand.vmem [shape: f32[1,384], index: 5, kind: input, shape index: {}]
  %s6 = inlined_call_operand.hbm [shape: bf16[128,128], index: 6, kind: input, shape index: {}]
  %s7 = inlined_call_operand.hbm [shape: f32[1,128], index: 7, kind: input, shape index: {}]
  %s8 = inlined_call_operand.hbm [shape: f32[1,128], index: 8, kind: input, shape index: {}]
  %s9 = inlined_call_operand.hbm [shape: f32[1,128], index: 9, kind: input, shape index: {}]
  %s10 = inlined_call_operand.hbm [shape: bf16[128,2048], index: 10, kind: input, shape index: {}]
  %s11 = inlined_call_operand.vmem [shape: f32[1,2048], index: 11, kind: input, shape index: {}]
  %s12 = inlined_call_operand.hbm [shape: bf16[2048,128], index: 12, kind: input, shape index: {}]
  %s13 = inlined_call_operand.vmem [shape: f32[1,128], index: 13, kind: input, shape index: {}]
  %s14 = inlined_call_operand.vmem [shape: f32[1,128], index: 14, kind: input, shape index: {}]
  %s15 = inlined_call_operand.vmem [shape: f32[1,128], index: 15, kind: input, shape index: {}]
  %s16 = inlined_call_operand.hbm [shape: bf16[128,128], index: 16, kind: input, shape index: {}]
  %s17 = inlined_call_operand.vmem [shape: f32[1,128], index: 17, kind: input, shape index: {}]
  %s18 = inlined_call_operand.hbm [shape: bf16[32,8,128], index: 18, kind: output, shape index: {}]
  %s19 = sld [smem:[#allocation0]]
  $region149: #{tpu_custom_call.1} parent=0
    _
  %s21 = ssub.s32 1, %s19
  %s22 = scalar_select 0, %s21, %s19
  $region1: #{tpu_custom_call.1} parent=0
    #allocation2 [shape = 'u8[131072]{0}', space=vmem, size = 0x20000, scoped, tag = 'input window, operand 0']
    #allocation3 [shape = 's32[2]{0}', space=sflag, size = 0x8, scoped, tag = 'scoped memory for tpu_custom_call.1']
    #allocation4 [shape = 's32[2]{0}', space=sflag, size = 0x8, scoped, tag = 'scoped memory for tpu_custom_call.1']
    #allocation5 [shape = 'u8[65536]{0}', space=vmem, size = 0x10000, scoped, tag = 'input window, operand 1, single buffered']
    #allocation6 [shape = 's32[1]{0}', space=sflag, size = 0x4, scoped, tag = 'scoped memory for tpu_custom_call.1']
    #allocation7 [shape = 'u8[16384]{0}', space=vmem, size = 0x4000, scoped, tag = 'input window, operand 2, single buffered']
    #allocation8 [shape = 'u8[98304]{0}', space=vmem, size = 0x18000, scoped, tag = 'input window, operand 4, single buffered']
    #allocation9 [shape = 's32[1]{0}', space=sflag, size = 0x4, scoped, tag = 'scoped memory for tpu_custom_call.1']
    #allocation10 [shape = 'u8[32768]{0}', space=vmem, size = 0x8000, scoped, tag = 'input window, operand 6, single buffered']
    #allocation11 [shape = 'u8[512]{0}', space=vmem, size = 0x400, scoped, tag = 'input window, operand 7, single buffered']
    #allocation12 [shape = 's32[1]{0}', space=sflag, size = 0x4, scoped, tag = 'scoped memory for tpu_custom_call.1']
    #allocation13 [shape = 'u8[512]{0}', space=vmem, size = 0x400, scoped, tag = 'input window, operand 8, single buffered']
    #allocation14 [shape = 'u8[512]{0}', space=vmem, size = 0x400, scoped, tag = 'input window, operand 9, single buffered']
    #allocation15 [shape = 's32[1]{0}', space=sflag, size = 0x4, scoped, tag = 'scoped memory for tpu_custom_call.1']
    #allocation16 [shape = 'u8[524288]{0}', space=vmem, size = 0x80000, scoped, tag = 'input window, operand 10, single buffered']
    #allocation17 [shape = 'u8[524288]{0}', space=vmem, size = 0x80000, scoped, tag = 'input window, operand 12, single buffered']
    #allocation18 [shape = 's32[1]{0}', space=sflag, size = 0x4, scoped, tag = 'scoped memory for tpu_custom_call.1']
    #allocation19 [shape = 'u8[32768]{0}', space=vmem, size = 0x8000, scoped, tag = 'input window, operand 16, single buffered']
    #allocation20 [shape = 'u8[65536]{0}', space=vmem, size = 0x10000, scoped, tag = 'output window, operand 0']
    %23 = vsyncpa [#allocation3], 0
    %s24 = scalar_lea.sflag [#allocation3], 1
    %25 = vsyncpa %s24, 0
    %26 = vsyncpa [#allocation6], 0
    %27 = vsyncpa [#allocation9], 0
    %28 = vsyncpa [#allocation12], 0
    %29 = vsyncpa [#allocation15], 0
    %30 = vsyncpa [#allocation18], 0
    %31 = vsyncpa [#allocation4], 0
    %s32 = scalar_lea.sflag [#allocation4], 1
    %33 = vsyncpa %s32, 0
    loop: start=0, step=1, limit=4
    $region2: #{tpu_custom_call.1} parent=1 // loop_pre_header
      _
    $region3: #{tpu_custom_call.1} parent=1 // loop_header
      %s35 = sphi 0, %s39
      %p36 = scmp.ge.s32.totalorder %s35, 4
      %s45 = sphi 0, %s47
      %s48 = sphi 0, %s45
      %s49 = sphi 0, %s48
      %s65 = sphi 0, %s49
      %s69 = sphi 0, %s69
      %s71 = sphi 0, %s69
      %s72 = sphi 0, %s71
      %s86 = sphi 0, %s72
      %s90 = sphi 0, %s90
      %s92 = sphi 0, %s90
      %s93 = sphi 0, %s92
      %s107 = sphi 0, %s93
      %s111 = sphi 0, %s111
      %s113 = sphi 0, %s111
      %s114 = sphi 0, %s113
      %s128 = sphi 0, %s114
      %s132 = sphi 0, %s132
      %s134 = sphi 0, %s132
      %s135 = sphi 0, %s134
      %s149 = sphi 0, %s135
      %s153 = sphi 0, %s153
      %s155 = sphi 0, %s153
      %s156 = sphi 0, %s155
      %s170 = sphi 0, %s156
      %s174 = sphi 0, %s174
      %s176 = sphi 0, %s174
      %s177 = sphi 0, %s176
      %s191 = sphi 0, %s177
      %s195 = sphi 0, %s195
      %s197 = sphi 0, %s195
      %s198 = sphi 0, %s197
      %s212 = sphi 0, %s198
      %s216 = sphi 0, %s216
      %s218 = sphi 0, %s216
      %s219 = sphi 0, %s218
      %s233 = sphi 0, %s219
      %s237 = sphi 0, %s237
      %s239 = sphi 0, %s237
      %s240 = sphi 0, %s239
      %s254 = sphi 0, %s240
      %s258 = sphi 0, %s258
      %s260 = sphi 0, %s258
      %s261 = sphi 0, %s260
      %s275 = sphi 0, %s261
      %s279 = sphi 0, %s279
      %s281 = sphi 0, %s279
      %s282 = sphi 0, %s281
      %s296 = sphi 0, %s282
      %s300 = sphi 0, %s300
      %s302 = sphi 0, %s300
      %s303 = sphi 0, %s302
      %s317 = sphi 0, %s303
      %s321 = sphi 0, %s321
      %s323 = sphi 0, %s321
      %s324 = sphi 0, %s323
      %s338 = sphi 0, %s324
      %s342 = sphi 0, %s342
      %s344 = sphi 0, %s342
      %s345 = sphi 0, %s344
      %s359 = sphi 0, %s345
      %s363 = sphi 0, %s363
      %s365 = sphi 0, %s363
      %s366 = sphi 0, %s365
      %s380 = sphi 0, %s366
      %s384 = sphi 0, %s384
      %s386 = sphi 0, %s384
      %s387 = sphi 0, %s386
      %s401 = sphi 0, %s387
      %s405 = sphi 0, %s405
      %s407 = sphi 0, %s405
      %s408 = sphi 0, %s407
      %s422 = sphi 0, %s408
      %s428 = sphi 0, %s430
      %s431 = sphi 0, %s428
      %s432 = sphi 0, %s431
      %s448 = sphi 0, %s432
    $region4: #{tpu_custom_call.1} parent=1 // loop_header_branch
      %38 = sbr.rel (%p36) target = $region8
    $region5: #{tpu_custom_call.1} parent=1 // loop_body
      %s40 = ssub.s32 %s35, 1
      %s41 = ssub.s32 %s35, 2
      %s42 = sadd.s32 %s35, 1
      %s43 = ssub.s32 %s35, %s42
      %p44 = scmp.eq.s32.totalorder %s43, 0
      %s46 = sadd.s32 %s45, 1
      %s47 = scalar_select %p44, %s45, %s46
      %p50 = pneg %p44
      %p51 = scmp.eq.s32.totalorder %s35, 1
      %p52 = por %p50, %p51
      %p53 = scmp.ne.s32.totalorder %s45, %s48
      %p54 = scmp.eq.s32.totalorder %s35, 0
      %p55 = por %p53, %p54
      %p56 = scmp.ne.s32.totalorder %s45, %s48
      %p57 = scmp.eq.s32.totalorder %s40, 1
      %p58 = por %p56, %p57
      %p59 = scmp.ne.s32.totalorder %s48, %s49
      %p60 = scmp.eq.s32.totalorder %s40, 0
      %p61 = por %p59, %p60
      %p62 = scmp.ne.s32.totalorder %s48, %s49
      %p63 = scmp.eq.s32.totalorder %s41, 1
      %p64 = por %p62, %p63
      %p66 = scmp.ne.s32.totalorder %s49, %s65
      %p67 = scmp.eq.s32.totalorder %s41, 0
      %p68 = por %p66, %p67
      %s70 = sadd.s32 %s69, 1
      %p73 = scmp.eq.s32.totalorder %s35, 1
      %p74 = scmp.ne.s32.totalorder %s69, %s71
      %p75 = scmp.eq.s32.totalorder %s35, 0
      %p76 = por %p74, %p75
      %p77 = scmp.ne.s32.totalorder %s69, %s71
      %p78 = scmp.eq.s32.totalorder %s40, 1
      %p79 = por %p77, %p78
      %p80 = scmp.ne.s32.totalorder %s71, %s72
      %p81 = scmp.eq.s32.totalorder %s40, 0
      %p82 = por %p80, %p81
      %p83 = scmp.ne.s32.totalorder %s71, %s72
      %p84 = scmp.eq.s32.totalorder %s41, 1
      %p85 = por %p83, %p84
      %p87 = scmp.ne.s32.totalorder %s72, %s86
      %p88 = scmp.eq.s32.totalorder %s41, 0
      %p89 = por %p87, %p88
      %s91 = sadd.s32 %s90, 1
      %p94 = scmp.eq.s32.totalorder %s35, 1
      %p95 = scmp.ne.s32.totalorder %s90, %s92
      %p96 = scmp.eq.s32.totalorder %s35, 0
      %p97 = por %p95, %p96
      %p98 = scmp.ne.s32.totalorder %s90, %s92
      %p99 = scmp.eq.s32.totalorder %s40, 1
      %p100 = por %p98, %p99
      %p101 = scmp.ne.s32.totalorder %s92, %s93
      %p102 = scmp.eq.s32.totalorder %s40, 0
      %p103 = por %p101, %p102
      %p104 = scmp.ne.s32.totalorder %s92, %s93
      %p105 = scmp.eq.s32.totalorder %s41, 1
      %p106 = por %p104, %p105
      %p108 = scmp.ne.s32.totalorder %s93, %s107
      %p109 = scmp.eq.s32.totalorder %s41, 0
      %p110 = por %p108, %p109
      %s112 = sadd.s32 %s111, 1
      %p115 = scmp.eq.s32.totalorder %s35, 1
      %p116 = scmp.ne.s32.totalorder %s111, %s113
      %p117 = scmp.eq.s32.totalorder %s35, 0
      %p118 = por %p116, %p117
      %p119 = scmp.ne.s32.totalorder %s111, %s113
      %p120 = scmp.eq.s32.totalorder %s40, 1
      %p121 = por %p119, %p120
      %p122 = scmp.ne.s32.totalorder %s113, %s114
      %p123 = scmp.eq.s32.totalorder %s40, 0
      %p124 = por %p122, %p123
      %p125 = scmp.ne.s32.totalorder %s113, %s114
      %p126 = scmp.eq.s32.totalorder %s41, 1
      %p127 = por %p125, %p126
      %p129 = scmp.ne.s32.totalorder %s114, %s128
      %p130 = scmp.eq.s32.totalorder %s41, 0
      %p131 = por %p129, %p130
      %s133 = sadd.s32 %s132, 1
      %p136 = scmp.eq.s32.totalorder %s35, 1
      %p137 = scmp.ne.s32.totalorder %s132, %s134
      %p138 = scmp.eq.s32.totalorder %s35, 0
      %p139 = por %p137, %p138
      %p140 = scmp.ne.s32.totalorder %s132, %s134
      %p141 = scmp.eq.s32.totalorder %s40, 1
      %p142 = por %p140, %p141
      %p143 = scmp.ne.s32.totalorder %s134, %s135
      %p144 = scmp.eq.s32.totalorder %s40, 0
      %p145 = por %p143, %p144
      %p146 = scmp.ne.s32.totalorder %s134, %s135
      %p147 = scmp.eq.s32.totalorder %s41, 1
      %p148 = por %p146, %p147
      %p150 = scmp.ne.s32.totalorder %s135, %s149
      %p151 = scmp.eq.s32.totalorder %s41, 0
      %p152 = por %p150, %p151
      %s154 = sadd.s32 %s153, 1
      %p157 = scmp.eq.s32.totalorder %s35, 1
      %p158 = scmp.ne.s32.totalorder %s153, %s155
      %p159 = scmp.eq.s32.totalorder %s35, 0
      %p160 = por %p158, %p159
      %p161 = scmp.ne.s32.totalorder %s153, %s155
      %p162 = scmp.eq.s32.totalorder %s40, 1
      %p163 = por %p161, %p162
      %p164 = scmp.ne.s32.totalorder %s155, %s156
      %p165 = scmp.eq.s32.totalorder %s40, 0
      %p166 = por %p164, %p165
      %p167 = scmp.ne.s32.totalorder %s155, %s156
      %p168 = scmp.eq.s32.totalorder %s41, 1
      %p169 = por %p167, %p168
      %p171 = scmp.ne.s32.totalorder %s156, %s170
      %p172 = scmp.eq.s32.totalorder %s41, 0
      %p173 = por %p171, %p172
      %s175 = sadd.s32 %s174, 1
      %p178 = scmp.eq.s32.totalorder %s35, 1
      %p179 = scmp.ne.s32.totalorder %s174, %s176
      %p180 = scmp.eq.s32.totalorder %s35, 0
      %p181 = por %p179, %p180
      %p182 = scmp.ne.s32.totalorder %s174, %s176
      %p183 = scmp.eq.s32.totalorder %s40, 1
      %p184 = por %p182, %p183
      %p185 = scmp.ne.s32.totalorder %s176, %s177
      %p186 = scmp.eq.s32.totalorder %s40, 0
      %p187 = por %p185, %p186
      %p188 = scmp.ne.s32.totalorder %s176, %s177
      %p189 = scmp.eq.s32.totalorder %s41, 1
      %p190 = por %p188, %p189
      %p192 = scmp.ne.s32.totalorder %s177, %s191
      %p193 = scmp.eq.s32.totalorder %s41, 0
      %p194 = por %p192, %p193
      %s196 = sadd.s32 %s195, 1
      %p199 = scmp.eq.s32.totalorder %s35, 1
      %p200 = scmp.ne.s32.totalorder %s195, %s197
      %p201 = scmp.eq.s32.totalorder %s35, 0
      %p202 = por %p200, %p201
      %p203 = scmp.ne.s32.totalorder %s195, %s197
      %p204 = scmp.eq.s32.totalorder %s40, 1
      %p205 = por %p203, %p204
      %p206 = scmp.ne.s32.totalorder %s197, %s198
      %p207 = scmp.eq.s32.totalorder %s40, 0
      %p208 = por %p206, %p207
      %p209 = scmp.ne.s32.totalorder %s197, %s198
      %p210 = scmp.eq.s32.totalorder %s41, 1
      %p211 = por %p209, %p210
      %p213 = scmp.ne.s32.totalorder %s198, %s212
      %p214 = scmp.eq.s32.totalorder %s41, 0
      %p215 = por %p213, %p214
      %s217 = sadd.s32 %s216, 1
      %p220 = scmp.eq.s32.totalorder %s35, 1
      %p221 = scmp.ne.s32.totalorder %s216, %s218
      %p222 = scmp.eq.s32.totalorder %s35, 0
      %p223 = por %p221, %p222
      %p224 = scmp.ne.s32.totalorder %s216, %s218
      %p225 = scmp.eq.s32.totalorder %s40, 1
      %p226 = por %p224, %p225
      %p227 = scmp.ne.s32.totalorder %s218, %s219
      %p228 = scmp.eq.s32.totalorder %s40, 0
      %p229 = por %p227, %p228
      %p230 = scmp.ne.s32.totalorder %s218, %s219
      %p231 = scmp.eq.s32.totalorder %s41, 1
      %p232 = por %p230, %p231
      %p234 = scmp.ne.s32.totalorder %s219, %s233
      %p235 = scmp.eq.s32.totalorder %s41, 0
      %p236 = por %p234, %p235
      %s238 = sadd.s32 %s237, 1
      %p241 = scmp.eq.s32.totalorder %s35, 1
      %p242 = scmp.ne.s32.totalorder %s237, %s239
      %p243 = scmp.eq.s32.totalorder %s35, 0
      %p244 = por %p242, %p243
      %p245 = scmp.ne.s32.totalorder %s237, %s239
      %p246 = scmp.eq.s32.totalorder %s40, 1
      %p247 = por %p245, %p246
      %p248 = scmp.ne.s32.totalorder %s239, %s240
      %p249 = scmp.eq.s32.totalorder %s40, 0
      %p250 = por %p248, %p249
      %p251 = scmp.ne.s32.totalorder %s239, %s240
      %p252 = scmp.eq.s32.totalorder %s41, 1
      %p253 = por %p251, %p252
      %p255 = scmp.ne.s32.totalorder %s240, %s254
      %p256 = scmp.eq.s32.totalorder %s41, 0
      %p257 = por %p255, %p256
      %s259 = sadd.s32 %s258, 1
      %p262 = scmp.eq.s32.totalorder %s35, 1
      %p263 = scmp.ne.s32.totalorder %s258, %s260
      %p264 = scmp.eq.s32.totalorder %s35, 0
      %p265 = por %p263, %p264
      %p266 = scmp.ne.s32.totalorder %s258, %s260
      %p267 = scmp.eq.s32.totalorder %s40, 1
      %p268 = por %p266, %p267
      %p269 = scmp.ne.s32.totalorder %s260, %s261
      %p270 = scmp.eq.s32.totalorder %s40, 0
      %p271 = por %p269, %p270
      %p272 = scmp.ne.s32.totalorder %s260, %s261
      %p273 = scmp.eq.s32.totalorder %s41, 1
      %p274 = por %p272, %p273
      %p276 = scmp.ne.s32.totalorder %s261, %s275
      %p277 = scmp.eq.s32.totalorder %s41, 0
      %p278 = por %p276, %p277
      %s280 = sadd.s32 %s279, 1
      %p283 = scmp.eq.s32.totalorder %s35, 1
      %p284 = scmp.ne.s32.totalorder %s279, %s281
      %p285 = scmp.eq.s32.totalorder %s35, 0
      %p286 = por %p284, %p285
      %p287 = scmp.ne.s32.totalorder %s279, %s281
      %p288 = scmp.eq.s32.totalorder %s40, 1
      %p289 = por %p287, %p288
      %p290 = scmp.ne.s32.totalorder %s281, %s282
      %p291 = scmp.eq.s32.totalorder %s40, 0
      %p292 = por %p290, %p291
      %p293 = scmp.ne.s32.totalorder %s281, %s282
      %p294 = scmp.eq.s32.totalorder %s41, 1
      %p295 = por %p293, %p294
      %p297 = scmp.ne.s32.totalorder %s282, %s296
      %p298 = scmp.eq.s32.totalorder %s41, 0
      %p299 = por %p297, %p298
      %s301 = sadd.s32 %s300, 1
      %p304 = scmp.eq.s32.totalorder %s35, 1
      %p305 = scmp.ne.s32.totalorder %s300, %s302
      %p306 = scmp.eq.s32.totalorder %s35, 0
      %p307 = por %p305, %p306
      %p308 = scmp.ne.s32.totalorder %s300, %s302
      %p309 = scmp.eq.s32.totalorder %s40, 1
      %p310 = por %p308, %p309
      %p311 = scmp.ne.s32.totalorder %s302, %s303
      %p312 = scmp.eq.s32.totalorder %s40, 0
      %p313 = por %p311, %p312
      %p314 = scmp.ne.s32.totalorder %s302, %s303
      %p315 = scmp.eq.s32.totalorder %s41, 1
      %p316 = por %p314, %p315
      %p318 = scmp.ne.s32.totalorder %s303, %s317
      %p319 = scmp.eq.s32.totalorder %s41, 0
      %p320 = por %p318, %p319
      %s322 = sadd.s32 %s321, 1
      %p325 = scmp.eq.s32.totalorder %s35, 1
      %p326 = scmp.ne.s32.totalorder %s321, %s323
      %p327 = scmp.eq.s32.totalorder %s35, 0
      %p328 = por %p326, %p327
      %p329 = scmp.ne.s32.totalorder %s321, %s323
      %p330 = scmp.eq.s32.totalorder %s40, 1
      %p331 = por %p329, %p330
      %p332 = scmp.ne.s32.totalorder %s323, %s324
      %p333 = scmp.eq.s32.totalorder %s40, 0
      %p334 = por %p332, %p333
      %p335 = scmp.ne.s32.totalorder %s323, %s324
      %p336 = scmp.eq.s32.totalorder %s41, 1
      %p337 = por %p335, %p336
      %p339 = scmp.ne.s32.totalorder %s324, %s338
      %p340 = scmp.eq.s32.totalorder %s41, 0
      %p341 = por %p339, %p340
      %s343 = sadd.s32 %s342, 1
      %p346 = scmp.eq.s32.totalorder %s35, 1
      %p347 = scmp.ne.s32.totalorder %s342, %s344
      %p348 = scmp.eq.s32.totalorder %s35, 0
      %p349 = por %p347, %p348
      %p350 = scmp.ne.s32.totalorder %s342, %s344
      %p351 = scmp.eq.s32.totalorder %s40, 1
      %p352 = por %p350, %p351
      %p353 = scmp.ne.s32.totalorder %s344, %s345
      %p354 = scmp.eq.s32.totalorder %s40, 0
      %p355 = por %p353, %p354
      %p356 = scmp.ne.s32.totalorder %s344, %s345
      %p357 = scmp.eq.s32.totalorder %s41, 1
      %p358 = por %p356, %p357
      %p360 = scmp.ne.s32.totalorder %s345, %s359
      %p361 = scmp.eq.s32.totalorder %s41, 0
      %p362 = por %p360, %p361
      %s364 = sadd.s32 %s363, 1
      %p367 = scmp.eq.s32.totalorder %s35, 1
      %p368 = scmp.ne.s32.totalorder %s363, %s365
      %p369 = scmp.eq.s32.totalorder %s35, 0
      %p370 = por %p368, %p369
      %p371 = scmp.ne.s32.totalorder %s363, %s365
      %p372 = scmp.eq.s32.totalorder %s40, 1
      %p373 = por %p371, %p372
      %p374 = scmp.ne.s32.totalorder %s365, %s366
      %p375 = scmp.eq.s32.totalorder %s40, 0
      %p376 = por %p374, %p375
      %p377 = scmp.ne.s32.totalorder %s365, %s366
      %p378 = scmp.eq.s32.totalorder %s41, 1
      %p379 = por %p377, %p378
      %p381 = scmp.ne.s32.totalorder %s366, %s380
      %p382 = scmp.eq.s32.totalorder %s41, 0
      %p383 = por %p381, %p382
      %s385 = sadd.s32 %s384, 1
      %p388 = scmp.eq.s32.totalorder %s35, 1
      %p389 = scmp.ne.s32.totalorder %s384, %s386
      %p390 = scmp.eq.s32.totalorder %s35, 0
      %p391 = por %p389, %p390
      %p392 = scmp.ne.s32.totalorder %s384, %s386
      %p393 = scmp.eq.s32.totalorder %s40, 1
      %p394 = por %p392, %p393
      %p395 = scmp.ne.s32.totalorder %s386, %s387
      %p396 = scmp.eq.s32.totalorder %s40, 0
      %p397 = por %p395, %p396
      %p398 = scmp.ne.s32.totalorder %s386, %s387
      %p399 = scmp.eq.s32.totalorder %s41, 1
      %p400 = por %p398, %p399
      %p402 = scmp.ne.s32.totalorder %s387, %s401
      %p403 = scmp.eq.s32.totalorder %s41, 0
      %p404 = por %p402, %p403
      %s406 = sadd.s32 %s405, 1
      %p409 = scmp.eq.s32.totalorder %s35, 1
      %p410 = scmp.ne.s32.totalorder %s405, %s407
      %p411 = scmp.eq.s32.totalorder %s35, 0
      %p412 = por %p410, %p411
      %p413 = scmp.ne.s32.totalorder %s405, %s407
      %p414 = scmp.eq.s32.totalorder %s40, 1
      %p415 = por %p413, %p414
      %p416 = scmp.ne.s32.totalorder %s407, %s408
      %p417 = scmp.eq.s32.totalorder %s40, 0
      %p418 = por %p416, %p417
      %p419 = scmp.ne.s32.totalorder %s407, %s408
      %p420 = scmp.eq.s32.totalorder %s41, 1
      %p421 = por %p419, %p420
      %p423 = scmp.ne.s32.totalorder %s408, %s422
      %p424 = scmp.eq.s32.totalorder %s41, 0
      %p425 = por %p423, %p424
      %s426 = ssub.s32 %s35, %s42
      %p427 = scmp.eq.s32.totalorder %s426, 0
      %s429 = sadd.s32 %s428, 1
      %s430 = scalar_select %p427, %s428, %s429
      %p433 = pneg %p427
      %p434 = scmp.eq.s32.totalorder %s35, 1
      %p435 = por %p433, %p434
      %p436 = scmp.ne.s32.totalorder %s428, %s431
      %p437 = scmp.eq.s32.totalorder %s35, 0
      %p438 = por %p436, %p437
      %p439 = scmp.ne.s32.totalorder %s428, %s431
      %p440 = scmp.eq.s32.totalorder %s40, 1
      %p441 = por %p439, %p440
      %p442 = scmp.ne.s32.totalorder %s431, %s432
      %p443 = scmp.eq.s32.totalorder %s40, 0
      %p444 = por %p442, %p443
      %p445 = scmp.ne.s32.totalorder %s431, %s432
      %p446 = scmp.eq.s32.totalorder %s41, 1
      %p447 = por %p445, %p446
      %p449 = scmp.ne.s32.totalorder %s432, %s448
      %p450 = scmp.eq.s32.totalorder %s41, 0
      %p451 = por %p449, %p450
      %p452 = scmp.le.s32.totalorder 1, %s35
      %p453 = scmp.lt.s32.totalorder %s35, 3
      %p454 = pnand %p452, %p453
      %p455 = pneg %p454
      // Predicated region
      $region9: #{tpu_custom_call.1} parent=5 // pred_check
        _
      $region10: #{tpu_custom_call.1} parent=5 // pred_check_branch
        %457 = sbr.rel (%p454) target = $region12
      $region11: #{tpu_custom_call.1} parent=5 // pred_region
        %s458 = ssub.s32 %s35, 1
        // Predicated region
        $region13: #{tpu_custom_call.1} parent=11 // pred_check
          %p459 = pneg %p82
        $region14: #{tpu_custom_call.1} parent=11 // pred_check_branch
          %461 = sbr.rel (%p459) target = $region16
        $region15: #{tpu_custom_call.1} parent=11 // pred_region
          %s463 = ssub.s32 2048, 2048
          %464 = vsyncadd [#allocation6], %s463
          %s465 = sshll.u32 [#allocation5], 4
          %s466 = int_to_ptr.vmem [resolvable:$true] %s465
          %471 = dma.hbm_to_vmem [thread:$0]  %s1, 2048, %s466, [#allocation6], 128, 128, 8
        $region16: #{tpu_custom_call.1} parent=11 // pred_fallthru
          _
        // Predicated region
        $region17: #{tpu_custom_call.1} parent=11 // pred_check
          %p472 = pneg %p103
        $region18: #{tpu_custom_call.1} parent=11 // pred_check_branch
          %474 = sbr.rel (%p472) target = $region20
        $region19: #{tpu_custom_call.1} parent=11 // pred_region
          %s476 = ssub.s32 512, 512
          %477 = vsyncadd [#allocation6], %s476
          %s478 = sshll.u32 [#allocation7], 4
          %s479 = int_to_ptr.vmem [resolvable:$true] %s478
          %484 = dma.hbm_to_vmem [thread:$0]  %s2, 512, %s479, [#allocation6], 64, 64, 4
        $region20: #{tpu_custom_call.1} parent=11 // pred_fallthru
          _
        // Predicated region
        $region21: #{tpu_custom_call.1} parent=11 // pred_check
          %p485 = pneg %p124
        $region22: #{tpu_custom_call.1} parent=11 // pred_check_branch
          %487 = sbr.rel (%p485) target = $region24
        $region23: #{tpu_custom_call.1} parent=11 // pred_region
          _
        $region24: #{tpu_custom_call.1} parent=11 // pred_fallthru
          _
        // Predicated region
        $region25: #{tpu_custom_call.1} parent=11 // pred_check
          %p488 = pneg %p145
        $region26: #{tpu_custom_call.1} parent=11 // pred_check_branch
          %490 = sbr.rel (%p488) target = $region28
        $region27: #{tpu_custom_call.1} parent=11 // pred_region
          %s492 = ssub.s32 3072, 3072
          %493 = vsyncadd [#allocation9], %s492
          %s494 = sshll.u32 [#allocation8], 4
          %s495 = int_to_ptr.vmem [resolvable:$true] %s494
          %500 = dma.hbm_to_vmem [thread:$0]  %s4, 3072, %s495, [#allocation9], 192, 192, 12
        $region28: #{tpu_custom_call.1} parent=11 // pred_fallthru
          _
        // Predicated region
        $region29: #{tpu_custom_call.1} parent=11 // pred_check
          %p501 = pneg %p166
        $region30: #{tpu_custom_call.1} parent=11 // pred_check_branch
          %503 = sbr.rel (%p501) target = $region32
        $region31: #{tpu_custom_call.1} parent=11 // pred_region
          _
        $region32: #{tpu_custom_call.1} parent=11 // pred_fallthru
          _
        // Predicated region
        $region33: #{tpu_custom_call.1} parent=11 // pred_check
          %p504 = pneg %p187
        $region34: #{tpu_custom_call.1} parent=11 // pred_check_branch
          %506 = sbr.rel (%p504) target = $region36
        $region35: #{tpu_custom_call.1} parent=11 // pred_region
          %s508 = ssub.s32 1024, 1024
          %509 = vsyncadd [#allocation9], %s508
          %s510 = sshll.u32 [#allocation10], 4
          %s511 = int_to_ptr.vmem [resolvable:$true] %s510
          %516 = dma.hbm_to_vmem [thread:$0]  %s6, 1024, %s511, [#allocation9], 64, 64, 4
        $region36: #{tpu_custom_call.1} parent=11 // pred_fallthru
          _
        // Predicated region
        $region37: #{tpu_custom_call.1} parent=11 // pred_check
          %p517 = pneg %p208
        $region38: #{tpu_custom_call.1} parent=11 // pred_check_branch
          %519 = sbr.rel (%p517) target = $region40
        $region39: #{tpu_custom_call.1} parent=11 // pred_region
          %s521 = ssub.s32 16, 16
          %522 = vsyncadd [#allocation12], %s521
          %s524 = sshll.u32 [#allocation11], 4
          %s525 = int_to_ptr.vmem [resolvable:$true] %s524
          %527 = dma.hbm_to_vmem [thread:$0]  %s7, 16, %s525, [#allocation12]
        $region40: #{tpu_custom_call.1} parent=11 // pred_fallthru
          _
        // Predicated region
        $region41: #{tpu_custom_call.1} parent=11 // pred_check
          %p528 = pneg %p229
        $region42: #{tpu_custom_call.1} parent=11 // pred_check_branch
          %530 = sbr.rel (%p528) target = $region44
        $region43: #{tpu_custom_call.1} parent=11 // pred_region
          %s532 = ssub.s32 16, 16
          %533 = vsyncadd [#allocation12], %s532
          %s535 = sshll.u32 [#allocation13], 4
          %s536 = int_to_ptr.vmem [resolvable:$true] %s535
          %538 = dma.hbm_to_vmem [thread:$0]  %s8, 16, %s536, [#allocation12]
        $region44: #{tpu_custom_call.1} parent=11 // pred_fallthru
          _
        // Predicated region
        $region45: #{tpu_custom_call.1} parent=11 // pred_check
          %p539 = pneg %p250
        $region46: #{tpu_custom_call.1} parent=11 // pred_check_branch
          %541 = sbr.rel (%p539) target = $region48
        $region47: #{tpu_custom_call.1} parent=11 // pred_region
          %s543 = ssub.s32 16, 16
          %544 = vsyncadd [#allocation15], %s543
          %s546 = sshll.u32 [#allocation14], 4
          %s547 = int_to_ptr.vmem [resolvable:$true] %s546
          %549 = dma.hbm_to_vmem [thread:$0]  %s9, 16, %s547, [#allocation15]
        $region48: #{tpu_custom_call.1} parent=11 // pred_fallthru
          _
        // Predicated region
        $region49: #{tpu_custom_call.1} parent=11 // pred_check
          %p550 = pneg %p271
        $region50: #{tpu_custom_call.1} parent=11 // pred_check_branch
          %552 = sbr.rel (%p550) target = $region52
        $region51: #{tpu_custom_call.1} parent=11 // pred_region
          %s554 = ssub.s32 16384, 16384
          %555 = vsyncadd [#allocation15], %s554
          %s556 = sshll.u32 [#allocation16], 4
          %s557 = int_to_ptr.vmem [resolvable:$true] %s556
          %562 = dma.hbm_to_vmem [thread:$0]  %s10, 16384, %s557, [#allocation15], 1024, 1024, 64
        $region52: #{tpu_custom_call.1} parent=11 // pred_fallthru
          _
        // Predicated region
        $region53: #{tpu_custom_call.1} parent=11 // pred_check
          %p563 = pneg %p292
        $region54: #{tpu_custom_call.1} parent=11 // pred_check_branch
          %565 = sbr.rel (%p563) target = $region56
        $region55: #{tpu_custom_call.1} parent=11 // pred_region
          _
        $region56: #{tpu_custom_call.1} parent=11 // pred_fallthru
          _
        // Predicated region
        $region57: #{tpu_custom_call.1} parent=11 // pred_check
          %p566 = pneg %p313
        $region58: #{tpu_custom_call.1} parent=11 // pred_check_branch
          %568 = sbr.rel (%p566) target = $region60
        $region59: #{tpu_custom_call.1} parent=11 // pred_region
          %s570 = ssub.s32 16384, 16384
          %571 = vsyncadd [#allocation18], %s570
          %s572 = sshll.u32 [#allocation17], 4
          %s573 = int_to_ptr.vmem [resolvable:$true] %s572
          %578 = dma.hbm_to_vmem [thread:$0]  %s12, 16384, %s573, [#allocation18], 64, 64, 4
        $region60: #{tpu_custom_call.1} parent=11 // pred_fallthru
          _
        // Predicated region
        $region61: #{tpu_custom_call.1} parent=11 // pred_check
          %p579 = pneg %p334
        $region62: #{tpu_custom_call.1} parent=11 // pred_check_branch
          %581 = sbr.rel (%p579) target = $region64
        $region63: #{tpu_custom_call.1} parent=11 // pred_region
          _
        $region64: #{tpu_custom_call.1} parent=11 // pred_fallthru
          _
        // Predicated region
        $region65: #{tpu_custom_call.1} parent=11 // pred_check
          %p582 = pneg %p355
        $region66: #{tpu_custom_call.1} parent=11 // pred_check_branch
          %584 = sbr.rel (%p582) target = $region68
        $region67: #{tpu_custom_call.1} parent=11 // pred_region
          _
        $region68: #{tpu_custom_call.1} parent=11 // pred_fallthru
          _
        // Predicated region
        $region69: #{tpu_custom_call.1} parent=11 // pred_check
          %p585 = pneg %p376
        $region70: #{tpu_custom_call.1} parent=11 // pred_check_branch
          %587 = sbr.rel (%p585) target = $region72
        $region71: #{tpu_custom_call.1} parent=11 // pred_region
          _
        $region72: #{tpu_custom_call.1} parent=11 // pred_fallthru
          _
        // Predicated region
        $region73: #{tpu_custom_call.1} parent=11 // pred_check
          %p588 = pneg %p397
        $region74: #{tpu_custom_call.1} parent=11 // pred_check_branch
          %590 = sbr.rel (%p588) target = $region76
        $region75: #{tpu_custom_call.1} parent=11 // pred_region
          %s592 = ssub.s32 1024, 1024
          %593 = vsyncadd [#allocation18], %s592
          %s594 = sshll.u32 [#allocation19], 4
          %s595 = int_to_ptr.vmem [resolvable:$true] %s594
          %600 = dma.hbm_to_vmem [thread:$0]  %s16, 1024, %s595, [#allocation18], 64, 64, 4
        $region76: #{tpu_custom_call.1} parent=11 // pred_fallthru
          _
        // Predicated region
        $region77: #{tpu_custom_call.1} parent=11 // pred_check
          %p601 = pneg %p418
        $region78: #{tpu_custom_call.1} parent=11 // pred_check_branch
          %603 = sbr.rel (%p601) target = $region80
        $region79: #{tpu_custom_call.1} parent=11 // pred_region
          _
        $region80: #{tpu_custom_call.1} parent=11 // pred_fallthru
          _
      $region12: #{tpu_custom_call.1} parent=5 // pred_fallthru
        _
      %p604 = scmp.lt.s32.totalorder %s35, 2
      // Predicated region
      $region81: #{tpu_custom_call.1} parent=5 // pred_check
        %p605 = pneg %p604
      $region82: #{tpu_custom_call.1} parent=5 // pred_check_branch
        %607 = sbr.rel (%p605) target = $region84
      $region83: #{tpu_custom_call.1} parent=5 // pred_region
        // Predicated region
        $region85: #{tpu_custom_call.1} parent=83 // pred_check
          %p608 = pneg %p55
        $region86: #{tpu_custom_call.1} parent=83 // pred_check_branch
          %610 = sbr.rel (%p608) target = $region88
        $region87: #{tpu_custom_call.1} parent=83 // pred_region
          %s611 = sand.u32 %s45, 1
          %s612 = scalar_lea.sflag [#allocation3], %s611
          %s613 = sand.u32 %s45, 1
          %s614 = smul.addr %s613, 128
          %s615 = scalar_lea.vmem [#allocation2], %s614
          %s616 = smul.u32 16, %s35
          %s618 = ssub.s32 2048, 2048
          %619 = vsyncadd %s612, %s618
          %s620 = smul.addr %s616, 128
          %s621 = scalar_lea.hbm %s0, %s620
          %s622 = sshll.u32 %s615, 4
          %s623 = int_to_ptr.vmem [resolvable:$true] %s622
          %628 = dma.hbm_to_vmem [thread:$0]  %s621, 2048, %s623, %s612, 128, 128, 8
        $region88: #{tpu_custom_call.1} parent=83 // pred_fallthru
          _
      $region84: #{tpu_custom_call.1} parent=5 // pred_fallthru
        _
      %p629 = scmp.le.s32.totalorder 1, %s35
      %p630 = scmp.lt.s32.totalorder %s35, 3
      %p631 = pnand %p629, %p630
      %p632 = pneg %p631
      // Predicated region
      $region89: #{tpu_custom_call.1} parent=5 // pred_check
        _
      $region90: #{tpu_custom_call.1} parent=5 // pred_check_branch
        %634 = sbr.rel (%p631) target = $region92
      $region91: #{tpu_custom_call.1} parent=5 // pred_region
        %s635 = ssub.s32 %s35, 1
        %s636 = sand.u32 %s48, 1
        %s637 = scalar_lea.sflag [#allocation3], %s636
        %s638 = sand.u32 %s48, 1
        %s639 = smul.addr %s638, 128
        %s640 = scalar_lea.vmem [#allocation2], %s639
        // Predicated region
        $region93: #{tpu_custom_call.1} parent=91 // pred_check
          %p641 = pneg %p61
        $region94: #{tpu_custom_call.1} parent=91 // pred_check_branch
          %643 = sbr.rel (%p641) target = $region96
        $region95: #{tpu_custom_call.1} parent=91 // pred_region
          %644 = dma.done %s637, 2048
        $region96: #{tpu_custom_call.1} parent=91 // pred_fallthru
          _
        // Predicated region
        $region97: #{tpu_custom_call.1} parent=91 // pred_check
          %p645 = pneg %p82
        $region98: #{tpu_custom_call.1} parent=91 // pred_check_branch
          %647 = sbr.rel (%p645) target = $region100
        $region99: #{tpu_custom_call.1} parent=91 // pred_region
          %648 = dma.done [#allocation6], 2048
        $region100: #{tpu_custom_call.1} parent=91 // pred_fallthru
          _
        // Predicated region
        $region101: #{tpu_custom_call.1} parent=91 // pred_check
          %p649 = pneg %p103
        $region102: #{tpu_custom_call.1} parent=91 // pred_check_branch
          %651 = sbr.rel (%p649) target = $region104
        $region103: #{tpu_custom_call.1} parent=91 // pred_region
          %652 = dma.done [#allocation6], 512
        $region104: #{tpu_custom_call.1} parent=91 // pred_fallthru
          _
        // Predicated region
        $region105: #{tpu_custom_call.1} parent=91 // pred_check
          %p653 = pneg %p145
        $region106: #{tpu_custom_call.1} parent=91 // pred_check_branch
          %655 = sbr.rel (%p653) target = $region108
        $region107: #{tpu_custom_call.1} parent=91 // pred_region
          %656 = dma.done [#allocation9], 3072
        $region108: #{tpu_custom_call.1} parent=91 // pred_fallthru
          _
        // Predicated region
        $region109: #{tpu_custom_call.1} parent=91 // pred_check
          %p657 = pneg %p187
        $region110: #{tpu_custom_call.1} parent=91 // pred_check_branch
          %659 = sbr.rel (%p657) target = $region112
        $region111: #{tpu_custom_call.1} parent=91 // pred_region
          %660 = dma.done [#allocation9], 1024
        $region112: #{tpu_custom_call.1} parent=91 // pred_fallthru
          _
        // Predicated region
        $region113: #{tpu_custom_call.1} parent=91 // pred_check
          %p661 = pneg %p208
        $region114: #{tpu_custom_call.1} parent=91 // pred_check_branch
          %663 = sbr.rel (%p661) target = $region116
        $region115: #{tpu_custom_call.1} parent=91 // pred_region
          %664 = dma.done [#allocation12], 16
        $region116: #{tpu_custom_call.1} parent=91 // pred_fallthru
          _
        // Predicated region
        $region117: #{tpu_custom_call.1} parent=91 // pred_check
          %p665 = pneg %p229
        $region118: #{tpu_custom_call.1} parent=91 // pred_check_branch
          %667 = sbr.rel (%p665) target = $region120
        $region119: #{tpu_custom_call.1} parent=91 // pred_region
          %668 = dma.done [#allocation12], 16
        $region120: #{tpu_custom_call.1} parent=91 // pred_fallthru
          _
        // Predicated region
        $region121: #{tpu_custom_call.1} parent=91 // pred_check
          %p669 = pneg %p250
        $region122: #{tpu_custom_call.1} parent=91 // pred_check_branch
          %671 = sbr.rel (%p669) target = $region124
        $region123: #{tpu_custom_call.1} parent=91 // pred_region
          %672 = dma.done [#allocation15], 16
        $region124: #{tpu_custom_call.1} parent=91 // pred_fallthru
          _
        // Predicated region
        $region125: #{tpu_custom_call.1} parent=91 // pred_check
          %p673 = pneg %p271
        $region126: #{tpu_custom_call.1} parent=91 // pred_check_branch
          %675 = sbr.rel (%p673) target = $region128
        $region127: #{tpu_custom_call.1} parent=91 // pred_region
          %676 = dma.done [#allocation15], 16384
        $region128: #{tpu_custom_call.1} parent=91 // pred_fallthru
          _
        // Predicated region
        $region129: #{tpu_custom_call.1} parent=91 // pred_check
          %p677 = pneg %p313
        $region130: #{tpu_custom_call.1} parent=91 // pred_check_branch
          %679 = sbr.rel (%p677) target = $region132
        $region131: #{tpu_custom_call.1} parent=91 // pred_region
          %680 = dma.done [#allocation18], 16384
        $region132: #{tpu_custom_call.1} parent=91 // pred_fallthru
          _
        // Predicated region
        $region133: #{tpu_custom_call.1} parent=91 // pred_check
          %p681 = pneg %p397
        $region134: #{tpu_custom_call.1} parent=91 // pred_check_branch
          %683 = sbr.rel (%p681) target = $region136
        $region135: #{tpu_custom_call.1} parent=91 // pred_region
          %684 = dma.done [#allocation18], 1024
        $region136: #{tpu_custom_call.1} parent=91 // pred_fallthru
          _
        %s685 = sand.u32 %s48, 1
        %s686 = scalar_lea.sflag [#allocation3], %s685
        %s687 = sand.u32 %s48, 1
        %s688 = smul.addr %s687, 128
        %s689 = scalar_lea.vmem [#allocation2], %s688
        %p690 = pneg %p61
        %p691 = pneg %p58
        %p692 = pneg %p82
        %p693 = pneg %p79
        %p694 = pneg %p103
        %p695 = pneg %p100
        %p696 = pneg %p124
        %p697 = pneg %p121
        %p698 = pneg %p145
        %p699 = pneg %p142
        %p700 = pneg %p166
        %p701 = pneg %p163
        %p702 = pneg %p187
        %p703 = pneg %p184
        %p704 = pneg %p208
        %p705 = pneg %p205
        %p706 = pneg %p229
        %p707 = pneg %p226
        %p708 = pneg %p250
        %p709 = pneg %p247
        %p710 = pneg %p271
        %p711 = pneg %p268
        %p712 = pneg %p292
        %p713 = pneg %p289
        %p714 = pneg %p313
        %p715 = pneg %p310
        %p716 = pneg %p334
        %p717 = pneg %p331
        %p718 = pneg %p355
        %p719 = pneg %p352
        %p720 = pneg %p376
        %p721 = pneg %p373
        %p722 = pneg %p397
        %p723 = pneg %p394
        %p724 = pneg %p418
        %p725 = pneg %p415
        %p726 = pneg %p444
        %p727 = pneg %p441
        %s728 = sand.u32 %s431, 1
        %s729 = scalar_lea.sflag [#allocation4], %s728
        %s730 = sand.u32 %s431, 1
        %s731 = smul.addr %s730, 64
        %s732 = scalar_lea.vmem [#allocation20], %s731
        %s733 = smul.u32 16, %s40
        %s734 = smul.u32 16, %s40
        %v736 = vld [vmem:[%s640] sm:$0xff]
        %v737 = vld [vmem:[%s640 + $0x8] sm:$0xff]
        %v738 = vld [vmem:[%s640 + $0x10] sm:$0xff]
        %v739 = vld [vmem:[%s640 + $0x18] sm:$0xff]
        %v740 = vld [vmem:[%s640 + $0x20] sm:$0xff]
        %v741 = vld [vmem:[%s640 + $0x28] sm:$0xff]
        %v742 = vld [vmem:[%s640 + $0x30] sm:$0xff]
        %v743 = vld [vmem:[%s640 + $0x38] sm:$0xff]
        %v744 = vld [vmem:[%s640 + $0x40] sm:$0xff]
        %v745 = vld [vmem:[%s640 + $0x48] sm:$0xff]
        %v746 = vld [vmem:[%s640 + $0x50] sm:$0xff]
        %v747 = vld [vmem:[%s640 + $0x58] sm:$0xff]
        %v748 = vld [vmem:[%s640 + $0x60] sm:$0xff]
        %v749 = vld [vmem:[%s640 + $0x68] sm:$0xff]
        %v750 = vld [vmem:[%s640 + $0x70] sm:$0xff]
        %v751 = vld [vmem:[%s640 + $0x78] sm:$0xff]
        %v752 = vpack.c.bf16 %v737, %v736
        %v753 = vpack.c.bf16 %v739, %v738
        %v754 = vpack.c.bf16 %v741, %v740
        %v755 = vpack.c.bf16 %v743, %v742
        %v756 = vpack.c.bf16 %v745, %v744
        %v757 = vpack.c.bf16 %v747, %v746
        %v758 = vpack.c.bf16 %v749, %v748
        %v759 = vpack.c.bf16 %v751, %v750
        %v760 = vld [vmem:[#allocation7] sm:$0xf]
        %v761 = vld [vmem:[#allocation7 + $0x4] sm:$0xf]
        %v762 = vld [vmem:[#allocation7 + $0x8] sm:$0xf]
        %v763 = vld [vmem:[#allocation7 + $0xc] sm:$0xf]
        %v764 = vld [vmem:[#allocation7 + $0x10] sm:$0xf]
        %v765 = vld [vmem:[#allocation7 + $0x14] sm:$0xf]
        %v766 = vld [vmem:[#allocation7 + $0x18] sm:$0xf]
        %v767 = vld [vmem:[#allocation7 + $0x1c] sm:$0xf]
        %v768 = vld [vmem:[%s3] sm:$0x1]
        %v770 = vlaneseq
        %v771 = vshrl.u32 %v770, 7
        %v772 = vsub.s32 0, %v771
        %v773 = vrot.slane %v768, %v772
        %v783 = vunpack.c.l.b16 %v760
        %v784 = vunpack.c.l.b16 %v761
        %v785 = vunpack.c.l.b16 %v762
        %v786 = vunpack.c.l.b16 %v763
        %v787 = vunpack.c.l.b16 %v764
        %v788 = vunpack.c.l.b16 %v765
        %v789 = vunpack.c.l.b16 %v766
        %v790 = vunpack.c.l.b16 %v767
        %v791 = vpack.c.b16 %v784, %v783
        %v792 = vpack.c.b16 %v786, %v785
        %v793 = vpack.c.b16 %v788, %v787
        %v794 = vpack.c.b16 %v790, %v789
        %vm799 = vcmask 523264
        %v801 = vsel %vm799, %v752, 0
        %v804 = vsel %vm799, %v753, 0
        %v807 = vsel %vm799, %v754, 0
        %v810 = vsel %vm799, %v755, 0
        %v813 = vsel %vm799, %v756, 0
        %v816 = vsel %vm799, %v757, 0
        %v819 = vsel %vm799, %v758, 0
        %v822 = vsel %vm799, %v759, 0
        %824 = vmatprep.subr.bf16.mxu0 0
        %825 = vmatpush1.bf16.msra.mxu0 0
        %826 = vmatprep.subr.bf16.mxu0 0
        %827 = vmatpush1.bf16.msra.mxu0 0
        %828 = vmatprep.subr.bf16.mxu0 0
        %829 = vmatpush1.bf16.msra.mxu0 0
        %830 = vmatprep.subr.bf16.mxu0 0
        %831 = vmatpush1.bf16.msra.mxu0 0
        %832 = vmatprep.subr.bf16.mxu0 0
        %833 = vmatpush1.bf16.msra.mxu0 %v794
        %834 = vmatprep.subr.bf16.mxu0 0
        %835 = vmatpush1.bf16.msra.mxu0 %v793
        %836 = vmatprep.subr.bf16.mxu0 0
        %837 = vmatpush1.bf16.msra.mxu0 %v792
        %838 = vmatprep.subr.bf16.mxu0 0
        %839 = vmatpush1.bf16.msra.mxu0 %v791
        %840 = vmatprep.subr.bf16.mxu0 0
        %841 = vmatpush2.bf16.msra.mxu0 0
        %842 = vmatprep.subr.bf16.mxu0 0
        %843 = vmatpush2.bf16.msra.mxu0 0
        %844 = vmatprep.subr.bf16.mxu0 0
        %845 = vmatpush2.bf16.msra.mxu0 0
        %846 = vmatprep.subr.bf16.mxu0 0
        %847 = vmatpush2.bf16.msra.mxu0 0
        %848 = vmatprep.subr.bf16.mxu0 0
        %849 = vmatpush2.bf16.msra.mxu0 0
        %850 = vmatprep.subr.bf16.mxu0 0
        %851 = vmatpush2.bf16.msra.mxu0 0
        %852 = vmatprep.subr.bf16.mxu0 0
        %853 = vmatpush2.bf16.msra.mxu0 0
        %854 = vmatprep.subr.bf16.mxu0 0
        %855 = vmatpush2.bf16.msra.mxu0 0
        %856 = vmatprep.mubr.bf16.mxu0 0
        %857 = vmatmul.mubr.bf16.gmra.mxu0 %v801
        %v858 = vpop.f32.mrf.mxu0
        %v859 = vadd.f32 %v773, %v858
        %v860 = vpop.f32.mrf.mxu0
        %v861 = vpop.f32.mrf.mxu0
        %v862 = vadd.f32 %v773, %v861
        %v863 = vpop.f32.mrf.mxu0
        %864 = vmatprep.mubr.bf16.mxu0 0
        %865 = vmatmul.mubr.bf16.gmra.mxu0 %v804
        %v866 = vpop.f32.mrf.mxu0
        %v867 = vadd.f32 %v773, %v866
        %v868 = vpop.f32.mrf.mxu0
        %v869 = vpop.f32.mrf.mxu0
        %v870 = vadd.f32 %v773, %v869
        %v871 = vpop.f32.mrf.mxu0
        %872 = vmatprep.mubr.bf16.mxu0 0
        %873 = vmatmul.mubr.bf16.gmra.mxu0 %v807
        %v874 = vpop.f32.mrf.mxu0
        %v875 = vadd.f32 %v773, %v874
        %v876 = vpop.f32.mrf.mxu0
        %v877 = vpop.f32.mrf.mxu0
        %v878 = vadd.f32 %v773, %v877
        %v879 = vpop.f32.mrf.mxu0
        %880 = vmatprep.mubr.bf16.mxu0 0
        %881 = vmatmul.mubr.bf16.gmra.mxu0 %v810
        %v882 = vpop.f32.mrf.mxu0
        %v883 = vadd.f32 %v773, %v882
        %v884 = vpop.f32.mrf.mxu0
        %v885 = vpop.f32.mrf.mxu0
        %v886 = vadd.f32 %v773, %v885
        %v887 = vpop.f32.mrf.mxu0
        %888 = vmatprep.mubr.bf16.mxu0 0
        %889 = vmatmul.mubr.bf16.gmra.mxu0 %v813
        %v890 = vpop.f32.mrf.mxu0
        %v891 = vadd.f32 %v773, %v890
        %v892 = vpop.f32.mrf.mxu0
        %v893 = vpop.f32.mrf.mxu0
        %v894 = vadd.f32 %v773, %v893
        %v895 = vpop.f32.mrf.mxu0
        %896 = vmatprep.mubr.bf16.mxu0 0
        %897 = vmatmul.mubr.bf16.gmra.mxu0 %v816
        %v898 = vpop.f32.mrf.mxu0
        %v899 = vadd.f32 %v773, %v898
        %v900 = vpop.f32.mrf.mxu0
        %v901 = vpop.f32.mrf.mxu0
        %v902 = vadd.f32 %v773, %v901
        %v903 = vpop.f32.mrf.mxu0
        %904 = vmatprep.mubr.bf16.mxu0 0
        %905 = vmatmul.mubr.bf16.gmra.mxu0 %v819
        %v906 = vpop.f32.mrf.mxu0
        %v907 = vadd.f32 %v773, %v906
        %v908 = vpop.f32.mrf.mxu0
        %v909 = vpop.f32.mrf.mxu0
        %v910 = vadd.f32 %v773, %v909
        %v911 = vpop.f32.mrf.mxu0
        %912 = vmatprep.mubr.bf16.mxu0 0
        %913 = vmatmul.mubr.bf16.gmra.mxu0 %v822
        %v914 = vpop.f32.mrf.mxu0
        %v915 = vadd.f32 %v773, %v914
        %v916 = vpop.f32.mrf.mxu0
        %v917 = vpop.f32.mrf.mxu0
        %v918 = vadd.f32 %v773, %v917
        %v919 = vpop.f32.mrf.mxu0
        %920 = vdwg.mxu0
        %v921 = vpack.c.bf16 %v862, %v859
        %v922 = vpack.c.bf16 %v870, %v867
        %v923 = vpack.c.bf16 %v878, %v875
        %v924 = vpack.c.bf16 %v886, %v883
        %v925 = vpack.c.bf16 %v894, %v891
        %v926 = vpack.c.bf16 %v902, %v899
        %v927 = vpack.c.bf16 %v910, %v907
        %v928 = vpack.c.bf16 %v918, %v915
        %v929 = vld [vmem:[#allocation8] sm:$0xff]
        %v930 = vld [vmem:[#allocation8 + $0x8] sm:$0xf]
        %v931 = vld [vmem:[#allocation8 + $0xc] sm:$0xff]
        %v932 = vld [vmem:[#allocation8 + $0x14] sm:$0xf]
        %v933 = vld [vmem:[#allocation8 + $0x18] sm:$0xff]
        %v934 = vld [vmem:[#allocation8 + $0x20] sm:$0xf]
        %v935 = vld [vmem:[#allocation8 + $0x24] sm:$0xff]
        %v936 = vld [vmem:[#allocation8 + $0x2c] sm:$0xf]
        %v937 = vld [vmem:[#allocation8 + $0x30] sm:$0xff]
        %v938 = vld [vmem:[#allocation8 + $0x38] sm:$0xf]
        %v939 = vld [vmem:[#allocation8 + $0x3c] sm:$0xff]
        %v940 = vld [vmem:[#allocation8 + $0x44] sm:$0xf]
        %v941 = vld [vmem:[#allocation8 + $0x48] sm:$0xff]
        %v942 = vld [vmem:[#allocation8 + $0x50] sm:$0xf]
        %v943 = vld [vmem:[#allocation8 + $0x54] sm:$0xff]
        %v944 = vld [vmem:[#allocation8 + $0x5c] sm:$0xf]
        %v945 = vld [vmem:[#allocation8 + $0x60] sm:$0xff]
        %v946 = vld [vmem:[#allocation8 + $0x68] sm:$0xf]
        %v947 = vld [vmem:[#allocation8 + $0x6c] sm:$0xff]
        %v948 = vld [vmem:[#allocation8 + $0x74] sm:$0xf]
        %v949 = vld [vmem:[#allocation8 + $0x78] sm:$0xff]
        %v950 = vld [vmem:[#allocation8 + $0x80] sm:$0xf]
        %v951 = vld [vmem:[#allocation8 + $0x84] sm:$0xff]
        %v952 = vld [vmem:[#allocation8 + $0x8c] sm:$0xf]
        %v953 = vld [vmem:[#allocation8 + $0x90] sm:$0xff]
        %v954 = vld [vmem:[#allocation8 + $0x98] sm:$0xf]
        %v955 = vld [vmem:[#allocation8 + $0x9c] sm:$0xff]
        %v956 = vld [vmem:[#allocation8 + $0xa4] sm:$0xf]
        %v957 = vld [vmem:[#allocation8 + $0xa8] sm:$0xff]
        %v958 = vld [vmem:[#allocation8 + $0xb0] sm:$0xf]
        %v959 = vld [vmem:[#allocation8 + $0xb4] sm:$0xff]
        %v960 = vld [vmem:[#allocation8 + $0xbc] sm:$0xf]
        %v961 = vld [vmem:[%s5] sm:$0x7]
        %v963 = vlaneseq
        %v964 = vshrl.u32 %v963, 7
        %v965 = vsub.s32 0, %v964
        %v966 = vrot.slane %v961, %v965
        %v967 = vlaneseq
        %v968 = vshrl.u32 %v967, 7
        %v969 = vsub.s32 1, %v968
        %v970 = vrot.slane %v961, %v969
        %v971 = vlaneseq
        %v972 = vshrl.u32 %v971, 7
        %v973 = vsub.s32 2, %v972
        %v974 = vrot.slane %v961, %v973
        %v1010 = vunpack.c.l.b16 %v929
        %v1011 = vunpack.c.h.b16 %v929
        %v1012 = vunpack.c.l.b16 %v930
        %v1013 = vunpack.c.l.b16 %v931
        %v1014 = vunpack.c.h.b16 %v931
        %v1015 = vunpack.c.l.b16 %v932
        %v1016 = vunpack.c.l.b16 %v933
        %v1017 = vunpack.c.h.b16 %v933
        %v1018 = vunpack.c.l.b16 %v934
        %v1019 = vunpack.c.l.b16 %v935
        %v1020 = vunpack.c.h.b16 %v935
        %v1021 = vunpack.c.l.b16 %v936
        %v1022 = vunpack.c.l.b16 %v937
        %v1023 = vunpack.c.h.b16 %v937
        %v1024 = vunpack.c.l.b16 %v938
        %v1025 = vunpack.c.l.b16 %v939
        %v1026 = vunpack.c.h.b16 %v939
        %v1027 = vunpack.c.l.b16 %v940
        %v1028 = vunpack.c.l.b16 %v941
        %v1029 = vunpack.c.h.b16 %v941
        %v1030 = vunpack.c.l.b16 %v942
        %v1031 = vunpack.c.l.b16 %v943
        %v1032 = vunpack.c.h.b16 %v943
        %v1033 = vunpack.c.l.b16 %v944
        %v1034 = vunpack.c.l.b16 %v945
        %v1035 = vunpack.c.h.b16 %v945
        %v1036 = vunpack.c.l.b16 %v946
        %v1037 = vunpack.c.l.b16 %v947
        %v1038 = vunpack.c.h.b16 %v947
        %v1039 = vunpack.c.l.b16 %v948
        %v1040 = vunpack.c.l.b16 %v949
        %v1041 = vunpack.c.h.b16 %v949
        %v1042 = vunpack.c.l.b16 %v950
        %v1043 = vunpack.c.l.b16 %v951
        %v1044 = vunpack.c.h.b16 %v951
        %v1045 = vunpack.c.l.b16 %v952
        %v1046 = vunpack.c.l.b16 %v953
        %v1047 = vunpack.c.h.b16 %v953
        %v1048 = vunpack.c.l.b16 %v954
        %v1049 = vunpack.c.l.b16 %v955
        %v1050 = vunpack.c.h.b16 %v955
        %v1051 = vunpack.c.l.b16 %v956
        %v1052 = vunpack.c.l.b16 %v957
        %v1053 = vunpack.c.h.b16 %v957
        %v1054 = vunpack.c.l.b16 %v958
        %v1055 = vunpack.c.l.b16 %v959
        %v1056 = vunpack.c.h.b16 %v959
        %v1057 = vunpack.c.l.b16 %v960
        %v1058 = vpack.c.b16 %v1013, %v1010
        %v1059 = vpack.c.b16 %v1014, %v1011
        %v1060 = vpack.c.b16 %v1015, %v1012
        %v1061 = vpack.c.b16 %v1019, %v1016
        %v1062 = vpack.c.b16 %v1020, %v1017
        %v1063 = vpack.c.b16 %v1021, %v1018
        %v1064 = vpack.c.b16 %v1025, %v1022
        %v1065 = vpack.c.b16 %v1026, %v1023
        %v1066 = vpack.c.b16 %v1027, %v1024
        %v1067 = vpack.c.b16 %v1031, %v1028
        %v1068 = vpack.c.b16 %v1032, %v1029
        %v1069 = vpack.c.b16 %v1033, %v1030
        %v1070 = vpack.c.b16 %v1037, %v1034
        %v1071 = vpack.c.b16 %v1038, %v1035
        %v1072 = vpack.c.b16 %v1039, %v1036
        %v1073 = vpack.c.b16 %v1043, %v1040
        %v1074 = vpack.c.b16 %v1044, %v1041
        %v1075 = vpack.c.b16 %v1045, %v1042
        %v1076 = vpack.c.b16 %v1049, %v1046
        %v1077 = vpack.c.b16 %v1050, %v1047
        %v1078 = vpack.c.b16 %v1051, %v1048
        %v1079 = vpack.c.b16 %v1055, %v1052
        %v1080 = vpack.c.b16 %v1056, %v1053
        %v1081 = vpack.c.b16 %v1057, %v1054
        %1106 = vmatprep.subr.bf16.mxu0 %v1080
        %1107 = vmatpush1.bf16.msra.mxu0 %v1079
        %1108 = vmatprep.subr.bf16.mxu0 %v1077
        %1109 = vmatpush1.bf16.msra.mxu0 %v1076
        %1110 = vmatprep.subr.bf16.mxu0 %v1074
        %1111 = vmatpush1.bf16.msra.mxu0 %v1073
        %1112 = vmatprep.subr.bf16.mxu0 %v1071
        %1113 = vmatpush1.bf16.msra.mxu0 %v1070
        %1114 = vmatprep.subr.bf16.mxu0 %v1068
        %1115 = vmatpush1.bf16.msra.mxu0 %v1067
        %1116 = vmatprep.subr.bf16.mxu0 %v1065
        %1117 = vmatpush1.bf16.msra.mxu0 %v1064
        %1118 = vmatprep.subr.bf16.mxu0 %v1062
        %1119 = vmatpush1.bf16.msra.mxu0 %v1061
        %1120 = vmatprep.subr.bf16.mxu0 %v1059
        %1121 = vmatpush1.bf16.msra.mxu0 %v1058
        %1122 = vmatprep.subr.bf16.mxu0 0
        %1123 = vmatpush2.bf16.msra.mxu0 0
        %1124 = vmatprep.subr.bf16.mxu0 0
        %1125 = vmatpush2.bf16.msra.mxu0 0
        %1126 = vmatprep.subr.bf16.mxu0 0
        %1127 = vmatpush2.bf16.msra.mxu0 0
        %1128 = vmatprep.subr.bf16.mxu0 0
        %1129 = vmatpush2.bf16.msra.mxu0 0
        %1130 = vmatprep.subr.bf16.mxu0 0
        %1131 = vmatpush2.bf16.msra.mxu0 0
        %1132 = vmatprep.subr.bf16.mxu0 0
        %1133 = vmatpush2.bf16.msra.mxu0 0
        %1134 = vmatprep.subr.bf16.mxu0 0
        %1135 = vmatpush2.bf16.msra.mxu0 0
        %1136 = vmatprep.subr.bf16.mxu0 0
        %1137 = vmatpush2.bf16.msra.mxu0 0
        %1138 = vmatprep.mubr.bf16.mxu0 0
        %1139 = vmatmul.mubr.bf16.gmra.mxu0 %v921
        %v1140 = vpop.f32.mrf.mxu0
        %v1141 = vadd.f32 %v966, %v1140
        %v1142 = vpop.f32.mrf.mxu0
        %v1143 = vadd.f32 %v970, %v1142
        %v1144 = vpop.f32.mrf.mxu0
        %v1145 = vadd.f32 %v966, %v1144
        %v1146 = vpop.f32.mrf.mxu0
        %v1147 = vadd.f32 %v970, %v1146
        %1148 = vmatprep.mubr.bf16.mxu0 0
        %1149 = vmatmul.mubr.bf16.gmra.mxu0 %v922
        %v1150 = vpop.f32.mrf.mxu0
        %v1151 = vadd.f32 %v966, %v1150
        %v1152 = vpop.f32.mrf.mxu0
        %v1153 = vadd.f32 %v970, %v1152
        %v1154 = vpop.f32.mrf.mxu0
        %v1155 = vadd.f32 %v966, %v1154
        %v1156 = vpop.f32.mrf.mxu0
        %v1157 = vadd.f32 %v970, %v1156
        %1158 = vmatprep.mubr.bf16.mxu0 0
        %1159 = vmatmul.mubr.bf16.gmra.mxu0 %v923
        %v1160 = vpop.f32.mrf.mxu0
        %v1161 = vadd.f32 %v966, %v1160
        %v1162 = vpop.f32.mrf.mxu0
        %v1163 = vadd.f32 %v970, %v1162
        %v1164 = vpop.f32.mrf.mxu0
        %v1165 = vadd.f32 %v966, %v1164
        %v1166 = vpop.f32.mrf.mxu0
        %v1167 = vadd.f32 %v970, %v1166
        %1168 = vmatprep.mubr.bf16.mxu0 0
        %1169 = vmatmul.mubr.bf16.gmra.mxu0 %v924
        %v1170 = vpop.f32.mrf.mxu0
        %v1171 = vadd.f32 %v966, %v1170
        %v1172 = vpop.f32.mrf.mxu0
        %v1173 = vadd.f32 %v970, %v1172
        %v1174 = vpop.f32.mrf.mxu0
        %v1175 = vadd.f32 %v966, %v1174
        %v1176 = vpop.f32.mrf.mxu0
        %v1177 = vadd.f32 %v970, %v1176
        %1178 = vmatprep.mubr.bf16.mxu0 0
        %1179 = vmatmul.mubr.bf16.gmra.mxu0 %v925
        %v1180 = vpop.f32.mrf.mxu0
        %v1181 = vadd.f32 %v966, %v1180
        %v1182 = vpop.f32.mrf.mxu0
        %v1183 = vadd.f32 %v970, %v1182
        %v1184 = vpop.f32.mrf.mxu0
        %v1185 = vadd.f32 %v966, %v1184
        %v1186 = vpop.f32.mrf.mxu0
        %v1187 = vadd.f32 %v970, %v1186
        %1188 = vmatprep.mubr.bf16.mxu0 0
        %1189 = vmatmul.mubr.bf16.gmra.mxu0 %v926
        %v1190 = vpop.f32.mrf.mxu0
        %v1191 = vadd.f32 %v966, %v1190
        %v1192 = vpop.f32.mrf.mxu0
        %v1193 = vadd.f32 %v970, %v1192
        %v1194 = vpop.f32.mrf.mxu0
        %v1195 = vadd.f32 %v966, %v1194
        %v1196 = vpop.f32.mrf.mxu0
        %v1197 = vadd.f32 %v970, %v1196
        %1198 = vmatprep.mubr.bf16.mxu0 0
        %1199 = vmatmul.mubr.bf16.gmra.mxu0 %v927
        %v1200 = vpop.f32.mrf.mxu0
        %v1201 = vadd.f32 %v966, %v1200
        %v1202 = vpop.f32.mrf.mxu0
        %v1203 = vadd.f32 %v970, %v1202
        %v1204 = vpop.f32.mrf.mxu0
        %v1205 = vadd.f32 %v966, %v1204
        %v1206 = vpop.f32.mrf.mxu0
        %v1207 = vadd.f32 %v970, %v1206
        %1208 = vmatprep.mubr.bf16.mxu0 0
        %1209 = vmatmul.mubr.bf16.gmra.mxu0 %v928
        %v1210 = vpop.f32.mrf.mxu0
        %v1211 = vadd.f32 %v966, %v1210
        %v1212 = vpop.f32.mrf.mxu0
        %v1213 = vadd.f32 %v970, %v1212
        %v1214 = vpop.f32.mrf.mxu0
        %v1215 = vadd.f32 %v966, %v1214
        %v1216 = vpop.f32.mrf.mxu0
        %v1217 = vadd.f32 %v970, %v1216
        %1218 = vdwg.mxu0
        %1219 = vmatprep.subr.bf16.mxu0 0
        %1220 = vmatpush1.bf16.msra.mxu0 %v1081
        %1221 = vmatprep.subr.bf16.mxu0 0
        %1222 = vmatpush1.bf16.msra.mxu0 %v1078
        %1223 = vmatprep.subr.bf16.mxu0 0
        %1224 = vmatpush1.bf16.msra.mxu0 %v1075
        %1225 = vmatprep.subr.bf16.mxu0 0
        %1226 = vmatpush1.bf16.msra.mxu0 %v1072
        %1227 = vmatprep.subr.bf16.mxu0 0
        %1228 = vmatpush1.bf16.msra.mxu0 %v1069
        %1229 = vmatprep.subr.bf16.mxu0 0
        %1230 = vmatpush1.bf16.msra.mxu0 %v1066
        %1231 = vmatprep.subr.bf16.mxu0 0
        %1232 = vmatpush1.bf16.msra.mxu0 %v1063
        %1233 = vmatprep.subr.bf16.mxu0 0
        %1234 = vmatpush1.bf16.msra.mxu0 %v1060
        %1235 = vmatprep.subr.bf16.mxu0 0
        %1236 = vmatpush2.bf16.msra.mxu0 0
        %1237 = vmatprep.subr.bf16.mxu0 0
        %1238 = vmatpush2.bf16.msra.mxu0 0
        %1239 = vmatprep.subr.bf16.mxu0 0
        %1240 = vmatpush2.bf16.msra.mxu0 0
        %1241 = vmatprep.subr.bf16.mxu0 0
        %1242 = vmatpush2.bf16.msra.mxu0 0
        %1243 = vmatprep.subr.bf16.mxu0 0
        %1244 = vmatpush2.bf16.msra.mxu0 0
        %1245 = vmatprep.subr.bf16.mxu0 0
        %1246 = vmatpush2.bf16.msra.mxu0 0
        %1247 = vmatprep.subr.bf16.mxu0 0
        %1248 = vmatpush2.bf16.msra.mxu0 0
        %1249 = vmatprep.subr.bf16.mxu0 0
        %1250 = vmatpush2.bf16.msra.mxu0 0
        %1251 = vmatprep.mubr.bf16.mxu0 0
        %1252 = vmatmul.mubr.bf16.gmra.mxu0 %v921
        %v1253 = vpop.f32.mrf.mxu0
        %v1254 = vadd.f32 %v974, %v1253
        %v1255 = vpop.f32.mrf.mxu0
        %v1256 = vpop.f32.mrf.mxu0
        %v1257 = vadd.f32 %v974, %v1256
        %v1258 = vpop.f32.mrf.mxu0
        %1259 = vmatprep.mubr.bf16.mxu0 0
        %1260 = vmatmul.mubr.bf16.gmra.mxu0 %v922
        %v1261 = vpop.f32.mrf.mxu0
        %v1262 = vadd.f32 %v974, %v1261
        %v1263 = vpop.f32.mrf.mxu0
        %v1264 = vpop.f32.mrf.mxu0
        %v1265 = vadd.f32 %v974, %v1264
        %v1266 = vpop.f32.mrf.mxu0
        %1267 = vmatprep.mubr.bf16.mxu0 0
        %1268 = vmatmul.mubr.bf16.gmra.mxu0 %v923
        %v1269 = vpop.f32.mrf.mxu0
        %v1270 = vadd.f32 %v974, %v1269
        %v1271 = vpop.f32.mrf.mxu0
        %v1272 = vpop.f32.mrf.mxu0
        %v1273 = vadd.f32 %v974, %v1272
        %v1274 = vpop.f32.mrf.mxu0
        %1275 = vmatprep.mubr.bf16.mxu0 0
        %1276 = vmatmul.mubr.bf16.gmra.mxu0 %v924
        %v1277 = vpop.f32.mrf.mxu0
        %v1278 = vadd.f32 %v974, %v1277
        %v1279 = vpop.f32.mrf.mxu0
        %v1280 = vpop.f32.mrf.mxu0
        %v1281 = vadd.f32 %v974, %v1280
        %v1282 = vpop.f32.mrf.mxu0
        %1283 = vmatprep.mubr.bf16.mxu0 0
        %1284 = vmatmul.mubr.bf16.gmra.mxu0 %v925
        %v1285 = vpop.f32.mrf.mxu0
        %v1286 = vadd.f32 %v974, %v1285
        %v1287 = vpop.f32.mrf.mxu0
        %v1288 = vpop.f32.mrf.mxu0
        %v1289 = vadd.f32 %v974, %v1288
        %v1290 = vpop.f32.mrf.mxu0
        %1291 = vmatprep.mubr.bf16.mxu0 0
        %1292 = vmatmul.mubr.bf16.gmra.mxu0 %v926
        %v1293 = vpop.f32.mrf.mxu0
        %v1294 = vadd.f32 %v974, %v1293
        %v1295 = vpop.f32.mrf.mxu0
        %v1296 = vpop.f32.mrf.mxu0
        %v1297 = vadd.f32 %v974, %v1296
        %v1298 = vpop.f32.mrf.mxu0
        %1299 = vmatprep.mubr.bf16.mxu0 0
        %1300 = vmatmul.mubr.bf16.gmra.mxu0 %v927
        %v1301 = vpop.f32.mrf.mxu0
        %v1302 = vadd.f32 %v974, %v1301
        %v1303 = vpop.f32.mrf.mxu0
        %v1304 = vpop.f32.mrf.mxu0
        %v1305 = vadd.f32 %v974, %v1304
        %v1306 = vpop.f32.mrf.mxu0
        %1307 = vmatprep.mubr.bf16.mxu0 0
        %1308 = vmatmul.mubr.bf16.gmra.mxu0 %v928
        %v1309 = vpop.f32.mrf.mxu0
        %v1310 = vadd.f32 %v974, %v1309
        %v1311 = vpop.f32.mrf.mxu0
        %v1312 = vpop.f32.mrf.mxu0
        %v1313 = vadd.f32 %v974, %v1312
        %v1314 = vpop.f32.mrf.mxu0
        %1315 = vdwg.mxu0
        %v1316 = vpack.c.bf16 %v1145, %v1141
        %v1317 = vpack.c.bf16 %v1155, %v1151
        %v1318 = vpack.c.bf16 %v1165, %v1161
        %v1319 = vpack.c.bf16 %v1175, %v1171
        %v1320 = vpack.c.bf16 %v1185, %v1181
        %v1321 = vpack.c.bf16 %v1195, %v1191
        %v1322 = vpack.c.bf16 %v1205, %v1201
        %v1323 = vpack.c.bf16 %v1215, %v1211
        %v1324 = vpack.c.bf16 %v1147, %v1143
        %v1325 = vpack.c.bf16 %v1157, %v1153
        %v1326 = vpack.c.bf16 %v1167, %v1163
        %v1327 = vpack.c.bf16 %v1177, %v1173
        %v1328 = vpack.c.bf16 %v1187, %v1183
        %v1329 = vpack.c.bf16 %v1197, %v1193
        %v1330 = vpack.c.bf16 %v1207, %v1203
        %v1331 = vpack.c.bf16 %v1217, %v1213
        %v1332 = vpack.c.bf16 %v1257, %v1254
        %v1333 = vpack.c.bf16 %v1265, %v1262
        %v1334 = vpack.c.bf16 %v1273, %v1270
        %v1335 = vpack.c.bf16 %v1281, %v1278
        %v1336 = vpack.c.bf16 %v1289, %v1286
        %v1337 = vpack.c.bf16 %v1297, %v1294
        %v1338 = vpack.c.bf16 %v1305, %v1302
        %v1339 = vpack.c.bf16 %v1313, %v1310
        %v1340 = vld [vmem:[#allocation5] sm:$0xff]
        %v1341 = vld [vmem:[#allocation5 + $0x8] sm:$0xff]
        %v1342 = vld [vmem:[#allocation5 + $0x10] sm:$0xff]
        %v1343 = vld [vmem:[#allocation5 + $0x18] sm:$0xff]
        %v1344 = vld [vmem:[#allocation5 + $0x20] sm:$0xff]
        %v1345 = vld [vmem:[#allocation5 + $0x28] sm:$0xff]
        %v1346 = vld [vmem:[#allocation5 + $0x30] sm:$0xff]
        %v1347 = vld [vmem:[#allocation5 + $0x38] sm:$0xff]
        %v1348 = vld [vmem:[#allocation5 + $0x40] sm:$0xff]
        %v1349 = vld [vmem:[#allocation5 + $0x48] sm:$0xff]
        %v1350 = vld [vmem:[#allocation5 + $0x50] sm:$0xff]
        %v1351 = vld [vmem:[#allocation5 + $0x58] sm:$0xff]
        %v1352 = vld [vmem:[#allocation5 + $0x60] sm:$0xff]
        %v1353 = vld [vmem:[#allocation5 + $0x68] sm:$0xff]
        %v1354 = vld [vmem:[#allocation5 + $0x70] sm:$0xff]
        %v1355 = vld [vmem:[#allocation5 + $0x78] sm:$0xff]
        %vm1356 = vcmask 130048
        %v1358 = vsel %vm1356, %v1316, 0
        %v1361 = vsel %vm1356, %v1317, 0
        %v1364 = vsel %vm1356, %v1318, 0
        %v1367 = vsel %vm1356, %v1319, 0
        %v1370 = vsel %vm1356, %v1320, 0
        %v1373 = vsel %vm1356, %v1321, 0
        %v1376 = vsel %vm1356, %v1322, 0
        %v1379 = vsel %vm1356, %v1323, 0
        %v1382 = vsel %vm1356, %v1324, 0
        %v1385 = vsel %vm1356, %v1325, 0
        %v1388 = vsel %vm1356, %v1326, 0
        %v1391 = vsel %vm1356, %v1327, 0
        %v1394 = vsel %vm1356, %v1328, 0
        %v1397 = vsel %vm1356, %v1329, 0
        %v1400 = vsel %vm1356, %v1330, 0
        %v1403 = vsel %vm1356, %v1331, 0
        %1405 = vmatprep.subr.bf16.mxu0 0
        %1406 = vmatpush1.bf16.xpose.msra.mxu0 %v1403
        %1407 = vmatprep.subr.bf16.mxu0 0
        %1408 = vmatpush1.bf16.xpose.msra.mxu0 %v1400
        %1409 = vmatprep.subr.bf16.mxu0 0
        %1410 = vmatpush1.bf16.xpose.msra.mxu0 %v1397
        %1411 = vmatprep.subr.bf16.mxu0 0
        %1412 = vmatpush1.bf16.xpose.msra.mxu0 %v1394
        %1413 = vmatprep.subr.bf16.mxu0 0
        %1414 = vmatpush1.bf16.xpose.msra.mxu0 %v1391
        %1415 = vmatprep.subr.bf16.mxu0 0
        %1416 = vmatpush1.bf16.xpose.msra.mxu0 %v1388
        %1417 = vmatprep.subr.bf16.mxu0 0
        %1418 = vmatpush1.bf16.xpose.msra.mxu0 %v1385
        %1419 = vmatprep.subr.bf16.mxu0 0
        %1420 = vmatpush1.bf16.xpose.msra.mxu0 %v1382
        %1421 = vmatprep.subr.bf16.mxu0 0
        %1422 = vmatpush2.bf16.xpose.msra.mxu0 0
        %1423 = vmatprep.subr.bf16.mxu0 0
        %1424 = vmatpush2.bf16.xpose.msra.mxu0 0
        %1425 = vmatprep.subr.bf16.mxu0 0
        %1426 = vmatpush2.bf16.xpose.msra.mxu0 0
        %1427 = vmatprep.subr.bf16.mxu0 0
        %1428 = vmatpush2.bf16.xpose.msra.mxu0 0
        %1429 = vmatprep.subr.bf16.mxu0 0
        %1430 = vmatpush2.bf16.xpose.msra.mxu0 0
        %1431 = vmatprep.subr.bf16.mxu0 0
        %1432 = vmatpush2.bf16.xpose.msra.mxu0 0
        %1433 = vmatprep.subr.bf16.mxu0 0
        %1434 = vmatpush2.bf16.xpose.msra.mxu0 0
        %1435 = vmatprep.subr.bf16.mxu0 0
        %1436 = vmatpush2.bf16.xpose.msra.mxu0 0
        %1437 = vmatprep.mubr.bf16.mxu0 0
        %1438 = vmatmul.mubr.bf16.gmra.mxu0 %v1358
        %v1439 = vpop.f32.mrf.mxu0
        %v1440 = vadd.f32 %v1340, %v1439
        %v1441 = vpop.f32.mrf.mxu0
        %v1442 = vpop.f32.mrf.mxu0
        %v1443 = vadd.f32 %v1341, %v1442
        %v1444 = vpop.f32.mrf.mxu0
        %1445 = vmatprep.mubr.bf16.mxu0 0
        %1446 = vmatmul.mubr.bf16.gmra.mxu0 %v1361
        %v1447 = vpop.f32.mrf.mxu0
        %v1448 = vadd.f32 %v1342, %v1447
        %v1449 = vpop.f32.mrf.mxu0
        %v1450 = vpop.f32.mrf.mxu0
        %v1451 = vadd.f32 %v1343, %v1450
        %v1452 = vpop.f32.mrf.mxu0
        %1453 = vmatprep.mubr.bf16.mxu0 0
        %1454 = vmatmul.mubr.bf16.gmra.mxu0 %v1364
        %v1455 = vpop.f32.mrf.mxu0
        %v1456 = vadd.f32 %v1344, %v1455
        %v1457 = vpop.f32.mrf.mxu0
        %v1458 = vpop.f32.mrf.mxu0
        %v1459 = vadd.f32 %v1345, %v1458
        %v1460 = vpop.f32.mrf.mxu0
        %1461 = vmatprep.mubr.bf16.mxu0 0
        %1462 = vmatmul.mubr.bf16.gmra.mxu0 %v1367
        %v1463 = vpop.f32.mrf.mxu0
        %v1464 = vadd.f32 %v1346, %v1463
        %v1465 = vpop.f32.mrf.mxu0
        %v1466 = vpop.f32.mrf.mxu0
        %v1467 = vadd.f32 %v1347, %v1466
        %v1468 = vpop.f32.mrf.mxu0
        %1469 = vmatprep.mubr.bf16.mxu0 0
        %1470 = vmatmul.mubr.bf16.gmra.mxu0 %v1370
        %v1471 = vpop.f32.mrf.mxu0
        %v1472 = vadd.f32 %v1348, %v1471
        %v1473 = vpop.f32.mrf.mxu0
        %v1474 = vpop.f32.mrf.mxu0
        %v1475 = vadd.f32 %v1349, %v1474
        %v1476 = vpop.f32.mrf.mxu0
        %1477 = vmatprep.mubr.bf16.mxu0 0
        %1478 = vmatmul.mubr.bf16.gmra.mxu0 %v1373
        %v1479 = vpop.f32.mrf.mxu0
        %v1480 = vadd.f32 %v1350, %v1479
        %v1481 = vpop.f32.mrf.mxu0
        %v1482 = vpop.f32.mrf.mxu0
        %v1483 = vadd.f32 %v1351, %v1482
        %v1484 = vpop.f32.mrf.mxu0
        %1485 = vmatprep.mubr.bf16.mxu0 0
        %1486 = vmatmul.mubr.bf16.gmra.mxu0 %v1376
        %v1487 = vpop.f32.mrf.mxu0
        %v1488 = vadd.f32 %v1352, %v1487
        %v1489 = vpop.f32.mrf.mxu0
        %v1490 = vpop.f32.mrf.mxu0
        %v1491 = vadd.f32 %v1353, %v1490
        %v1492 = vpop.f32.mrf.mxu0
        %1493 = vmatprep.mubr.bf16.mxu0 0
        %1494 = vmatmul.mubr.bf16.gmra.mxu0 %v1379
        %v1495 = vpop.f32.mrf.mxu0
        %v1496 = vadd.f32 %v1354, %v1495
        %v1497 = vpop.f32.mrf.mxu0
        %v1498 = vpop.f32.mrf.mxu0
        %v1499 = vadd.f32 %v1355, %v1498
        %v1500 = vpop.f32.mrf.mxu0
        %1501 = vdwg.mxu0
        %1502 = vmax.xlane.f32.xlu0 %v1440
        %v1503 = vpop.xlane.xlu0 %1502
        %1504 = vmax.xlane.f32.xlu0 %v1443
        %v1505 = vpop.xlane.xlu0 %1504
        %1506 = vmax.xlane.f32.xlu0 %v1448
        %v1507 = vpop.xlane.xlu0 %1506
        %1508 = vmax.xlane.f32.xlu0 %v1451
        %v1509 = vpop.xlane.xlu0 %1508
        %1510 = vmax.xlane.f32.xlu0 %v1456
        %v1511 = vpop.xlane.xlu0 %1510
        %1512 = vmax.xlane.f32.xlu0 %v1459
        %v1513 = vpop.xlane.xlu0 %1512
        %1514 = vmax.xlane.f32.xlu0 %v1464
        %v1515 = vpop.xlane.xlu0 %1514
        %1516 = vmax.xlane.f32.xlu0 %v1467
        %v1517 = vpop.xlane.xlu0 %1516
        %1518 = vmax.xlane.f32.xlu0 %v1472
        %v1519 = vpop.xlane.xlu0 %1518
        %1520 = vmax.xlane.f32.xlu0 %v1475
        %v1521 = vpop.xlane.xlu0 %1520
        %1522 = vmax.xlane.f32.xlu0 %v1480
        %v1523 = vpop.xlane.xlu0 %1522
        %1524 = vmax.xlane.f32.xlu0 %v1483
        %v1525 = vpop.xlane.xlu0 %1524
        %1526 = vmax.xlane.f32.xlu0 %v1488
        %v1527 = vpop.xlane.xlu0 %1526
        %1528 = vmax.xlane.f32.xlu0 %v1491
        %v1529 = vpop.xlane.xlu0 %1528
        %1530 = vmax.xlane.f32.xlu0 %v1496
        %v1531 = vpop.xlane.xlu0 %1530
        %1532 = vmax.xlane.f32.xlu0 %v1499
        %v1533 = vpop.xlane.xlu0 %1532
        %v1534 = vsub.f32 %v1440, %v1503
        %v1535 = vsub.f32 %v1443, %v1505
        %v1536 = vsub.f32 %v1448, %v1507
        %v1537 = vsub.f32 %v1451, %v1509
        %v1538 = vsub.f32 %v1456, %v1511
        %v1539 = vsub.f32 %v1459, %v1513
        %v1540 = vsub.f32 %v1464, %v1515
        %v1541 = vsub.f32 %v1467, %v1517
        %v1542 = vsub.f32 %v1472, %v1519
        %v1543 = vsub.f32 %v1475, %v1521
        %v1544 = vsub.f32 %v1480, %v1523
        %v1545 = vsub.f32 %v1483, %v1525
        %v1546 = vsub.f32 %v1488, %v1527
        %v1547 = vsub.f32 %v1491, %v1529
        %v1548 = vsub.f32 %v1496, %v1531
        %v1549 = vsub.f32 %v1499, %v1533
        %v1550 = vmul.f32 %v1534, 1.442695
        %v1551 = vpow.pop %v1550
        %v1552 = vmul.f32 %v1535, 1.442695
        %v1553 = vpow.pop %v1552
        %v1554 = vmul.f32 %v1536, 1.442695
        %v1555 = vpow.pop %v1554
        %v1556 = vmul.f32 %v1537, 1.442695
        %v1557 = vpow.pop %v1556
        %v1558 = vmul.f32 %v1538, 1.442695
        %v1559 = vpow.pop %v1558
        %v1560 = vmul.f32 %v1539, 1.442695
        %v1561 = vpow.pop %v1560
        %v1562 = vmul.f32 %v1540, 1.442695
        %v1563 = vpow.pop %v1562
        %v1564 = vmul.f32 %v1541, 1.442695
        %v1565 = vpow.pop %v1564
        %v1566 = vmul.f32 %v1542, 1.442695
        %v1567 = vpow.pop %v1566
        %v1568 = vmul.f32 %v1543, 1.442695
        %v1569 = vpow.pop %v1568
        %v1570 = vmul.f32 %v1544, 1.442695
        %v1571 = vpow.pop %v1570
        %v1572 = vmul.f32 %v1545, 1.442695
        %v1573 = vpow.pop %v1572
        %v1574 = vmul.f32 %v1546, 1.442695
        %v1575 = vpow.pop %v1574
        %v1576 = vmul.f32 %v1547, 1.442695
        %v1577 = vpow.pop %v1576
        %v1578 = vmul.f32 %v1548, 1.442695
        %v1579 = vpow.pop %v1578
        %v1580 = vmul.f32 %v1549, 1.442695
        %v1581 = vpow.pop %v1580
        %1582 = vadd.xlane.f32.xlu0 %v1551
        %v1583 = vpop.xlane.xlu0 %1582
        %1584 = vadd.xlane.f32.xlu0 %v1553
        %v1585 = vpop.xlane.xlu0 %1584
        %1586 = vadd.xlane.f32.xlu0 %v1555
        %v1587 = vpop.xlane.xlu0 %1586
        %1588 = vadd.xlane.f32.xlu0 %v1557
        %v1589 = vpop.xlane.xlu0 %1588
        %1590 = vadd.xlane.f32.xlu0 %v1559
        %v1591 = vpop.xlane.xlu0 %1590
        %1592 = vadd.xlane.f32.xlu0 %v1561
        %v1593 = vpop.xlane.xlu0 %1592
        %1594 = vadd.xlane.f32.xlu0 %v1563
        %v1595 = vpop.xlane.xlu0 %1594
        %1596 = vadd.xlane.f32.xlu0 %v1565
        %v1597 = vpop.xlane.xlu0 %1596
        %1598 = vadd.xlane.f32.xlu0 %v1567
        %v1599 = vpop.xlane.xlu0 %1598
        %1600 = vadd.xlane.f32.xlu0 %v1569
        %v1601 = vpop.xlane.xlu0 %1600
        %1602 = vadd.xlane.f32.xlu0 %v1571
        %v1603 = vpop.xlane.xlu0 %1602
        %1604 = vadd.xlane.f32.xlu0 %v1573
        %v1605 = vpop.xlane.xlu0 %1604
        %1606 = vadd.xlane.f32.xlu0 %v1575
        %v1607 = vpop.xlane.xlu0 %1606
        %1608 = vadd.xlane.f32.xlu0 %v1577
        %v1609 = vpop.xlane.xlu0 %1608
        %1610 = vadd.xlane.f32.xlu0 %v1579
        %v1611 = vpop.xlane.xlu0 %1610
        %1612 = vadd.xlane.f32.xlu0 %v1581
        %v1613 = vpop.xlane.xlu0 %1612
        %v1614 = vrcp.pop %v1583
        %v1615 = vrcp.pop %v1585
        %v1616 = vrcp.pop %v1587
        %v1617 = vrcp.pop %v1589
        %v1618 = vrcp.pop %v1591
        %v1619 = vrcp.pop %v1593
        %v1620 = vrcp.pop %v1595
        %v1621 = vrcp.pop %v1597
        %v1622 = vrcp.pop %v1599
        %v1623 = vrcp.pop %v1601
        %v1624 = vrcp.pop %v1603
        %v1625 = vrcp.pop %v1605
        %v1626 = vrcp.pop %v1607
        %v1627 = vrcp.pop %v1609
        %v1628 = vrcp.pop %v1611
        %v1629 = vrcp.pop %v1613
        %v1630 = vpack.c.bf16 %v1553, %v1551
        %v1631 = vpack.c.bf16 %v1557, %v1555
        %v1632 = vpack.c.bf16 %v1561, %v1559
        %v1633 = vpack.c.bf16 %v1565, %v1563
        %v1634 = vpack.c.bf16 %v1569, %v1567
        %v1635 = vpack.c.bf16 %v1573, %v1571
        %v1636 = vpack.c.bf16 %v1577, %v1575
        %v1637 = vpack.c.bf16 %v1581, %v1579
        %1638 = vmatprep.subr.bf16.mxu0 0
        %1639 = vmatpush1.bf16.msra.mxu0 %v1339
        %1640 = vmatprep.subr.bf16.mxu0 0
        %1641 = vmatpush1.bf16.msra.mxu0 %v1338
        %1642 = vmatprep.subr.bf16.mxu0 0
        %1643 = vmatpush1.bf16.msra.mxu0 %v1337
        %1644 = vmatprep.subr.bf16.mxu0 0
        %1645 = vmatpush1.bf16.msra.mxu0 %v1336
        %1646 = vmatprep.subr.bf16.mxu0 0
        %1647 = vmatpush1.bf16.msra.mxu0 %v1335
        %1648 = vmatprep.subr.bf16.mxu0 0
        %1649 = vmatpush1.bf16.msra.mxu0 %v1334
        %1650 = vmatprep.subr.bf16.mxu0 0
        %1651 = vmatpush1.bf16.msra.mxu0 %v1333
        %1652 = vmatprep.subr.bf16.mxu0 0
        %1653 = vmatpush1.bf16.msra.mxu0 %v1332
        %1654 = vmatprep.subr.bf16.mxu0 0
        %1655 = vmatpush2.bf16.msra.mxu0 0
        %1656 = vmatprep.subr.bf16.mxu0 0
        %1657 = vmatpush2.bf16.msra.mxu0 0
        %1658 = vmatprep.subr.bf16.mxu0 0
        %1659 = vmatpush2.bf16.msra.mxu0 0
        %1660 = vmatprep.subr.bf16.mxu0 0
        %1661 = vmatpush2.bf16.msra.mxu0 0
        %1662 = vmatprep.subr.bf16.mxu0 0
        %1663 = vmatpush2.bf16.msra.mxu0 0
        %1664 = vmatprep.subr.bf16.mxu0 0
        %1665 = vmatpush2.bf16.msra.mxu0 0
        %1666 = vmatprep.subr.bf16.mxu0 0
        %1667 = vmatpush2.bf16.msra.mxu0 0
        %1668 = vmatprep.subr.bf16.mxu0 0
        %1669 = vmatpush2.bf16.msra.mxu0 0
        %1670 = vmatprep.mubr.bf16.mxu0 0
        %1671 = vmatmul.mubr.bf16.gmra.mxu0 %v1630
        %v1672 = vpop.f32.mrf.mxu0
        %v1673 = vadd.f32 0.0, %v1672
        %v1674 = vpop.f32.mrf.mxu0
        %v1675 = vpop.f32.mrf.mxu0
        %v1676 = vadd.f32 0.0, %v1675
        %v1677 = vpop.f32.mrf.mxu0
        %1678 = vmatprep.mubr.bf16.mxu0 0
        %1679 = vmatmul.mubr.bf16.gmra.mxu0 %v1631
        %v1680 = vpop.f32.mrf.mxu0
        %v1681 = vadd.f32 0.0, %v1680
        %v1682 = vpop.f32.mrf.mxu0
        %v1683 = vpop.f32.mrf.mxu0
        %v1684 = vadd.f32 0.0, %v1683
        %v1685 = vpop.f32.mrf.mxu0
        %1686 = vmatprep.mubr.bf16.mxu0 0
        %1687 = vmatmul.mubr.bf16.gmra.mxu0 %v1632
        %v1688 = vpop.f32.mrf.mxu0
        %v1689 = vadd.f32 0.0, %v1688
        %v1690 = vpop.f32.mrf.mxu0
        %v1691 = vpop.f32.mrf.mxu0
        %v1692 = vadd.f32 0.0, %v1691
        %v1693 = vpop.f32.mrf.mxu0
        %1694 = vmatprep.mubr.bf16.mxu0 0
        %1695 = vmatmul.mubr.bf16.gmra.mxu0 %v1633
        %v1696 = vpop.f32.mrf.mxu0
        %v1697 = vadd.f32 0.0, %v1696
        %v1698 = vpop.f32.mrf.mxu0
        %v1699 = vpop.f32.mrf.mxu0
        %v1700 = vadd.f32 0.0, %v1699
        %v1701 = vpop.f32.mrf.mxu0
        %1702 = vmatprep.mubr.bf16.mxu0 0
        %1703 = vmatmul.mubr.bf16.gmra.mxu0 %v1634
        %v1704 = vpop.f32.mrf.mxu0
        %v1705 = vadd.f32 0.0, %v1704
        %v1706 = vpop.f32.mrf.mxu0
        %v1707 = vpop.f32.mrf.mxu0
        %v1708 = vadd.f32 0.0, %v1707
        %v1709 = vpop.f32.mrf.mxu0
        %1710 = vmatprep.mubr.bf16.mxu0 0
        %1711 = vmatmul.mubr.bf16.gmra.mxu0 %v1635
        %v1712 = vpop.f32.mrf.mxu0
        %v1713 = vadd.f32 0.0, %v1712
        %v1714 = vpop.f32.mrf.mxu0
        %v1715 = vpop.f32.mrf.mxu0
        %v1716 = vadd.f32 0.0, %v1715
        %v1717 = vpop.f32.mrf.mxu0
        %1718 = vmatprep.mubr.bf16.mxu0 0
        %1719 = vmatmul.mubr.bf16.gmra.mxu0 %v1636
        %v1720 = vpop.f32.mrf.mxu0
        %v1721 = vadd.f32 0.0, %v1720
        %v1722 = vpop.f32.mrf.mxu0
        %v1723 = vpop.f32.mrf.mxu0
        %v1724 = vadd.f32 0.0, %v1723
        %v1725 = vpop.f32.mrf.mxu0
        %1726 = vmatprep.mubr.bf16.mxu0 0
        %1727 = vmatmul.mubr.bf16.gmra.mxu0 %v1637
        %v1728 = vpop.f32.mrf.mxu0
        %v1729 = vadd.f32 0.0, %v1728
        %v1730 = vpop.f32.mrf.mxu0
        %v1731 = vpop.f32.mrf.mxu0
        %v1732 = vadd.f32 0.0, %v1731
        %v1733 = vpop.f32.mrf.mxu0
        %1734 = vdwg.mxu0
        %v1735 = vmul.f32 %v1673, %v1614
        %v1736 = vmul.f32 %v1676, %v1615
        %v1737 = vmul.f32 %v1681, %v1616
        %v1738 = vmul.f32 %v1684, %v1617
        %v1739 = vmul.f32 %v1689, %v1618
        %v1740 = vmul.f32 %v1692, %v1619
        %v1741 = vmul.f32 %v1697, %v1620
        %v1742 = vmul.f32 %v1700, %v1621
        %v1743 = vmul.f32 %v1705, %v1622
        %v1744 = vmul.f32 %v1708, %v1623
        %v1745 = vmul.f32 %v1713, %v1624
        %v1746 = vmul.f32 %v1716, %v1625
        %v1747 = vmul.f32 %v1721, %v1626
        %v1748 = vmul.f32 %v1724, %v1627
        %v1749 = vmul.f32 %v1729, %v1628
        %v1750 = vmul.f32 %v1732, %v1629
        %v1751 = vpack.c.bf16 %v1736, %v1735
        %v1752 = vpack.c.bf16 %v1738, %v1737
        %v1753 = vpack.c.bf16 %v1740, %v1739
        %v1754 = vpack.c.bf16 %v1742, %v1741
        %v1755 = vpack.c.bf16 %v1744, %v1743
        %v1756 = vpack.c.bf16 %v1746, %v1745
        %v1757 = vpack.c.bf16 %v1748, %v1747
        %v1758 = vpack.c.bf16 %v1750, %v1749
        %1767 = vrot.lane.b32.xlu0 %v1316, 112
        %v1768 = vpop.permute.xlu0 %1767
        %1769 = vrot.lane.b32.xlu0 %v1317, 112
        %v1770 = vpop.permute.xlu0 %1769
        %1771 = vrot.lane.b32.xlu0 %v1318, 112
        %v1772 = vpop.permute.xlu0 %1771
        %1773 = vrot.lane.b32.xlu0 %v1319, 112
        %v1774 = vpop.permute.xlu0 %1773
        %1775 = vrot.lane.b32.xlu0 %v1320, 112
        %v1776 = vpop.permute.xlu0 %1775
        %1777 = vrot.lane.b32.xlu0 %v1321, 112
        %v1778 = vpop.permute.xlu0 %1777
        %1779 = vrot.lane.b32.xlu0 %v1322, 112
        %v1780 = vpop.permute.xlu0 %1779
        %1781 = vrot.lane.b32.xlu0 %v1323, 112
        %v1782 = vpop.permute.xlu0 %1781
        %1791 = vrot.lane.b32.xlu0 %v1324, 112
        %v1792 = vpop.permute.xlu0 %1791
        %1793 = vrot.lane.b32.xlu0 %v1325, 112
        %v1794 = vpop.permute.xlu0 %1793
        %1795 = vrot.lane.b32.xlu0 %v1326, 112
        %v1796 = vpop.permute.xlu0 %1795
        %1797 = vrot.lane.b32.xlu0 %v1327, 112
        %v1798 = vpop.permute.xlu0 %1797
        %1799 = vrot.lane.b32.xlu0 %v1328, 112
        %v1800 = vpop.permute.xlu0 %1799
        %1801 = vrot.lane.b32.xlu0 %v1329, 112
        %v1802 = vpop.permute.xlu0 %1801
        %1803 = vrot.lane.b32.xlu0 %v1330, 112
        %v1804 = vpop.permute.xlu0 %1803
        %1805 = vrot.lane.b32.xlu0 %v1331, 112
        %v1806 = vpop.permute.xlu0 %1805
        %v1808 = vsel %vm1356, %v1768, 0
        %v1811 = vsel %vm1356, %v1770, 0
        %v1814 = vsel %vm1356, %v1772, 0
        %v1817 = vsel %vm1356, %v1774, 0
        %v1820 = vsel %vm1356, %v1776, 0
        %v1823 = vsel %vm1356, %v1778, 0
        %v1826 = vsel %vm1356, %v1780, 0
        %v1829 = vsel %vm1356, %v1782, 0
        %v1832 = vsel %vm1356, %v1792, 0
        %v1835 = vsel %vm1356, %v1794, 0
        %v1838 = vsel %vm1356, %v1796, 0
        %v1841 = vsel %vm1356, %v1798, 0
        %v1844 = vsel %vm1356, %v1800, 0
        %v1847 = vsel %vm1356, %v1802, 0
        %v1850 = vsel %vm1356, %v1804, 0
        %v1853 = vsel %vm1356, %v1806, 0
        %1855 = vmatprep.subr.bf16.mxu0 0
        %1856 = vmatpush1.bf16.xpose.msra.mxu0 %v1853
        %1857 = vmatprep.subr.bf16.mxu0 0
        %1858 = vmatpush1.bf16.xpose.msra.mxu0 %v1850
        %1859 = vmatprep.subr.bf16.mxu0 0
        %1860 = vmatpush1.bf16.xpose.msra.mxu0 %v1847
        %1861 = vmatprep.subr.bf16.mxu0 0
        %1862 = vmatpush1.bf16.xpose.msra.mxu0 %v1844
        %1863 = vmatprep.subr.bf16.mxu0 0
        %1864 = vmatpush1.bf16.xpose.msra.mxu0 %v1841
        %1865 = vmatprep.subr.bf16.mxu0 0
        %1866 = vmatpush1.bf16.xpose.msra.mxu0 %v1838
        %1867 = vmatprep.subr.bf16.mxu0 0
        %1868 = vmatpush1.bf16.xpose.msra.mxu0 %v1835
        %1869 = vmatprep.subr.bf16.mxu0 0
        %1870 = vmatpush1.bf16.xpose.msra.mxu0 %v1832
        %1871 = vmatprep.subr.bf16.mxu0 0
        %1872 = vmatpush2.bf16.xpose.msra.mxu0 0
        %1873 = vmatprep.subr.bf16.mxu0 0
        %1874 = vmatpush2.bf16.xpose.msra.mxu0 0
        %1875 = vmatprep.subr.bf16.mxu0 0
        %1876 = vmatpush2.bf16.xpose.msra.mxu0 0
        %1877 = vmatprep.subr.bf16.mxu0 0
        %1878 = vmatpush2.bf16.xpose.msra.mxu0 0
        %1879 = vmatprep.subr.bf16.mxu0 0
        %1880 = vmatpush2.bf16.xpose.msra.mxu0 0
        %1881 = vmatprep.subr.bf16.mxu0 0
        %1882 = vmatpush2.bf16.xpose.msra.mxu0 0
        %1883 = vmatprep.subr.bf16.mxu0 0
        %1884 = vmatpush2.bf16.xpose.msra.mxu0 0
        %1885 = vmatprep.subr.bf16.mxu0 0
        %1886 = vmatpush2.bf16.xpose.msra.mxu0 0
        %1887 = vmatprep.mubr.bf16.mxu0 0
        %1888 = vmatmul.mubr.bf16.gmra.mxu0 %v1808
        %v1889 = vpop.f32.mrf.mxu0
        %v1890 = vadd.f32 %v1340, %v1889
        %v1891 = vpop.f32.mrf.mxu0
        %v1892 = vpop.f32.mrf.mxu0
        %v1893 = vadd.f32 %v1341, %v1892
        %v1894 = vpop.f32.mrf.mxu0
        %1895 = vmatprep.mubr.bf16.mxu0 0
        %1896 = vmatmul.mubr.bf16.gmra.mxu0 %v1811
        %v1897 = vpop.f32.mrf.mxu0
        %v1898 = vadd.f32 %v1342, %v1897
        %v1899 = vpop.f32.mrf.mxu0
        %v1900 = vpop.f32.mrf.mxu0
        %v1901 = vadd.f32 %v1343, %v1900
        %v1902 = vpop.f32.mrf.mxu0
        %1903 = vmatprep.mubr.bf16.mxu0 0
        %1904 = vmatmul.mubr.bf16.gmra.mxu0 %v1814
        %v1905 = vpop.f32.mrf.mxu0
        %v1906 = vadd.f32 %v1344, %v1905
        %v1907 = vpop.f32.mrf.mxu0
        %v1908 = vpop.f32.mrf.mxu0
        %v1909 = vadd.f32 %v1345, %v1908
        %v1910 = vpop.f32.mrf.mxu0
        %1911 = vmatprep.mubr.bf16.mxu0 0
        %1912 = vmatmul.mubr.bf16.gmra.mxu0 %v1817
        %v1913 = vpop.f32.mrf.mxu0
        %v1914 = vadd.f32 %v1346, %v1913
        %v1915 = vpop.f32.mrf.mxu0
        %v1916 = vpop.f32.mrf.mxu0
        %v1917 = vadd.f32 %v1347, %v1916
        %v1918 = vpop.f32.mrf.mxu0
        %1919 = vmatprep.mubr.bf16.mxu0 0
        %1920 = vmatmul.mubr.bf16.gmra.mxu0 %v1820
        %v1921 = vpop.f32.mrf.mxu0
        %v1922 = vadd.f32 %v1348, %v1921
        %v1923 = vpop.f32.mrf.mxu0
        %v1924 = vpop.f32.mrf.mxu0
        %v1925 = vadd.f32 %v1349, %v1924
        %v1926 = vpop.f32.mrf.mxu0
        %1927 = vmatprep.mubr.bf16.mxu0 0
        %1928 = vmatmul.mubr.bf16.gmra.mxu0 %v1823
        %v1929 = vpop.f32.mrf.mxu0
        %v1930 = vadd.f32 %v1350, %v1929
        %v1931 = vpop.f32.mrf.mxu0
        %v1932 = vpop.f32.mrf.mxu0
        %v1933 = vadd.f32 %v1351, %v1932
        %v1934 = vpop.f32.mrf.mxu0
        %1935 = vmatprep.mubr.bf16.mxu0 0
        %1936 = vmatmul.mubr.bf16.gmra.mxu0 %v1826
        %v1937 = vpop.f32.mrf.mxu0
        %v1938 = vadd.f32 %v1352, %v1937
        %v1939 = vpop.f32.mrf.mxu0
        %v1940 = vpop.f32.mrf.mxu0
        %v1941 = vadd.f32 %v1353, %v1940
        %v1942 = vpop.f32.mrf.mxu0
        %1943 = vmatprep.mubr.bf16.mxu0 0
        %1944 = vmatmul.mubr.bf16.gmra.mxu0 %v1829
        %v1945 = vpop.f32.mrf.mxu0
        %v1946 = vadd.f32 %v1354, %v1945
        %v1947 = vpop.f32.mrf.mxu0
        %v1948 = vpop.f32.mrf.mxu0
        %v1949 = vadd.f32 %v1355, %v1948
        %v1950 = vpop.f32.mrf.mxu0
        %1951 = vdwg.mxu0
        %1952 = vmax.xlane.f32.xlu0 %v1890
        %v1953 = vpop.xlane.xlu0 %1952
        %1954 = vmax.xlane.f32.xlu0 %v1893
        %v1955 = vpop.xlane.xlu0 %1954
        %1956 = vmax.xlane.f32.xlu0 %v1898
        %v1957 = vpop.xlane.xlu0 %1956
        %1958 = vmax.xlane.f32.xlu0 %v1901
        %v1959 = vpop.xlane.xlu0 %1958
        %1960 = vmax.xlane.f32.xlu0 %v1906
        %v1961 = vpop.xlane.xlu0 %1960
        %1962 = vmax.xlane.f32.xlu0 %v1909
        %v1963 = vpop.xlane.xlu0 %1962
        %1964 = vmax.xlane.f32.xlu0 %v1914
        %v1965 = vpop.xlane.xlu0 %1964
        %1966 = vmax.xlane.f32.xlu0 %v1917
        %v1967 = vpop.xlane.xlu0 %1966
        %1968 = vmax.xlane.f32.xlu0 %v1922
        %v1969 = vpop.xlane.xlu0 %1968
        %1970 = vmax.xlane.f32.xlu0 %v1925
        %v1971 = vpop.xlane.xlu0 %1970
        %1972 = vmax.xlane.f32.xlu0 %v1930
        %v1973 = vpop.xlane.xlu0 %1972
        %1974 = vmax.xlane.f32.xlu0 %v1933
        %v1975 = vpop.xlane.xlu0 %1974
        %1976 = vmax.xlane.f32.xlu0 %v1938
        %v1977 = vpop.xlane.xlu0 %1976
        %1978 = vmax.xlane.f32.xlu0 %v1941
        %v1979 = vpop.xlane.xlu0 %1978
        %1980 = vmax.xlane.f32.xlu0 %v1946
        %v1981 = vpop.xlane.xlu0 %1980
        %1982 = vmax.xlane.f32.xlu0 %v1949
        %v1983 = vpop.xlane.xlu0 %1982
        %v1984 = vsub.f32 %v1890, %v1953
        %v1985 = vsub.f32 %v1893, %v1955
        %v1986 = vsub.f32 %v1898, %v1957
        %v1987 = vsub.f32 %v1901, %v1959
        %v1988 = vsub.f32 %v1906, %v1961
        %v1989 = vsub.f32 %v1909, %v1963
        %v1990 = vsub.f32 %v1914, %v1965
        %v1991 = vsub.f32 %v1917, %v1967
        %v1992 = vsub.f32 %v1922, %v1969
        %v1993 = vsub.f32 %v1925, %v1971
        %v1994 = vsub.f32 %v1930, %v1973
        %v1995 = vsub.f32 %v1933, %v1975
        %v1996 = vsub.f32 %v1938, %v1977
        %v1997 = vsub.f32 %v1941, %v1979
        %v1998 = vsub.f32 %v1946, %v1981
        %v1999 = vsub.f32 %v1949, %v1983
        %v2000 = vmul.f32 %v1984, 1.442695
        %v2001 = vpow.pop %v2000
        %v2002 = vmul.f32 %v1985, 1.442695
        %v2003 = vpow.pop %v2002
        %v2004 = vmul.f32 %v1986, 1.442695
        %v2005 = vpow.pop %v2004
        %v2006 = vmul.f32 %v1987, 1.442695
        %v2007 = vpow.pop %v2006
        %v2008 = vmul.f32 %v1988, 1.442695
        %v2009 = vpow.pop %v2008
        %v2010 = vmul.f32 %v1989, 1.442695
        %v2011 = vpow.pop %v2010
        %v2012 = vmul.f32 %v1990, 1.442695
        %v2013 = vpow.pop %v2012
        %v2014 = vmul.f32 %v1991, 1.442695
        %v2015 = vpow.pop %v2014
        %v2016 = vmul.f32 %v1992, 1.442695
        %v2017 = vpow.pop %v2016
        %v2018 = vmul.f32 %v1993, 1.442695
        %v2019 = vpow.pop %v2018
        %v2020 = vmul.f32 %v1994, 1.442695
        %v2021 = vpow.pop %v2020
        %v2022 = vmul.f32 %v1995, 1.442695
        %v2023 = vpow.pop %v2022
        %v2024 = vmul.f32 %v1996, 1.442695
        %v2025 = vpow.pop %v2024
        %v2026 = vmul.f32 %v1997, 1.442695
        %v2027 = vpow.pop %v2026
        %v2028 = vmul.f32 %v1998, 1.442695
        %v2029 = vpow.pop %v2028
        %v2030 = vmul.f32 %v1999, 1.442695
        %v2031 = vpow.pop %v2030
        %2032 = vadd.xlane.f32.xlu0 %v2001
        %v2033 = vpop.xlane.xlu0 %2032
        %2034 = vadd.xlane.f32.xlu0 %v2003
        %v2035 = vpop.xlane.xlu0 %2034
        %2036 = vadd.xlane.f32.xlu0 %v2005
        %v2037 = vpop.xlane.xlu0 %2036
        %2038 = vadd.xlane.f32.xlu0 %v2007
        %v2039 = vpop.xlane.xlu0 %2038
        %2040 = vadd.xlane.f32.xlu0 %v2009
        %v2041 = vpop.xlane.xlu0 %2040
        %2042 = vadd.xlane.f32.xlu0 %v2011
        %v2043 = vpop.xlane.xlu0 %2042
        %2044 = vadd.xlane.f32.xlu0 %v2013
        %v2045 = vpop.xlane.xlu0 %2044
        %2046 = vadd.xlane.f32.xlu0 %v2015
        %v2047 = vpop.xlane.xlu0 %2046
        %2048 = vadd.xlane.f32.xlu0 %v2017
        %v2049 = vpop.xlane.xlu0 %2048
        %2050 = vadd.xlane.f32.xlu0 %v2019
        %v2051 = vpop.xlane.xlu0 %2050
        %2052 = vadd.xlane.f32.xlu0 %v2021
        %v2053 = vpop.xlane.xlu0 %2052
        %2054 = vadd.xlane.f32.xlu0 %v2023
        %v2055 = vpop.xlane.xlu0 %2054
        %2056 = vadd.xlane.f32.xlu0 %v2025
        %v2057 = vpop.xlane.xlu0 %2056
        %2058 = vadd.xlane.f32.xlu0 %v2027
        %v2059 = vpop.xlane.xlu0 %2058
        %2060 = vadd.xlane.f32.xlu0 %v2029
        %v2061 = vpop.xlane.xlu0 %2060
        %2062 = vadd.xlane.f32.xlu0 %v2031
        %v2063 = vpop.xlane.xlu0 %2062
        %v2064 = vrcp.pop %v2033
        %v2065 = vrcp.pop %v2035
        %v2066 = vrcp.pop %v2037
        %v2067 = vrcp.pop %v2039
        %v2068 = vrcp.pop %v2041
        %v2069 = vrcp.pop %v2043
        %v2070 = vrcp.pop %v2045
        %v2071 = vrcp.pop %v2047
        %v2072 = vrcp.pop %v2049
        %v2073 = vrcp.pop %v2051
        %v2074 = vrcp.pop %v2053
        %v2075 = vrcp.pop %v2055
        %v2076 = vrcp.pop %v2057
        %v2077 = vrcp.pop %v2059
        %v2078 = vrcp.pop %v2061
        %v2079 = vrcp.pop %v2063
        %v2080 = vpack.c.bf16 %v2003, %v2001
        %v2081 = vpack.c.bf16 %v2007, %v2005
        %v2082 = vpack.c.bf16 %v2011, %v2009
        %v2083 = vpack.c.bf16 %v2015, %v2013
        %v2084 = vpack.c.bf16 %v2019, %v2017
        %v2085 = vpack.c.bf16 %v2023, %v2021
        %v2086 = vpack.c.bf16 %v2027, %v2025
        %v2087 = vpack.c.bf16 %v2031, %v2029
        %2096 = vrot.lane.b32.xlu0 %v1332, 112
        %v2097 = vpop.permute.xlu0 %2096
        %2098 = vrot.lane.b32.xlu0 %v1333, 112
        %v2099 = vpop.permute.xlu0 %2098
        %2100 = vrot.lane.b32.xlu0 %v1334, 112
        %v2101 = vpop.permute.xlu0 %2100
        %2102 = vrot.lane.b32.xlu0 %v1335, 112
        %v2103 = vpop.permute.xlu0 %2102
        %2104 = vrot.lane.b32.xlu0 %v1336, 112
        %v2105 = vpop.permute.xlu0 %2104
        %2106 = vrot.lane.b32.xlu0 %v1337, 112
        %v2107 = vpop.permute.xlu0 %2106
        %2108 = vrot.lane.b32.xlu0 %v1338, 112
        %v2109 = vpop.permute.xlu0 %2108
        %2110 = vrot.lane.b32.xlu0 %v1339, 112
        %v2111 = vpop.permute.xlu0 %2110
        %2120 = vmatprep.subr.bf16.mxu0 0
        %2121 = vmatpush1.bf16.msra.mxu0 %v2111
        %2122 = vmatprep.subr.bf16.mxu0 0
        %2123 = vmatpush1.bf16.msra.mxu0 %v2109
        %2124 = vmatprep.subr.bf16.mxu0 0
        %2125 = vmatpush1.bf16.msra.mxu0 %v2107
        %2126 = vmatprep.subr.bf16.mxu0 0
        %2127 = vmatpush1.bf16.msra.mxu0 %v2105
        %2128 = vmatprep.subr.bf16.mxu0 0
        %2129 = vmatpush1.bf16.msra.mxu0 %v2103
        %2130 = vmatprep.subr.bf16.mxu0 0
        %2131 = vmatpush1.bf16.msra.mxu0 %v2101
        %2132 = vmatprep.subr.bf16.mxu0 0
        %2133 = vmatpush1.bf16.msra.mxu0 %v2099
        %2134 = vmatprep.subr.bf16.mxu0 0
        %2135 = vmatpush1.bf16.msra.mxu0 %v2097
        %2136 = vmatprep.subr.bf16.mxu0 0
        %2137 = vmatpush2.bf16.msra.mxu0 0
        %2138 = vmatprep.subr.bf16.mxu0 0
        %2139 = vmatpush2.bf16.msra.mxu0 0
        %2140 = vmatprep.subr.bf16.mxu0 0
        %2141 = vmatpush2.bf16.msra.mxu0 0
        %2142 = vmatprep.subr.bf16.mxu0 0
        %2143 = vmatpush2.bf16.msra.mxu0 0
        %2144 = vmatprep.subr.bf16.mxu0 0
        %2145 = vmatpush2.bf16.msra.mxu0 0
        %2146 = vmatprep.subr.bf16.mxu0 0
        %2147 = vmatpush2.bf16.msra.mxu0 0
        %2148 = vmatprep.subr.bf16.mxu0 0
        %2149 = vmatpush2.bf16.msra.mxu0 0
        %2150 = vmatprep.subr.bf16.mxu0 0
        %2151 = vmatpush2.bf16.msra.mxu0 0
        %2152 = vmatprep.mubr.bf16.mxu0 0
        %2153 = vmatmul.mubr.bf16.gmra.mxu0 %v2080
        %v2154 = vpop.f32.mrf.mxu0
        %v2155 = vadd.f32 0.0, %v2154
        %v2156 = vpop.f32.mrf.mxu0
        %v2157 = vpop.f32.mrf.mxu0
        %v2158 = vadd.f32 0.0, %v2157
        %v2159 = vpop.f32.mrf.mxu0
        %2160 = vmatprep.mubr.bf16.mxu0 0
        %2161 = vmatmul.mubr.bf16.gmra.mxu0 %v2081
        %v2162 = vpop.f32.mrf.mxu0
        %v2163 = vadd.f32 0.0, %v2162
        %v2164 = vpop.f32.mrf.mxu0
        %v2165 = vpop.f32.mrf.mxu0
        %v2166 = vadd.f32 0.0, %v2165
        %v2167 = vpop.f32.mrf.mxu0
        %2168 = vmatprep.mubr.bf16.mxu0 0
        %2169 = vmatmul.mubr.bf16.gmra.mxu0 %v2082
        %v2170 = vpop.f32.mrf.mxu0
        %v2171 = vadd.f32 0.0, %v2170
        %v2172 = vpop.f32.mrf.mxu0
        %v2173 = vpop.f32.mrf.mxu0
        %v2174 = vadd.f32 0.0, %v2173
        %v2175 = vpop.f32.mrf.mxu0
        %2176 = vmatprep.mubr.bf16.mxu0 0
        %2177 = vmatmul.mubr.bf16.gmra.mxu0 %v2083
        %v2178 = vpop.f32.mrf.mxu0
        %v2179 = vadd.f32 0.0, %v2178
        %v2180 = vpop.f32.mrf.mxu0
        %v2181 = vpop.f32.mrf.mxu0
        %v2182 = vadd.f32 0.0, %v2181
        %v2183 = vpop.f32.mrf.mxu0
        %2184 = vmatprep.mubr.bf16.mxu0 0
        %2185 = vmatmul.mubr.bf16.gmra.mxu0 %v2084
        %v2186 = vpop.f32.mrf.mxu0
        %v2187 = vadd.f32 0.0, %v2186
        %v2188 = vpop.f32.mrf.mxu0
        %v2189 = vpop.f32.mrf.mxu0
        %v2190 = vadd.f32 0.0, %v2189
        %v2191 = vpop.f32.mrf.mxu0
        %2192 = vmatprep.mubr.bf16.mxu0 0
        %2193 = vmatmul.mubr.bf16.gmra.mxu0 %v2085
        %v2194 = vpop.f32.mrf.mxu0
        %v2195 = vadd.f32 0.0, %v2194
        %v2196 = vpop.f32.mrf.mxu0
        %v2197 = vpop.f32.mrf.mxu0
        %v2198 = vadd.f32 0.0, %v2197
        %v2199 = vpop.f32.mrf.mxu0
        %2200 = vmatprep.mubr.bf16.mxu0 0
        %2201 = vmatmul.mubr.bf16.gmra.mxu0 %v2086
        %v2202 = vpop.f32.mrf.mxu0
        %v2203 = vadd.f32 0.0, %v2202
        %v2204 = vpop.f32.mrf.mxu0
        %v2205 = vpop.f32.mrf.mxu0
        %v2206 = vadd.f32 0.0, %v2205
        %v2207 = vpop.f32.mrf.mxu0
        %2208 = vmatprep.mubr.bf16.mxu0 0
        %2209 = vmatmul.mubr.bf16.gmra.mxu0 %v2087
        %v2210 = vpop.f32.mrf.mxu0
        %v2211 = vadd.f32 0.0, %v2210
        %v2212 = vpop.f32.mrf.mxu0
        %v2213 = vpop.f32.mrf.mxu0
        %v2214 = vadd.f32 0.0, %v2213
        %v2215 = vpop.f32.mrf.mxu0
        %2216 = vdwg.mxu0
        %v2217 = vmul.f32 %v2155, %v2064
        %v2218 = vmul.f32 %v2158, %v2065
        %v2219 = vmul.f32 %v2163, %v2066
        %v2220 = vmul.f32 %v2166, %v2067
        %v2221 = vmul.f32 %v2171, %v2068
        %v2222 = vmul.f32 %v2174, %v2069
        %v2223 = vmul.f32 %v2179, %v2070
        %v2224 = vmul.f32 %v2182, %v2071
        %v2225 = vmul.f32 %v2187, %v2072
        %v2226 = vmul.f32 %v2190, %v2073
        %v2227 = vmul.f32 %v2195, %v2074
        %v2228 = vmul.f32 %v2198, %v2075
        %v2229 = vmul.f32 %v2203, %v2076
        %v2230 = vmul.f32 %v2206, %v2077
        %v2231 = vmul.f32 %v2211, %v2078
        %v2232 = vmul.f32 %v2214, %v2079
        %v2233 = vpack.c.bf16 %v2218, %v2217
        %v2234 = vpack.c.bf16 %v2220, %v2219
        %v2235 = vpack.c.bf16 %v2222, %v2221
        %v2236 = vpack.c.bf16 %v2224, %v2223
        %v2237 = vpack.c.bf16 %v2226, %v2225
        %v2238 = vpack.c.bf16 %v2228, %v2227
        %v2239 = vpack.c.bf16 %v2230, %v2229
        %v2240 = vpack.c.bf16 %v2232, %v2231
        %2241 = vrot.lane.b32.xlu0 %v1316, 96
        %v2242 = vpop.permute.xlu0 %2241
        %2243 = vrot.lane.b32.xlu0 %v1317, 96
        %v2244 = vpop.permute.xlu0 %2243
        %2245 = vrot.lane.b32.xlu0 %v1318, 96
        %v2246 = vpop.permute.xlu0 %2245
        %2247 = vrot.lane.b32.xlu0 %v1319, 96
        %v2248 = vpop.permute.xlu0 %2247
        %2249 = vrot.lane.b32.xlu0 %v1320, 96
        %v2250 = vpop.permute.xlu0 %2249
        %2251 = vrot.lane.b32.xlu0 %v1321, 96
        %v2252 = vpop.permute.xlu0 %2251
        %2253 = vrot.lane.b32.xlu0 %v1322, 96
        %v2254 = vpop.permute.xlu0 %2253
        %2255 = vrot.lane.b32.xlu0 %v1323, 96
        %v2256 = vpop.permute.xlu0 %2255
        %2257 = vrot.lane.b32.xlu0 %v1324, 96
        %v2258 = vpop.permute.xlu0 %2257
        %2259 = vrot.lane.b32.xlu0 %v1325, 96
        %v2260 = vpop.permute.xlu0 %2259
        %2261 = vrot.lane.b32.xlu0 %v1326, 96
        %v2262 = vpop.permute.xlu0 %2261
        %2263 = vrot.lane.b32.xlu0 %v1327, 96
        %v2264 = vpop.permute.xlu0 %2263
        %2265 = vrot.lane.b32.xlu0 %v1328, 96
        %v2266 = vpop.permute.xlu0 %2265
        %2267 = vrot.lane.b32.xlu0 %v1329, 96
        %v2268 = vpop.permute.xlu0 %2267
        %2269 = vrot.lane.b32.xlu0 %v1330, 96
        %v2270 = vpop.permute.xlu0 %2269
        %2271 = vrot.lane.b32.xlu0 %v1331, 96
        %v2272 = vpop.permute.xlu0 %2271
        %v2274 = vsel %vm1356, %v2242, 0
        %v2277 = vsel %vm1356, %v2244, 0
        %v2280 = vsel %vm1356, %v2246, 0
        %v2283 = vsel %vm1356, %v2248, 0
        %v2286 = vsel %vm1356, %v2250, 0
        %v2289 = vsel %vm1356, %v2252, 0
        %v2292 = vsel %vm1356, %v2254, 0
        %v2295 = vsel %vm1356, %v2256, 0
        %v2298 = vsel %vm1356, %v2258, 0
        %v2301 = vsel %vm1356, %v2260, 0
        %v2304 = vsel %vm1356, %v2262, 0
        %v2307 = vsel %vm1356, %v2264, 0
        %v2310 = vsel %vm1356, %v2266, 0
        %v2313 = vsel %vm1356, %v2268, 0
        %v2316 = vsel %vm1356, %v2270, 0
        %v2319 = vsel %vm1356, %v2272, 0
        %2321 = vmatprep.subr.bf16.mxu0 0
        %2322 = vmatpush1.bf16.xpose.msra.mxu0 %v2319
        %2323 = vmatprep.subr.bf16.mxu0 0
        %2324 = vmatpush1.bf16.xpose.msra.mxu0 %v2316
        %2325 = vmatprep.subr.bf16.mxu0 0
        %2326 = vmatpush1.bf16.xpose.msra.mxu0 %v2313
        %2327 = vmatprep.subr.bf16.mxu0 0
        %2328 = vmatpush1.bf16.xpose.msra.mxu0 %v2310
        %2329 = vmatprep.subr.bf16.mxu0 0
        %2330 = vmatpush1.bf16.xpose.msra.mxu0 %v2307
        %2331 = vmatprep.subr.bf16.mxu0 0
        %2332 = vmatpush1.bf16.xpose.msra.mxu0 %v2304
        %2333 = vmatprep.subr.bf16.mxu0 0
        %2334 = vmatpush1.bf16.xpose.msra.mxu0 %v2301
        %2335 = vmatprep.subr.bf16.mxu0 0
        %2336 = vmatpush1.bf16.xpose.msra.mxu0 %v2298
        %2337 = vmatprep.subr.bf16.mxu0 0
        %2338 = vmatpush2.bf16.xpose.msra.mxu0 0
        %2339 = vmatprep.subr.bf16.mxu0 0
        %2340 = vmatpush2.bf16.xpose.msra.mxu0 0
        %2341 = vmatprep.subr.bf16.mxu0 0
        %2342 = vmatpush2.bf16.xpose.msra.mxu0 0
        %2343 = vmatprep.subr.bf16.mxu0 0
        %2344 = vmatpush2.bf16.xpose.msra.mxu0 0
        %2345 = vmatprep.subr.bf16.mxu0 0
        %2346 = vmatpush2.bf16.xpose.msra.mxu0 0
        %2347 = vmatprep.subr.bf16.mxu0 0
        %2348 = vmatpush2.bf16.xpose.msra.mxu0 0
        %2349 = vmatprep.subr.bf16.mxu0 0
        %2350 = vmatpush2.bf16.xpose.msra.mxu0 0
        %2351 = vmatprep.subr.bf16.mxu0 0
        %2352 = vmatpush2.bf16.xpose.msra.mxu0 0
        %2353 = vmatprep.mubr.bf16.mxu0 0
        %2354 = vmatmul.mubr.bf16.gmra.mxu0 %v2274
        %v2355 = vpop.f32.mrf.mxu0
        %v2356 = vadd.f32 %v1340, %v2355
        %v2357 = vpop.f32.mrf.mxu0
        %v2358 = vpop.f32.mrf.mxu0
        %v2359 = vadd.f32 %v1341, %v2358
        %v2360 = vpop.f32.mrf.mxu0
        %2361 = vmatprep.mubr.bf16.mxu0 0
        %2362 = vmatmul.mubr.bf16.gmra.mxu0 %v2277
        %v2363 = vpop.f32.mrf.mxu0
        %v2364 = vadd.f32 %v1342, %v2363
        %v2365 = vpop.f32.mrf.mxu0
        %v2366 = vpop.f32.mrf.mxu0
        %v2367 = vadd.f32 %v1343, %v2366
        %v2368 = vpop.f32.mrf.mxu0
        %2369 = vmatprep.mubr.bf16.mxu0 0
        %2370 = vmatmul.mubr.bf16.gmra.mxu0 %v2280
        %v2371 = vpop.f32.mrf.mxu0
        %v2372 = vadd.f32 %v1344, %v2371
        %v2373 = vpop.f32.mrf.mxu0
        %v2374 = vpop.f32.mrf.mxu0
        %v2375 = vadd.f32 %v1345, %v2374
        %v2376 = vpop.f32.mrf.mxu0
        %2377 = vmatprep.mubr.bf16.mxu0 0
        %2378 = vmatmul.mubr.bf16.gmra.mxu0 %v2283
        %v2379 = vpop.f32.mrf.mxu0
        %v2380 = vadd.f32 %v1346, %v2379
        %v2381 = vpop.f32.mrf.mxu0
        %v2382 = vpop.f32.mrf.mxu0
        %v2383 = vadd.f32 %v1347, %v2382
        %v2384 = vpop.f32.mrf.mxu0
        %2385 = vmatprep.mubr.bf16.mxu0 0
        %2386 = vmatmul.mubr.bf16.gmra.mxu0 %v2286
        %v2387 = vpop.f32.mrf.mxu0
        %v2388 = vadd.f32 %v1348, %v2387
        %v2389 = vpop.f32.mrf.mxu0
        %v2390 = vpop.f32.mrf.mxu0
        %v2391 = vadd.f32 %v1349, %v2390
        %v2392 = vpop.f32.mrf.mxu0
        %2393 = vmatprep.mubr.bf16.mxu0 0
        %2394 = vmatmul.mubr.bf16.gmra.mxu0 %v2289
        %v2395 = vpop.f32.mrf.mxu0
        %v2396 = vadd.f32 %v1350, %v2395
        %v2397 = vpop.f32.mrf.mxu0
        %v2398 = vpop.f32.mrf.mxu0
        %v2399 = vadd.f32 %v1351, %v2398
        %v2400 = vpop.f32.mrf.mxu0
        %2401 = vmatprep.mubr.bf16.mxu0 0
        %2402 = vmatmul.mubr.bf16.gmra.mxu0 %v2292
        %v2403 = vpop.f32.mrf.mxu0
        %v2404 = vadd.f32 %v1352, %v2403
        %v2405 = vpop.f32.mrf.mxu0
        %v2406 = vpop.f32.mrf.mxu0
        %v2407 = vadd.f32 %v1353, %v2406
        %v2408 = vpop.f32.mrf.mxu0
        %2409 = vmatprep.mubr.bf16.mxu0 0
        %2410 = vmatmul.mubr.bf16.gmra.mxu0 %v2295
        %v2411 = vpop.f32.mrf.mxu0
        %v2412 = vadd.f32 %v1354, %v2411
        %v2413 = vpop.f32.mrf.mxu0
        %v2414 = vpop.f32.mrf.mxu0
        %v2415 = vadd.f32 %v1355, %v2414
        %v2416 = vpop.f32.mrf.mxu0
        %2417 = vdwg.mxu0
        %2418 = vmax.xlane.f32.xlu0 %v2356
        %v2419 = vpop.xlane.xlu0 %2418
        %2420 = vmax.xlane.f32.xlu0 %v2359
        %v2421 = vpop.xlane.xlu0 %2420
        %2422 = vmax.xlane.f32.xlu0 %v2364
        %v2423 = vpop.xlane.xlu0 %2422
        %2424 = vmax.xlane.f32.xlu0 %v2367
        %v2425 = vpop.xlane.xlu0 %2424
        %2426 = vmax.xlane.f32.xlu0 %v2372
        %v2427 = vpop.xlane.xlu0 %2426
        %2428 = vmax.xlane.f32.xlu0 %v2375
        %v2429 = vpop.xlane.xlu0 %2428
        %2430 = vmax.xlane.f32.xlu0 %v2380
        %v2431 = vpop.xlane.xlu0 %2430
        %2432 = vmax.xlane.f32.xlu0 %v2383
        %v2433 = vpop.xlane.xlu0 %2432
        %2434 = vmax.xlane.f32.xlu0 %v2388
        %v2435 = vpop.xlane.xlu0 %2434
        %2436 = vmax.xlane.f32.xlu0 %v2391
        %v2437 = vpop.xlane.xlu0 %2436
        %2438 = vmax.xlane.f32.xlu0 %v2396
        %v2439 = vpop.xlane.xlu0 %2438
        %2440 = vmax.xlane.f32.xlu0 %v2399
        %v2441 = vpop.xlane.xlu0 %2440
        %2442 = vmax.xlane.f32.xlu0 %v2404
        %v2443 = vpop.xlane.xlu0 %2442
        %2444 = vmax.xlane.f32.xlu0 %v2407
        %v2445 = vpop.xlane.xlu0 %2444
        %2446 = vmax.xlane.f32.xlu0 %v2412
        %v2447 = vpop.xlane.xlu0 %2446
        %2448 = vmax.xlane.f32.xlu0 %v2415
        %v2449 = vpop.xlane.xlu0 %2448
        %v2450 = vsub.f32 %v2356, %v2419
        %v2451 = vsub.f32 %v2359, %v2421
        %v2452 = vsub.f32 %v2364, %v2423
        %v2453 = vsub.f32 %v2367, %v2425
        %v2454 = vsub.f32 %v2372, %v2427
        %v2455 = vsub.f32 %v2375, %v2429
        %v2456 = vsub.f32 %v2380, %v2431
        %v2457 = vsub.f32 %v2383, %v2433
        %v2458 = vsub.f32 %v2388, %v2435
        %v2459 = vsub.f32 %v2391, %v2437
        %v2460 = vsub.f32 %v2396, %v2439
        %v2461 = vsub.f32 %v2399, %v2441
        %v2462 = vsub.f32 %v2404, %v2443
        %v2463 = vsub.f32 %v2407, %v2445
        %v2464 = vsub.f32 %v2412, %v2447
        %v2465 = vsub.f32 %v2415, %v2449
        %v2466 = vmul.f32 %v2450, 1.442695
        %v2467 = vpow.pop %v2466
        %v2468 = vmul.f32 %v2451, 1.442695
        %v2469 = vpow.pop %v2468
        %v2470 = vmul.f32 %v2452, 1.442695
        %v2471 = vpow.pop %v2470
        %v2472 = vmul.f32 %v2453, 1.442695
        %v2473 = vpow.pop %v2472
        %v2474 = vmul.f32 %v2454, 1.442695
        %v2475 = vpow.pop %v2474
        %v2476 = vmul.f32 %v2455, 1.442695
        %v2477 = vpow.pop %v2476
        %v2478 = vmul.f32 %v2456, 1.442695
        %v2479 = vpow.pop %v2478
        %v2480 = vmul.f32 %v2457, 1.442695
        %v2481 = vpow.pop %v2480
        %v2482 = vmul.f32 %v2458, 1.442695
        %v2483 = vpow.pop %v2482
        %v2484 = vmul.f32 %v2459, 1.442695
        %v2485 = vpow.pop %v2484
        %v2486 = vmul.f32 %v2460, 1.442695
        %v2487 = vpow.pop %v2486
        %v2488 = vmul.f32 %v2461, 1.442695
        %v2489 = vpow.pop %v2488
        %v2490 = vmul.f32 %v2462, 1.442695
        %v2491 = vpow.pop %v2490
        %v2492 = vmul.f32 %v2463, 1.442695
        %v2493 = vpow.pop %v2492
        %v2494 = vmul.f32 %v2464, 1.442695
        %v2495 = vpow.pop %v2494
        %v2496 = vmul.f32 %v2465, 1.442695
        %v2497 = vpow.pop %v2496
        %2498 = vadd.xlane.f32.xlu0 %v2467
        %v2499 = vpop.xlane.xlu0 %2498
        %2500 = vadd.xlane.f32.xlu0 %v2469
        %v2501 = vpop.xlane.xlu0 %2500
        %2502 = vadd.xlane.f32.xlu0 %v2471
        %v2503 = vpop.xlane.xlu0 %2502
        %2504 = vadd.xlane.f32.xlu0 %v2473
        %v2505 = vpop.xlane.xlu0 %2504
        %2506 = vadd.xlane.f32.xlu0 %v2475
        %v2507 = vpop.xlane.xlu0 %2506
        %2508 = vadd.xlane.f32.xlu0 %v2477
        %v2509 = vpop.xlane.xlu0 %2508
        %2510 = vadd.xlane.f32.xlu0 %v2479
        %v2511 = vpop.xlane.xlu0 %2510
        %2512 = vadd.xlane.f32.xlu0 %v2481
        %v2513 = vpop.xlane.xlu0 %2512
        %2514 = vadd.xlane.f32.xlu0 %v2483
        %v2515 = vpop.xlane.xlu0 %2514
        %2516 = vadd.xlane.f32.xlu0 %v2485
        %v2517 = vpop.xlane.xlu0 %2516
        %2518 = vadd.xlane.f32.xlu0 %v2487
        %v2519 = vpop.xlane.xlu0 %2518
        %2520 = vadd.xlane.f32.xlu0 %v2489
        %v2521 = vpop.xlane.xlu0 %2520
        %2522 = vadd.xlane.f32.xlu0 %v2491
        %v2523 = vpop.xlane.xlu0 %2522
        %2524 = vadd.xlane.f32.xlu0 %v2493
        %v2525 = vpop.xlane.xlu0 %2524
        %2526 = vadd.xlane.f32.xlu0 %v2495
        %v2527 = vpop.xlane.xlu0 %2526
        %2528 = vadd.xlane.f32.xlu0 %v2497
        %v2529 = vpop.xlane.xlu0 %2528
        %v2530 = vrcp.pop %v2499
        %v2531 = vrcp.pop %v2501
        %v2532 = vrcp.pop %v2503
        %v2533 = vrcp.pop %v2505
        %v2534 = vrcp.pop %v2507
        %v2535 = vrcp.pop %v2509
        %v2536 = vrcp.pop %v2511
        %v2537 = vrcp.pop %v2513
        %v2538 = vrcp.pop %v2515
        %v2539 = vrcp.pop %v2517
        %v2540 = vrcp.pop %v2519
        %v2541 = vrcp.pop %v2521
        %v2542 = vrcp.pop %v2523
        %v2543 = vrcp.pop %v2525
        %v2544 = vrcp.pop %v2527
        %v2545 = vrcp.pop %v2529
        %v2546 = vpack.c.bf16 %v2469, %v2467
        %v2547 = vpack.c.bf16 %v2473, %v2471
        %v2548 = vpack.c.bf16 %v2477, %v2475
        %v2549 = vpack.c.bf16 %v2481, %v2479
        %v2550 = vpack.c.bf16 %v2485, %v2483
        %v2551 = vpack.c.bf16 %v2489, %v2487
        %v2552 = vpack.c.bf16 %v2493, %v2491
        %v2553 = vpack.c.bf16 %v2497, %v2495
        %2554 = vrot.lane.b32.xlu0 %v1332, 96
        %v2555 = vpop.permute.xlu0 %2554
        %2556 = vrot.lane.b32.xlu0 %v1333, 96
        %v2557 = vpop.permute.xlu0 %2556
        %2558 = vrot.lane.b32.xlu0 %v1334, 96
        %v2559 = vpop.permute.xlu0 %2558
        %2560 = vrot.lane.b32.xlu0 %v1335, 96
        %v2561 = vpop.permute.xlu0 %2560
        %2562 = vrot.lane.b32.xlu0 %v1336, 96
        %v2563 = vpop.permute.xlu0 %2562
        %2564 = vrot.lane.b32.xlu0 %v1337, 96
        %v2565 = vpop.permute.xlu0 %2564
        %2566 = vrot.lane.b32.xlu0 %v1338, 96
        %v2567 = vpop.permute.xlu0 %2566
        %2568 = vrot.lane.b32.xlu0 %v1339, 96
        %v2569 = vpop.permute.xlu0 %2568
        %2578 = vmatprep.subr.bf16.mxu0 0
        %2579 = vmatpush1.bf16.msra.mxu0 %v2569
        %2580 = vmatprep.subr.bf16.mxu0 0
        %2581 = vmatpush1.bf16.msra.mxu0 %v2567
        %2582 = vmatprep.subr.bf16.mxu0 0
        %2583 = vmatpush1.bf16.msra.mxu0 %v2565
        %2584 = vmatprep.subr.bf16.mxu0 0
        %2585 = vmatpush1.bf16.msra.mxu0 %v2563
        %2586 = vmatprep.subr.bf16.mxu0 0
        %2587 = vmatpush1.bf16.msra.mxu0 %v2561
        %2588 = vmatprep.subr.bf16.mxu0 0
        %2589 = vmatpush1.bf16.msra.mxu0 %v2559
        %2590 = vmatprep.subr.bf16.mxu0 0
        %2591 = vmatpush1.bf16.msra.mxu0 %v2557
        %2592 = vmatprep.subr.bf16.mxu0 0
        %2593 = vmatpush1.bf16.msra.mxu0 %v2555
        %2594 = vmatprep.subr.bf16.mxu0 0
        %2595 = vmatpush2.bf16.msra.mxu0 0
        %2596 = vmatprep.subr.bf16.mxu0 0
        %2597 = vmatpush2.bf16.msra.mxu0 0
        %2598 = vmatprep.subr.bf16.mxu0 0
        %2599 = vmatpush2.bf16.msra.mxu0 0
        %2600 = vmatprep.subr.bf16.mxu0 0
        %2601 = vmatpush2.bf16.msra.mxu0 0
        %2602 = vmatprep.subr.bf16.mxu0 0
        %2603 = vmatpush2.bf16.msra.mxu0 0
        %2604 = vmatprep.subr.bf16.mxu0 0
        %2605 = vmatpush2.bf16.msra.mxu0 0
        %2606 = vmatprep.subr.bf16.mxu0 0
        %2607 = vmatpush2.bf16.msra.mxu0 0
        %2608 = vmatprep.subr.bf16.mxu0 0
        %2609 = vmatpush2.bf16.msra.mxu0 0
        %2610 = vmatprep.mubr.bf16.mxu0 0
        %2611 = vmatmul.mubr.bf16.gmra.mxu0 %v2546
        %v2612 = vpop.f32.mrf.mxu0
        %v2613 = vadd.f32 0.0, %v2612
        %v2614 = vpop.f32.mrf.mxu0
        %v2615 = vpop.f32.mrf.mxu0
        %v2616 = vadd.f32 0.0, %v2615
        %v2617 = vpop.f32.mrf.mxu0
        %2618 = vmatprep.mubr.bf16.mxu0 0
        %2619 = vmatmul.mubr.bf16.gmra.mxu0 %v2547
        %v2620 = vpop.f32.mrf.mxu0
        %v2621 = vadd.f32 0.0, %v2620
        %v2622 = vpop.f32.mrf.mxu0
        %v2623 = vpop.f32.mrf.mxu0
        %v2624 = vadd.f32 0.0, %v2623
        %v2625 = vpop.f32.mrf.mxu0
        %2626 = vmatprep.mubr.bf16.mxu0 0
        %2627 = vmatmul.mubr.bf16.gmra.mxu0 %v2548
        %v2628 = vpop.f32.mrf.mxu0
        %v2629 = vadd.f32 0.0, %v2628
        %v2630 = vpop.f32.mrf.mxu0
        %v2631 = vpop.f32.mrf.mxu0
        %v2632 = vadd.f32 0.0, %v2631
        %v2633 = vpop.f32.mrf.mxu0
        %2634 = vmatprep.mubr.bf16.mxu0 0
        %2635 = vmatmul.mubr.bf16.gmra.mxu0 %v2549
        %v2636 = vpop.f32.mrf.mxu0
        %v2637 = vadd.f32 0.0, %v2636
        %v2638 = vpop.f32.mrf.mxu0
        %v2639 = vpop.f32.mrf.mxu0
        %v2640 = vadd.f32 0.0, %v2639
        %v2641 = vpop.f32.mrf.mxu0
        %2642 = vmatprep.mubr.bf16.mxu0 0
        %2643 = vmatmul.mubr.bf16.gmra.mxu0 %v2550
        %v2644 = vpop.f32.mrf.mxu0
        %v2645 = vadd.f32 0.0, %v2644
        %v2646 = vpop.f32.mrf.mxu0
        %v2647 = vpop.f32.mrf.mxu0
        %v2648 = vadd.f32 0.0, %v2647
        %v2649 = vpop.f32.mrf.mxu0
        %2650 = vmatprep.mubr.bf16.mxu0 0
        %2651 = vmatmul.mubr.bf16.gmra.mxu0 %v2551
        %v2652 = vpop.f32.mrf.mxu0
        %v2653 = vadd.f32 0.0, %v2652
        %v2654 = vpop.f32.mrf.mxu0
        %v2655 = vpop.f32.mrf.mxu0
        %v2656 = vadd.f32 0.0, %v2655
        %v2657 = vpop.f32.mrf.mxu0
        %2658 = vmatprep.mubr.bf16.mxu0 0
        %2659 = vmatmul.mubr.bf16.gmra.mxu0 %v2552
        %v2660 = vpop.f32.mrf.mxu0
        %v2661 = vadd.f32 0.0, %v2660
        %v2662 = vpop.f32.mrf.mxu0
        %v2663 = vpop.f32.mrf.mxu0
        %v2664 = vadd.f32 0.0, %v2663
        %v2665 = vpop.f32.mrf.mxu0
        %2666 = vmatprep.mubr.bf16.mxu0 0
        %2667 = vmatmul.mubr.bf16.gmra.mxu0 %v2553
        %v2668 = vpop.f32.mrf.mxu0
        %v2669 = vadd.f32 0.0, %v2668
        %v2670 = vpop.f32.mrf.mxu0
        %v2671 = vpop.f32.mrf.mxu0
        %v2672 = vadd.f32 0.0, %v2671
        %v2673 = vpop.f32.mrf.mxu0
        %2674 = vdwg.mxu0
        %v2675 = vmul.f32 %v2613, %v2530
        %v2676 = vmul.f32 %v2616, %v2531
        %v2677 = vmul.f32 %v2621, %v2532
        %v2678 = vmul.f32 %v2624, %v2533
        %v2679 = vmul.f32 %v2629, %v2534
        %v2680 = vmul.f32 %v2632, %v2535
        %v2681 = vmul.f32 %v2637, %v2536
        %v2682 = vmul.f32 %v2640, %v2537
        %v2683 = vmul.f32 %v2645, %v2538
        %v2684 = vmul.f32 %v2648, %v2539
        %v2685 = vmul.f32 %v2653, %v2540
        %v2686 = vmul.f32 %v2656, %v2541
        %v2687 = vmul.f32 %v2661, %v2542
        %v2688 = vmul.f32 %v2664, %v2543
        %v2689 = vmul.f32 %v2669, %v2544
        %v2690 = vmul.f32 %v2672, %v2545
        %v2691 = vpack.c.bf16 %v2676, %v2675
        %v2692 = vpack.c.bf16 %v2678, %v2677
        %v2693 = vpack.c.bf16 %v2680, %v2679
        %v2694 = vpack.c.bf16 %v2682, %v2681
        %v2695 = vpack.c.bf16 %v2684, %v2683
        %v2696 = vpack.c.bf16 %v2686, %v2685
        %v2697 = vpack.c.bf16 %v2688, %v2687
        %v2698 = vpack.c.bf16 %v2690, %v2689
        %2699 = vrot.lane.b32.xlu0 %v1316, 80
        %v2700 = vpop.permute.xlu0 %2699
        %2701 = vrot.lane.b32.xlu0 %v1317, 80
        %v2702 = vpop.permute.xlu0 %2701
        %2703 = vrot.lane.b32.xlu0 %v1318, 80
        %v2704 = vpop.permute.xlu0 %2703
        %2705 = vrot.lane.b32.xlu0 %v1319, 80
        %v2706 = vpop.permute.xlu0 %2705
        %2707 = vrot.lane.b32.xlu0 %v1320, 80
        %v2708 = vpop.permute.xlu0 %2707
        %2709 = vrot.lane.b32.xlu0 %v1321, 80
        %v2710 = vpop.permute.xlu0 %2709
        %2711 = vrot.lane.b32.xlu0 %v1322, 80
        %v2712 = vpop.permute.xlu0 %2711
        %2713 = vrot.lane.b32.xlu0 %v1323, 80
        %v2714 = vpop.permute.xlu0 %2713
        %2715 = vrot.lane.b32.xlu0 %v1324, 80
        %v2716 = vpop.permute.xlu0 %2715
        %2717 = vrot.lane.b32.xlu0 %v1325, 80
        %v2718 = vpop.permute.xlu0 %2717
        %2719 = vrot.lane.b32.xlu0 %v1326, 80
        %v2720 = vpop.permute.xlu0 %2719
        %2721 = vrot.lane.b32.xlu0 %v1327, 80
        %v2722 = vpop.permute.xlu0 %2721
        %2723 = vrot.lane.b32.xlu0 %v1328, 80
        %v2724 = vpop.permute.xlu0 %2723
        %2725 = vrot.lane.b32.xlu0 %v1329, 80
        %v2726 = vpop.permute.xlu0 %2725
        %2727 = vrot.lane.b32.xlu0 %v1330, 80
        %v2728 = vpop.permute.xlu0 %2727
        %2729 = vrot.lane.b32.xlu0 %v1331, 80
        %v2730 = vpop.permute.xlu0 %2729
        %v2732 = vsel %vm1356, %v2700, 0
        %v2735 = vsel %vm1356, %v2702, 0
        %v2738 = vsel %vm1356, %v2704, 0
        %v2741 = vsel %vm1356, %v2706, 0
        %v2744 = vsel %vm1356, %v2708, 0
        %v2747 = vsel %vm1356, %v2710, 0
        %v2750 = vsel %vm1356, %v2712, 0
        %v2753 = vsel %vm1356, %v2714, 0
        %v2756 = vsel %vm1356, %v2716, 0
        %v2759 = vsel %vm1356, %v2718, 0
        %v2762 = vsel %vm1356, %v2720, 0
        %v2765 = vsel %vm1356, %v2722, 0
        %v2768 = vsel %vm1356, %v2724, 0
        %v2771 = vsel %vm1356, %v2726, 0
        %v2774 = vsel %vm1356, %v2728, 0
        %v2777 = vsel %vm1356, %v2730, 0
        %2779 = vmatprep.subr.bf16.mxu0 0
        %2780 = vmatpush1.bf16.xpose.msra.mxu0 %v2777
        %2781 = vmatprep.subr.bf16.mxu0 0
        %2782 = vmatpush1.bf16.xpose.msra.mxu0 %v2774
        %2783 = vmatprep.subr.bf16.mxu0 0
        %2784 = vmatpush1.bf16.xpose.msra.mxu0 %v2771
        %2785 = vmatprep.subr.bf16.mxu0 0
        %2786 = vmatpush1.bf16.xpose.msra.mxu0 %v2768
        %2787 = vmatprep.subr.bf16.mxu0 0
        %2788 = vmatpush1.bf16.xpose.msra.mxu0 %v2765
        %2789 = vmatprep.subr.bf16.mxu0 0
        %2790 = vmatpush1.bf16.xpose.msra.mxu0 %v2762
        %2791 = vmatprep.subr.bf16.mxu0 0
        %2792 = vmatpush1.bf16.xpose.msra.mxu0 %v2759
        %2793 = vmatprep.subr.bf16.mxu0 0
        %2794 = vmatpush1.bf16.xpose.msra.mxu0 %v2756
        %2795 = vmatprep.subr.bf16.mxu0 0
        %2796 = vmatpush2.bf16.xpose.msra.mxu0 0
        %2797 = vmatprep.subr.bf16.mxu0 0
        %2798 = vmatpush2.bf16.xpose.msra.mxu0 0
        %2799 = vmatprep.subr.bf16.mxu0 0
        %2800 = vmatpush2.bf16.xpose.msra.mxu0 0
        %2801 = vmatprep.subr.bf16.mxu0 0
        %2802 = vmatpush2.bf16.xpose.msra.mxu0 0
        %2803 = vmatprep.subr.bf16.mxu0 0
        %2804 = vmatpush2.bf16.xpose.msra.mxu0 0
        %2805 = vmatprep.subr.bf16.mxu0 0
        %2806 = vmatpush2.bf16.xpose.msra.mxu0 0
        %2807 = vmatprep.subr.bf16.mxu0 0
        %2808 = vmatpush2.bf16.xpose.msra.mxu0 0
        %2809 = vmatprep.subr.bf16.mxu0 0
        %2810 = vmatpush2.bf16.xpose.msra.mxu0 0
        %2811 = vmatprep.mubr.bf16.mxu0 0
        %2812 = vmatmul.mubr.bf16.gmra.mxu0 %v2732
        %v2813 = vpop.f32.mrf.mxu0
        %v2814 = vadd.f32 %v1340, %v2813
        %v2815 = vpop.f32.mrf.mxu0
        %v2816 = vpop.f32.mrf.mxu0
        %v2817 = vadd.f32 %v1341, %v2816
        %v2818 = vpop.f32.mrf.mxu0
        %2819 = vmatprep.mubr.bf16.mxu0 0
        %2820 = vmatmul.mubr.bf16.gmra.mxu0 %v2735
        %v2821 = vpop.f32.mrf.mxu0
        %v2822 = vadd.f32 %v1342, %v2821
        %v2823 = vpop.f32.mrf.mxu0
        %v2824 = vpop.f32.mrf.mxu0
        %v2825 = vadd.f32 %v1343, %v2824
        %v2826 = vpop.f32.mrf.mxu0
        %2827 = vmatprep.mubr.bf16.mxu0 0
        %2828 = vmatmul.mubr.bf16.gmra.mxu0 %v2738
        %v2829 = vpop.f32.mrf.mxu0
        %v2830 = vadd.f32 %v1344, %v2829
        %v2831 = vpop.f32.mrf.mxu0
        %v2832 = vpop.f32.mrf.mxu0
        %v2833 = vadd.f32 %v1345, %v2832
        %v2834 = vpop.f32.mrf.mxu0
        %2835 = vmatprep.mubr.bf16.mxu0 0
        %2836 = vmatmul.mubr.bf16.gmra.mxu0 %v2741
        %v2837 = vpop.f32.mrf.mxu0
        %v2838 = vadd.f32 %v1346, %v2837
        %v2839 = vpop.f32.mrf.mxu0
        %v2840 = vpop.f32.mrf.mxu0
        %v2841 = vadd.f32 %v1347, %v2840
        %v2842 = vpop.f32.mrf.mxu0
        %2843 = vmatprep.mubr.bf16.mxu0 0
        %2844 = vmatmul.mubr.bf16.gmra.mxu0 %v2744
        %v2845 = vpop.f32.mrf.mxu0
        %v2846 = vadd.f32 %v1348, %v2845
        %v2847 = vpop.f32.mrf.mxu0
        %v2848 = vpop.f32.mrf.mxu0
        %v2849 = vadd.f32 %v1349, %v2848
        %v2850 = vpop.f32.mrf.mxu0
        %2851 = vmatprep.mubr.bf16.mxu0 0
        %2852 = vmatmul.mubr.bf16.gmra.mxu0 %v2747
        %v2853 = vpop.f32.mrf.mxu0
        %v2854 = vadd.f32 %v1350, %v2853
        %v2855 = vpop.f32.mrf.mxu0
        %v2856 = vpop.f32.mrf.mxu0
        %v2857 = vadd.f32 %v1351, %v2856
        %v2858 = vpop.f32.mrf.mxu0
        %2859 = vmatprep.mubr.bf16.mxu0 0
        %2860 = vmatmul.mubr.bf16.gmra.mxu0 %v2750
        %v2861 = vpop.f32.mrf.mxu0
        %v2862 = vadd.f32 %v1352, %v2861
        %v2863 = vpop.f32.mrf.mxu0
        %v2864 = vpop.f32.mrf.mxu0
        %v2865 = vadd.f32 %v1353, %v2864
        %v2866 = vpop.f32.mrf.mxu0
        %2867 = vmatprep.mubr.bf16.mxu0 0
        %2868 = vmatmul.mubr.bf16.gmra.mxu0 %v2753
        %v2869 = vpop.f32.mrf.mxu0
        %v2870 = vadd.f32 %v1354, %v2869
        %v2871 = vpop.f32.mrf.mxu0
        %v2872 = vpop.f32.mrf.mxu0
        %v2873 = vadd.f32 %v1355, %v2872
        %v2874 = vpop.f32.mrf.mxu0
        %2875 = vdwg.mxu0
        %2876 = vmax.xlane.f32.xlu0 %v2814
        %v2877 = vpop.xlane.xlu0 %2876
        %2878 = vmax.xlane.f32.xlu0 %v2817
        %v2879 = vpop.xlane.xlu0 %2878
        %2880 = vmax.xlane.f32.xlu0 %v2822
        %v2881 = vpop.xlane.xlu0 %2880
        %2882 = vmax.xlane.f32.xlu0 %v2825
        %v2883 = vpop.xlane.xlu0 %2882
        %2884 = vmax.xlane.f32.xlu0 %v2830
        %v2885 = vpop.xlane.xlu0 %2884
        %2886 = vmax.xlane.f32.xlu0 %v2833
        %v2887 = vpop.xlane.xlu0 %2886
        %2888 = vmax.xlane.f32.xlu0 %v2838
        %v2889 = vpop.xlane.xlu0 %2888
        %2890 = vmax.xlane.f32.xlu0 %v2841
        %v2891 = vpop.xlane.xlu0 %2890
        %2892 = vmax.xlane.f32.xlu0 %v2846
        %v2893 = vpop.xlane.xlu0 %2892
        %2894 = vmax.xlane.f32.xlu0 %v2849
        %v2895 = vpop.xlane.xlu0 %2894
        %2896 = vmax.xlane.f32.xlu0 %v2854
        %v2897 = vpop.xlane.xlu0 %2896
        %2898 = vmax.xlane.f32.xlu0 %v2857
        %v2899 = vpop.xlane.xlu0 %2898
        %2900 = vmax.xlane.f32.xlu0 %v2862
        %v2901 = vpop.xlane.xlu0 %2900
        %2902 = vmax.xlane.f32.xlu0 %v2865
        %v2903 = vpop.xlane.xlu0 %2902
        %2904 = vmax.xlane.f32.xlu0 %v2870
        %v2905 = vpop.xlane.xlu0 %2904
        %2906 = vmax.xlane.f32.xlu0 %v2873
        %v2907 = vpop.xlane.xlu0 %2906
        %v2908 = vsub.f32 %v2814, %v2877
        %v2909 = vsub.f32 %v2817, %v2879
        %v2910 = vsub.f32 %v2822, %v2881
        %v2911 = vsub.f32 %v2825, %v2883
        %v2912 = vsub.f32 %v2830, %v2885
        %v2913 = vsub.f32 %v2833, %v2887
        %v2914 = vsub.f32 %v2838, %v2889
        %v2915 = vsub.f32 %v2841, %v2891
        %v2916 = vsub.f32 %v2846, %v2893
        %v2917 = vsub.f32 %v2849, %v2895
        %v2918 = vsub.f32 %v2854, %v2897
        %v2919 = vsub.f32 %v2857, %v2899
        %v2920 = vsub.f32 %v2862, %v2901
        %v2921 = vsub.f32 %v2865, %v2903
        %v2922 = vsub.f32 %v2870, %v2905
        %v2923 = vsub.f32 %v2873, %v2907
        %v2924 = vmul.f32 %v2908, 1.442695
        %v2925 = vpow.pop %v2924
        %v2926 = vmul.f32 %v2909, 1.442695
        %v2927 = vpow.pop %v2926
        %v2928 = vmul.f32 %v2910, 1.442695
        %v2929 = vpow.pop %v2928
        %v2930 = vmul.f32 %v2911, 1.442695
        %v2931 = vpow.pop %v2930
        %v2932 = vmul.f32 %v2912, 1.442695
        %v2933 = vpow.pop %v2932
        %v2934 = vmul.f32 %v2913, 1.442695
        %v2935 = vpow.pop %v2934
        %v2936 = vmul.f32 %v2914, 1.442695
        %v2937 = vpow.pop %v2936
        %v2938 = vmul.f32 %v2915, 1.442695
        %v2939 = vpow.pop %v2938
        %v2940 = vmul.f32 %v2916, 1.442695
        %v2941 = vpow.pop %v2940
        %v2942 = vmul.f32 %v2917, 1.442695
        %v2943 = vpow.pop %v2942
        %v2944 = vmul.f32 %v2918, 1.442695
        %v2945 = vpow.pop %v2944
        %v2946 = vmul.f32 %v2919, 1.442695
        %v2947 = vpow.pop %v2946
        %v2948 = vmul.f32 %v2920, 1.442695
        %v2949 = vpow.pop %v2948
        %v2950 = vmul.f32 %v2921, 1.442695
        %v2951 = vpow.pop %v2950
        %v2952 = vmul.f32 %v2922, 1.442695
        %v2953 = vpow.pop %v2952
        %v2954 = vmul.f32 %v2923, 1.442695
        %v2955 = vpow.pop %v2954
        %2956 = vadd.xlane.f32.xlu0 %v2925
        %v2957 = vpop.xlane.xlu0 %2956
        %2958 = vadd.xlane.f32.xlu0 %v2927
        %v2959 = vpop.xlane.xlu0 %2958
        %2960 = vadd.xlane.f32.xlu0 %v2929
        %v2961 = vpop.xlane.xlu0 %2960
        %2962 = vadd.xlane.f32.xlu0 %v2931
        %v2963 = vpop.xlane.xlu0 %2962
        %2964 = vadd.xlane.f32.xlu0 %v2933
        %v2965 = vpop.xlane.xlu0 %2964
        %2966 = vadd.xlane.f32.xlu0 %v2935
        %v2967 = vpop.xlane.xlu0 %2966
        %2968 = vadd.xlane.f32.xlu0 %v2937
        %v2969 = vpop.xlane.xlu0 %2968
        %2970 = vadd.xlane.f32.xlu0 %v2939
        %v2971 = vpop.xlane.xlu0 %2970
        %2972 = vadd.xlane.f32.xlu0 %v2941
        %v2973 = vpop.xlane.xlu0 %2972
        %2974 = vadd.xlane.f32.xlu0 %v2943
        %v2975 = vpop.xlane.xlu0 %2974
        %2976 = vadd.xlane.f32.xlu0 %v2945
        %v2977 = vpop.xlane.xlu0 %2976
        %2978 = vadd.xlane.f32.xlu0 %v2947
        %v2979 = vpop.xlane.xlu0 %2978
        %2980 = vadd.xlane.f32.xlu0 %v2949
        %v2981 = vpop.xlane.xlu0 %2980
        %2982 = vadd.xlane.f32.xlu0 %v2951
        %v2983 = vpop.xlane.xlu0 %2982
        %2984 = vadd.xlane.f32.xlu0 %v2953
        %v2985 = vpop.xlane.xlu0 %2984
        %2986 = vadd.xlane.f32.xlu0 %v2955
        %v2987 = vpop.xlane.xlu0 %2986
        %v2988 = vrcp.pop %v2957
        %v2989 = vrcp.pop %v2959
        %v2990 = vrcp.pop %v2961
        %v2991 = vrcp.pop %v2963
        %v2992 = vrcp.pop %v2965
        %v2993 = vrcp.pop %v2967
        %v2994 = vrcp.pop %v2969
        %v2995 = vrcp.pop %v2971
        %v2996 = vrcp.pop %v2973
        %v2997 = vrcp.pop %v2975
        %v2998 = vrcp.pop %v2977
        %v2999 = vrcp.pop %v2979
        %v3000 = vrcp.pop %v2981
        %v3001 = vrcp.pop %v2983
        %v3002 = vrcp.pop %v2985
        %v3003 = vrcp.pop %v2987
        %v3004 = vpack.c.bf16 %v2927, %v2925
        %v3005 = vpack.c.bf16 %v2931, %v2929
        %v3006 = vpack.c.bf16 %v2935, %v2933
        %v3007 = vpack.c.bf16 %v2939, %v2937
        %v3008 = vpack.c.bf16 %v2943, %v2941
        %v3009 = vpack.c.bf16 %v2947, %v2945
        %v3010 = vpack.c.bf16 %v2951, %v2949
        %v3011 = vpack.c.bf16 %v2955, %v2953
        %3012 = vrot.lane.b32.xlu0 %v1332, 80
        %v3013 = vpop.permute.xlu0 %3012
        %3014 = vrot.lane.b32.xlu0 %v1333, 80
        %v3015 = vpop.permute.xlu0 %3014
        %3016 = vrot.lane.b32.xlu0 %v1334, 80
        %v3017 = vpop.permute.xlu0 %3016
        %3018 = vrot.lane.b32.xlu0 %v1335, 80
        %v3019 = vpop.permute.xlu0 %3018
        %3020 = vrot.lane.b32.xlu0 %v1336, 80
        %v3021 = vpop.permute.xlu0 %3020
        %3022 = vrot.lane.b32.xlu0 %v1337, 80
        %v3023 = vpop.permute.xlu0 %3022
        %3024 = vrot.lane.b32.xlu0 %v1338, 80
        %v3025 = vpop.permute.xlu0 %3024
        %3026 = vrot.lane.b32.xlu0 %v1339, 80
        %v3027 = vpop.permute.xlu0 %3026
        %3036 = vmatprep.subr.bf16.mxu0 0
        %3037 = vmatpush1.bf16.msra.mxu0 %v3027
        %3038 = vmatprep.subr.bf16.mxu0 0
        %3039 = vmatpush1.bf16.msra.mxu0 %v3025
        %3040 = vmatprep.subr.bf16.mxu0 0
        %3041 = vmatpush1.bf16.msra.mxu0 %v3023
        %3042 = vmatprep.subr.bf16.mxu0 0
        %3043 = vmatpush1.bf16.msra.mxu0 %v3021
        %3044 = vmatprep.subr.bf16.mxu0 0
        %3045 = vmatpush1.bf16.msra.mxu0 %v3019
        %3046 = vmatprep.subr.bf16.mxu0 0
        %3047 = vmatpush1.bf16.msra.mxu0 %v3017
        %3048 = vmatprep.subr.bf16.mxu0 0
        %3049 = vmatpush1.bf16.msra.mxu0 %v3015
        %3050 = vmatprep.subr.bf16.mxu0 0
        %3051 = vmatpush1.bf16.msra.mxu0 %v3013
        %3052 = vmatprep.subr.bf16.mxu0 0
        %3053 = vmatpush2.bf16.msra.mxu0 0
        %3054 = vmatprep.subr.bf16.mxu0 0
        %3055 = vmatpush2.bf16.msra.mxu0 0
        %3056 = vmatprep.subr.bf16.mxu0 0
        %3057 = vmatpush2.bf16.msra.mxu0 0
        %3058 = vmatprep.subr.bf16.mxu0 0
        %3059 = vmatpush2.bf16.msra.mxu0 0
        %3060 = vmatprep.subr.bf16.mxu0 0
        %3061 = vmatpush2.bf16.msra.mxu0 0
        %3062 = vmatprep.subr.bf16.mxu0 0
        %3063 = vmatpush2.bf16.msra.mxu0 0
        %3064 = vmatprep.subr.bf16.mxu0 0
        %3065 = vmatpush2.bf16.msra.mxu0 0
        %3066 = vmatprep.subr.bf16.mxu0 0
        %3067 = vmatpush2.bf16.msra.mxu0 0
        %3068 = vmatprep.mubr.bf16.mxu0 0
        %3069 = vmatmul.mubr.bf16.gmra.mxu0 %v3004
        %v3070 = vpop.f32.mrf.mxu0
        %v3071 = vadd.f32 0.0, %v3070
        %v3072 = vpop.f32.mrf.mxu0
        %v3073 = vpop.f32.mrf.mxu0
        %v3074 = vadd.f32 0.0, %v3073
        %v3075 = vpop.f32.mrf.mxu0
        %3076 = vmatprep.mubr.bf16.mxu0 0
        %3077 = vmatmul.mubr.bf16.gmra.mxu0 %v3005
        %v3078 = vpop.f32.mrf.mxu0
        %v3079 = vadd.f32 0.0, %v3078
        %v3080 = vpop.f32.mrf.mxu0
        %v3081 = vpop.f32.mrf.mxu0
        %v3082 = vadd.f32 0.0, %v3081
        %v3083 = vpop.f32.mrf.mxu0
        %3084 = vmatprep.mubr.bf16.mxu0 0
        %3085 = vmatmul.mubr.bf16.gmra.mxu0 %v3006
        %v3086 = vpop.f32.mrf.mxu0
        %v3087 = vadd.f32 0.0, %v3086
        %v3088 = vpop.f32.mrf.mxu0
        %v3089 = vpop.f32.mrf.mxu0
        %v3090 = vadd.f32 0.0, %v3089
        %v3091 = vpop.f32.mrf.mxu0
        %3092 = vmatprep.mubr.bf16.mxu0 0
        %3093 = vmatmul.mubr.bf16.gmra.mxu0 %v3007
        %v3094 = vpop.f32.mrf.mxu0
        %v3095 = vadd.f32 0.0, %v3094
        %v3096 = vpop.f32.mrf.mxu0
        %v3097 = vpop.f32.mrf.mxu0
        %v3098 = vadd.f32 0.0, %v3097
        %v3099 = vpop.f32.mrf.mxu0
        %3100 = vmatprep.mubr.bf16.mxu0 0
        %3101 = vmatmul.mubr.bf16.gmra.mxu0 %v3008
        %v3102 = vpop.f32.mrf.mxu0
        %v3103 = vadd.f32 0.0, %v3102
        %v3104 = vpop.f32.mrf.mxu0
        %v3105 = vpop.f32.mrf.mxu0
        %v3106 = vadd.f32 0.0, %v3105
        %v3107 = vpop.f32.mrf.mxu0
        %3108 = vmatprep.mubr.bf16.mxu0 0
        %3109 = vmatmul.mubr.bf16.gmra.mxu0 %v3009
        %v3110 = vpop.f32.mrf.mxu0
        %v3111 = vadd.f32 0.0, %v3110
        %v3112 = vpop.f32.mrf.mxu0
        %v3113 = vpop.f32.mrf.mxu0
        %v3114 = vadd.f32 0.0, %v3113
        %v3115 = vpop.f32.mrf.mxu0
        %3116 = vmatprep.mubr.bf16.mxu0 0
        %3117 = vmatmul.mubr.bf16.gmra.mxu0 %v3010
        %v3118 = vpop.f32.mrf.mxu0
        %v3119 = vadd.f32 0.0, %v3118
        %v3120 = vpop.f32.mrf.mxu0
        %v3121 = vpop.f32.mrf.mxu0
        %v3122 = vadd.f32 0.0, %v3121
        %v3123 = vpop.f32.mrf.mxu0
        %3124 = vmatprep.mubr.bf16.mxu0 0
        %3125 = vmatmul.mubr.bf16.gmra.mxu0 %v3011
        %v3126 = vpop.f32.mrf.mxu0
        %v3127 = vadd.f32 0.0, %v3126
        %v3128 = vpop.f32.mrf.mxu0
        %v3129 = vpop.f32.mrf.mxu0
        %v3130 = vadd.f32 0.0, %v3129
        %v3131 = vpop.f32.mrf.mxu0
        %3132 = vdwg.mxu0
        %v3133 = vmul.f32 %v3071, %v2988
        %v3134 = vmul.f32 %v3074, %v2989
        %v3135 = vmul.f32 %v3079, %v2990
        %v3136 = vmul.f32 %v3082, %v2991
        %v3137 = vmul.f32 %v3087, %v2992
        %v3138 = vmul.f32 %v3090, %v2993
        %v3139 = vmul.f32 %v3095, %v2994
        %v3140 = vmul.f32 %v3098, %v2995
        %v3141 = vmul.f32 %v3103, %v2996
        %v3142 = vmul.f32 %v3106, %v2997
        %v3143 = vmul.f32 %v3111, %v2998
        %v3144 = vmul.f32 %v3114, %v2999
        %v3145 = vmul.f32 %v3119, %v3000
        %v3146 = vmul.f32 %v3122, %v3001
        %v3147 = vmul.f32 %v3127, %v3002
        %v3148 = vmul.f32 %v3130, %v3003
        %v3149 = vpack.c.bf16 %v3134, %v3133
        %v3150 = vpack.c.bf16 %v3136, %v3135
        %v3151 = vpack.c.bf16 %v3138, %v3137
        %v3152 = vpack.c.bf16 %v3140, %v3139
        %v3153 = vpack.c.bf16 %v3142, %v3141
        %v3154 = vpack.c.bf16 %v3144, %v3143
        %v3155 = vpack.c.bf16 %v3146, %v3145
        %v3156 = vpack.c.bf16 %v3148, %v3147
        %3157 = vrot.lane.b32.xlu0 %v1316, 64
        %v3158 = vpop.permute.xlu0 %3157
        %3159 = vrot.lane.b32.xlu0 %v1317, 64
        %v3160 = vpop.permute.xlu0 %3159
        %3161 = vrot.lane.b32.xlu0 %v1318, 64
        %v3162 = vpop.permute.xlu0 %3161
        %3163 = vrot.lane.b32.xlu0 %v1319, 64
        %v3164 = vpop.permute.xlu0 %3163
        %3165 = vrot.lane.b32.xlu0 %v1320, 64
        %v3166 = vpop.permute.xlu0 %3165
        %3167 = vrot.lane.b32.xlu0 %v1321, 64
        %v3168 = vpop.permute.xlu0 %3167
        %3169 = vrot.lane.b32.xlu0 %v1322, 64
        %v3170 = vpop.permute.xlu0 %3169
        %3171 = vrot.lane.b32.xlu0 %v1323, 64
        %v3172 = vpop.permute.xlu0 %3171
        %3173 = vrot.lane.b32.xlu0 %v1324, 64
        %v3174 = vpop.permute.xlu0 %3173
        %3175 = vrot.lane.b32.xlu0 %v1325, 64
        %v3176 = vpop.permute.xlu0 %3175
        %3177 = vrot.lane.b32.xlu0 %v1326, 64
        %v3178 = vpop.permute.xlu0 %3177
        %3179 = vrot.lane.b32.xlu0 %v1327, 64
        %v3180 = vpop.permute.xlu0 %3179
        %3181 = vrot.lane.b32.xlu0 %v1328, 64
        %v3182 = vpop.permute.xlu0 %3181
        %3183 = vrot.lane.b32.xlu0 %v1329, 64
        %v3184 = vpop.permute.xlu0 %3183
        %3185 = vrot.lane.b32.xlu0 %v1330, 64
        %v3186 = vpop.permute.xlu0 %3185
        %3187 = vrot.lane.b32.xlu0 %v1331, 64
        %v3188 = vpop.permute.xlu0 %3187
        %v3190 = vsel %vm1356, %v3158, 0
        %v3193 = vsel %vm1356, %v3160, 0
        %v3196 = vsel %vm1356, %v3162, 0
        %v3199 = vsel %vm1356, %v3164, 0
        %v3202 = vsel %vm1356, %v3166, 0
        %v3205 = vsel %vm1356, %v3168, 0
        %v3208 = vsel %vm1356, %v3170, 0
        %v3211 = vsel %vm1356, %v3172, 0
        %v3214 = vsel %vm1356, %v3174, 0
        %v3217 = vsel %vm1356, %v3176, 0
        %v3220 = vsel %vm1356, %v3178, 0
        %v3223 = vsel %vm1356, %v3180, 0
        %v3226 = vsel %vm1356, %v3182, 0
        %v3229 = vsel %vm1356, %v3184, 0
        %v3232 = vsel %vm1356, %v3186, 0
        %v3235 = vsel %vm1356, %v3188, 0
        %3237 = vmatprep.subr.bf16.mxu0 0
        %3238 = vmatpush1.bf16.xpose.msra.mxu0 %v3235
        %3239 = vmatprep.subr.bf16.mxu0 0
        %3240 = vmatpush1.bf16.xpose.msra.mxu0 %v3232
        %3241 = vmatprep.subr.bf16.mxu0 0
        %3242 = vmatpush1.bf16.xpose.msra.mxu0 %v3229
        %3243 = vmatprep.subr.bf16.mxu0 0
        %3244 = vmatpush1.bf16.xpose.msra.mxu0 %v3226
        %3245 = vmatprep.subr.bf16.mxu0 0
        %3246 = vmatpush1.bf16.xpose.msra.mxu0 %v3223
        %3247 = vmatprep.subr.bf16.mxu0 0
        %3248 = vmatpush1.bf16.xpose.msra.mxu0 %v3220
        %3249 = vmatprep.subr.bf16.mxu0 0
        %3250 = vmatpush1.bf16.xpose.msra.mxu0 %v3217
        %3251 = vmatprep.subr.bf16.mxu0 0
        %3252 = vmatpush1.bf16.xpose.msra.mxu0 %v3214
        %3253 = vmatprep.subr.bf16.mxu0 0
        %3254 = vmatpush2.bf16.xpose.msra.mxu0 0
        %3255 = vmatprep.subr.bf16.mxu0 0
        %3256 = vmatpush2.bf16.xpose.msra.mxu0 0
        %3257 = vmatprep.subr.bf16.mxu0 0
        %3258 = vmatpush2.bf16.xpose.msra.mxu0 0
        %3259 = vmatprep.subr.bf16.mxu0 0
        %3260 = vmatpush2.bf16.xpose.msra.mxu0 0
        %3261 = vmatprep.subr.bf16.mxu0 0
        %3262 = vmatpush2.bf16.xpose.msra.mxu0 0
        %3263 = vmatprep.subr.bf16.mxu0 0
        %3264 = vmatpush2.bf16.xpose.msra.mxu0 0
        %3265 = vmatprep.subr.bf16.mxu0 0
        %3266 = vmatpush2.bf16.xpose.msra.mxu0 0
        %3267 = vmatprep.subr.bf16.mxu0 0
        %3268 = vmatpush2.bf16.xpose.msra.mxu0 0
        %3269 = vmatprep.mubr.bf16.mxu0 0
        %3270 = vmatmul.mubr.bf16.gmra.mxu0 %v3190
        %v3271 = vpop.f32.mrf.mxu0
        %v3272 = vadd.f32 %v1340, %v3271
        %v3273 = vpop.f32.mrf.mxu0
        %v3274 = vpop.f32.mrf.mxu0
        %v3275 = vadd.f32 %v1341, %v3274
        %v3276 = vpop.f32.mrf.mxu0
        %3277 = vmatprep.mubr.bf16.mxu0 0
        %3278 = vmatmul.mubr.bf16.gmra.mxu0 %v3193
        %v3279 = vpop.f32.mrf.mxu0
        %v3280 = vadd.f32 %v1342, %v3279
        %v3281 = vpop.f32.mrf.mxu0
        %v3282 = vpop.f32.mrf.mxu0
        %v3283 = vadd.f32 %v1343, %v3282
        %v3284 = vpop.f32.mrf.mxu0
        %3285 = vmatprep.mubr.bf16.mxu0 0
        %3286 = vmatmul.mubr.bf16.gmra.mxu0 %v3196
        %v3287 = vpop.f32.mrf.mxu0
        %v3288 = vadd.f32 %v1344, %v3287
        %v3289 = vpop.f32.mrf.mxu0
        %v3290 = vpop.f32.mrf.mxu0
        %v3291 = vadd.f32 %v1345, %v3290
        %v3292 = vpop.f32.mrf.mxu0
        %3293 = vmatprep.mubr.bf16.mxu0 0
        %3294 = vmatmul.mubr.bf16.gmra.mxu0 %v3199
        %v3295 = vpop.f32.mrf.mxu0
        %v3296 = vadd.f32 %v1346, %v3295
        %v3297 = vpop.f32.mrf.mxu0
        %v3298 = vpop.f32.mrf.mxu0
        %v3299 = vadd.f32 %v1347, %v3298
        %v3300 = vpop.f32.mrf.mxu0
        %3301 = vmatprep.mubr.bf16.mxu0 0
        %3302 = vmatmul.mubr.bf16.gmra.mxu0 %v3202
        %v3303 = vpop.f32.mrf.mxu0
        %v3304 = vadd.f32 %v1348, %v3303
        %v3305 = vpop.f32.mrf.mxu0
        %v3306 = vpop.f32.mrf.mxu0
        %v3307 = vadd.f32 %v1349, %v3306
        %v3308 = vpop.f32.mrf.mxu0
        %3309 = vmatprep.mubr.bf16.mxu0 0
        %3310 = vmatmul.mubr.bf16.gmra.mxu0 %v3205
        %v3311 = vpop.f32.mrf.mxu0
        %v3312 = vadd.f32 %v1350, %v3311
        %v3313 = vpop.f32.mrf.mxu0
        %v3314 = vpop.f32.mrf.mxu0
        %v3315 = vadd.f32 %v1351, %v3314
        %v3316 = vpop.f32.mrf.mxu0
        %3317 = vmatprep.mubr.bf16.mxu0 0
        %3318 = vmatmul.mubr.bf16.gmra.mxu0 %v3208
        %v3319 = vpop.f32.mrf.mxu0
        %v3320 = vadd.f32 %v1352, %v3319
        %v3321 = vpop.f32.mrf.mxu0
        %v3322 = vpop.f32.mrf.mxu0
        %v3323 = vadd.f32 %v1353, %v3322
        %v3324 = vpop.f32.mrf.mxu0
        %3325 = vmatprep.mubr.bf16.mxu0 0
        %3326 = vmatmul.mubr.bf16.gmra.mxu0 %v3211
        %v3327 = vpop.f32.mrf.mxu0
        %v3328 = vadd.f32 %v1354, %v3327
        %v3329 = vpop.f32.mrf.mxu0
        %v3330 = vpop.f32.mrf.mxu0
        %v3331 = vadd.f32 %v1355, %v3330
        %v3332 = vpop.f32.mrf.mxu0
        %3333 = vdwg.mxu0
        %3334 = vmax.xlane.f32.xlu0 %v3272
        %v3335 = vpop.xlane.xlu0 %3334
        %3336 = vmax.xlane.f32.xlu0 %v3275
        %v3337 = vpop.xlane.xlu0 %3336
        %3338 = vmax.xlane.f32.xlu0 %v3280
        %v3339 = vpop.xlane.xlu0 %3338
        %3340 = vmax.xlane.f32.xlu0 %v3283
        %v3341 = vpop.xlane.xlu0 %3340
        %3342 = vmax.xlane.f32.xlu0 %v3288
        %v3343 = vpop.xlane.xlu0 %3342
        %3344 = vmax.xlane.f32.xlu0 %v3291
        %v3345 = vpop.xlane.xlu0 %3344
        %3346 = vmax.xlane.f32.xlu0 %v3296
        %v3347 = vpop.xlane.xlu0 %3346
        %3348 = vmax.xlane.f32.xlu0 %v3299
        %v3349 = vpop.xlane.xlu0 %3348
        %3350 = vmax.xlane.f32.xlu0 %v3304
        %v3351 = vpop.xlane.xlu0 %3350
        %3352 = vmax.xlane.f32.xlu0 %v3307
        %v3353 = vpop.xlane.xlu0 %3352
        %3354 = vmax.xlane.f32.xlu0 %v3312
        %v3355 = vpop.xlane.xlu0 %3354
        %3356 = vmax.xlane.f32.xlu0 %v3315
        %v3357 = vpop.xlane.xlu0 %3356
        %3358 = vmax.xlane.f32.xlu0 %v3320
        %v3359 = vpop.xlane.xlu0 %3358
        %3360 = vmax.xlane.f32.xlu0 %v3323
        %v3361 = vpop.xlane.xlu0 %3360
        %3362 = vmax.xlane.f32.xlu0 %v3328
        %v3363 = vpop.xlane.xlu0 %3362
        %3364 = vmax.xlane.f32.xlu0 %v3331
        %v3365 = vpop.xlane.xlu0 %3364
        %v3366 = vsub.f32 %v3272, %v3335
        %v3367 = vsub.f32 %v3275, %v3337
        %v3368 = vsub.f32 %v3280, %v3339
        %v3369 = vsub.f32 %v3283, %v3341
        %v3370 = vsub.f32 %v3288, %v3343
        %v3371 = vsub.f32 %v3291, %v3345
        %v3372 = vsub.f32 %v3296, %v3347
        %v3373 = vsub.f32 %v3299, %v3349
        %v3374 = vsub.f32 %v3304, %v3351
        %v3375 = vsub.f32 %v3307, %v3353
        %v3376 = vsub.f32 %v3312, %v3355
        %v3377 = vsub.f32 %v3315, %v3357
        %v3378 = vsub.f32 %v3320, %v3359
        %v3379 = vsub.f32 %v3323, %v3361
        %v3380 = vsub.f32 %v3328, %v3363
        %v3381 = vsub.f32 %v3331, %v3365
        %v3382 = vmul.f32 %v3366, 1.442695
        %v3383 = vpow.pop %v3382
        %v3384 = vmul.f32 %v3367, 1.442695
        %v3385 = vpow.pop %v3384
        %v3386 = vmul.f32 %v3368, 1.442695
        %v3387 = vpow.pop %v3386
        %v3388 = vmul.f32 %v3369, 1.442695
        %v3389 = vpow.pop %v3388
        %v3390 = vmul.f32 %v3370, 1.442695
        %v3391 = vpow.pop %v3390
        %v3392 = vmul.f32 %v3371, 1.442695
        %v3393 = vpow.pop %v3392
        %v3394 = vmul.f32 %v3372, 1.442695
        %v3395 = vpow.pop %v3394
        %v3396 = vmul.f32 %v3373, 1.442695
        %v3397 = vpow.pop %v3396
        %v3398 = vmul.f32 %v3374, 1.442695
        %v3399 = vpow.pop %v3398
        %v3400 = vmul.f32 %v3375, 1.442695
        %v3401 = vpow.pop %v3400
        %v3402 = vmul.f32 %v3376, 1.442695
        %v3403 = vpow.pop %v3402
        %v3404 = vmul.f32 %v3377, 1.442695
        %v3405 = vpow.pop %v3404
        %v3406 = vmul.f32 %v3378, 1.442695
        %v3407 = vpow.pop %v3406
        %v3408 = vmul.f32 %v3379, 1.442695
        %v3409 = vpow.pop %v3408
        %v3410 = vmul.f32 %v3380, 1.442695
        %v3411 = vpow.pop %v3410
        %v3412 = vmul.f32 %v3381, 1.442695
        %v3413 = vpow.pop %v3412
        %3414 = vadd.xlane.f32.xlu0 %v3383
        %v3415 = vpop.xlane.xlu0 %3414
        %3416 = vadd.xlane.f32.xlu0 %v3385
        %v3417 = vpop.xlane.xlu0 %3416
        %3418 = vadd.xlane.f32.xlu0 %v3387
        %v3419 = vpop.xlane.xlu0 %3418
        %3420 = vadd.xlane.f32.xlu0 %v3389
        %v3421 = vpop.xlane.xlu0 %3420
        %3422 = vadd.xlane.f32.xlu0 %v3391
        %v3423 = vpop.xlane.xlu0 %3422
        %3424 = vadd.xlane.f32.xlu0 %v3393
        %v3425 = vpop.xlane.xlu0 %3424
        %3426 = vadd.xlane.f32.xlu0 %v3395
        %v3427 = vpop.xlane.xlu0 %3426
        %3428 = vadd.xlane.f32.xlu0 %v3397
        %v3429 = vpop.xlane.xlu0 %3428
        %3430 = vadd.xlane.f32.xlu0 %v3399
        %v3431 = vpop.xlane.xlu0 %3430
        %3432 = vadd.xlane.f32.xlu0 %v3401
        %v3433 = vpop.xlane.xlu0 %3432
        %3434 = vadd.xlane.f32.xlu0 %v3403
        %v3435 = vpop.xlane.xlu0 %3434
        %3436 = vadd.xlane.f32.xlu0 %v3405
        %v3437 = vpop.xlane.xlu0 %3436
        %3438 = vadd.xlane.f32.xlu0 %v3407
        %v3439 = vpop.xlane.xlu0 %3438
        %3440 = vadd.xlane.f32.xlu0 %v3409
        %v3441 = vpop.xlane.xlu0 %3440
        %3442 = vadd.xlane.f32.xlu0 %v3411
        %v3443 = vpop.xlane.xlu0 %3442
        %3444 = vadd.xlane.f32.xlu0 %v3413
        %v3445 = vpop.xlane.xlu0 %3444
        %v3446 = vrcp.pop %v3415
        %v3447 = vrcp.pop %v3417
        %v3448 = vrcp.pop %v3419
        %v3449 = vrcp.pop %v3421
        %v3450 = vrcp.pop %v3423
        %v3451 = vrcp.pop %v3425
        %v3452 = vrcp.pop %v3427
        %v3453 = vrcp.pop %v3429
        %v3454 = vrcp.pop %v3431
        %v3455 = vrcp.pop %v3433
        %v3456 = vrcp.pop %v3435
        %v3457 = vrcp.pop %v3437
        %v3458 = vrcp.pop %v3439
        %v3459 = vrcp.pop %v3441
        %v3460 = vrcp.pop %v3443
        %v3461 = vrcp.pop %v3445
        %v3462 = vpack.c.bf16 %v3385, %v3383
        %v3463 = vpack.c.bf16 %v3389, %v3387
        %v3464 = vpack.c.bf16 %v3393, %v3391
        %v3465 = vpack.c.bf16 %v3397, %v3395
        %v3466 = vpack.c.bf16 %v3401, %v3399
        %v3467 = vpack.c.bf16 %v3405, %v3403
        %v3468 = vpack.c.bf16 %v3409, %v3407
        %v3469 = vpack.c.bf16 %v3413, %v3411
        %3470 = vrot.lane.b32.xlu0 %v1332, 64
        %v3471 = vpop.permute.xlu0 %3470
        %3472 = vrot.lane.b32.xlu0 %v1333, 64
        %v3473 = vpop.permute.xlu0 %3472
        %3474 = vrot.lane.b32.xlu0 %v1334, 64
        %v3475 = vpop.permute.xlu0 %3474
        %3476 = vrot.lane.b32.xlu0 %v1335, 64
        %v3477 = vpop.permute.xlu0 %3476
        %3478 = vrot.lane.b32.xlu0 %v1336, 64
        %v3479 = vpop.permute.xlu0 %3478
        %3480 = vrot.lane.b32.xlu0 %v1337, 64
        %v3481 = vpop.permute.xlu0 %3480
        %3482 = vrot.lane.b32.xlu0 %v1338, 64
        %v3483 = vpop.permute.xlu0 %3482
        %3484 = vrot.lane.b32.xlu0 %v1339, 64
        %v3485 = vpop.permute.xlu0 %3484
        %3494 = vmatprep.subr.bf16.mxu0 0
        %3495 = vmatpush1.bf16.msra.mxu0 %v3485
        %3496 = vmatprep.subr.bf16.mxu0 0
        %3497 = vmatpush1.bf16.msra.mxu0 %v3483
        %3498 = vmatprep.subr.bf16.mxu0 0
        %3499 = vmatpush1.bf16.msra.mxu0 %v3481
        %3500 = vmatprep.subr.bf16.mxu0 0
        %3501 = vmatpush1.bf16.msra.mxu0 %v3479
        %3502 = vmatprep.subr.bf16.mxu0 0
        %3503 = vmatpush1.bf16.msra.mxu0 %v3477
        %3504 = vmatprep.subr.bf16.mxu0 0
        %3505 = vmatpush1.bf16.msra.mxu0 %v3475
        %3506 = vmatprep.subr.bf16.mxu0 0
        %3507 = vmatpush1.bf16.msra.mxu0 %v3473
        %3508 = vmatprep.subr.bf16.mxu0 0
        %3509 = vmatpush1.bf16.msra.mxu0 %v3471
        %3510 = vmatprep.subr.bf16.mxu0 0
        %3511 = vmatpush2.bf16.msra.mxu0 0
        %3512 = vmatprep.subr.bf16.mxu0 0
        %3513 = vmatpush2.bf16.msra.mxu0 0
        %3514 = vmatprep.subr.bf16.mxu0 0
        %3515 = vmatpush2.bf16.msra.mxu0 0
        %3516 = vmatprep.subr.bf16.mxu0 0
        %3517 = vmatpush2.bf16.msra.mxu0 0
        %3518 = vmatprep.subr.bf16.mxu0 0
        %3519 = vmatpush2.bf16.msra.mxu0 0
        %3520 = vmatprep.subr.bf16.mxu0 0
        %3521 = vmatpush2.bf16.msra.mxu0 0
        %3522 = vmatprep.subr.bf16.mxu0 0
        %3523 = vmatpush2.bf16.msra.mxu0 0
        %3524 = vmatprep.subr.bf16.mxu0 0
        %3525 = vmatpush2.bf16.msra.mxu0 0
        %3526 = vmatprep.mubr.bf16.mxu0 0
        %3527 = vmatmul.mubr.bf16.gmra.mxu0 %v3462
        %v3528 = vpop.f32.mrf.mxu0
        %v3529 = vadd.f32 0.0, %v3528
        %v3530 = vpop.f32.mrf.mxu0
        %v3531 = vpop.f32.mrf.mxu0
        %v3532 = vadd.f32 0.0, %v3531
        %v3533 = vpop.f32.mrf.mxu0
        %3534 = vmatprep.mubr.bf16.mxu0 0
        %3535 = vmatmul.mubr.bf16.gmra.mxu0 %v3463
        %v3536 = vpop.f32.mrf.mxu0
        %v3537 = vadd.f32 0.0, %v3536
        %v3538 = vpop.f32.mrf.mxu0
        %v3539 = vpop.f32.mrf.mxu0
        %v3540 = vadd.f32 0.0, %v3539
        %v3541 = vpop.f32.mrf.mxu0
        %3542 = vmatprep.mubr.bf16.mxu0 0
        %3543 = vmatmul.mubr.bf16.gmra.mxu0 %v3464
        %v3544 = vpop.f32.mrf.mxu0
        %v3545 = vadd.f32 0.0, %v3544
        %v3546 = vpop.f32.mrf.mxu0
        %v3547 = vpop.f32.mrf.mxu0
        %v3548 = vadd.f32 0.0, %v3547
        %v3549 = vpop.f32.mrf.mxu0
        %3550 = vmatprep.mubr.bf16.mxu0 0
        %3551 = vmatmul.mubr.bf16.gmra.mxu0 %v3465
        %v3552 = vpop.f32.mrf.mxu0
        %v3553 = vadd.f32 0.0, %v3552
        %v3554 = vpop.f32.mrf.mxu0
        %v3555 = vpop.f32.mrf.mxu0
        %v3556 = vadd.f32 0.0, %v3555
        %v3557 = vpop.f32.mrf.mxu0
        %3558 = vmatprep.mubr.bf16.mxu0 0
        %3559 = vmatmul.mubr.bf16.gmra.mxu0 %v3466
        %v3560 = vpop.f32.mrf.mxu0
        %v3561 = vadd.f32 0.0, %v3560
        %v3562 = vpop.f32.mrf.mxu0
        %v3563 = vpop.f32.mrf.mxu0
        %v3564 = vadd.f32 0.0, %v3563
        %v3565 = vpop.f32.mrf.mxu0
        %3566 = vmatprep.mubr.bf16.mxu0 0
        %3567 = vmatmul.mubr.bf16.gmra.mxu0 %v3467
        %v3568 = vpop.f32.mrf.mxu0
        %v3569 = vadd.f32 0.0, %v3568
        %v3570 = vpop.f32.mrf.mxu0
        %v3571 = vpop.f32.mrf.mxu0
        %v3572 = vadd.f32 0.0, %v3571
        %v3573 = vpop.f32.mrf.mxu0
        %3574 = vmatprep.mubr.bf16.mxu0 0
        %3575 = vmatmul.mubr.bf16.gmra.mxu0 %v3468
        %v3576 = vpop.f32.mrf.mxu0
        %v3577 = vadd.f32 0.0, %v3576
        %v3578 = vpop.f32.mrf.mxu0
        %v3579 = vpop.f32.mrf.mxu0
        %v3580 = vadd.f32 0.0, %v3579
        %v3581 = vpop.f32.mrf.mxu0
        %3582 = vmatprep.mubr.bf16.mxu0 0
        %3583 = vmatmul.mubr.bf16.gmra.mxu0 %v3469
        %v3584 = vpop.f32.mrf.mxu0
        %v3585 = vadd.f32 0.0, %v3584
        %v3586 = vpop.f32.mrf.mxu0
        %v3587 = vpop.f32.mrf.mxu0
        %v3588 = vadd.f32 0.0, %v3587
        %v3589 = vpop.f32.mrf.mxu0
        %3590 = vdwg.mxu0
        %v3591 = vmul.f32 %v3529, %v3446
        %v3592 = vmul.f32 %v3532, %v3447
        %v3593 = vmul.f32 %v3537, %v3448
        %v3594 = vmul.f32 %v3540, %v3449
        %v3595 = vmul.f32 %v3545, %v3450
        %v3596 = vmul.f32 %v3548, %v3451
        %v3597 = vmul.f32 %v3553, %v3452
        %v3598 = vmul.f32 %v3556, %v3453
        %v3599 = vmul.f32 %v3561, %v3454
        %v3600 = vmul.f32 %v3564, %v3455
        %v3601 = vmul.f32 %v3569, %v3456
        %v3602 = vmul.f32 %v3572, %v3457
        %v3603 = vmul.f32 %v3577, %v3458
        %v3604 = vmul.f32 %v3580, %v3459
        %v3605 = vmul.f32 %v3585, %v3460
        %v3606 = vmul.f32 %v3588, %v3461
        %v3607 = vpack.c.bf16 %v3592, %v3591
        %v3608 = vpack.c.bf16 %v3594, %v3593
        %v3609 = vpack.c.bf16 %v3596, %v3595
        %v3610 = vpack.c.bf16 %v3598, %v3597
        %v3611 = vpack.c.bf16 %v3600, %v3599
        %v3612 = vpack.c.bf16 %v3602, %v3601
        %v3613 = vpack.c.bf16 %v3604, %v3603
        %v3614 = vpack.c.bf16 %v3606, %v3605
        %3615 = vrot.lane.b32.xlu0 %v1316, 48
        %v3616 = vpop.permute.xlu0 %3615
        %3617 = vrot.lane.b32.xlu0 %v1317, 48
        %v3618 = vpop.permute.xlu0 %3617
        %3619 = vrot.lane.b32.xlu0 %v1318, 48
        %v3620 = vpop.permute.xlu0 %3619
        %3621 = vrot.lane.b32.xlu0 %v1319, 48
        %v3622 = vpop.permute.xlu0 %3621
        %3623 = vrot.lane.b32.xlu0 %v1320, 48
        %v3624 = vpop.permute.xlu0 %3623
        %3625 = vrot.lane.b32.xlu0 %v1321, 48
        %v3626 = vpop.permute.xlu0 %3625
        %3627 = vrot.lane.b32.xlu0 %v1322, 48
        %v3628 = vpop.permute.xlu0 %3627
        %3629 = vrot.lane.b32.xlu0 %v1323, 48
        %v3630 = vpop.permute.xlu0 %3629
        %3631 = vrot.lane.b32.xlu0 %v1324, 48
        %v3632 = vpop.permute.xlu0 %3631
        %3633 = vrot.lane.b32.xlu0 %v1325, 48
        %v3634 = vpop.permute.xlu0 %3633
        %3635 = vrot.lane.b32.xlu0 %v1326, 48
        %v3636 = vpop.permute.xlu0 %3635
        %3637 = vrot.lane.b32.xlu0 %v1327, 48
        %v3638 = vpop.permute.xlu0 %3637
        %3639 = vrot.lane.b32.xlu0 %v1328, 48
        %v3640 = vpop.permute.xlu0 %3639
        %3641 = vrot.lane.b32.xlu0 %v1329, 48
        %v3642 = vpop.permute.xlu0 %3641
        %3643 = vrot.lane.b32.xlu0 %v1330, 48
        %v3644 = vpop.permute.xlu0 %3643
        %3645 = vrot.lane.b32.xlu0 %v1331, 48
        %v3646 = vpop.permute.xlu0 %3645
        %v3648 = vsel %vm1356, %v3616, 0
        %v3651 = vsel %vm1356, %v3618, 0
        %v3654 = vsel %vm1356, %v3620, 0
        %v3657 = vsel %vm1356, %v3622, 0
        %v3660 = vsel %vm1356, %v3624, 0
        %v3663 = vsel %vm1356, %v3626, 0
        %v3666 = vsel %vm1356, %v3628, 0
        %v3669 = vsel %vm1356, %v3630, 0
        %v3672 = vsel %vm1356, %v3632, 0
        %v3675 = vsel %vm1356, %v3634, 0
        %v3678 = vsel %vm1356, %v3636, 0
        %v3681 = vsel %vm1356, %v3638, 0
        %v3684 = vsel %vm1356, %v3640, 0
        %v3687 = vsel %vm1356, %v3642, 0
        %v3690 = vsel %vm1356, %v3644, 0
        %v3693 = vsel %vm1356, %v3646, 0
        %3695 = vmatprep.subr.bf16.mxu0 0
        %3696 = vmatpush1.bf16.xpose.msra.mxu0 %v3693
        %3697 = vmatprep.subr.bf16.mxu0 0
        %3698 = vmatpush1.bf16.xpose.msra.mxu0 %v3690
        %3699 = vmatprep.subr.bf16.mxu0 0
        %3700 = vmatpush1.bf16.xpose.msra.mxu0 %v3687
        %3701 = vmatprep.subr.bf16.mxu0 0
        %3702 = vmatpush1.bf16.xpose.msra.mxu0 %v3684
        %3703 = vmatprep.subr.bf16.mxu0 0
        %3704 = vmatpush1.bf16.xpose.msra.mxu0 %v3681
        %3705 = vmatprep.subr.bf16.mxu0 0
        %3706 = vmatpush1.bf16.xpose.msra.mxu0 %v3678
        %3707 = vmatprep.subr.bf16.mxu0 0
        %3708 = vmatpush1.bf16.xpose.msra.mxu0 %v3675
        %3709 = vmatprep.subr.bf16.mxu0 0
        %3710 = vmatpush1.bf16.xpose.msra.mxu0 %v3672
        %3711 = vmatprep.subr.bf16.mxu0 0
        %3712 = vmatpush2.bf16.xpose.msra.mxu0 0
        %3713 = vmatprep.subr.bf16.mxu0 0
        %3714 = vmatpush2.bf16.xpose.msra.mxu0 0
        %3715 = vmatprep.subr.bf16.mxu0 0
        %3716 = vmatpush2.bf16.xpose.msra.mxu0 0
        %3717 = vmatprep.subr.bf16.mxu0 0
        %3718 = vmatpush2.bf16.xpose.msra.mxu0 0
        %3719 = vmatprep.subr.bf16.mxu0 0
        %3720 = vmatpush2.bf16.xpose.msra.mxu0 0
        %3721 = vmatprep.subr.bf16.mxu0 0
        %3722 = vmatpush2.bf16.xpose.msra.mxu0 0
        %3723 = vmatprep.subr.bf16.mxu0 0
        %3724 = vmatpush2.bf16.xpose.msra.mxu0 0
        %3725 = vmatprep.subr.bf16.mxu0 0
        %3726 = vmatpush2.bf16.xpose.msra.mxu0 0
        %3727 = vmatprep.mubr.bf16.mxu0 0
        %3728 = vmatmul.mubr.bf16.gmra.mxu0 %v3648
        %v3729 = vpop.f32.mrf.mxu0
        %v3730 = vadd.f32 %v1340, %v3729
        %v3731 = vpop.f32.mrf.mxu0
        %v3732 = vpop.f32.mrf.mxu0
        %v3733 = vadd.f32 %v1341, %v3732
        %v3734 = vpop.f32.mrf.mxu0
        %3735 = vmatprep.mubr.bf16.mxu0 0
        %3736 = vmatmul.mubr.bf16.gmra.mxu0 %v3651
        %v3737 = vpop.f32.mrf.mxu0
        %v3738 = vadd.f32 %v1342, %v3737
        %v3739 = vpop.f32.mrf.mxu0
        %v3740 = vpop.f32.mrf.mxu0
        %v3741 = vadd.f32 %v1343, %v3740
        %v3742 = vpop.f32.mrf.mxu0
        %3743 = vmatprep.mubr.bf16.mxu0 0
        %3744 = vmatmul.mubr.bf16.gmra.mxu0 %v3654
        %v3745 = vpop.f32.mrf.mxu0
        %v3746 = vadd.f32 %v1344, %v3745
        %v3747 = vpop.f32.mrf.mxu0
        %v3748 = vpop.f32.mrf.mxu0
        %v3749 = vadd.f32 %v1345, %v3748
        %v3750 = vpop.f32.mrf.mxu0
        %3751 = vmatprep.mubr.bf16.mxu0 0
        %3752 = vmatmul.mubr.bf16.gmra.mxu0 %v3657
        %v3753 = vpop.f32.mrf.mxu0
        %v3754 = vadd.f32 %v1346, %v3753
        %v3755 = vpop.f32.mrf.mxu0
        %v3756 = vpop.f32.mrf.mxu0
        %v3757 = vadd.f32 %v1347, %v3756
        %v3758 = vpop.f32.mrf.mxu0
        %3759 = vmatprep.mubr.bf16.mxu0 0
        %3760 = vmatmul.mubr.bf16.gmra.mxu0 %v3660
        %v3761 = vpop.f32.mrf.mxu0
        %v3762 = vadd.f32 %v1348, %v3761
        %v3763 = vpop.f32.mrf.mxu0
        %v3764 = vpop.f32.mrf.mxu0
        %v3765 = vadd.f32 %v1349, %v3764
        %v3766 = vpop.f32.mrf.mxu0
        %3767 = vmatprep.mubr.bf16.mxu0 0
        %3768 = vmatmul.mubr.bf16.gmra.mxu0 %v3663
        %v3769 = vpop.f32.mrf.mxu0
        %v3770 = vadd.f32 %v1350, %v3769
        %v3771 = vpop.f32.mrf.mxu0
        %v3772 = vpop.f32.mrf.mxu0
        %v3773 = vadd.f32 %v1351, %v3772
        %v3774 = vpop.f32.mrf.mxu0
        %3775 = vmatprep.mubr.bf16.mxu0 0
        %3776 = vmatmul.mubr.bf16.gmra.mxu0 %v3666
        %v3777 = vpop.f32.mrf.mxu0
        %v3778 = vadd.f32 %v1352, %v3777
        %v3779 = vpop.f32.mrf.mxu0
        %v3780 = vpop.f32.mrf.mxu0
        %v3781 = vadd.f32 %v1353, %v3780
        %v3782 = vpop.f32.mrf.mxu0
        %3783 = vmatprep.mubr.bf16.mxu0 0
        %3784 = vmatmul.mubr.bf16.gmra.mxu0 %v3669
        %v3785 = vpop.f32.mrf.mxu0
        %v3786 = vadd.f32 %v1354, %v3785
        %v3787 = vpop.f32.mrf.mxu0
        %v3788 = vpop.f32.mrf.mxu0
        %v3789 = vadd.f32 %v1355, %v3788
        %v3790 = vpop.f32.mrf.mxu0
        %3791 = vdwg.mxu0
        %3792 = vmax.xlane.f32.xlu0 %v3730
        %v3793 = vpop.xlane.xlu0 %3792
        %3794 = vmax.xlane.f32.xlu0 %v3733
        %v3795 = vpop.xlane.xlu0 %3794
        %3796 = vmax.xlane.f32.xlu0 %v3738
        %v3797 = vpop.xlane.xlu0 %3796
        %3798 = vmax.xlane.f32.xlu0 %v3741
        %v3799 = vpop.xlane.xlu0 %3798
        %3800 = vmax.xlane.f32.xlu0 %v3746
        %v3801 = vpop.xlane.xlu0 %3800
        %3802 = vmax.xlane.f32.xlu0 %v3749
        %v3803 = vpop.xlane.xlu0 %3802
        %3804 = vmax.xlane.f32.xlu0 %v3754
        %v3805 = vpop.xlane.xlu0 %3804
        %3806 = vmax.xlane.f32.xlu0 %v3757
        %v3807 = vpop.xlane.xlu0 %3806
        %3808 = vmax.xlane.f32.xlu0 %v3762
        %v3809 = vpop.xlane.xlu0 %3808
        %3810 = vmax.xlane.f32.xlu0 %v3765
        %v3811 = vpop.xlane.xlu0 %3810
        %3812 = vmax.xlane.f32.xlu0 %v3770
        %v3813 = vpop.xlane.xlu0 %3812
        %3814 = vmax.xlane.f32.xlu0 %v3773
        %v3815 = vpop.xlane.xlu0 %3814
        %3816 = vmax.xlane.f32.xlu0 %v3778
        %v3817 = vpop.xlane.xlu0 %3816
        %3818 = vmax.xlane.f32.xlu0 %v3781
        %v3819 = vpop.xlane.xlu0 %3818
        %3820 = vmax.xlane.f32.xlu0 %v3786
        %v3821 = vpop.xlane.xlu0 %3820
        %3822 = vmax.xlane.f32.xlu0 %v3789
        %v3823 = vpop.xlane.xlu0 %3822
        %v3824 = vsub.f32 %v3730, %v3793
        %v3825 = vsub.f32 %v3733, %v3795
        %v3826 = vsub.f32 %v3738, %v3797
        %v3827 = vsub.f32 %v3741, %v3799
        %v3828 = vsub.f32 %v3746, %v3801
        %v3829 = vsub.f32 %v3749, %v3803
        %v3830 = vsub.f32 %v3754, %v3805
        %v3831 = vsub.f32 %v3757, %v3807
        %v3832 = vsub.f32 %v3762, %v3809
        %v3833 = vsub.f32 %v3765, %v3811
        %v3834 = vsub.f32 %v3770, %v3813
        %v3835 = vsub.f32 %v3773, %v3815
        %v3836 = vsub.f32 %v3778, %v3817
        %v3837 = vsub.f32 %v3781, %v3819
        %v3838 = vsub.f32 %v3786, %v3821
        %v3839 = vsub.f32 %v3789, %v3823
        %v3840 = vmul.f32 %v3824, 1.442695
        %v3841 = vpow.pop %v3840
        %v3842 = vmul.f32 %v3825, 1.442695
        %v3843 = vpow.pop %v3842
        %v3844 = vmul.f32 %v3826, 1.442695
        %v3845 = vpow.pop %v3844
        %v3846 = vmul.f32 %v3827, 1.442695
        %v3847 = vpow.pop %v3846
        %v3848 = vmul.f32 %v3828, 1.442695
        %v3849 = vpow.pop %v3848
        %v3850 = vmul.f32 %v3829, 1.442695
        %v3851 = vpow.pop %v3850
        %v3852 = vmul.f32 %v3830, 1.442695
        %v3853 = vpow.pop %v3852
        %v3854 = vmul.f32 %v3831, 1.442695
        %v3855 = vpow.pop %v3854
        %v3856 = vmul.f32 %v3832, 1.442695
        %v3857 = vpow.pop %v3856
        %v3858 = vmul.f32 %v3833, 1.442695
        %v3859 = vpow.pop %v3858
        %v3860 = vmul.f32 %v3834, 1.442695
        %v3861 = vpow.pop %v3860
        %v3862 = vmul.f32 %v3835, 1.442695
        %v3863 = vpow.pop %v3862
        %v3864 = vmul.f32 %v3836, 1.442695
        %v3865 = vpow.pop %v3864
        %v3866 = vmul.f32 %v3837, 1.442695
        %v3867 = vpow.pop %v3866
        %v3868 = vmul.f32 %v3838, 1.442695
        %v3869 = vpow.pop %v3868
        %v3870 = vmul.f32 %v3839, 1.442695
        %v3871 = vpow.pop %v3870
        %3872 = vadd.xlane.f32.xlu0 %v3841
        %v3873 = vpop.xlane.xlu0 %3872
        %3874 = vadd.xlane.f32.xlu0 %v3843
        %v3875 = vpop.xlane.xlu0 %3874
        %3876 = vadd.xlane.f32.xlu0 %v3845
        %v3877 = vpop.xlane.xlu0 %3876
        %3878 = vadd.xlane.f32.xlu0 %v3847
        %v3879 = vpop.xlane.xlu0 %3878
        %3880 = vadd.xlane.f32.xlu0 %v3849
        %v3881 = vpop.xlane.xlu0 %3880
        %3882 = vadd.xlane.f32.xlu0 %v3851
        %v3883 = vpop.xlane.xlu0 %3882
        %3884 = vadd.xlane.f32.xlu0 %v3853
        %v3885 = vpop.xlane.xlu0 %3884
        %3886 = vadd.xlane.f32.xlu0 %v3855
        %v3887 = vpop.xlane.xlu0 %3886
        %3888 = vadd.xlane.f32.xlu0 %v3857
        %v3889 = vpop.xlane.xlu0 %3888
        %3890 = vadd.xlane.f32.xlu0 %v3859
        %v3891 = vpop.xlane.xlu0 %3890
        %3892 = vadd.xlane.f32.xlu0 %v3861
        %v3893 = vpop.xlane.xlu0 %3892
        %3894 = vadd.xlane.f32.xlu0 %v3863
        %v3895 = vpop.xlane.xlu0 %3894
        %3896 = vadd.xlane.f32.xlu0 %v3865
        %v3897 = vpop.xlane.xlu0 %3896
        %3898 = vadd.xlane.f32.xlu0 %v3867
        %v3899 = vpop.xlane.xlu0 %3898
        %3900 = vadd.xlane.f32.xlu0 %v3869
        %v3901 = vpop.xlane.xlu0 %3900
        %3902 = vadd.xlane.f32.xlu0 %v3871
        %v3903 = vpop.xlane.xlu0 %3902
        %v3904 = vrcp.pop %v3873
        %v3905 = vrcp.pop %v3875
        %v3906 = vrcp.pop %v3877
        %v3907 = vrcp.pop %v3879
        %v3908 = vrcp.pop %v3881
        %v3909 = vrcp.pop %v3883
        %v3910 = vrcp.pop %v3885
        %v3911 = vrcp.pop %v3887
        %v3912 = vrcp.pop %v3889
        %v3913 = vrcp.pop %v3891
        %v3914 = vrcp.pop %v3893
        %v3915 = vrcp.pop %v3895
        %v3916 = vrcp.pop %v3897
        %v3917 = vrcp.pop %v3899
        %v3918 = vrcp.pop %v3901
        %v3919 = vrcp.pop %v3903
        %v3920 = vpack.c.bf16 %v3843, %v3841
        %v3921 = vpack.c.bf16 %v3847, %v3845
        %v3922 = vpack.c.bf16 %v3851, %v3849
        %v3923 = vpack.c.bf16 %v3855, %v3853
        %v3924 = vpack.c.bf16 %v3859, %v3857
        %v3925 = vpack.c.bf16 %v3863, %v3861
        %v3926 = vpack.c.bf16 %v3867, %v3865
        %v3927 = vpack.c.bf16 %v3871, %v3869
        %3928 = vrot.lane.b32.xlu0 %v1332, 48
        %v3929 = vpop.permute.xlu0 %3928
        %3930 = vrot.lane.b32.xlu0 %v1333, 48
        %v3931 = vpop.permute.xlu0 %3930
        %3932 = vrot.lane.b32.xlu0 %v1334, 48
        %v3933 = vpop.permute.xlu0 %3932
        %3934 = vrot.lane.b32.xlu0 %v1335, 48
        %v3935 = vpop.permute.xlu0 %3934
        %3936 = vrot.lane.b32.xlu0 %v1336, 48
        %v3937 = vpop.permute.xlu0 %3936
        %3938 = vrot.lane.b32.xlu0 %v1337, 48
        %v3939 = vpop.permute.xlu0 %3938
        %3940 = vrot.lane.b32.xlu0 %v1338, 48
        %v3941 = vpop.permute.xlu0 %3940
        %3942 = vrot.lane.b32.xlu0 %v1339, 48
        %v3943 = vpop.permute.xlu0 %3942
        %3952 = vmatprep.subr.bf16.mxu0 0
        %3953 = vmatpush1.bf16.msra.mxu0 %v3943
        %3954 = vmatprep.subr.bf16.mxu0 0
        %3955 = vmatpush1.bf16.msra.mxu0 %v3941
        %3956 = vmatprep.subr.bf16.mxu0 0
        %3957 = vmatpush1.bf16.msra.mxu0 %v3939
        %3958 = vmatprep.subr.bf16.mxu0 0
        %3959 = vmatpush1.bf16.msra.mxu0 %v3937
        %3960 = vmatprep.subr.bf16.mxu0 0
        %3961 = vmatpush1.bf16.msra.mxu0 %v3935
        %3962 = vmatprep.subr.bf16.mxu0 0
        %3963 = vmatpush1.bf16.msra.mxu0 %v3933
        %3964 = vmatprep.subr.bf16.mxu0 0
        %3965 = vmatpush1.bf16.msra.mxu0 %v3931
        %3966 = vmatprep.subr.bf16.mxu0 0
        %3967 = vmatpush1.bf16.msra.mxu0 %v3929
        %3968 = vmatprep.subr.bf16.mxu0 0
        %3969 = vmatpush2.bf16.msra.mxu0 0
        %3970 = vmatprep.subr.bf16.mxu0 0
        %3971 = vmatpush2.bf16.msra.mxu0 0
        %3972 = vmatprep.subr.bf16.mxu0 0
        %3973 = vmatpush2.bf16.msra.mxu0 0
        %3974 = vmatprep.subr.bf16.mxu0 0
        %3975 = vmatpush2.bf16.msra.mxu0 0
        %3976 = vmatprep.subr.bf16.mxu0 0
        %3977 = vmatpush2.bf16.msra.mxu0 0
        %3978 = vmatprep.subr.bf16.mxu0 0
        %3979 = vmatpush2.bf16.msra.mxu0 0
        %3980 = vmatprep.subr.bf16.mxu0 0
        %3981 = vmatpush2.bf16.msra.mxu0 0
        %3982 = vmatprep.subr.bf16.mxu0 0
        %3983 = vmatpush2.bf16.msra.mxu0 0
        %3984 = vmatprep.mubr.bf16.mxu0 0
        %3985 = vmatmul.mubr.bf16.gmra.mxu0 %v3920
        %v3986 = vpop.f32.mrf.mxu0
        %v3987 = vadd.f32 0.0, %v3986
        %v3988 = vpop.f32.mrf.mxu0
        %v3989 = vpop.f32.mrf.mxu0
        %v3990 = vadd.f32 0.0, %v3989
        %v3991 = vpop.f32.mrf.mxu0
        %3992 = vmatprep.mubr.bf16.mxu0 0
        %3993 = vmatmul.mubr.bf16.gmra.mxu0 %v3921
        %v3994 = vpop.f32.mrf.mxu0
        %v3995 = vadd.f32 0.0, %v3994
        %v3996 = vpop.f32.mrf.mxu0
        %v3997 = vpop.f32.mrf.mxu0
        %v3998 = vadd.f32 0.0, %v3997
        %v3999 = vpop.f32.mrf.mxu0
        %4000 = vmatprep.mubr.bf16.mxu0 0
        %4001 = vmatmul.mubr.bf16.gmra.mxu0 %v3922
        %v4002 = vpop.f32.mrf.mxu0
        %v4003 = vadd.f32 0.0, %v4002
        %v4004 = vpop.f32.mrf.mxu0
        %v4005 = vpop.f32.mrf.mxu0
        %v4006 = vadd.f32 0.0, %v4005
        %v4007 = vpop.f32.mrf.mxu0
        %4008 = vmatprep.mubr.bf16.mxu0 0
        %4009 = vmatmul.mubr.bf16.gmra.mxu0 %v3923
        %v4010 = vpop.f32.mrf.mxu0
        %v4011 = vadd.f32 0.0, %v4010
        %v4012 = vpop.f32.mrf.mxu0
        %v4013 = vpop.f32.mrf.mxu0
        %v4014 = vadd.f32 0.0, %v4013
        %v4015 = vpop.f32.mrf.mxu0
        %4016 = vmatprep.mubr.bf16.mxu0 0
        %4017 = vmatmul.mubr.bf16.gmra.mxu0 %v3924
        %v4018 = vpop.f32.mrf.mxu0
        %v4019 = vadd.f32 0.0, %v4018
        %v4020 = vpop.f32.mrf.mxu0
        %v4021 = vpop.f32.mrf.mxu0
        %v4022 = vadd.f32 0.0, %v4021
        %v4023 = vpop.f32.mrf.mxu0
        %4024 = vmatprep.mubr.bf16.mxu0 0
        %4025 = vmatmul.mubr.bf16.gmra.mxu0 %v3925
        %v4026 = vpop.f32.mrf.mxu0
        %v4027 = vadd.f32 0.0, %v4026
        %v4028 = vpop.f32.mrf.mxu0
        %v4029 = vpop.f32.mrf.mxu0
        %v4030 = vadd.f32 0.0, %v4029
        %v4031 = vpop.f32.mrf.mxu0
        %4032 = vmatprep.mubr.bf16.mxu0 0
        %4033 = vmatmul.mubr.bf16.gmra.mxu0 %v3926
        %v4034 = vpop.f32.mrf.mxu0
        %v4035 = vadd.f32 0.0, %v4034
        %v4036 = vpop.f32.mrf.mxu0
        %v4037 = vpop.f32.mrf.mxu0
        %v4038 = vadd.f32 0.0, %v4037
        %v4039 = vpop.f32.mrf.mxu0
        %4040 = vmatprep.mubr.bf16.mxu0 0
        %4041 = vmatmul.mubr.bf16.gmra.mxu0 %v3927
        %v4042 = vpop.f32.mrf.mxu0
        %v4043 = vadd.f32 0.0, %v4042
        %v4044 = vpop.f32.mrf.mxu0
        %v4045 = vpop.f32.mrf.mxu0
        %v4046 = vadd.f32 0.0, %v4045
        %v4047 = vpop.f32.mrf.mxu0
        %4048 = vdwg.mxu0
        %v4049 = vmul.f32 %v3987, %v3904
        %v4050 = vmul.f32 %v3990, %v3905
        %v4051 = vmul.f32 %v3995, %v3906
        %v4052 = vmul.f32 %v3998, %v3907
        %v4053 = vmul.f32 %v4003, %v3908
        %v4054 = vmul.f32 %v4006, %v3909
        %v4055 = vmul.f32 %v4011, %v3910
        %v4056 = vmul.f32 %v4014, %v3911
        %v4057 = vmul.f32 %v4019, %v3912
        %v4058 = vmul.f32 %v4022, %v3913
        %v4059 = vmul.f32 %v4027, %v3914
        %v4060 = vmul.f32 %v4030, %v3915
        %v4061 = vmul.f32 %v4035, %v3916
        %v4062 = vmul.f32 %v4038, %v3917
        %v4063 = vmul.f32 %v4043, %v3918
        %v4064 = vmul.f32 %v4046, %v3919
        %v4065 = vpack.c.bf16 %v4050, %v4049
        %v4066 = vpack.c.bf16 %v4052, %v4051
        %v4067 = vpack.c.bf16 %v4054, %v4053
        %v4068 = vpack.c.bf16 %v4056, %v4055
        %v4069 = vpack.c.bf16 %v4058, %v4057
        %v4070 = vpack.c.bf16 %v4060, %v4059
        %v4071 = vpack.c.bf16 %v4062, %v4061
        %v4072 = vpack.c.bf16 %v4064, %v4063
        %4073 = vrot.lane.b32.xlu0 %v1316, 32
        %v4074 = vpop.permute.xlu0 %4073
        %4075 = vrot.lane.b32.xlu0 %v1317, 32
        %v4076 = vpop.permute.xlu0 %4075
        %4077 = vrot.lane.b32.xlu0 %v1318, 32
        %v4078 = vpop.permute.xlu0 %4077
        %4079 = vrot.lane.b32.xlu0 %v1319, 32
        %v4080 = vpop.permute.xlu0 %4079
        %4081 = vrot.lane.b32.xlu0 %v1320, 32
        %v4082 = vpop.permute.xlu0 %4081
        %4083 = vrot.lane.b32.xlu0 %v1321, 32
        %v4084 = vpop.permute.xlu0 %4083
        %4085 = vrot.lane.b32.xlu0 %v1322, 32
        %v4086 = vpop.permute.xlu0 %4085
        %4087 = vrot.lane.b32.xlu0 %v1323, 32
        %v4088 = vpop.permute.xlu0 %4087
        %4089 = vrot.lane.b32.xlu0 %v1324, 32
        %v4090 = vpop.permute.xlu0 %4089
        %4091 = vrot.lane.b32.xlu0 %v1325, 32
        %v4092 = vpop.permute.xlu0 %4091
        %4093 = vrot.lane.b32.xlu0 %v1326, 32
        %v4094 = vpop.permute.xlu0 %4093
        %4095 = vrot.lane.b32.xlu0 %v1327, 32
        %v4096 = vpop.permute.xlu0 %4095
        %4097 = vrot.lane.b32.xlu0 %v1328, 32
        %v4098 = vpop.permute.xlu0 %4097
        %4099 = vrot.lane.b32.xlu0 %v1329, 32
        %v4100 = vpop.permute.xlu0 %4099
        %4101 = vrot.lane.b32.xlu0 %v1330, 32
        %v4102 = vpop.permute.xlu0 %4101
        %4103 = vrot.lane.b32.xlu0 %v1331, 32
        %v4104 = vpop.permute.xlu0 %4103
        %v4106 = vsel %vm1356, %v4074, 0
        %v4109 = vsel %vm1356, %v4076, 0
        %v4112 = vsel %vm1356, %v4078, 0
        %v4115 = vsel %vm1356, %v4080, 0
        %v4118 = vsel %vm1356, %v4082, 0
        %v4121 = vsel %vm1356, %v4084, 0
        %v4124 = vsel %vm1356, %v4086, 0
        %v4127 = vsel %vm1356, %v4088, 0
        %v4130 = vsel %vm1356, %v4090, 0
        %v4133 = vsel %vm1356, %v4092, 0
        %v4136 = vsel %vm1356, %v4094, 0
        %v4139 = vsel %vm1356, %v4096, 0
        %v4142 = vsel %vm1356, %v4098, 0
        %v4145 = vsel %vm1356, %v4100, 0
        %v4148 = vsel %vm1356, %v4102, 0
        %v4151 = vsel %vm1356, %v4104, 0
        %4153 = vmatprep.subr.bf16.mxu0 0
        %4154 = vmatpush1.bf16.xpose.msra.mxu0 %v4151
        %4155 = vmatprep.subr.bf16.mxu0 0
        %4156 = vmatpush1.bf16.xpose.msra.mxu0 %v4148
        %4157 = vmatprep.subr.bf16.mxu0 0
        %4158 = vmatpush1.bf16.xpose.msra.mxu0 %v4145
        %4159 = vmatprep.subr.bf16.mxu0 0
        %4160 = vmatpush1.bf16.xpose.msra.mxu0 %v4142
        %4161 = vmatprep.subr.bf16.mxu0 0
        %4162 = vmatpush1.bf16.xpose.msra.mxu0 %v4139
        %4163 = vmatprep.subr.bf16.mxu0 0
        %4164 = vmatpush1.bf16.xpose.msra.mxu0 %v4136
        %4165 = vmatprep.subr.bf16.mxu0 0
        %4166 = vmatpush1.bf16.xpose.msra.mxu0 %v4133
        %4167 = vmatprep.subr.bf16.mxu0 0
        %4168 = vmatpush1.bf16.xpose.msra.mxu0 %v4130
        %4169 = vmatprep.subr.bf16.mxu0 0
        %4170 = vmatpush2.bf16.xpose.msra.mxu0 0
        %4171 = vmatprep.subr.bf16.mxu0 0
        %4172 = vmatpush2.bf16.xpose.msra.mxu0 0
        %4173 = vmatprep.subr.bf16.mxu0 0
        %4174 = vmatpush2.bf16.xpose.msra.mxu0 0
        %4175 = vmatprep.subr.bf16.mxu0 0
        %4176 = vmatpush2.bf16.xpose.msra.mxu0 0
        %4177 = vmatprep.subr.bf16.mxu0 0
        %4178 = vmatpush2.bf16.xpose.msra.mxu0 0
        %4179 = vmatprep.subr.bf16.mxu0 0
        %4180 = vmatpush2.bf16.xpose.msra.mxu0 0
        %4181 = vmatprep.subr.bf16.mxu0 0
        %4182 = vmatpush2.bf16.xpose.msra.mxu0 0
        %4183 = vmatprep.subr.bf16.mxu0 0
        %4184 = vmatpush2.bf16.xpose.msra.mxu0 0
        %4185 = vmatprep.mubr.bf16.mxu0 0
        %4186 = vmatmul.mubr.bf16.gmra.mxu0 %v4106
        %v4187 = vpop.f32.mrf.mxu0
        %v4188 = vadd.f32 %v1340, %v4187
        %v4189 = vpop.f32.mrf.mxu0
        %v4190 = vpop.f32.mrf.mxu0
        %v4191 = vadd.f32 %v1341, %v4190
        %v4192 = vpop.f32.mrf.mxu0
        %4193 = vmatprep.mubr.bf16.mxu0 0
        %4194 = vmatmul.mubr.bf16.gmra.mxu0 %v4109
        %v4195 = vpop.f32.mrf.mxu0
        %v4196 = vadd.f32 %v1342, %v4195
        %v4197 = vpop.f32.mrf.mxu0
        %v4198 = vpop.f32.mrf.mxu0
        %v4199 = vadd.f32 %v1343, %v4198
        %v4200 = vpop.f32.mrf.mxu0
        %4201 = vmatprep.mubr.bf16.mxu0 0
        %4202 = vmatmul.mubr.bf16.gmra.mxu0 %v4112
        %v4203 = vpop.f32.mrf.mxu0
        %v4204 = vadd.f32 %v1344, %v4203
        %v4205 = vpop.f32.mrf.mxu0
        %v4206 = vpop.f32.mrf.mxu0
        %v4207 = vadd.f32 %v1345, %v4206
        %v4208 = vpop.f32.mrf.mxu0
        %4209 = vmatprep.mubr.bf16.mxu0 0
        %4210 = vmatmul.mubr.bf16.gmra.mxu0 %v4115
        %v4211 = vpop.f32.mrf.mxu0
        %v4212 = vadd.f32 %v1346, %v4211
        %v4213 = vpop.f32.mrf.mxu0
        %v4214 = vpop.f32.mrf.mxu0
        %v4215 = vadd.f32 %v1347, %v4214
        %v4216 = vpop.f32.mrf.mxu0
        %4217 = vmatprep.mubr.bf16.mxu0 0
        %4218 = vmatmul.mubr.bf16.gmra.mxu0 %v4118
        %v4219 = vpop.f32.mrf.mxu0
        %v4220 = vadd.f32 %v1348, %v4219
        %v4221 = vpop.f32.mrf.mxu0
        %v4222 = vpop.f32.mrf.mxu0
        %v4223 = vadd.f32 %v1349, %v4222
        %v4224 = vpop.f32.mrf.mxu0
        %4225 = vmatprep.mubr.bf16.mxu0 0
        %4226 = vmatmul.mubr.bf16.gmra.mxu0 %v4121
        %v4227 = vpop.f32.mrf.mxu0
        %v4228 = vadd.f32 %v1350, %v4227
        %v4229 = vpop.f32.mrf.mxu0
        %v4230 = vpop.f32.mrf.mxu0
        %v4231 = vadd.f32 %v1351, %v4230
        %v4232 = vpop.f32.mrf.mxu0
        %4233 = vmatprep.mubr.bf16.mxu0 0
        %4234 = vmatmul.mubr.bf16.gmra.mxu0 %v4124
        %v4235 = vpop.f32.mrf.mxu0
        %v4236 = vadd.f32 %v1352, %v4235
        %v4237 = vpop.f32.mrf.mxu0
        %v4238 = vpop.f32.mrf.mxu0
        %v4239 = vadd.f32 %v1353, %v4238
        %v4240 = vpop.f32.mrf.mxu0
        %4241 = vmatprep.mubr.bf16.mxu0 0
        %4242 = vmatmul.mubr.bf16.gmra.mxu0 %v4127
        %v4243 = vpop.f32.mrf.mxu0
        %v4244 = vadd.f32 %v1354, %v4243
        %v4245 = vpop.f32.mrf.mxu0
        %v4246 = vpop.f32.mrf.mxu0
        %v4247 = vadd.f32 %v1355, %v4246
        %v4248 = vpop.f32.mrf.mxu0
        %4249 = vdwg.mxu0
        %4250 = vmax.xlane.f32.xlu0 %v4188
        %v4251 = vpop.xlane.xlu0 %4250
        %4252 = vmax.xlane.f32.xlu0 %v4191
        %v4253 = vpop.xlane.xlu0 %4252
        %4254 = vmax.xlane.f32.xlu0 %v4196
        %v4255 = vpop.xlane.xlu0 %4254
        %4256 = vmax.xlane.f32.xlu0 %v4199
        %v4257 = vpop.xlane.xlu0 %4256
        %4258 = vmax.xlane.f32.xlu0 %v4204
        %v4259 = vpop.xlane.xlu0 %4258
        %4260 = vmax.xlane.f32.xlu0 %v4207
        %v4261 = vpop.xlane.xlu0 %4260
        %4262 = vmax.xlane.f32.xlu0 %v4212
        %v4263 = vpop.xlane.xlu0 %4262
        %4264 = vmax.xlane.f32.xlu0 %v4215
        %v4265 = vpop.xlane.xlu0 %4264
        %4266 = vmax.xlane.f32.xlu0 %v4220
        %v4267 = vpop.xlane.xlu0 %4266
        %4268 = vmax.xlane.f32.xlu0 %v4223
        %v4269 = vpop.xlane.xlu0 %4268
        %4270 = vmax.xlane.f32.xlu0 %v4228
        %v4271 = vpop.xlane.xlu0 %4270
        %4272 = vmax.xlane.f32.xlu0 %v4231
        %v4273 = vpop.xlane.xlu0 %4272
        %4274 = vmax.xlane.f32.xlu0 %v4236
        %v4275 = vpop.xlane.xlu0 %4274
        %4276 = vmax.xlane.f32.xlu0 %v4239
        %v4277 = vpop.xlane.xlu0 %4276
        %4278 = vmax.xlane.f32.xlu0 %v4244
        %v4279 = vpop.xlane.xlu0 %4278
        %4280 = vmax.xlane.f32.xlu0 %v4247
        %v4281 = vpop.xlane.xlu0 %4280
        %v4282 = vsub.f32 %v4188, %v4251
        %v4283 = vsub.f32 %v4191, %v4253
        %v4284 = vsub.f32 %v4196, %v4255
        %v4285 = vsub.f32 %v4199, %v4257
        %v4286 = vsub.f32 %v4204, %v4259
        %v4287 = vsub.f32 %v4207, %v4261
        %v4288 = vsub.f32 %v4212, %v4263
        %v4289 = vsub.f32 %v4215, %v4265
        %v4290 = vsub.f32 %v4220, %v4267
        %v4291 = vsub.f32 %v4223, %v4269
        %v4292 = vsub.f32 %v4228, %v4271
        %v4293 = vsub.f32 %v4231, %v4273
        %v4294 = vsub.f32 %v4236, %v4275
        %v4295 = vsub.f32 %v4239, %v4277
        %v4296 = vsub.f32 %v4244, %v4279
        %v4297 = vsub.f32 %v4247, %v4281
        %v4298 = vmul.f32 %v4282, 1.442695
        %v4299 = vpow.pop %v4298
        %v4300 = vmul.f32 %v4283, 1.442695
        %v4301 = vpow.pop %v4300
        %v4302 = vmul.f32 %v4284, 1.442695
        %v4303 = vpow.pop %v4302
        %v4304 = vmul.f32 %v4285, 1.442695
        %v4305 = vpow.pop %v4304
        %v4306 = vmul.f32 %v4286, 1.442695
        %v4307 = vpow.pop %v4306
        %v4308 = vmul.f32 %v4287, 1.442695
        %v4309 = vpow.pop %v4308
        %v4310 = vmul.f32 %v4288, 1.442695
        %v4311 = vpow.pop %v4310
        %v4312 = vmul.f32 %v4289, 1.442695
        %v4313 = vpow.pop %v4312
        %v4314 = vmul.f32 %v4290, 1.442695
        %v4315 = vpow.pop %v4314
        %v4316 = vmul.f32 %v4291, 1.442695
        %v4317 = vpow.pop %v4316
        %v4318 = vmul.f32 %v4292, 1.442695
        %v4319 = vpow.pop %v4318
        %v4320 = vmul.f32 %v4293, 1.442695
        %v4321 = vpow.pop %v4320
        %v4322 = vmul.f32 %v4294, 1.442695
        %v4323 = vpow.pop %v4322
        %v4324 = vmul.f32 %v4295, 1.442695
        %v4325 = vpow.pop %v4324
        %v4326 = vmul.f32 %v4296, 1.442695
        %v4327 = vpow.pop %v4326
        %v4328 = vmul.f32 %v4297, 1.442695
        %v4329 = vpow.pop %v4328
        %4330 = vadd.xlane.f32.xlu0 %v4299
        %v4331 = vpop.xlane.xlu0 %4330
        %4332 = vadd.xlane.f32.xlu0 %v4301
        %v4333 = vpop.xlane.xlu0 %4332
        %4334 = vadd.xlane.f32.xlu0 %v4303
        %v4335 = vpop.xlane.xlu0 %4334
        %4336 = vadd.xlane.f32.xlu0 %v4305
        %v4337 = vpop.xlane.xlu0 %4336
        %4338 = vadd.xlane.f32.xlu0 %v4307
        %v4339 = vpop.xlane.xlu0 %4338
        %4340 = vadd.xlane.f32.xlu0 %v4309
        %v4341 = vpop.xlane.xlu0 %4340
        %4342 = vadd.xlane.f32.xlu0 %v4311
        %v4343 = vpop.xlane.xlu0 %4342
        %4344 = vadd.xlane.f32.xlu0 %v4313
        %v4345 = vpop.xlane.xlu0 %4344
        %4346 = vadd.xlane.f32.xlu0 %v4315
        %v4347 = vpop.xlane.xlu0 %4346
        %4348 = vadd.xlane.f32.xlu0 %v4317
        %v4349 = vpop.xlane.xlu0 %4348
        %4350 = vadd.xlane.f32.xlu0 %v4319
        %v4351 = vpop.xlane.xlu0 %4350
        %4352 = vadd.xlane.f32.xlu0 %v4321
        %v4353 = vpop.xlane.xlu0 %4352
        %4354 = vadd.xlane.f32.xlu0 %v4323
        %v4355 = vpop.xlane.xlu0 %4354
        %4356 = vadd.xlane.f32.xlu0 %v4325
        %v4357 = vpop.xlane.xlu0 %4356
        %4358 = vadd.xlane.f32.xlu0 %v4327
        %v4359 = vpop.xlane.xlu0 %4358
        %4360 = vadd.xlane.f32.xlu0 %v4329
        %v4361 = vpop.xlane.xlu0 %4360
        %v4362 = vrcp.pop %v4331
        %v4363 = vrcp.pop %v4333
        %v4364 = vrcp.pop %v4335
        %v4365 = vrcp.pop %v4337
        %v4366 = vrcp.pop %v4339
        %v4367 = vrcp.pop %v4341
        %v4368 = vrcp.pop %v4343
        %v4369 = vrcp.pop %v4345
        %v4370 = vrcp.pop %v4347
        %v4371 = vrcp.pop %v4349
        %v4372 = vrcp.pop %v4351
        %v4373 = vrcp.pop %v4353
        %v4374 = vrcp.pop %v4355
        %v4375 = vrcp.pop %v4357
        %v4376 = vrcp.pop %v4359
        %v4377 = vrcp.pop %v4361
        %v4378 = vpack.c.bf16 %v4301, %v4299
        %v4379 = vpack.c.bf16 %v4305, %v4303
        %v4380 = vpack.c.bf16 %v4309, %v4307
        %v4381 = vpack.c.bf16 %v4313, %v4311
        %v4382 = vpack.c.bf16 %v4317, %v4315
        %v4383 = vpack.c.bf16 %v4321, %v4319
        %v4384 = vpack.c.bf16 %v4325, %v4323
        %v4385 = vpack.c.bf16 %v4329, %v4327
        %4386 = vrot.lane.b32.xlu0 %v1332, 32
        %v4387 = vpop.permute.xlu0 %4386
        %4388 = vrot.lane.b32.xlu0 %v1333, 32
        %v4389 = vpop.permute.xlu0 %4388
        %4390 = vrot.lane.b32.xlu0 %v1334, 32
        %v4391 = vpop.permute.xlu0 %4390
        %4392 = vrot.lane.b32.xlu0 %v1335, 32
        %v4393 = vpop.permute.xlu0 %4392
        %4394 = vrot.lane.b32.xlu0 %v1336, 32
        %v4395 = vpop.permute.xlu0 %4394
        %4396 = vrot.lane.b32.xlu0 %v1337, 32
        %v4397 = vpop.permute.xlu0 %4396
        %4398 = vrot.lane.b32.xlu0 %v1338, 32
        %v4399 = vpop.permute.xlu0 %4398
        %4400 = vrot.lane.b32.xlu0 %v1339, 32
        %v4401 = vpop.permute.xlu0 %4400
        %4410 = vmatprep.subr.bf16.mxu0 0
        %4411 = vmatpush1.bf16.msra.mxu0 %v4401
        %4412 = vmatprep.subr.bf16.mxu0 0
        %4413 = vmatpush1.bf16.msra.mxu0 %v4399
        %4414 = vmatprep.subr.bf16.mxu0 0
        %4415 = vmatpush1.bf16.msra.mxu0 %v4397
        %4416 = vmatprep.subr.bf16.mxu0 0
        %4417 = vmatpush1.bf16.msra.mxu0 %v4395
        %4418 = vmatprep.subr.bf16.mxu0 0
        %4419 = vmatpush1.bf16.msra.mxu0 %v4393
        %4420 = vmatprep.subr.bf16.mxu0 0
        %4421 = vmatpush1.bf16.msra.mxu0 %v4391
        %4422 = vmatprep.subr.bf16.mxu0 0
        %4423 = vmatpush1.bf16.msra.mxu0 %v4389
        %4424 = vmatprep.subr.bf16.mxu0 0
        %4425 = vmatpush1.bf16.msra.mxu0 %v4387
        %4426 = vmatprep.subr.bf16.mxu0 0
        %4427 = vmatpush2.bf16.msra.mxu0 0
        %4428 = vmatprep.subr.bf16.mxu0 0
        %4429 = vmatpush2.bf16.msra.mxu0 0
        %4430 = vmatprep.subr.bf16.mxu0 0
        %4431 = vmatpush2.bf16.msra.mxu0 0
        %4432 = vmatprep.subr.bf16.mxu0 0
        %4433 = vmatpush2.bf16.msra.mxu0 0
        %4434 = vmatprep.subr.bf16.mxu0 0
        %4435 = vmatpush2.bf16.msra.mxu0 0
        %4436 = vmatprep.subr.bf16.mxu0 0
        %4437 = vmatpush2.bf16.msra.mxu0 0
        %4438 = vmatprep.subr.bf16.mxu0 0
        %4439 = vmatpush2.bf16.msra.mxu0 0
        %4440 = vmatprep.subr.bf16.mxu0 0
        %4441 = vmatpush2.bf16.msra.mxu0 0
        %4442 = vmatprep.mubr.bf16.mxu0 0
        %4443 = vmatmul.mubr.bf16.gmra.mxu0 %v4378
        %v4444 = vpop.f32.mrf.mxu0
        %v4445 = vadd.f32 0.0, %v4444
        %v4446 = vpop.f32.mrf.mxu0
        %v4447 = vpop.f32.mrf.mxu0
        %v4448 = vadd.f32 0.0, %v4447
        %v4449 = vpop.f32.mrf.mxu0
        %4450 = vmatprep.mubr.bf16.mxu0 0
        %4451 = vmatmul.mubr.bf16.gmra.mxu0 %v4379
        %v4452 = vpop.f32.mrf.mxu0
        %v4453 = vadd.f32 0.0, %v4452
        %v4454 = vpop.f32.mrf.mxu0
        %v4455 = vpop.f32.mrf.mxu0
        %v4456 = vadd.f32 0.0, %v4455
        %v4457 = vpop.f32.mrf.mxu0
        %4458 = vmatprep.mubr.bf16.mxu0 0
        %4459 = vmatmul.mubr.bf16.gmra.mxu0 %v4380
        %v4460 = vpop.f32.mrf.mxu0
        %v4461 = vadd.f32 0.0, %v4460
        %v4462 = vpop.f32.mrf.mxu0
        %v4463 = vpop.f32.mrf.mxu0
        %v4464 = vadd.f32 0.0, %v4463
        %v4465 = vpop.f32.mrf.mxu0
        %4466 = vmatprep.mubr.bf16.mxu0 0
        %4467 = vmatmul.mubr.bf16.gmra.mxu0 %v4381
        %v4468 = vpop.f32.mrf.mxu0
        %v4469 = vadd.f32 0.0, %v4468
        %v4470 = vpop.f32.mrf.mxu0
        %v4471 = vpop.f32.mrf.mxu0
        %v4472 = vadd.f32 0.0, %v4471
        %v4473 = vpop.f32.mrf.mxu0
        %4474 = vmatprep.mubr.bf16.mxu0 0
        %4475 = vmatmul.mubr.bf16.gmra.mxu0 %v4382
        %v4476 = vpop.f32.mrf.mxu0
        %v4477 = vadd.f32 0.0, %v4476
        %v4478 = vpop.f32.mrf.mxu0
        %v4479 = vpop.f32.mrf.mxu0
        %v4480 = vadd.f32 0.0, %v4479
        %v4481 = vpop.f32.mrf.mxu0
        %4482 = vmatprep.mubr.bf16.mxu0 0
        %4483 = vmatmul.mubr.bf16.gmra.mxu0 %v4383
        %v4484 = vpop.f32.mrf.mxu0
        %v4485 = vadd.f32 0.0, %v4484
        %v4486 = vpop.f32.mrf.mxu0
        %v4487 = vpop.f32.mrf.mxu0
        %v4488 = vadd.f32 0.0, %v4487
        %v4489 = vpop.f32.mrf.mxu0
        %4490 = vmatprep.mubr.bf16.mxu0 0
        %4491 = vmatmul.mubr.bf16.gmra.mxu0 %v4384
        %v4492 = vpop.f32.mrf.mxu0
        %v4493 = vadd.f32 0.0, %v4492
        %v4494 = vpop.f32.mrf.mxu0
        %v4495 = vpop.f32.mrf.mxu0
        %v4496 = vadd.f32 0.0, %v4495
        %v4497 = vpop.f32.mrf.mxu0
        %4498 = vmatprep.mubr.bf16.mxu0 0
        %4499 = vmatmul.mubr.bf16.gmra.mxu0 %v4385
        %v4500 = vpop.f32.mrf.mxu0
        %v4501 = vadd.f32 0.0, %v4500
        %v4502 = vpop.f32.mrf.mxu0
        %v4503 = vpop.f32.mrf.mxu0
        %v4504 = vadd.f32 0.0, %v4503
        %v4505 = vpop.f32.mrf.mxu0
        %4506 = vdwg.mxu0
        %v4507 = vmul.f32 %v4445, %v4362
        %v4508 = vmul.f32 %v4448, %v4363
        %v4509 = vmul.f32 %v4453, %v4364
        %v4510 = vmul.f32 %v4456, %v4365
        %v4511 = vmul.f32 %v4461, %v4366
        %v4512 = vmul.f32 %v4464, %v4367
        %v4513 = vmul.f32 %v4469, %v4368
        %v4514 = vmul.f32 %v4472, %v4369
        %v4515 = vmul.f32 %v4477, %v4370
        %v4516 = vmul.f32 %v4480, %v4371
        %v4517 = vmul.f32 %v4485, %v4372
        %v4518 = vmul.f32 %v4488, %v4373
        %v4519 = vmul.f32 %v4493, %v4374
        %v4520 = vmul.f32 %v4496, %v4375
        %v4521 = vmul.f32 %v4501, %v4376
        %v4522 = vmul.f32 %v4504, %v4377
        %v4523 = vpack.c.bf16 %v4508, %v4507
        %v4524 = vpack.c.bf16 %v4510, %v4509
        %v4525 = vpack.c.bf16 %v4512, %v4511
        %v4526 = vpack.c.bf16 %v4514, %v4513
        %v4527 = vpack.c.bf16 %v4516, %v4515
        %v4528 = vpack.c.bf16 %v4518, %v4517
        %v4529 = vpack.c.bf16 %v4520, %v4519
        %v4530 = vpack.c.bf16 %v4522, %v4521
        %4531 = vrot.lane.b32.xlu0 %v1316, 16
        %v4532 = vpop.permute.xlu0 %4531
        %4533 = vrot.lane.b32.xlu0 %v1317, 16
        %v4534 = vpop.permute.xlu0 %4533
        %4535 = vrot.lane.b32.xlu0 %v1318, 16
        %v4536 = vpop.permute.xlu0 %4535
        %4537 = vrot.lane.b32.xlu0 %v1319, 16
        %v4538 = vpop.permute.xlu0 %4537
        %4539 = vrot.lane.b32.xlu0 %v1320, 16
        %v4540 = vpop.permute.xlu0 %4539
        %4541 = vrot.lane.b32.xlu0 %v1321, 16
        %v4542 = vpop.permute.xlu0 %4541
        %4543 = vrot.lane.b32.xlu0 %v1322, 16
        %v4544 = vpop.permute.xlu0 %4543
        %4545 = vrot.lane.b32.xlu0 %v1323, 16
        %v4546 = vpop.permute.xlu0 %4545
        %4547 = vrot.lane.b32.xlu0 %v1324, 16
        %v4548 = vpop.permute.xlu0 %4547
        %4549 = vrot.lane.b32.xlu0 %v1325, 16
        %v4550 = vpop.permute.xlu0 %4549
        %4551 = vrot.lane.b32.xlu0 %v1326, 16
        %v4552 = vpop.permute.xlu0 %4551
        %4553 = vrot.lane.b32.xlu0 %v1327, 16
        %v4554 = vpop.permute.xlu0 %4553
        %4555 = vrot.lane.b32.xlu0 %v1328, 16
        %v4556 = vpop.permute.xlu0 %4555
        %4557 = vrot.lane.b32.xlu0 %v1329, 16
        %v4558 = vpop.permute.xlu0 %4557
        %4559 = vrot.lane.b32.xlu0 %v1330, 16
        %v4560 = vpop.permute.xlu0 %4559
        %4561 = vrot.lane.b32.xlu0 %v1331, 16
        %v4562 = vpop.permute.xlu0 %4561
        %v4564 = vsel %vm1356, %v4532, 0
        %v4567 = vsel %vm1356, %v4534, 0
        %v4570 = vsel %vm1356, %v4536, 0
        %v4573 = vsel %vm1356, %v4538, 0
        %v4576 = vsel %vm1356, %v4540, 0
        %v4579 = vsel %vm1356, %v4542, 0
        %v4582 = vsel %vm1356, %v4544, 0
        %v4585 = vsel %vm1356, %v4546, 0
        %v4588 = vsel %vm1356, %v4548, 0
        %v4591 = vsel %vm1356, %v4550, 0
        %v4594 = vsel %vm1356, %v4552, 0
        %v4597 = vsel %vm1356, %v4554, 0
        %v4600 = vsel %vm1356, %v4556, 0
        %v4603 = vsel %vm1356, %v4558, 0
        %v4606 = vsel %vm1356, %v4560, 0
        %v4609 = vsel %vm1356, %v4562, 0
        %4611 = vmatprep.subr.bf16.mxu0 0
        %4612 = vmatpush1.bf16.xpose.msra.mxu0 %v4609
        %4613 = vmatprep.subr.bf16.mxu0 0
        %4614 = vmatpush1.bf16.xpose.msra.mxu0 %v4606
        %4615 = vmatprep.subr.bf16.mxu0 0
        %4616 = vmatpush1.bf16.xpose.msra.mxu0 %v4603
        %4617 = vmatprep.subr.bf16.mxu0 0
        %4618 = vmatpush1.bf16.xpose.msra.mxu0 %v4600
        %4619 = vmatprep.subr.bf16.mxu0 0
        %4620 = vmatpush1.bf16.xpose.msra.mxu0 %v4597
        %4621 = vmatprep.subr.bf16.mxu0 0
        %4622 = vmatpush1.bf16.xpose.msra.mxu0 %v4594
        %4623 = vmatprep.subr.bf16.mxu0 0
        %4624 = vmatpush1.bf16.xpose.msra.mxu0 %v4591
        %4625 = vmatprep.subr.bf16.mxu0 0
        %4626 = vmatpush1.bf16.xpose.msra.mxu0 %v4588
        %4627 = vmatprep.subr.bf16.mxu0 0
        %4628 = vmatpush2.bf16.xpose.msra.mxu0 0
        %4629 = vmatprep.subr.bf16.mxu0 0
        %4630 = vmatpush2.bf16.xpose.msra.mxu0 0
        %4631 = vmatprep.subr.bf16.mxu0 0
        %4632 = vmatpush2.bf16.xpose.msra.mxu0 0
        %4633 = vmatprep.subr.bf16.mxu0 0
        %4634 = vmatpush2.bf16.xpose.msra.mxu0 0
        %4635 = vmatprep.subr.bf16.mxu0 0
        %4636 = vmatpush2.bf16.xpose.msra.mxu0 0
        %4637 = vmatprep.subr.bf16.mxu0 0
        %4638 = vmatpush2.bf16.xpose.msra.mxu0 0
        %4639 = vmatprep.subr.bf16.mxu0 0
        %4640 = vmatpush2.bf16.xpose.msra.mxu0 0
        %4641 = vmatprep.subr.bf16.mxu0 0
        %4642 = vmatpush2.bf16.xpose.msra.mxu0 0
        %4643 = vmatprep.mubr.bf16.mxu0 0
        %4644 = vmatmul.mubr.bf16.gmra.mxu0 %v4564
        %v4645 = vpop.f32.mrf.mxu0
        %v4646 = vadd.f32 %v1340, %v4645
        %v4647 = vpop.f32.mrf.mxu0
        %v4648 = vpop.f32.mrf.mxu0
        %v4649 = vadd.f32 %v1341, %v4648
        %v4650 = vpop.f32.mrf.mxu0
        %4651 = vmatprep.mubr.bf16.mxu0 0
        %4652 = vmatmul.mubr.bf16.gmra.mxu0 %v4567
        %v4653 = vpop.f32.mrf.mxu0
        %v4654 = vadd.f32 %v1342, %v4653
        %v4655 = vpop.f32.mrf.mxu0
        %v4656 = vpop.f32.mrf.mxu0
        %v4657 = vadd.f32 %v1343, %v4656
        %v4658 = vpop.f32.mrf.mxu0
        %4659 = vmatprep.mubr.bf16.mxu0 0
        %4660 = vmatmul.mubr.bf16.gmra.mxu0 %v4570
        %v4661 = vpop.f32.mrf.mxu0
        %v4662 = vadd.f32 %v1344, %v4661
        %v4663 = vpop.f32.mrf.mxu0
        %v4664 = vpop.f32.mrf.mxu0
        %v4665 = vadd.f32 %v1345, %v4664
        %v4666 = vpop.f32.mrf.mxu0
        %4667 = vmatprep.mubr.bf16.mxu0 0
        %4668 = vmatmul.mubr.bf16.gmra.mxu0 %v4573
        %v4669 = vpop.f32.mrf.mxu0
        %v4670 = vadd.f32 %v1346, %v4669
        %v4671 = vpop.f32.mrf.mxu0
        %v4672 = vpop.f32.mrf.mxu0
        %v4673 = vadd.f32 %v1347, %v4672
        %v4674 = vpop.f32.mrf.mxu0
        %4675 = vmatprep.mubr.bf16.mxu0 0
        %4676 = vmatmul.mubr.bf16.gmra.mxu0 %v4576
        %v4677 = vpop.f32.mrf.mxu0
        %v4678 = vadd.f32 %v1348, %v4677
        %v4679 = vpop.f32.mrf.mxu0
        %v4680 = vpop.f32.mrf.mxu0
        %v4681 = vadd.f32 %v1349, %v4680
        %v4682 = vpop.f32.mrf.mxu0
        %4683 = vmatprep.mubr.bf16.mxu0 0
        %4684 = vmatmul.mubr.bf16.gmra.mxu0 %v4579
        %v4685 = vpop.f32.mrf.mxu0
        %v4686 = vadd.f32 %v1350, %v4685
        %v4687 = vpop.f32.mrf.mxu0
        %v4688 = vpop.f32.mrf.mxu0
        %v4689 = vadd.f32 %v1351, %v4688
        %v4690 = vpop.f32.mrf.mxu0
        %4691 = vmatprep.mubr.bf16.mxu0 0
        %4692 = vmatmul.mubr.bf16.gmra.mxu0 %v4582
        %v4693 = vpop.f32.mrf.mxu0
        %v4694 = vadd.f32 %v1352, %v4693
        %v4695 = vpop.f32.mrf.mxu0
        %v4696 = vpop.f32.mrf.mxu0
        %v4697 = vadd.f32 %v1353, %v4696
        %v4698 = vpop.f32.mrf.mxu0
        %4699 = vmatprep.mubr.bf16.mxu0 0
        %4700 = vmatmul.mubr.bf16.gmra.mxu0 %v4585
        %v4701 = vpop.f32.mrf.mxu0
        %v4702 = vadd.f32 %v1354, %v4701
        %v4703 = vpop.f32.mrf.mxu0
        %v4704 = vpop.f32.mrf.mxu0
        %v4705 = vadd.f32 %v1355, %v4704
        %v4706 = vpop.f32.mrf.mxu0
        %4707 = vdwg.mxu0
        %4708 = vmax.xlane.f32.xlu0 %v4646
        %v4709 = vpop.xlane.xlu0 %4708
        %4710 = vmax.xlane.f32.xlu0 %v4649
        %v4711 = vpop.xlane.xlu0 %4710
        %4712 = vmax.xlane.f32.xlu0 %v4654
        %v4713 = vpop.xlane.xlu0 %4712
        %4714 = vmax.xlane.f32.xlu0 %v4657
        %v4715 = vpop.xlane.xlu0 %4714
        %4716 = vmax.xlane.f32.xlu0 %v4662
        %v4717 = vpop.xlane.xlu0 %4716
        %4718 = vmax.xlane.f32.xlu0 %v4665
        %v4719 = vpop.xlane.xlu0 %4718
        %4720 = vmax.xlane.f32.xlu0 %v4670
        %v4721 = vpop.xlane.xlu0 %4720
        %4722 = vmax.xlane.f32.xlu0 %v4673
        %v4723 = vpop.xlane.xlu0 %4722
        %4724 = vmax.xlane.f32.xlu0 %v4678
        %v4725 = vpop.xlane.xlu0 %4724
        %4726 = vmax.xlane.f32.xlu0 %v4681
        %v4727 = vpop.xlane.xlu0 %4726
        %4728 = vmax.xlane.f32.xlu0 %v4686
        %v4729 = vpop.xlane.xlu0 %4728
        %4730 = vmax.xlane.f32.xlu0 %v4689
        %v4731 = vpop.xlane.xlu0 %4730
        %4732 = vmax.xlane.f32.xlu0 %v4694
        %v4733 = vpop.xlane.xlu0 %4732
        %4734 = vmax.xlane.f32.xlu0 %v4697
        %v4735 = vpop.xlane.xlu0 %4734
        %4736 = vmax.xlane.f32.xlu0 %v4702
        %v4737 = vpop.xlane.xlu0 %4736
        %4738 = vmax.xlane.f32.xlu0 %v4705
        %v4739 = vpop.xlane.xlu0 %4738
        %v4740 = vsub.f32 %v4646, %v4709
        %v4741 = vsub.f32 %v4649, %v4711
        %v4742 = vsub.f32 %v4654, %v4713
        %v4743 = vsub.f32 %v4657, %v4715
        %v4744 = vsub.f32 %v4662, %v4717
        %v4745 = vsub.f32 %v4665, %v4719
        %v4746 = vsub.f32 %v4670, %v4721
        %v4747 = vsub.f32 %v4673, %v4723
        %v4748 = vsub.f32 %v4678, %v4725
        %v4749 = vsub.f32 %v4681, %v4727
        %v4750 = vsub.f32 %v4686, %v4729
        %v4751 = vsub.f32 %v4689, %v4731
        %v4752 = vsub.f32 %v4694, %v4733
        %v4753 = vsub.f32 %v4697, %v4735
        %v4754 = vsub.f32 %v4702, %v4737
        %v4755 = vsub.f32 %v4705, %v4739
        %v4756 = vmul.f32 %v4740, 1.442695
        %v4757 = vpow.pop %v4756
        %v4758 = vmul.f32 %v4741, 1.442695
        %v4759 = vpow.pop %v4758
        %v4760 = vmul.f32 %v4742, 1.442695
        %v4761 = vpow.pop %v4760
        %v4762 = vmul.f32 %v4743, 1.442695
        %v4763 = vpow.pop %v4762
        %v4764 = vmul.f32 %v4744, 1.442695
        %v4765 = vpow.pop %v4764
        %v4766 = vmul.f32 %v4745, 1.442695
        %v4767 = vpow.pop %v4766
        %v4768 = vmul.f32 %v4746, 1.442695
        %v4769 = vpow.pop %v4768
        %v4770 = vmul.f32 %v4747, 1.442695
        %v4771 = vpow.pop %v4770
        %v4772 = vmul.f32 %v4748, 1.442695
        %v4773 = vpow.pop %v4772
        %v4774 = vmul.f32 %v4749, 1.442695
        %v4775 = vpow.pop %v4774
        %v4776 = vmul.f32 %v4750, 1.442695
        %v4777 = vpow.pop %v4776
        %v4778 = vmul.f32 %v4751, 1.442695
        %v4779 = vpow.pop %v4778
        %v4780 = vmul.f32 %v4752, 1.442695
        %v4781 = vpow.pop %v4780
        %v4782 = vmul.f32 %v4753, 1.442695
        %v4783 = vpow.pop %v4782
        %v4784 = vmul.f32 %v4754, 1.442695
        %v4785 = vpow.pop %v4784
        %v4786 = vmul.f32 %v4755, 1.442695
        %v4787 = vpow.pop %v4786
        %4788 = vadd.xlane.f32.xlu0 %v4757
        %v4789 = vpop.xlane.xlu0 %4788
        %4790 = vadd.xlane.f32.xlu0 %v4759
        %v4791 = vpop.xlane.xlu0 %4790
        %4792 = vadd.xlane.f32.xlu0 %v4761
        %v4793 = vpop.xlane.xlu0 %4792
        %4794 = vadd.xlane.f32.xlu0 %v4763
        %v4795 = vpop.xlane.xlu0 %4794
        %4796 = vadd.xlane.f32.xlu0 %v4765
        %v4797 = vpop.xlane.xlu0 %4796
        %4798 = vadd.xlane.f32.xlu0 %v4767
        %v4799 = vpop.xlane.xlu0 %4798
        %4800 = vadd.xlane.f32.xlu0 %v4769
        %v4801 = vpop.xlane.xlu0 %4800
        %4802 = vadd.xlane.f32.xlu0 %v4771
        %v4803 = vpop.xlane.xlu0 %4802
        %4804 = vadd.xlane.f32.xlu0 %v4773
        %v4805 = vpop.xlane.xlu0 %4804
        %4806 = vadd.xlane.f32.xlu0 %v4775
        %v4807 = vpop.xlane.xlu0 %4806
        %4808 = vadd.xlane.f32.xlu0 %v4777
        %v4809 = vpop.xlane.xlu0 %4808
        %4810 = vadd.xlane.f32.xlu0 %v4779
        %v4811 = vpop.xlane.xlu0 %4810
        %4812 = vadd.xlane.f32.xlu0 %v4781
        %v4813 = vpop.xlane.xlu0 %4812
        %4814 = vadd.xlane.f32.xlu0 %v4783
        %v4815 = vpop.xlane.xlu0 %4814
        %4816 = vadd.xlane.f32.xlu0 %v4785
        %v4817 = vpop.xlane.xlu0 %4816
        %4818 = vadd.xlane.f32.xlu0 %v4787
        %v4819 = vpop.xlane.xlu0 %4818
        %v4820 = vrcp.pop %v4789
        %v4821 = vrcp.pop %v4791
        %v4822 = vrcp.pop %v4793
        %v4823 = vrcp.pop %v4795
        %v4824 = vrcp.pop %v4797
        %v4825 = vrcp.pop %v4799
        %v4826 = vrcp.pop %v4801
        %v4827 = vrcp.pop %v4803
        %v4828 = vrcp.pop %v4805
        %v4829 = vrcp.pop %v4807
        %v4830 = vrcp.pop %v4809
        %v4831 = vrcp.pop %v4811
        %v4832 = vrcp.pop %v4813
        %v4833 = vrcp.pop %v4815
        %v4834 = vrcp.pop %v4817
        %v4835 = vrcp.pop %v4819
        %v4836 = vpack.c.bf16 %v4759, %v4757
        %v4837 = vpack.c.bf16 %v4763, %v4761
        %v4838 = vpack.c.bf16 %v4767, %v4765
        %v4839 = vpack.c.bf16 %v4771, %v4769
        %v4840 = vpack.c.bf16 %v4775, %v4773
        %v4841 = vpack.c.bf16 %v4779, %v4777
        %v4842 = vpack.c.bf16 %v4783, %v4781
        %v4843 = vpack.c.bf16 %v4787, %v4785
        %4844 = vrot.lane.b32.xlu0 %v1332, 16
        %v4845 = vpop.permute.xlu0 %4844
        %4846 = vrot.lane.b32.xlu0 %v1333, 16
        %v4847 = vpop.permute.xlu0 %4846
        %4848 = vrot.lane.b32.xlu0 %v1334, 16
        %v4849 = vpop.permute.xlu0 %4848
        %4850 = vrot.lane.b32.xlu0 %v1335, 16
        %v4851 = vpop.permute.xlu0 %4850
        %4852 = vrot.lane.b32.xlu0 %v1336, 16
        %v4853 = vpop.permute.xlu0 %4852
        %4854 = vrot.lane.b32.xlu0 %v1337, 16
        %v4855 = vpop.permute.xlu0 %4854
        %4856 = vrot.lane.b32.xlu0 %v1338, 16
        %v4857 = vpop.permute.xlu0 %4856
        %4858 = vrot.lane.b32.xlu0 %v1339, 16
        %v4859 = vpop.permute.xlu0 %4858
        %4868 = vmatprep.subr.bf16.mxu0 0
        %4869 = vmatpush1.bf16.msra.mxu0 %v4859
        %4870 = vmatprep.subr.bf16.mxu0 0
        %4871 = vmatpush1.bf16.msra.mxu0 %v4857
        %4872 = vmatprep.subr.bf16.mxu0 0
        %4873 = vmatpush1.bf16.msra.mxu0 %v4855
        %4874 = vmatprep.subr.bf16.mxu0 0
        %4875 = vmatpush1.bf16.msra.mxu0 %v4853
        %4876 = vmatprep.subr.bf16.mxu0 0
        %4877 = vmatpush1.bf16.msra.mxu0 %v4851
        %4878 = vmatprep.subr.bf16.mxu0 0
        %4879 = vmatpush1.bf16.msra.mxu0 %v4849
        %4880 = vmatprep.subr.bf16.mxu0 0
        %4881 = vmatpush1.bf16.msra.mxu0 %v4847
        %4882 = vmatprep.subr.bf16.mxu0 0
        %4883 = vmatpush1.bf16.msra.mxu0 %v4845
        %4884 = vmatprep.subr.bf16.mxu0 0
        %4885 = vmatpush2.bf16.msra.mxu0 0
        %4886 = vmatprep.subr.bf16.mxu0 0
        %4887 = vmatpush2.bf16.msra.mxu0 0
        %4888 = vmatprep.subr.bf16.mxu0 0
        %4889 = vmatpush2.bf16.msra.mxu0 0
        %4890 = vmatprep.subr.bf16.mxu0 0
        %4891 = vmatpush2.bf16.msra.mxu0 0
        %4892 = vmatprep.subr.bf16.mxu0 0
        %4893 = vmatpush2.bf16.msra.mxu0 0
        %4894 = vmatprep.subr.bf16.mxu0 0
        %4895 = vmatpush2.bf16.msra.mxu0 0
        %4896 = vmatprep.subr.bf16.mxu0 0
        %4897 = vmatpush2.bf16.msra.mxu0 0
        %4898 = vmatprep.subr.bf16.mxu0 0
        %4899 = vmatpush2.bf16.msra.mxu0 0
        %4900 = vmatprep.mubr.bf16.mxu0 0
        %4901 = vmatmul.mubr.bf16.gmra.mxu0 %v4836
        %v4902 = vpop.f32.mrf.mxu0
        %v4903 = vadd.f32 0.0, %v4902
        %v4904 = vpop.f32.mrf.mxu0
        %v4905 = vpop.f32.mrf.mxu0
        %v4906 = vadd.f32 0.0, %v4905
        %v4907 = vpop.f32.mrf.mxu0
        %4908 = vmatprep.mubr.bf16.mxu0 0
        %4909 = vmatmul.mubr.bf16.gmra.mxu0 %v4837
        %v4910 = vpop.f32.mrf.mxu0
        %v4911 = vadd.f32 0.0, %v4910
        %v4912 = vpop.f32.mrf.mxu0
        %v4913 = vpop.f32.mrf.mxu0
        %v4914 = vadd.f32 0.0, %v4913
        %v4915 = vpop.f32.mrf.mxu0
        %4916 = vmatprep.mubr.bf16.mxu0 0
        %4917 = vmatmul.mubr.bf16.gmra.mxu0 %v4838
        %v4918 = vpop.f32.mrf.mxu0
        %v4919 = vadd.f32 0.0, %v4918
        %v4920 = vpop.f32.mrf.mxu0
        %v4921 = vpop.f32.mrf.mxu0
        %v4922 = vadd.f32 0.0, %v4921
        %v4923 = vpop.f32.mrf.mxu0
        %4924 = vmatprep.mubr.bf16.mxu0 0
        %4925 = vmatmul.mubr.bf16.gmra.mxu0 %v4839
        %v4926 = vpop.f32.mrf.mxu0
        %v4927 = vadd.f32 0.0, %v4926
        %v4928 = vpop.f32.mrf.mxu0
        %v4929 = vpop.f32.mrf.mxu0
        %v4930 = vadd.f32 0.0, %v4929
        %v4931 = vpop.f32.mrf.mxu0
        %4932 = vmatprep.mubr.bf16.mxu0 0
        %4933 = vmatmul.mubr.bf16.gmra.mxu0 %v4840
        %v4934 = vpop.f32.mrf.mxu0
        %v4935 = vadd.f32 0.0, %v4934
        %v4936 = vpop.f32.mrf.mxu0
        %v4937 = vpop.f32.mrf.mxu0
        %v4938 = vadd.f32 0.0, %v4937
        %v4939 = vpop.f32.mrf.mxu0
        %4940 = vmatprep.mubr.bf16.mxu0 0
        %4941 = vmatmul.mubr.bf16.gmra.mxu0 %v4841
        %v4942 = vpop.f32.mrf.mxu0
        %v4943 = vadd.f32 0.0, %v4942
        %v4944 = vpop.f32.mrf.mxu0
        %v4945 = vpop.f32.mrf.mxu0
        %v4946 = vadd.f32 0.0, %v4945
        %v4947 = vpop.f32.mrf.mxu0
        %4948 = vmatprep.mubr.bf16.mxu0 0
        %4949 = vmatmul.mubr.bf16.gmra.mxu0 %v4842
        %v4950 = vpop.f32.mrf.mxu0
        %v4951 = vadd.f32 0.0, %v4950
        %v4952 = vpop.f32.mrf.mxu0
        %v4953 = vpop.f32.mrf.mxu0
        %v4954 = vadd.f32 0.0, %v4953
        %v4955 = vpop.f32.mrf.mxu0
        %4956 = vmatprep.mubr.bf16.mxu0 0
        %4957 = vmatmul.mubr.bf16.gmra.mxu0 %v4843
        %v4958 = vpop.f32.mrf.mxu0
        %v4959 = vadd.f32 0.0, %v4958
        %v4960 = vpop.f32.mrf.mxu0
        %v4961 = vpop.f32.mrf.mxu0
        %v4962 = vadd.f32 0.0, %v4961
        %v4963 = vpop.f32.mrf.mxu0
        %4964 = vdwg.mxu0
        %v4965 = vmul.f32 %v4903, %v4820
        %v4966 = vmul.f32 %v4906, %v4821
        %v4967 = vmul.f32 %v4911, %v4822
        %v4968 = vmul.f32 %v4914, %v4823
        %v4969 = vmul.f32 %v4919, %v4824
        %v4970 = vmul.f32 %v4922, %v4825
        %v4971 = vmul.f32 %v4927, %v4826
        %v4972 = vmul.f32 %v4930, %v4827
        %v4973 = vmul.f32 %v4935, %v4828
        %v4974 = vmul.f32 %v4938, %v4829
        %v4975 = vmul.f32 %v4943, %v4830
        %v4976 = vmul.f32 %v4946, %v4831
        %v4977 = vmul.f32 %v4951, %v4832
        %v4978 = vmul.f32 %v4954, %v4833
        %v4979 = vmul.f32 %v4959, %v4834
        %v4980 = vmul.f32 %v4962, %v4835
        %v4981 = vpack.c.bf16 %v4966, %v4965
        %v4982 = vpack.c.bf16 %v4968, %v4967
        %v4983 = vpack.c.bf16 %v4970, %v4969
        %v4984 = vpack.c.bf16 %v4972, %v4971
        %v4985 = vpack.c.bf16 %v4974, %v4973
        %v4986 = vpack.c.bf16 %v4976, %v4975
        %v4987 = vpack.c.bf16 %v4978, %v4977
        %v4988 = vpack.c.bf16 %v4980, %v4979
        %4997 = vrot.lane.b32.xlu0 %v2233, 16
        %v4998 = vpop.permute.xlu0 %4997
        %4999 = vrot.lane.b32.xlu0 %v2234, 16
        %v5000 = vpop.permute.xlu0 %4999
        %5001 = vrot.lane.b32.xlu0 %v2235, 16
        %v5002 = vpop.permute.xlu0 %5001
        %5003 = vrot.lane.b32.xlu0 %v2236, 16
        %v5004 = vpop.permute.xlu0 %5003
        %5005 = vrot.lane.b32.xlu0 %v2237, 16
        %v5006 = vpop.permute.xlu0 %5005
        %5007 = vrot.lane.b32.xlu0 %v2238, 16
        %v5008 = vpop.permute.xlu0 %5007
        %5009 = vrot.lane.b32.xlu0 %v2239, 16
        %v5010 = vpop.permute.xlu0 %5009
        %5011 = vrot.lane.b32.xlu0 %v2240, 16
        %v5012 = vpop.permute.xlu0 %5011
        %5021 = vrot.lane.b32.xlu0 %v2691, 32
        %v5022 = vpop.permute.xlu0 %5021
        %5023 = vrot.lane.b32.xlu0 %v2692, 32
        %v5024 = vpop.permute.xlu0 %5023
        %5025 = vrot.lane.b32.xlu0 %v2693, 32
        %v5026 = vpop.permute.xlu0 %5025
        %5027 = vrot.lane.b32.xlu0 %v2694, 32
        %v5028 = vpop.permute.xlu0 %5027
        %5029 = vrot.lane.b32.xlu0 %v2695, 32
        %v5030 = vpop.permute.xlu0 %5029
        %5031 = vrot.lane.b32.xlu0 %v2696, 32
        %v5032 = vpop.permute.xlu0 %5031
        %5033 = vrot.lane.b32.xlu0 %v2697, 32
        %v5034 = vpop.permute.xlu0 %5033
        %5035 = vrot.lane.b32.xlu0 %v2698, 32
        %v5036 = vpop.permute.xlu0 %5035
        %5045 = vrot.lane.b32.xlu0 %v3149, 48
        %v5046 = vpop.permute.xlu0 %5045
        %5047 = vrot.lane.b32.xlu0 %v3150, 48
        %v5048 = vpop.permute.xlu0 %5047
        %5049 = vrot.lane.b32.xlu0 %v3151, 48
        %v5050 = vpop.permute.xlu0 %5049
        %5051 = vrot.lane.b32.xlu0 %v3152, 48
        %v5052 = vpop.permute.xlu0 %5051
        %5053 = vrot.lane.b32.xlu0 %v3153, 48
        %v5054 = vpop.permute.xlu0 %5053
        %5055 = vrot.lane.b32.xlu0 %v3154, 48
        %v5056 = vpop.permute.xlu0 %5055
        %5057 = vrot.lane.b32.xlu0 %v3155, 48
        %v5058 = vpop.permute.xlu0 %5057
        %5059 = vrot.lane.b32.xlu0 %v3156, 48
        %v5060 = vpop.permute.xlu0 %5059
        %5069 = vrot.lane.b32.xlu0 %v3607, 64
        %v5070 = vpop.permute.xlu0 %5069
        %5071 = vrot.lane.b32.xlu0 %v3608, 64
        %v5072 = vpop.permute.xlu0 %5071
        %5073 = vrot.lane.b32.xlu0 %v3609, 64
        %v5074 = vpop.permute.xlu0 %5073
        %5075 = vrot.lane.b32.xlu0 %v3610, 64
        %v5076 = vpop.permute.xlu0 %5075
        %5077 = vrot.lane.b32.xlu0 %v3611, 64
        %v5078 = vpop.permute.xlu0 %5077
        %5079 = vrot.lane.b32.xlu0 %v3612, 64
        %v5080 = vpop.permute.xlu0 %5079
        %5081 = vrot.lane.b32.xlu0 %v3613, 64
        %v5082 = vpop.permute.xlu0 %5081
        %5083 = vrot.lane.b32.xlu0 %v3614, 64
        %v5084 = vpop.permute.xlu0 %5083
        %5093 = vrot.lane.b32.xlu0 %v4065, 80
        %v5094 = vpop.permute.xlu0 %5093
        %5095 = vrot.lane.b32.xlu0 %v4066, 80
        %v5096 = vpop.permute.xlu0 %5095
        %5097 = vrot.lane.b32.xlu0 %v4067, 80
        %v5098 = vpop.permute.xlu0 %5097
        %5099 = vrot.lane.b32.xlu0 %v4068, 80
        %v5100 = vpop.permute.xlu0 %5099
        %5101 = vrot.lane.b32.xlu0 %v4069, 80
        %v5102 = vpop.permute.xlu0 %5101
        %5103 = vrot.lane.b32.xlu0 %v4070, 80
        %v5104 = vpop.permute.xlu0 %5103
        %5105 = vrot.lane.b32.xlu0 %v4071, 80
        %v5106 = vpop.permute.xlu0 %5105
        %5107 = vrot.lane.b32.xlu0 %v4072, 80
        %v5108 = vpop.permute.xlu0 %5107
        %5117 = vrot.lane.b32.xlu0 %v4523, 96
        %v5118 = vpop.permute.xlu0 %5117
        %5119 = vrot.lane.b32.xlu0 %v4524, 96
        %v5120 = vpop.permute.xlu0 %5119
        %5121 = vrot.lane.b32.xlu0 %v4525, 96
        %v5122 = vpop.permute.xlu0 %5121
        %5123 = vrot.lane.b32.xlu0 %v4526, 96
        %v5124 = vpop.permute.xlu0 %5123
        %5125 = vrot.lane.b32.xlu0 %v4527, 96
        %v5126 = vpop.permute.xlu0 %5125
        %5127 = vrot.lane.b32.xlu0 %v4528, 96
        %v5128 = vpop.permute.xlu0 %5127
        %5129 = vrot.lane.b32.xlu0 %v4529, 96
        %v5130 = vpop.permute.xlu0 %5129
        %5131 = vrot.lane.b32.xlu0 %v4530, 96
        %v5132 = vpop.permute.xlu0 %5131
        %5141 = vrot.lane.b32.xlu0 %v4981, 112
        %v5142 = vpop.permute.xlu0 %5141
        %5143 = vrot.lane.b32.xlu0 %v4982, 112
        %v5144 = vpop.permute.xlu0 %5143
        %5145 = vrot.lane.b32.xlu0 %v4983, 112
        %v5146 = vpop.permute.xlu0 %5145
        %5147 = vrot.lane.b32.xlu0 %v4984, 112
        %v5148 = vpop.permute.xlu0 %5147
        %5149 = vrot.lane.b32.xlu0 %v4985, 112
        %v5150 = vpop.permute.xlu0 %5149
        %5151 = vrot.lane.b32.xlu0 %v4986, 112
        %v5152 = vpop.permute.xlu0 %5151
        %5153 = vrot.lane.b32.xlu0 %v4987, 112
        %v5154 = vpop.permute.xlu0 %5153
        %5155 = vrot.lane.b32.xlu0 %v4988, 112
        %v5156 = vpop.permute.xlu0 %5155
        %v5159 = vsel %vm1356, %v1751, %v4998
        %v5162 = vsel %vm1356, %v1752, %v5000
        %v5165 = vsel %vm1356, %v1753, %v5002
        %v5168 = vsel %vm1356, %v1754, %v5004
        %v5171 = vsel %vm1356, %v1755, %v5006
        %v5174 = vsel %vm1356, %v1756, %v5008
        %v5177 = vsel %vm1356, %v1757, %v5010
        %v5180 = vsel %vm1356, %v1758, %v5012
        %vm5181 = vcmask 261120
        %v5183 = vsel %vm5181, %v5159, %v5022
        %v5185 = vsel %vm5181, %v5162, %v5024
        %v5187 = vsel %vm5181, %v5165, %v5026
        %v5189 = vsel %vm5181, %v5168, %v5028
        %v5191 = vsel %vm5181, %v5171, %v5030
        %v5193 = vsel %vm5181, %v5174, %v5032
        %v5195 = vsel %vm5181, %v5177, %v5034
        %v5197 = vsel %vm5181, %v5180, %v5036
        %vm5198 = vcmask 392192
        %v5200 = vsel %vm5198, %v5183, %v5046
        %v5202 = vsel %vm5198, %v5185, %v5048
        %v5204 = vsel %vm5198, %v5187, %v5050
        %v5206 = vsel %vm5198, %v5189, %v5052
        %v5208 = vsel %vm5198, %v5191, %v5054
        %v5210 = vsel %vm5198, %v5193, %v5056
        %v5212 = vsel %vm5198, %v5195, %v5058
        %v5214 = vsel %vm5198, %v5197, %v5060
        %v5216 = vsel %vm799, %v5200, %v5070
        %v5218 = vsel %vm799, %v5202, %v5072
        %v5220 = vsel %vm799, %v5204, %v5074
        %v5222 = vsel %vm799, %v5206, %v5076
        %v5224 = vsel %vm799, %v5208, %v5078
        %v5226 = vsel %vm799, %v5210, %v5080
        %v5228 = vsel %vm799, %v5212, %v5082
        %v5230 = vsel %vm799, %v5214, %v5084
        %vm5231 = vcmask 654336
        %v5233 = vsel %vm5231, %v5216, %v5094
        %v5235 = vsel %vm5231, %v5218, %v5096
        %v5237 = vsel %vm5231, %v5220, %v5098
        %v5239 = vsel %vm5231, %v5222, %v5100
        %v5241 = vsel %vm5231, %v5224, %v5102
        %v5243 = vsel %vm5231, %v5226, %v5104
        %v5245 = vsel %vm5231, %v5228, %v5106
        %v5247 = vsel %vm5231, %v5230, %v5108
        %vm5248 = vcmask 785408
        %v5250 = vsel %vm5248, %v5233, %v5118
        %v5252 = vsel %vm5248, %v5235, %v5120
        %v5254 = vsel %vm5248, %v5237, %v5122
        %v5256 = vsel %vm5248, %v5239, %v5124
        %v5258 = vsel %vm5248, %v5241, %v5126
        %v5260 = vsel %vm5248, %v5243, %v5128
        %v5262 = vsel %vm5248, %v5245, %v5130
        %v5264 = vsel %vm5248, %v5247, %v5132
        %vm5265 = vcmask 916480
        %v5267 = vsel %vm5265, %v5250, %v5142
        %v5270 = vsel %vm5265, %v5252, %v5144
        %v5273 = vsel %vm5265, %v5254, %v5146
        %v5276 = vsel %vm5265, %v5256, %v5148
        %v5279 = vsel %vm5265, %v5258, %v5150
        %v5282 = vsel %vm5265, %v5260, %v5152
        %v5285 = vsel %vm5265, %v5262, %v5154
        %v5288 = vsel %vm5265, %v5264, %v5156
        %v5290 = vld [vmem:[#allocation10] sm:$0xf]
        %v5291 = vld [vmem:[#allocation10 + $0x4] sm:$0xf]
        %v5292 = vld [vmem:[#allocation10 + $0x8] sm:$0xf]
        %v5293 = vld [vmem:[#allocation10 + $0xc] sm:$0xf]
        %v5294 = vld [vmem:[#allocation10 + $0x10] sm:$0xf]
        %v5295 = vld [vmem:[#allocation10 + $0x14] sm:$0xf]
        %v5296 = vld [vmem:[#allocation10 + $0x18] sm:$0xf]
        %v5297 = vld [vmem:[#allocation10 + $0x1c] sm:$0xf]
        %v5298 = vld [vmem:[#allocation10 + $0x20] sm:$0xf]
        %v5299 = vld [vmem:[#allocation10 + $0x24] sm:$0xf]
        %v5300 = vld [vmem:[#allocation10 + $0x28] sm:$0xf]
        %v5301 = vld [vmem:[#allocation10 + $0x2c] sm:$0xf]
        %v5302 = vld [vmem:[#allocation10 + $0x30] sm:$0xf]
        %v5303 = vld [vmem:[#allocation10 + $0x34] sm:$0xf]
        %v5304 = vld [vmem:[#allocation10 + $0x38] sm:$0xf]
        %v5305 = vld [vmem:[#allocation10 + $0x3c] sm:$0xf]
        %v5306 = vld [vmem:[#allocation11] sm:$0x1]
        %v5308 = vlaneseq
        %v5309 = vshrl.u32 %v5308, 7
        %v5310 = vsub.s32 0, %v5309
        %v5311 = vrot.slane %v5306, %v5310
        %v5329 = vunpack.c.l.b16 %v5290
        %v5330 = vunpack.c.l.b16 %v5291
        %v5331 = vunpack.c.l.b16 %v5292
        %v5332 = vunpack.c.l.b16 %v5293
        %v5333 = vunpack.c.l.b16 %v5294
        %v5334 = vunpack.c.l.b16 %v5295
        %v5335 = vunpack.c.l.b16 %v5296
        %v5336 = vunpack.c.l.b16 %v5297
        %v5337 = vunpack.c.l.b16 %v5298
        %v5338 = vunpack.c.l.b16 %v5299
        %v5339 = vunpack.c.l.b16 %v5300
        %v5340 = vunpack.c.l.b16 %v5301
        %v5341 = vunpack.c.l.b16 %v5302
        %v5342 = vunpack.c.l.b16 %v5303
        %v5343 = vunpack.c.l.b16 %v5304
        %v5344 = vunpack.c.l.b16 %v5305
        %v5345 = vpack.c.b16 %v5330, %v5329
        %v5346 = vpack.c.b16 %v5332, %v5331
        %v5347 = vpack.c.b16 %v5334, %v5333
        %v5348 = vpack.c.b16 %v5336, %v5335
        %v5349 = vpack.c.b16 %v5338, %v5337
        %v5350 = vpack.c.b16 %v5340, %v5339
        %v5351 = vpack.c.b16 %v5342, %v5341
        %v5352 = vpack.c.b16 %v5344, %v5343
        %5361 = vmatprep.subr.bf16.mxu0 0
        %5362 = vmatpush1.bf16.msra.mxu0 %v5352
        %5363 = vmatprep.subr.bf16.mxu0 0
        %5364 = vmatpush1.bf16.msra.mxu0 %v5351
        %5365 = vmatprep.subr.bf16.mxu0 0
        %5366 = vmatpush1.bf16.msra.mxu0 %v5350
        %5367 = vmatprep.subr.bf16.mxu0 0
        %5368 = vmatpush1.bf16.msra.mxu0 %v5349
        %5369 = vmatprep.subr.bf16.mxu0 0
        %5370 = vmatpush1.bf16.msra.mxu0 %v5348
        %5371 = vmatprep.subr.bf16.mxu0 0
        %5372 = vmatpush1.bf16.msra.mxu0 %v5347
        %5373 = vmatprep.subr.bf16.mxu0 0
        %5374 = vmatpush1.bf16.msra.mxu0 %v5346
        %5375 = vmatprep.subr.bf16.mxu0 0
        %5376 = vmatpush1.bf16.msra.mxu0 %v5345
        %5377 = vmatprep.subr.bf16.mxu0 0
        %5378 = vmatpush2.bf16.msra.mxu0 0
        %5379 = vmatprep.subr.bf16.mxu0 0
        %5380 = vmatpush2.bf16.msra.mxu0 0
        %5381 = vmatprep.subr.bf16.mxu0 0
        %5382 = vmatpush2.bf16.msra.mxu0 0
        %5383 = vmatprep.subr.bf16.mxu0 0
        %5384 = vmatpush2.bf16.msra.mxu0 0
        %5385 = vmatprep.subr.bf16.mxu0 0
        %5386 = vmatpush2.bf16.msra.mxu0 0
        %5387 = vmatprep.subr.bf16.mxu0 0
        %5388 = vmatpush2.bf16.msra.mxu0 0
        %5389 = vmatprep.subr.bf16.mxu0 0
        %5390 = vmatpush2.bf16.msra.mxu0 0
        %5391 = vmatprep.subr.bf16.mxu0 0
        %5392 = vmatpush2.bf16.msra.mxu0 0
        %5393 = vmatprep.mubr.bf16.mxu0 0
        %5394 = vmatmul.mubr.bf16.gmra.mxu0 %v5267
        %v5395 = vpop.f32.mrf.mxu0
        %v5396 = vadd.f32 %v5311, %v5395
        %v5397 = vpop.f32.mrf.mxu0
        %v5398 = vpop.f32.mrf.mxu0
        %v5399 = vadd.f32 %v5311, %v5398
        %v5400 = vpop.f32.mrf.mxu0
        %5401 = vmatprep.mubr.bf16.mxu0 0
        %5402 = vmatmul.mubr.bf16.gmra.mxu0 %v5270
        %v5403 = vpop.f32.mrf.mxu0
        %v5404 = vadd.f32 %v5311, %v5403
        %v5405 = vpop.f32.mrf.mxu0
        %v5406 = vpop.f32.mrf.mxu0
        %v5407 = vadd.f32 %v5311, %v5406
        %v5408 = vpop.f32.mrf.mxu0
        %5409 = vmatprep.mubr.bf16.mxu0 0
        %5410 = vmatmul.mubr.bf16.gmra.mxu0 %v5273
        %v5411 = vpop.f32.mrf.mxu0
        %v5412 = vadd.f32 %v5311, %v5411
        %v5413 = vpop.f32.mrf.mxu0
        %v5414 = vpop.f32.mrf.mxu0
        %v5415 = vadd.f32 %v5311, %v5414
        %v5416 = vpop.f32.mrf.mxu0
        %5417 = vmatprep.mubr.bf16.mxu0 0
        %5418 = vmatmul.mubr.bf16.gmra.mxu0 %v5276
        %v5419 = vpop.f32.mrf.mxu0
        %v5420 = vadd.f32 %v5311, %v5419
        %v5421 = vpop.f32.mrf.mxu0
        %v5422 = vpop.f32.mrf.mxu0
        %v5423 = vadd.f32 %v5311, %v5422
        %v5424 = vpop.f32.mrf.mxu0
        %5425 = vmatprep.mubr.bf16.mxu0 0
        %5426 = vmatmul.mubr.bf16.gmra.mxu0 %v5279
        %v5427 = vpop.f32.mrf.mxu0
        %v5428 = vadd.f32 %v5311, %v5427
        %v5429 = vpop.f32.mrf.mxu0
        %v5430 = vpop.f32.mrf.mxu0
        %v5431 = vadd.f32 %v5311, %v5430
        %v5432 = vpop.f32.mrf.mxu0
        %5433 = vmatprep.mubr.bf16.mxu0 0
        %5434 = vmatmul.mubr.bf16.gmra.mxu0 %v5282
        %v5435 = vpop.f32.mrf.mxu0
        %v5436 = vadd.f32 %v5311, %v5435
        %v5437 = vpop.f32.mrf.mxu0
        %v5438 = vpop.f32.mrf.mxu0
        %v5439 = vadd.f32 %v5311, %v5438
        %v5440 = vpop.f32.mrf.mxu0
        %5441 = vmatprep.mubr.bf16.mxu0 0
        %5442 = vmatmul.mubr.bf16.gmra.mxu0 %v5285
        %v5443 = vpop.f32.mrf.mxu0
        %v5444 = vadd.f32 %v5311, %v5443
        %v5445 = vpop.f32.mrf.mxu0
        %v5446 = vpop.f32.mrf.mxu0
        %v5447 = vadd.f32 %v5311, %v5446
        %v5448 = vpop.f32.mrf.mxu0
        %5449 = vmatprep.mubr.bf16.mxu0 0
        %5450 = vmatmul.mubr.bf16.gmra.mxu0 %v5288
        %v5451 = vpop.f32.mrf.mxu0
        %v5452 = vadd.f32 %v5311, %v5451
        %v5453 = vpop.f32.mrf.mxu0
        %v5454 = vpop.f32.mrf.mxu0
        %v5455 = vadd.f32 %v5311, %v5454
        %v5456 = vpop.f32.mrf.mxu0
        %5457 = vdwg.mxu0
        %v5458 = vadd.f32 %v859, %v5396
        %v5459 = vadd.f32 %v862, %v5399
        %v5460 = vadd.f32 %v867, %v5404
        %v5461 = vadd.f32 %v870, %v5407
        %v5462 = vadd.f32 %v875, %v5412
        %v5463 = vadd.f32 %v878, %v5415
        %v5464 = vadd.f32 %v883, %v5420
        %v5465 = vadd.f32 %v886, %v5423
        %v5466 = vadd.f32 %v891, %v5428
        %v5467 = vadd.f32 %v894, %v5431
        %v5468 = vadd.f32 %v899, %v5436
        %v5469 = vadd.f32 %v902, %v5439
        %v5470 = vadd.f32 %v907, %v5444
        %v5471 = vadd.f32 %v910, %v5447
        %v5472 = vadd.f32 %v915, %v5452
        %v5473 = vadd.f32 %v918, %v5455
        %v5474 = vld [vmem:[#allocation13] sm:$0x1]
        %v5475 = vld [vmem:[#allocation14] sm:$0x1]
        %5476 = vadd.xlane.f32.xlu0 %v5458
        %v5477 = vpop.xlane.xlu0 %5476
        %5478 = vadd.xlane.f32.xlu0 %v5459
        %v5479 = vpop.xlane.xlu0 %5478
        %5480 = vadd.xlane.f32.xlu0 %v5460
        %v5481 = vpop.xlane.xlu0 %5480
        %5482 = vadd.xlane.f32.xlu0 %v5461
        %v5483 = vpop.xlane.xlu0 %5482
        %5484 = vadd.xlane.f32.xlu0 %v5462
        %v5485 = vpop.xlane.xlu0 %5484
        %5486 = vadd.xlane.f32.xlu0 %v5463
        %v5487 = vpop.xlane.xlu0 %5486
        %5488 = vadd.xlane.f32.xlu0 %v5464
        %v5489 = vpop.xlane.xlu0 %5488
        %5490 = vadd.xlane.f32.xlu0 %v5465
        %v5491 = vpop.xlane.xlu0 %5490
        %5492 = vadd.xlane.f32.xlu0 %v5466
        %v5493 = vpop.xlane.xlu0 %5492
        %5494 = vadd.xlane.f32.xlu0 %v5467
        %v5495 = vpop.xlane.xlu0 %5494
        %5496 = vadd.xlane.f32.xlu0 %v5468
        %v5497 = vpop.xlane.xlu0 %5496
        %5498 = vadd.xlane.f32.xlu0 %v5469
        %v5499 = vpop.xlane.xlu0 %5498
        %5500 = vadd.xlane.f32.xlu0 %v5470
        %v5501 = vpop.xlane.xlu0 %5500
        %5502 = vadd.xlane.f32.xlu0 %v5471
        %v5503 = vpop.xlane.xlu0 %5502
        %5504 = vadd.xlane.f32.xlu0 %v5472
        %v5505 = vpop.xlane.xlu0 %5504
        %5506 = vadd.xlane.f32.xlu0 %v5473
        %v5507 = vpop.xlane.xlu0 %5506
        %v5508 = vrcp.pop 128.0
        %v5509 = vmul.f32 %v5477, %v5508
        %v5510 = vmul.f32 %v5479, %v5508
        %v5511 = vmul.f32 %v5481, %v5508
        %v5512 = vmul.f32 %v5483, %v5508
        %v5513 = vmul.f32 %v5485, %v5508
        %v5514 = vmul.f32 %v5487, %v5508
        %v5515 = vmul.f32 %v5489, %v5508
        %v5516 = vmul.f32 %v5491, %v5508
        %v5517 = vmul.f32 %v5493, %v5508
        %v5518 = vmul.f32 %v5495, %v5508
        %v5519 = vmul.f32 %v5497, %v5508
        %v5520 = vmul.f32 %v5499, %v5508
        %v5521 = vmul.f32 %v5501, %v5508
        %v5522 = vmul.f32 %v5503, %v5508
        %v5523 = vmul.f32 %v5505, %v5508
        %v5524 = vmul.f32 %v5507, %v5508
        %v5525 = vsub.f32 %v5458, %v5509
        %v5526 = vsub.f32 %v5459, %v5510
        %v5527 = vsub.f32 %v5460, %v5511
        %v5528 = vsub.f32 %v5461, %v5512
        %v5529 = vsub.f32 %v5462, %v5513
        %v5530 = vsub.f32 %v5463, %v5514
        %v5531 = vsub.f32 %v5464, %v5515
        %v5532 = vsub.f32 %v5465, %v5516
        %v5533 = vsub.f32 %v5466, %v5517
        %v5534 = vsub.f32 %v5467, %v5518
        %v5535 = vsub.f32 %v5468, %v5519
        %v5536 = vsub.f32 %v5469, %v5520
        %v5537 = vsub.f32 %v5470, %v5521
        %v5538 = vsub.f32 %v5471, %v5522
        %v5539 = vsub.f32 %v5472, %v5523
        %v5540 = vsub.f32 %v5473, %v5524
        %v5541 = vmul.f32 %v5525, %v5525
        %v5542 = vmul.f32 %v5526, %v5526
        %v5543 = vmul.f32 %v5527, %v5527
        %v5544 = vmul.f32 %v5528, %v5528
        %v5545 = vmul.f32 %v5529, %v5529
        %v5546 = vmul.f32 %v5530, %v5530
        %v5547 = vmul.f32 %v5531, %v5531
        %v5548 = vmul.f32 %v5532, %v5532
        %v5549 = vmul.f32 %v5533, %v5533
        %v5550 = vmul.f32 %v5534, %v5534
        %v5551 = vmul.f32 %v5535, %v5535
        %v5552 = vmul.f32 %v5536, %v5536
        %v5553 = vmul.f32 %v5537, %v5537
        %v5554 = vmul.f32 %v5538, %v5538
        %v5555 = vmul.f32 %v5539, %v5539
        %v5556 = vmul.f32 %v5540, %v5540
        %5557 = vadd.xlane.f32.xlu0 %v5541
        %v5558 = vpop.xlane.xlu0 %5557
        %5559 = vadd.xlane.f32.xlu0 %v5542
        %v5560 = vpop.xlane.xlu0 %5559
        %5561 = vadd.xlane.f32.xlu0 %v5543
        %v5562 = vpop.xlane.xlu0 %5561
        %5563 = vadd.xlane.f32.xlu0 %v5544
        %v5564 = vpop.xlane.xlu0 %5563
        %5565 = vadd.xlane.f32.xlu0 %v5545
        %v5566 = vpop.xlane.xlu0 %5565
        %5567 = vadd.xlane.f32.xlu0 %v5546
        %v5568 = vpop.xlane.xlu0 %5567
        %5569 = vadd.xlane.f32.xlu0 %v5547
        %v5570 = vpop.xlane.xlu0 %5569
        %5571 = vadd.xlane.f32.xlu0 %v5548
        %v5572 = vpop.xlane.xlu0 %5571
        %5573 = vadd.xlane.f32.xlu0 %v5549
        %v5574 = vpop.xlane.xlu0 %5573
        %5575 = vadd.xlane.f32.xlu0 %v5550
        %v5576 = vpop.xlane.xlu0 %5575
        %5577 = vadd.xlane.f32.xlu0 %v5551
        %v5578 = vpop.xlane.xlu0 %5577
        %5579 = vadd.xlane.f32.xlu0 %v5552
        %v5580 = vpop.xlane.xlu0 %5579
        %5581 = vadd.xlane.f32.xlu0 %v5553
        %v5582 = vpop.xlane.xlu0 %5581
        %5583 = vadd.xlane.f32.xlu0 %v5554
        %v5584 = vpop.xlane.xlu0 %5583
        %5585 = vadd.xlane.f32.xlu0 %v5555
        %v5586 = vpop.xlane.xlu0 %5585
        %5587 = vadd.xlane.f32.xlu0 %v5556
        %v5588 = vpop.xlane.xlu0 %5587
        %v5589 = vmul.f32 %v5558, %v5508
        %v5590 = vmul.f32 %v5560, %v5508
        %v5591 = vmul.f32 %v5562, %v5508
        %v5592 = vmul.f32 %v5564, %v5508
        %v5593 = vmul.f32 %v5566, %v5508
        %v5594 = vmul.f32 %v5568, %v5508
        %v5595 = vmul.f32 %v5570, %v5508
        %v5596 = vmul.f32 %v5572, %v5508
        %v5597 = vmul.f32 %v5574, %v5508
        %v5598 = vmul.f32 %v5576, %v5508
        %v5599 = vmul.f32 %v5578, %v5508
        %v5600 = vmul.f32 %v5580, %v5508
        %v5601 = vmul.f32 %v5582, %v5508
        %v5602 = vmul.f32 %v5584, %v5508
        %v5603 = vmul.f32 %v5586, %v5508
        %v5604 = vmul.f32 %v5588, %v5508
        %v5605 = vadd.f32 %v5589, 1e-05
        %v5606 = vadd.f32 %v5590, 1e-05
        %v5607 = vadd.f32 %v5591, 1e-05
        %v5608 = vadd.f32 %v5592, 1e-05
        %v5609 = vadd.f32 %v5593, 1e-05
        %v5610 = vadd.f32 %v5594, 1e-05
        %v5611 = vadd.f32 %v5595, 1e-05
        %v5612 = vadd.f32 %v5596, 1e-05
        %v5613 = vadd.f32 %v5597, 1e-05
        %v5614 = vadd.f32 %v5598, 1e-05
        %v5615 = vadd.f32 %v5599, 1e-05
        %v5616 = vadd.f32 %v5600, 1e-05
        %v5617 = vadd.f32 %v5601, 1e-05
        %v5618 = vadd.f32 %v5602, 1e-05
        %v5619 = vadd.f32 %v5603, 1e-05
        %v5620 = vadd.f32 %v5604, 1e-05
        %v5621 = vrsqrt.pop %v5605
        %v5622 = vrsqrt.pop %v5606
        %v5623 = vrsqrt.pop %v5607
        %v5624 = vrsqrt.pop %v5608
        %v5625 = vrsqrt.pop %v5609
        %v5626 = vrsqrt.pop %v5610
        %v5627 = vrsqrt.pop %v5611
        %v5628 = vrsqrt.pop %v5612
        %v5629 = vrsqrt.pop %v5613
        %v5630 = vrsqrt.pop %v5614
        %v5631 = vrsqrt.pop %v5615
        %v5632 = vrsqrt.pop %v5616
        %v5633 = vrsqrt.pop %v5617
        %v5634 = vrsqrt.pop %v5618
        %v5635 = vrsqrt.pop %v5619
        %v5636 = vrsqrt.pop %v5620
        %v5637 = vmul.f32 %v5525, %v5621
        %v5638 = vmul.f32 %v5526, %v5622
        %v5639 = vmul.f32 %v5527, %v5623
        %v5640 = vmul.f32 %v5528, %v5624
        %v5641 = vmul.f32 %v5529, %v5625
        %v5642 = vmul.f32 %v5530, %v5626
        %v5643 = vmul.f32 %v5531, %v5627
        %v5644 = vmul.f32 %v5532, %v5628
        %v5645 = vmul.f32 %v5533, %v5629
        %v5646 = vmul.f32 %v5534, %v5630
        %v5647 = vmul.f32 %v5535, %v5631
        %v5648 = vmul.f32 %v5536, %v5632
        %v5649 = vmul.f32 %v5537, %v5633
        %v5650 = vmul.f32 %v5538, %v5634
        %v5651 = vmul.f32 %v5539, %v5635
        %v5652 = vmul.f32 %v5540, %v5636
        %v5654 = vlaneseq
        %v5655 = vshrl.u32 %v5654, 7
        %v5656 = vsub.s32 0, %v5655
        %v5657 = vrot.slane %v5474, %v5656
        %v5659 = vmul.f32 %v5637, %v5657
        %v5660 = vmul.f32 %v5638, %v5657
        %v5661 = vmul.f32 %v5639, %v5657
        %v5662 = vmul.f32 %v5640, %v5657
        %v5663 = vmul.f32 %v5641, %v5657
        %v5664 = vmul.f32 %v5642, %v5657
        %v5665 = vmul.f32 %v5643, %v5657
        %v5666 = vmul.f32 %v5644, %v5657
        %v5667 = vmul.f32 %v5645, %v5657
        %v5668 = vmul.f32 %v5646, %v5657
        %v5669 = vmul.f32 %v5647, %v5657
        %v5670 = vmul.f32 %v5648, %v5657
        %v5671 = vmul.f32 %v5649, %v5657
        %v5672 = vmul.f32 %v5650, %v5657
        %v5673 = vmul.f32 %v5651, %v5657
        %v5674 = vmul.f32 %v5652, %v5657
        %v5676 = vlaneseq
        %v5677 = vshrl.u32 %v5676, 7
        %v5678 = vsub.s32 0, %v5677
        %v5679 = vrot.slane %v5475, %v5678
        %v5681 = vadd.f32 %v5659, %v5679
        %v5682 = vadd.f32 %v5660, %v5679
        %v5683 = vadd.f32 %v5661, %v5679
        %v5684 = vadd.f32 %v5662, %v5679
        %v5685 = vadd.f32 %v5663, %v5679
        %v5686 = vadd.f32 %v5664, %v5679
        %v5687 = vadd.f32 %v5665, %v5679
        %v5688 = vadd.f32 %v5666, %v5679
        %v5689 = vadd.f32 %v5667, %v5679
        %v5690 = vadd.f32 %v5668, %v5679
        %v5691 = vadd.f32 %v5669, %v5679
        %v5692 = vadd.f32 %v5670, %v5679
        %v5693 = vadd.f32 %v5671, %v5679
        %v5694 = vadd.f32 %v5672, %v5679
        %v5695 = vadd.f32 %v5673, %v5679
        %v5696 = vadd.f32 %v5674, %v5679
        %v5697 = vpack.c.bf16 %v5682, %v5681
        %v5698 = vpack.c.bf16 %v5684, %v5683
        %v5699 = vpack.c.bf16 %v5686, %v5685
        %v5700 = vpack.c.bf16 %v5688, %v5687
        %v5701 = vpack.c.bf16 %v5690, %v5689
        %v5702 = vpack.c.bf16 %v5692, %v5691
        %v5703 = vpack.c.bf16 %v5694, %v5693
        %v5704 = vpack.c.bf16 %v5696, %v5695
        %v5705 = vld [vmem:[#allocation16] sm:$0xff]
        %v5706 = vld [vmem:[#allocation16 + $0x8] sm:$0xff]
        %v5707 = vld [vmem:[#allocation16 + $0x10] sm:$0xff]
        %v5708 = vld [vmem:[#allocation16 + $0x18] sm:$0xff]
        %v5709 = vld [vmem:[#allocation16 + $0x20] sm:$0xff]
        %v5710 = vld [vmem:[#allocation16 + $0x28] sm:$0xff]
        %v5711 = vld [vmem:[#allocation16 + $0x30] sm:$0xff]
        %v5712 = vld [vmem:[#allocation16 + $0x38] sm:$0xff]
        %v5713 = vld [vmem:[#allocation16 + $0x40] sm:$0xff]
        %v5714 = vld [vmem:[#allocation16 + $0x48] sm:$0xff]
        %v5715 = vld [vmem:[#allocation16 + $0x50] sm:$0xff]
        %v5716 = vld [vmem:[#allocation16 + $0x58] sm:$0xff]
        %v5717 = vld [vmem:[#allocation16 + $0x60] sm:$0xff]
        %v5718 = vld [vmem:[#allocation16 + $0x68] sm:$0xff]
        %v5719 = vld [vmem:[#allocation16 + $0x70] sm:$0xff]
        %v5720 = vld [vmem:[#allocation16 + $0x78] sm:$0xff]
        %v5721 = vld [vmem:[#allocation16 + $0x80] sm:$0xff]
        %v5722 = vld [vmem:[#allocation16 + $0x88] sm:$0xff]
        %v5723 = vld [vmem:[#allocation16 + $0x90] sm:$0xff]
        %v5724 = vld [vmem:[#allocation16 + $0x98] sm:$0xff]
        %v5725 = vld [vmem:[#allocation16 + $0xa0] sm:$0xff]
        %v5726 = vld [vmem:[#allocation16 + $0xa8] sm:$0xff]
        %v5727 = vld [vmem:[#allocation16 + $0xb0] sm:$0xff]
        %v5728 = vld [vmem:[#allocation16 + $0xb8] sm:$0xff]
        %v5729 = vld [vmem:[#allocation16 + $0xc0] sm:$0xff]
        %v5730 = vld [vmem:[#allocation16 + $0xc8] sm:$0xff]
        %v5731 = vld [vmem:[#allocation16 + $0xd0] sm:$0xff]
        %v5732 = vld [vmem:[#allocation16 + $0xd8] sm:$0xff]
        %v5733 = vld [vmem:[#allocation16 + $0xe0] sm:$0xff]
        %v5734 = vld [vmem:[#allocation16 + $0xe8] sm:$0xff]
        %v5735 = vld [vmem:[#allocation16 + $0xf0] sm:$0xff]
        %v5736 = vld [vmem:[#allocation16 + $0xf8] sm:$0xff]
        %v5737 = vld [vmem:[#allocation16 + $0x100] sm:$0xff]
        %v5738 = vld [vmem:[#allocation16 + $0x108] sm:$0xff]
        %v5739 = vld [vmem:[#allocation16 + $0x110] sm:$0xff]
        %v5740 = vld [vmem:[#allocation16 + $0x118] sm:$0xff]
        %v5741 = vld [vmem:[#allocation16 + $0x120] sm:$0xff]
        %v5742 = vld [vmem:[#allocation16 + $0x128] sm:$0xff]
        %v5743 = vld [vmem:[#allocation16 + $0x130] sm:$0xff]
        %v5744 = vld [vmem:[#allocation16 + $0x138] sm:$0xff]
        %v5745 = vld [vmem:[#allocation16 + $0x140] sm:$0xff]
        %v5746 = vld [vmem:[#allocation16 + $0x148] sm:$0xff]
        %v5747 = vld [vmem:[#allocation16 + $0x150] sm:$0xff]
        %v5748 = vld [vmem:[#allocation16 + $0x158] sm:$0xff]
        %v5749 = vld [vmem:[#allocation16 + $0x160] sm:$0xff]
        %v5750 = vld [vmem:[#allocation16 + $0x168] sm:$0xff]
        %v5751 = vld [vmem:[#allocation16 + $0x170] sm:$0xff]
        %v5752 = vld [vmem:[#allocation16 + $0x178] sm:$0xff]
        %v5753 = vld [vmem:[#allocation16 + $0x180] sm:$0xff]
        %v5754 = vld [vmem:[#allocation16 + $0x188] sm:$0xff]
        %v5755 = vld [vmem:[#allocation16 + $0x190] sm:$0xff]
        %v5756 = vld [vmem:[#allocation16 + $0x198] sm:$0xff]
        %v5757 = vld [vmem:[#allocation16 + $0x1a0] sm:$0xff]
        %v5758 = vld [vmem:[#allocation16 + $0x1a8] sm:$0xff]
        %v5759 = vld [vmem:[#allocation16 + $0x1b0] sm:$0xff]
        %v5760 = vld [vmem:[#allocation16 + $0x1b8] sm:$0xff]
        %v5761 = vld [vmem:[#allocation16 + $0x1c0] sm:$0xff]
        %v5762 = vld [vmem:[#allocation16 + $0x1c8] sm:$0xff]
        %v5763 = vld [vmem:[#allocation16 + $0x1d0] sm:$0xff]
        %v5764 = vld [vmem:[#allocation16 + $0x1d8] sm:$0xff]
        %v5765 = vld [vmem:[#allocation16 + $0x1e0] sm:$0xff]
        %v5766 = vld [vmem:[#allocation16 + $0x1e8] sm:$0xff]
        %v5767 = vld [vmem:[#allocation16 + $0x1f0] sm:$0xff]
        %v5768 = vld [vmem:[#allocation16 + $0x1f8] sm:$0xff]
        %v5769 = vld [vmem:[#allocation16 + $0x200] sm:$0xff]
        %v5770 = vld [vmem:[#allocation16 + $0x208] sm:$0xff]
        %v5771 = vld [vmem:[#allocation16 + $0x210] sm:$0xff]
        %v5772 = vld [vmem:[#allocation16 + $0x218] sm:$0xff]
        %v5773 = vld [vmem:[#allocation16 + $0x220] sm:$0xff]
        %v5774 = vld [vmem:[#allocation16 + $0x228] sm:$0xff]
        %v5775 = vld [vmem:[#allocation16 + $0x230] sm:$0xff]
        %v5776 = vld [vmem:[#allocation16 + $0x238] sm:$0xff]
        %v5777 = vld [vmem:[#allocation16 + $0x240] sm:$0xff]
        %v5778 = vld [vmem:[#allocation16 + $0x248] sm:$0xff]
        %v5779 = vld [vmem:[#allocation16 + $0x250] sm:$0xff]
        %v5780 = vld [vmem:[#allocation16 + $0x258] sm:$0xff]
        %v5781 = vld [vmem:[#allocation16 + $0x260] sm:$0xff]
        %v5782 = vld [vmem:[#allocation16 + $0x268] sm:$0xff]
        %v5783 = vld [vmem:[#allocation16 + $0x270] sm:$0xff]
        %v5784 = vld [vmem:[#allocation16 + $0x278] sm:$0xff]
        %v5785 = vld [vmem:[#allocation16 + $0x280] sm:$0xff]
        %v5786 = vld [vmem:[#allocation16 + $0x288] sm:$0xff]
        %v5787 = vld [vmem:[#allocation16 + $0x290] sm:$0xff]
        %v5788 = vld [vmem:[#allocation16 + $0x298] sm:$0xff]
        %v5789 = vld [vmem:[#allocation16 + $0x2a0] sm:$0xff]
        %v5790 = vld [vmem:[#allocation16 + $0x2a8] sm:$0xff]
        %v5791 = vld [vmem:[#allocation16 + $0x2b0] sm:$0xff]
        %v5792 = vld [vmem:[#allocation16 + $0x2b8] sm:$0xff]
        %v5793 = vld [vmem:[#allocation16 + $0x2c0] sm:$0xff]
        %v5794 = vld [vmem:[#allocation16 + $0x2c8] sm:$0xff]
        %v5795 = vld [vmem:[#allocation16 + $0x2d0] sm:$0xff]
        %v5796 = vld [vmem:[#allocation16 + $0x2d8] sm:$0xff]
        %v5797 = vld [vmem:[#allocation16 + $0x2e0] sm:$0xff]
        %v5798 = vld [vmem:[#allocation16 + $0x2e8] sm:$0xff]
        %v5799 = vld [vmem:[#allocation16 + $0x2f0] sm:$0xff]
        %v5800 = vld [vmem:[#allocation16 + $0x2f8] sm:$0xff]
        %v5801 = vld [vmem:[#allocation16 + $0x300] sm:$0xff]
        %v5802 = vld [vmem:[#allocation16 + $0x308] sm:$0xff]
        %v5803 = vld [vmem:[#allocation16 + $0x310] sm:$0xff]
        %v5804 = vld [vmem:[#allocation16 + $0x318] sm:$0xff]
        %v5805 = vld [vmem:[#allocation16 + $0x320] sm:$0xff]
        %v5806 = vld [vmem:[#allocation16 + $0x328] sm:$0xff]
        %v5807 = vld [vmem:[#allocation16 + $0x330] sm:$0xff]
        %v5808 = vld [vmem:[#allocation16 + $0x338] sm:$0xff]
        %v5809 = vld [vmem:[#allocation16 + $0x340] sm:$0xff]
        %v5810 = vld [vmem:[#allocation16 + $0x348] sm:$0xff]
        %v5811 = vld [vmem:[#allocation16 + $0x350] sm:$0xff]
        %v5812 = vld [vmem:[#allocation16 + $0x358] sm:$0xff]
        %v5813 = vld [vmem:[#allocation16 + $0x360] sm:$0xff]
        %v5814 = vld [vmem:[#allocation16 + $0x368] sm:$0xff]
        %v5815 = vld [vmem:[#allocation16 + $0x370] sm:$0xff]
        %v5816 = vld [vmem:[#allocation16 + $0x378] sm:$0xff]
        %v5817 = vld [vmem:[#allocation16 + $0x380] sm:$0xff]
        %v5818 = vld [vmem:[#allocation16 + $0x388] sm:$0xff]
        %v5819 = vld [vmem:[#allocation16 + $0x390] sm:$0xff]
        %v5820 = vld [vmem:[#allocation16 + $0x398] sm:$0xff]
        %v5821 = vld [vmem:[#allocation16 + $0x3a0] sm:$0xff]
        %v5822 = vld [vmem:[#allocation16 + $0x3a8] sm:$0xff]
        %v5823 = vld [vmem:[#allocation16 + $0x3b0] sm:$0xff]
        %v5824 = vld [vmem:[#allocation16 + $0x3b8] sm:$0xff]
        %v5825 = vld [vmem:[#allocation16 + $0x3c0] sm:$0xff]
        %v5826 = vld [vmem:[#allocation16 + $0x3c8] sm:$0xff]
        %v5827 = vld [vmem:[#allocation16 + $0x3d0] sm:$0xff]
        %v5828 = vld [vmem:[#allocation16 + $0x3d8] sm:$0xff]
        %v5829 = vld [vmem:[#allocation16 + $0x3e0] sm:$0xff]
        %v5830 = vld [vmem:[#allocation16 + $0x3e8] sm:$0xff]
        %v5831 = vld [vmem:[#allocation16 + $0x3f0] sm:$0xff]
        %v5832 = vld [vmem:[#allocation16 + $0x3f8] sm:$0xff]
        %v5833 = vld [vmem:[%s11] sm:$0xff]
        %v5834 = vld [vmem:[%s11 + $0x8] sm:$0xff]
        %v5837 = vlaneseq
        %v5838 = vshrl.u32 %v5837, 7
        %v5839 = vsub.s32 0, %v5838
        %v5840 = vrot.slane %v5833, %v5839
        %v5841 = vlaneseq
        %v5842 = vshrl.u32 %v5841, 7
        %v5843 = vsub.s32 1, %v5842
        %v5844 = vrot.slane %v5833, %v5843
        %v5845 = vlaneseq
        %v5846 = vshrl.u32 %v5845, 7
        %v5847 = vsub.s32 2, %v5846
        %v5848 = vrot.slane %v5833, %v5847
        %v5849 = vlaneseq
        %v5850 = vshrl.u32 %v5849, 7
        %v5851 = vsub.s32 3, %v5850
        %v5852 = vrot.slane %v5833, %v5851
        %v5853 = vlaneseq
        %v5854 = vshrl.u32 %v5853, 7
        %v5855 = vsub.s32 4, %v5854
        %v5856 = vrot.slane %v5833, %v5855
        %v5857 = vlaneseq
        %v5858 = vshrl.u32 %v5857, 7
        %v5859 = vsub.s32 5, %v5858
        %v5860 = vrot.slane %v5833, %v5859
        %v5861 = vlaneseq
        %v5862 = vshrl.u32 %v5861, 7
        %v5863 = vsub.s32 6, %v5862
        %v5864 = vrot.slane %v5833, %v5863
        %v5865 = vlaneseq
        %v5866 = vshrl.u32 %v5865, 7
        %v5867 = vsub.s32 7, %v5866
        %v5868 = vrot.slane %v5833, %v5867
        %v5869 = vlaneseq
        %v5870 = vshrl.u32 %v5869, 7
        %v5871 = vsub.s32 0, %v5870
        %v5872 = vrot.slane %v5834, %v5871
        %v5873 = vlaneseq
        %v5874 = vshrl.u32 %v5873, 7
        %v5875 = vsub.s32 1, %v5874
        %v5876 = vrot.slane %v5834, %v5875
        %v5877 = vlaneseq
        %v5878 = vshrl.u32 %v5877, 7
        %v5879 = vsub.s32 2, %v5878
        %v5880 = vrot.slane %v5834, %v5879
        %v5881 = vlaneseq
        %v5882 = vshrl.u32 %v5881, 7
        %v5883 = vsub.s32 3, %v5882
        %v5884 = vrot.slane %v5834, %v5883
        %v5885 = vlaneseq
        %v5886 = vshrl.u32 %v5885, 7
        %v5887 = vsub.s32 4, %v5886
        %v5888 = vrot.slane %v5834, %v5887
        %v5889 = vlaneseq
        %v5890 = vshrl.u32 %v5889, 7
        %v5891 = vsub.s32 5, %v5890
        %v5892 = vrot.slane %v5834, %v5891
        %v5893 = vlaneseq
        %v5894 = vshrl.u32 %v5893, 7
        %v5895 = vsub.s32 6, %v5894
        %v5896 = vrot.slane %v5834, %v5895
        %v5897 = vlaneseq
        %v5898 = vshrl.u32 %v5897, 7
        %v5899 = vsub.s32 7, %v5898
        %v5900 = vrot.slane %v5834, %v5899
        %v6045 = vunpack.c.l.b16 %v5705
        %v6046 = vunpack.c.h.b16 %v5705
        %v6047 = vunpack.c.l.b16 %v5706
        %v6048 = vunpack.c.h.b16 %v5706
        %v6049 = vunpack.c.l.b16 %v5707
        %v6050 = vunpack.c.h.b16 %v5707
        %v6051 = vunpack.c.l.b16 %v5708
        %v6052 = vunpack.c.h.b16 %v5708
        %v6053 = vunpack.c.l.b16 %v5709
        %v6054 = vunpack.c.h.b16 %v5709
        %v6055 = vunpack.c.l.b16 %v5710
        %v6056 = vunpack.c.h.b16 %v5710
        %v6057 = vunpack.c.l.b16 %v5711
        %v6058 = vunpack.c.h.b16 %v5711
        %v6059 = vunpack.c.l.b16 %v5712
        %v6060 = vunpack.c.h.b16 %v5712
        %v6061 = vunpack.c.l.b16 %v5713
        %v6062 = vunpack.c.h.b16 %v5713
        %v6063 = vunpack.c.l.b16 %v5714
        %v6064 = vunpack.c.h.b16 %v5714
        %v6065 = vunpack.c.l.b16 %v5715
        %v6066 = vunpack.c.h.b16 %v5715
        %v6067 = vunpack.c.l.b16 %v5716
        %v6068 = vunpack.c.h.b16 %v5716
        %v6069 = vunpack.c.l.b16 %v5717
        %v6070 = vunpack.c.h.b16 %v5717
        %v6071 = vunpack.c.l.b16 %v5718
        %v6072 = vunpack.c.h.b16 %v5718
        %v6073 = vunpack.c.l.b16 %v5719
        %v6074 = vunpack.c.h.b16 %v5719
        %v6075 = vunpack.c.l.b16 %v5720
        %v6076 = vunpack.c.h.b16 %v5720
        %v6077 = vunpack.c.l.b16 %v5721
        %v6078 = vunpack.c.h.b16 %v5721
        %v6079 = vunpack.c.l.b16 %v5722
        %v6080 = vunpack.c.h.b16 %v5722
        %v6081 = vunpack.c.l.b16 %v5723
        %v6082 = vunpack.c.h.b16 %v5723
        %v6083 = vunpack.c.l.b16 %v5724
        %v6084 = vunpack.c.h.b16 %v5724
        %v6085 = vunpack.c.l.b16 %v5725
        %v6086 = vunpack.c.h.b16 %v5725
        %v6087 = vunpack.c.l.b16 %v5726
        %v6088 = vunpack.c.h.b16 %v5726
        %v6089 = vunpack.c.l.b16 %v5727
        %v6090 = vunpack.c.h.b16 %v5727
        %v6091 = vunpack.c.l.b16 %v5728
        %v6092 = vunpack.c.h.b16 %v5728
        %v6093 = vunpack.c.l.b16 %v5729
        %v6094 = vunpack.c.h.b16 %v5729
        %v6095 = vunpack.c.l.b16 %v5730
        %v6096 = vunpack.c.h.b16 %v5730
        %v6097 = vunpack.c.l.b16 %v5731
        %v6098 = vunpack.c.h.b16 %v5731
        %v6099 = vunpack.c.l.b16 %v5732
        %v6100 = vunpack.c.h.b16 %v5732
        %v6101 = vunpack.c.l.b16 %v5733
        %v6102 = vunpack.c.h.b16 %v5733
        %v6103 = vunpack.c.l.b16 %v5734
        %v6104 = vunpack.c.h.b16 %v5734
        %v6105 = vunpack.c.l.b16 %v5735
        %v6106 = vunpack.c.h.b16 %v5735
        %v6107 = vunpack.c.l.b16 %v5736
        %v6108 = vunpack.c.h.b16 %v5736
        %v6109 = vunpack.c.l.b16 %v5737
        %v6110 = vunpack.c.h.b16 %v5737
        %v6111 = vunpack.c.l.b16 %v5738
        %v6112 = vunpack.c.h.b16 %v5738
        %v6113 = vunpack.c.l.b16 %v5739
        %v6114 = vunpack.c.h.b16 %v5739
        %v6115 = vunpack.c.l.b16 %v5740
        %v6116 = vunpack.c.h.b16 %v5740
        %v6117 = vunpack.c.l.b16 %v5741
        %v6118 = vunpack.c.h.b16 %v5741
        %v6119 = vunpack.c.l.b16 %v5742
        %v6120 = vunpack.c.h.b16 %v5742
        %v6121 = vunpack.c.l.b16 %v5743
        %v6122 = vunpack.c.h.b16 %v5743
        %v6123 = vunpack.c.l.b16 %v5744
        %v6124 = vunpack.c.h.b16 %v5744
        %v6125 = vunpack.c.l.b16 %v5745
        %v6126 = vunpack.c.h.b16 %v5745
        %v6127 = vunpack.c.l.b16 %v5746
        %v6128 = vunpack.c.h.b16 %v5746
        %v6129 = vunpack.c.l.b16 %v5747
        %v6130 = vunpack.c.h.b16 %v5747
        %v6131 = vunpack.c.l.b16 %v5748
        %v6132 = vunpack.c.h.b16 %v5748
        %v6133 = vunpack.c.l.b16 %v5749
        %v6134 = vunpack.c.h.b16 %v5749
        %v6135 = vunpack.c.l.b16 %v5750
        %v6136 = vunpack.c.h.b16 %v5750
        %v6137 = vunpack.c.l.b16 %v5751
        %v6138 = vunpack.c.h.b16 %v5751
        %v6139 = vunpack.c.l.b16 %v5752
        %v6140 = vunpack.c.h.b16 %v5752
        %v6141 = vunpack.c.l.b16 %v5753
        %v6142 = vunpack.c.h.b16 %v5753
        %v6143 = vunpack.c.l.b16 %v5754
        %v6144 = vunpack.c.h.b16 %v5754
        %v6145 = vunpack.c.l.b16 %v5755
        %v6146 = vunpack.c.h.b16 %v5755
        %v6147 = vunpack.c.l.b16 %v5756
        %v6148 = vunpack.c.h.b16 %v5756
        %v6149 = vunpack.c.l.b16 %v5757
        %v6150 = vunpack.c.h.b16 %v5757
        %v6151 = vunpack.c.l.b16 %v5758
        %v6152 = vunpack.c.h.b16 %v5758
        %v6153 = vunpack.c.l.b16 %v5759
        %v6154 = vunpack.c.h.b16 %v5759
        %v6155 = vunpack.c.l.b16 %v5760
        %v6156 = vunpack.c.h.b16 %v5760
        %v6157 = vunpack.c.l.b16 %v5761
        %v6158 = vunpack.c.h.b16 %v5761
        %v6159 = vunpack.c.l.b16 %v5762
        %v6160 = vunpack.c.h.b16 %v5762
        %v6161 = vunpack.c.l.b16 %v5763
        %v6162 = vunpack.c.h.b16 %v5763
        %v6163 = vunpack.c.l.b16 %v5764
        %v6164 = vunpack.c.h.b16 %v5764
        %v6165 = vunpack.c.l.b16 %v5765
        %v6166 = vunpack.c.h.b16 %v5765
        %v6167 = vunpack.c.l.b16 %v5766
        %v6168 = vunpack.c.h.b16 %v5766
        %v6169 = vunpack.c.l.b16 %v5767
        %v6170 = vunpack.c.h.b16 %v5767
        %v6171 = vunpack.c.l.b16 %v5768
        %v6172 = vunpack.c.h.b16 %v5768
        %v6173 = vunpack.c.l.b16 %v5769
        %v6174 = vunpack.c.h.b16 %v5769
        %v6175 = vunpack.c.l.b16 %v5770
        %v6176 = vunpack.c.h.b16 %v5770
        %v6177 = vunpack.c.l.b16 %v5771
        %v6178 = vunpack.c.h.b16 %v5771
        %v6179 = vunpack.c.l.b16 %v5772
        %v6180 = vunpack.c.h.b16 %v5772
        %v6181 = vunpack.c.l.b16 %v5773
        %v6182 = vunpack.c.h.b16 %v5773
        %v6183 = vunpack.c.l.b16 %v5774
        %v6184 = vunpack.c.h.b16 %v5774
        %v6185 = vunpack.c.l.b16 %v5775
        %v6186 = vunpack.c.h.b16 %v5775
        %v6187 = vunpack.c.l.b16 %v5776
        %v6188 = vunpack.c.h.b16 %v5776
        %v6189 = vunpack.c.l.b16 %v5777
        %v6190 = vunpack.c.h.b16 %v5777
        %v6191 = vunpack.c.l.b16 %v5778
        %v6192 = vunpack.c.h.b16 %v5778
        %v6193 = vunpack.c.l.b16 %v5779
        %v6194 = vunpack.c.h.b16 %v5779
        %v6195 = vunpack.c.l.b16 %v5780
        %v6196 = vunpack.c.h.b16 %v5780
        %v6197 = vunpack.c.l.b16 %v5781
        %v6198 = vunpack.c.h.b16 %v5781
        %v6199 = vunpack.c.l.b16 %v5782
        %v6200 = vunpack.c.h.b16 %v5782
        %v6201 = vunpack.c.l.b16 %v5783
        %v6202 = vunpack.c.h.b16 %v5783
        %v6203 = vunpack.c.l.b16 %v5784
        %v6204 = vunpack.c.h.b16 %v5784
        %v6205 = vunpack.c.l.b16 %v5785
        %v6206 = vunpack.c.h.b16 %v5785
        %v6207 = vunpack.c.l.b16 %v5786
        %v6208 = vunpack.c.h.b16 %v5786
        %v6209 = vunpack.c.l.b16 %v5787
        %v6210 = vunpack.c.h.b16 %v5787
        %v6211 = vunpack.c.l.b16 %v5788
        %v6212 = vunpack.c.h.b16 %v5788
        %v6213 = vunpack.c.l.b16 %v5789
        %v6214 = vunpack.c.h.b16 %v5789
        %v6215 = vunpack.c.l.b16 %v5790
        %v6216 = vunpack.c.h.b16 %v5790
        %v6217 = vunpack.c.l.b16 %v5791
        %v6218 = vunpack.c.h.b16 %v5791
        %v6219 = vunpack.c.l.b16 %v5792
        %v6220 = vunpack.c.h.b16 %v5792
        %v6221 = vunpack.c.l.b16 %v5793
        %v6222 = vunpack.c.h.b16 %v5793
        %v6223 = vunpack.c.l.b16 %v5794
        %v6224 = vunpack.c.h.b16 %v5794
        %v6225 = vunpack.c.l.b16 %v5795
        %v6226 = vunpack.c.h.b16 %v5795
        %v6227 = vunpack.c.l.b16 %v5796
        %v6228 = vunpack.c.h.b16 %v5796
        %v6229 = vunpack.c.l.b16 %v5797
        %v6230 = vunpack.c.h.b16 %v5797
        %v6231 = vunpack.c.l.b16 %v5798
        %v6232 = vunpack.c.h.b16 %v5798
        %v6233 = vunpack.c.l.b16 %v5799
        %v6234 = vunpack.c.h.b16 %v5799
        %v6235 = vunpack.c.l.b16 %v5800
        %v6236 = vunpack.c.h.b16 %v5800
        %v6237 = vunpack.c.l.b16 %v5801
        %v6238 = vunpack.c.h.b16 %v5801
        %v6239 = vunpack.c.l.b16 %v5802
        %v6240 = vunpack.c.h.b16 %v5802
        %v6241 = vunpack.c.l.b16 %v5803
        %v6242 = vunpack.c.h.b16 %v5803
        %v6243 = vunpack.c.l.b16 %v5804
        %v6244 = vunpack.c.h.b16 %v5804
        %v6245 = vunpack.c.l.b16 %v5805
        %v6246 = vunpack.c.h.b16 %v5805
        %v6247 = vunpack.c.l.b16 %v5806
        %v6248 = vunpack.c.h.b16 %v5806
        %v6249 = vunpack.c.l.b16 %v5807
        %v6250 = vunpack.c.h.b16 %v5807
        %v6251 = vunpack.c.l.b16 %v5808
        %v6252 = vunpack.c.h.b16 %v5808
        %v6253 = vunpack.c.l.b16 %v5809
        %v6254 = vunpack.c.h.b16 %v5809
        %v6255 = vunpack.c.l.b16 %v5810
        %v6256 = vunpack.c.h.b16 %v5810
        %v6257 = vunpack.c.l.b16 %v5811
        %v6258 = vunpack.c.h.b16 %v5811
        %v6259 = vunpack.c.l.b16 %v5812
        %v6260 = vunpack.c.h.b16 %v5812
        %v6261 = vunpack.c.l.b16 %v5813
        %v6262 = vunpack.c.h.b16 %v5813
        %v6263 = vunpack.c.l.b16 %v5814
        %v6264 = vunpack.c.h.b16 %v5814
        %v6265 = vunpack.c.l.b16 %v5815
        %v6266 = vunpack.c.h.b16 %v5815
        %v6267 = vunpack.c.l.b16 %v5816
        %v6268 = vunpack.c.h.b16 %v5816
        %v6269 = vunpack.c.l.b16 %v5817
        %v6270 = vunpack.c.h.b16 %v5817
        %v6271 = vunpack.c.l.b16 %v5818
        %v6272 = vunpack.c.h.b16 %v5818
        %v6273 = vunpack.c.l.b16 %v5819
        %v6274 = vunpack.c.h.b16 %v5819
        %v6275 = vunpack.c.l.b16 %v5820
        %v6276 = vunpack.c.h.b16 %v5820
        %v6277 = vunpack.c.l.b16 %v5821
        %v6278 = vunpack.c.h.b16 %v5821
        %v6279 = vunpack.c.l.b16 %v5822
        %v6280 = vunpack.c.h.b16 %v5822
        %v6281 = vunpack.c.l.b16 %v5823
        %v6282 = vunpack.c.h.b16 %v5823
        %v6283 = vunpack.c.l.b16 %v5824
        %v6284 = vunpack.c.h.b16 %v5824
        %v6285 = vunpack.c.l.b16 %v5825
        %v6286 = vunpack.c.h.b16 %v5825
        %v6287 = vunpack.c.l.b16 %v5826
        %v6288 = vunpack.c.h.b16 %v5826
        %v6289 = vunpack.c.l.b16 %v5827
        %v6290 = vunpack.c.h.b16 %v5827
        %v6291 = vunpack.c.l.b16 %v5828
        %v6292 = vunpack.c.h.b16 %v5828
        %v6293 = vunpack.c.l.b16 %v5829
        %v6294 = vunpack.c.h.b16 %v5829
        %v6295 = vunpack.c.l.b16 %v5830
        %v6296 = vunpack.c.h.b16 %v5830
        %v6297 = vunpack.c.l.b16 %v5831
        %v6298 = vunpack.c.h.b16 %v5831
        %v6299 = vunpack.c.l.b16 %v5832
        %v6300 = vunpack.c.h.b16 %v5832
        %v6301 = vpack.c.b16 %v6061, %v6045
        %v6302 = vpack.c.b16 %v6062, %v6046
        %v6303 = vpack.c.b16 %v6063, %v6047
        %v6304 = vpack.c.b16 %v6064, %v6048
        %v6305 = vpack.c.b16 %v6065, %v6049
        %v6306 = vpack.c.b16 %v6066, %v6050
        %v6307 = vpack.c.b16 %v6067, %v6051
        %v6308 = vpack.c.b16 %v6068, %v6052
        %v6309 = vpack.c.b16 %v6069, %v6053
        %v6310 = vpack.c.b16 %v6070, %v6054
        %v6311 = vpack.c.b16 %v6071, %v6055
        %v6312 = vpack.c.b16 %v6072, %v6056
        %v6313 = vpack.c.b16 %v6073, %v6057
        %v6314 = vpack.c.b16 %v6074, %v6058
        %v6315 = vpack.c.b16 %v6075, %v6059
        %v6316 = vpack.c.b16 %v6076, %v6060
        %v6317 = vpack.c.b16 %v6093, %v6077
        %v6318 = vpack.c.b16 %v6094, %v6078
        %v6319 = vpack.c.b16 %v6095, %v6079
        %v6320 = vpack.c.b16 %v6096, %v6080
        %v6321 = vpack.c.b16 %v6097, %v6081
        %v6322 = vpack.c.b16 %v6098, %v6082
        %v6323 = vpack.c.b16 %v6099, %v6083
        %v6324 = vpack.c.b16 %v6100, %v6084
        %v6325 = vpack.c.b16 %v6101, %v6085
        %v6326 = vpack.c.b16 %v6102, %v6086
        %v6327 = vpack.c.b16 %v6103, %v6087
        %v6328 = vpack.c.b16 %v6104, %v6088
        %v6329 = vpack.c.b16 %v6105, %v6089
        %v6330 = vpack.c.b16 %v6106, %v6090
        %v6331 = vpack.c.b16 %v6107, %v6091
        %v6332 = vpack.c.b16 %v6108, %v6092
        %v6333 = vpack.c.b16 %v6125, %v6109
        %v6334 = vpack.c.b16 %v6126, %v6110
        %v6335 = vpack.c.b16 %v6127, %v6111
        %v6336 = vpack.c.b16 %v6128, %v6112
        %v6337 = vpack.c.b16 %v6129, %v6113
        %v6338 = vpack.c.b16 %v6130, %v6114
        %v6339 = vpack.c.b16 %v6131, %v6115
        %v6340 = vpack.c.b16 %v6132, %v6116
        %v6341 = vpack.c.b16 %v6133, %v6117
        %v6342 = vpack.c.b16 %v6134, %v6118
        %v6343 = vpack.c.b16 %v6135, %v6119
        %v6344 = vpack.c.b16 %v6136, %v6120
        %v6345 = vpack.c.b16 %v6137, %v6121
        %v6346 = vpack.c.b16 %v6138, %v6122
        %v6347 = vpack.c.b16 %v6139, %v6123
        %v6348 = vpack.c.b16 %v6140, %v6124
        %v6349 = vpack.c.b16 %v6157, %v6141
        %v6350 = vpack.c.b16 %v6158, %v6142
        %v6351 = vpack.c.b16 %v6159, %v6143
        %v6352 = vpack.c.b16 %v6160, %v6144
        %v6353 = vpack.c.b16 %v6161, %v6145
        %v6354 = vpack.c.b16 %v6162, %v6146
        %v6355 = vpack.c.b16 %v6163, %v6147
        %v6356 = vpack.c.b16 %v6164, %v6148
        %v6357 = vpack.c.b16 %v6165, %v6149
        %v6358 = vpack.c.b16 %v6166, %v6150
        %v6359 = vpack.c.b16 %v6167, %v6151
        %v6360 = vpack.c.b16 %v6168, %v6152
        %v6361 = vpack.c.b16 %v6169, %v6153
        %v6362 = vpack.c.b16 %v6170, %v6154
        %v6363 = vpack.c.b16 %v6171, %v6155
        %v6364 = vpack.c.b16 %v6172, %v6156
        %v6365 = vpack.c.b16 %v6189, %v6173
        %v6366 = vpack.c.b16 %v6190, %v6174
        %v6367 = vpack.c.b16 %v6191, %v6175
        %v6368 = vpack.c.b16 %v6192, %v6176
        %v6369 = vpack.c.b16 %v6193, %v6177
        %v6370 = vpack.c.b16 %v6194, %v6178
        %v6371 = vpack.c.b16 %v6195, %v6179
        %v6372 = vpack.c.b16 %v6196, %v6180
        %v6373 = vpack.c.b16 %v6197, %v6181
        %v6374 = vpack.c.b16 %v6198, %v6182
        %v6375 = vpack.c.b16 %v6199, %v6183
        %v6376 = vpack.c.b16 %v6200, %v6184
        %v6377 = vpack.c.b16 %v6201, %v6185
        %v6378 = vpack.c.b16 %v6202, %v6186
        %v6379 = vpack.c.b16 %v6203, %v6187
        %v6380 = vpack.c.b16 %v6204, %v6188
        %v6381 = vpack.c.b16 %v6221, %v6205
        %v6382 = vpack.c.b16 %v6222, %v6206
        %v6383 = vpack.c.b16 %v6223, %v6207
        %v6384 = vpack.c.b16 %v6224, %v6208
        %v6385 = vpack.c.b16 %v6225, %v6209
        %v6386 = vpack.c.b16 %v6226, %v6210
        %v6387 = vpack.c.b16 %v6227, %v6211
        %v6388 = vpack.c.b16 %v6228, %v6212
        %v6389 = vpack.c.b16 %v6229, %v6213
        %v6390 = vpack.c.b16 %v6230, %v6214
        %v6391 = vpack.c.b16 %v6231, %v6215
        %v6392 = vpack.c.b16 %v6232, %v6216
        %v6393 = vpack.c.b16 %v6233, %v6217
        %v6394 = vpack.c.b16 %v6234, %v6218
        %v6395 = vpack.c.b16 %v6235, %v6219
        %v6396 = vpack.c.b16 %v6236, %v6220
        %v6397 = vpack.c.b16 %v6253, %v6237
        %v6398 = vpack.c.b16 %v6254, %v6238
        %v6399 = vpack.c.b16 %v6255, %v6239
        %v6400 = vpack.c.b16 %v6256, %v6240
        %v6401 = vpack.c.b16 %v6257, %v6241
        %v6402 = vpack.c.b16 %v6258, %v6242
        %v6403 = vpack.c.b16 %v6259, %v6243
        %v6404 = vpack.c.b16 %v6260, %v6244
        %v6405 = vpack.c.b16 %v6261, %v6245
        %v6406 = vpack.c.b16 %v6262, %v6246
        %v6407 = vpack.c.b16 %v6263, %v6247
        %v6408 = vpack.c.b16 %v6264, %v6248
        %v6409 = vpack.c.b16 %v6265, %v6249
        %v6410 = vpack.c.b16 %v6266, %v6250
        %v6411 = vpack.c.b16 %v6267, %v6251
        %v6412 = vpack.c.b16 %v6268, %v6252
        %v6413 = vpack.c.b16 %v6285, %v6269
        %v6414 = vpack.c.b16 %v6286, %v6270
        %v6415 = vpack.c.b16 %v6287, %v6271
        %v6416 = vpack.c.b16 %v6288, %v6272
        %v6417 = vpack.c.b16 %v6289, %v6273
        %v6418 = vpack.c.b16 %v6290, %v6274
        %v6419 = vpack.c.b16 %v6291, %v6275
        %v6420 = vpack.c.b16 %v6292, %v6276
        %v6421 = vpack.c.b16 %v6293, %v6277
        %v6422 = vpack.c.b16 %v6294, %v6278
        %v6423 = vpack.c.b16 %v6295, %v6279
        %v6424 = vpack.c.b16 %v6296, %v6280
        %v6425 = vpack.c.b16 %v6297, %v6281
        %v6426 = vpack.c.b16 %v6298, %v6282
        %v6427 = vpack.c.b16 %v6299, %v6283
        %v6428 = vpack.c.b16 %v6300, %v6284
        %6557 = vmatprep.subr.bf16.mxu0 %v6414
        %6558 = vmatpush1.bf16.msra.mxu0 %v6413
        %6559 = vmatprep.subr.bf16.mxu0 %v6398
        %6560 = vmatpush1.bf16.msra.mxu0 %v6397
        %6561 = vmatprep.subr.bf16.mxu0 %v6382
        %6562 = vmatpush1.bf16.msra.mxu0 %v6381
        %6563 = vmatprep.subr.bf16.mxu0 %v6366
        %6564 = vmatpush1.bf16.msra.mxu0 %v6365
        %6565 = vmatprep.subr.bf16.mxu0 %v6350
        %6566 = vmatpush1.bf16.msra.mxu0 %v6349
        %6567 = vmatprep.subr.bf16.mxu0 %v6334
        %6568 = vmatpush1.bf16.msra.mxu0 %v6333
        %6569 = vmatprep.subr.bf16.mxu0 %v6318
        %6570 = vmatpush1.bf16.msra.mxu0 %v6317
        %6571 = vmatprep.subr.bf16.mxu0 %v6302
        %6572 = vmatpush1.bf16.msra.mxu0 %v6301
        %6573 = vmatprep.subr.bf16.mxu0 0
        %6574 = vmatpush2.bf16.msra.mxu0 0
        %6575 = vmatprep.subr.bf16.mxu0 0
        %6576 = vmatpush2.bf16.msra.mxu0 0
        %6577 = vmatprep.subr.bf16.mxu0 0
        %6578 = vmatpush2.bf16.msra.mxu0 0
        %6579 = vmatprep.subr.bf16.mxu0 0
        %6580 = vmatpush2.bf16.msra.mxu0 0
        %6581 = vmatprep.subr.bf16.mxu0 0
        %6582 = vmatpush2.bf16.msra.mxu0 0
        %6583 = vmatprep.subr.bf16.mxu0 0
        %6584 = vmatpush2.bf16.msra.mxu0 0
        %6585 = vmatprep.subr.bf16.mxu0 0
        %6586 = vmatpush2.bf16.msra.mxu0 0
        %6587 = vmatprep.subr.bf16.mxu0 0
        %6588 = vmatpush2.bf16.msra.mxu0 0
        %6589 = vmatprep.mubr.bf16.mxu0 0
        %6590 = vmatmul.mubr.bf16.gmra.mxu0 %v5697
        %v6591 = vpop.f32.mrf.mxu0
        %v6592 = vadd.f32 %v5840, %v6591
        %v6593 = vpop.f32.mrf.mxu0
        %v6594 = vadd.f32 %v5844, %v6593
        %v6595 = vpop.f32.mrf.mxu0
        %v6596 = vadd.f32 %v5840, %v6595
        %v6597 = vpop.f32.mrf.mxu0
        %v6598 = vadd.f32 %v5844, %v6597
        %6599 = vmatprep.mubr.bf16.mxu0 0
        %6600 = vmatmul.mubr.bf16.gmra.mxu0 %v5698
        %v6601 = vpop.f32.mrf.mxu0
        %v6602 = vadd.f32 %v5840, %v6601
        %v6603 = vpop.f32.mrf.mxu0
        %v6604 = vadd.f32 %v5844, %v6603
        %v6605 = vpop.f32.mrf.mxu0
        %v6606 = vadd.f32 %v5840, %v6605
        %v6607 = vpop.f32.mrf.mxu0
        %v6608 = vadd.f32 %v5844, %v6607
        %6609 = vmatprep.mubr.bf16.mxu0 0
        %6610 = vmatmul.mubr.bf16.gmra.mxu0 %v5699
        %v6611 = vpop.f32.mrf.mxu0
        %v6612 = vadd.f32 %v5840, %v6611
        %v6613 = vpop.f32.mrf.mxu0
        %v6614 = vadd.f32 %v5844, %v6613
        %v6615 = vpop.f32.mrf.mxu0
        %v6616 = vadd.f32 %v5840, %v6615
        %v6617 = vpop.f32.mrf.mxu0
        %v6618 = vadd.f32 %v5844, %v6617
        %6619 = vmatprep.mubr.bf16.mxu0 0
        %6620 = vmatmul.mubr.bf16.gmra.mxu0 %v5700
        %v6621 = vpop.f32.mrf.mxu0
        %v6622 = vadd.f32 %v5840, %v6621
        %v6623 = vpop.f32.mrf.mxu0
        %v6624 = vadd.f32 %v5844, %v6623
        %v6625 = vpop.f32.mrf.mxu0
        %v6626 = vadd.f32 %v5840, %v6625
        %v6627 = vpop.f32.mrf.mxu0
        %v6628 = vadd.f32 %v5844, %v6627
        %6629 = vmatprep.mubr.bf16.mxu0 0
        %6630 = vmatmul.mubr.bf16.gmra.mxu0 %v5701
        %v6631 = vpop.f32.mrf.mxu0
        %v6632 = vadd.f32 %v5840, %v6631
        %v6633 = vpop.f32.mrf.mxu0
        %v6634 = vadd.f32 %v5844, %v6633
        %v6635 = vpop.f32.mrf.mxu0
        %v6636 = vadd.f32 %v5840, %v6635
        %v6637 = vpop.f32.mrf.mxu0
        %v6638 = vadd.f32 %v5844, %v6637
        %6639 = vmatprep.mubr.bf16.mxu0 0
        %6640 = vmatmul.mubr.bf16.gmra.mxu0 %v5702
        %v6641 = vpop.f32.mrf.mxu0
        %v6642 = vadd.f32 %v5840, %v6641
        %v6643 = vpop.f32.mrf.mxu0
        %v6644 = vadd.f32 %v5844, %v6643
        %v6645 = vpop.f32.mrf.mxu0
        %v6646 = vadd.f32 %v5840, %v6645
        %v6647 = vpop.f32.mrf.mxu0
        %v6648 = vadd.f32 %v5844, %v6647
        %6649 = vmatprep.mubr.bf16.mxu0 0
        %6650 = vmatmul.mubr.bf16.gmra.mxu0 %v5703
        %v6651 = vpop.f32.mrf.mxu0
        %v6652 = vadd.f32 %v5840, %v6651
        %v6653 = vpop.f32.mrf.mxu0
        %v6654 = vadd.f32 %v5844, %v6653
        %v6655 = vpop.f32.mrf.mxu0
        %v6656 = vadd.f32 %v5840, %v6655
        %v6657 = vpop.f32.mrf.mxu0
        %v6658 = vadd.f32 %v5844, %v6657
        %6659 = vmatprep.mubr.bf16.mxu0 0
        %6660 = vmatmul.mubr.bf16.gmra.mxu0 %v5704
        %v6661 = vpop.f32.mrf.mxu0
        %v6662 = vadd.f32 %v5840, %v6661
        %v6663 = vpop.f32.mrf.mxu0
        %v6664 = vadd.f32 %v5844, %v6663
        %v6665 = vpop.f32.mrf.mxu0
        %v6666 = vadd.f32 %v5840, %v6665
        %v6667 = vpop.f32.mrf.mxu0
        %v6668 = vadd.f32 %v5844, %v6667
        %6669 = vdwg.mxu0
        %6670 = vmatprep.subr.bf16.mxu0 %v6416
        %6671 = vmatpush1.bf16.msra.mxu0 %v6415
        %6672 = vmatprep.subr.bf16.mxu0 %v6400
        %6673 = vmatpush1.bf16.msra.mxu0 %v6399
        %6674 = vmatprep.subr.bf16.mxu0 %v6384
        %6675 = vmatpush1.bf16.msra.mxu0 %v6383
        %6676 = vmatprep.subr.bf16.mxu0 %v6368
        %6677 = vmatpush1.bf16.msra.mxu0 %v6367
        %6678 = vmatprep.subr.bf16.mxu0 %v6352
        %6679 = vmatpush1.bf16.msra.mxu0 %v6351
        %6680 = vmatprep.subr.bf16.mxu0 %v6336
        %6681 = vmatpush1.bf16.msra.mxu0 %v6335
        %6682 = vmatprep.subr.bf16.mxu0 %v6320
        %6683 = vmatpush1.bf16.msra.mxu0 %v6319
        %6684 = vmatprep.subr.bf16.mxu0 %v6304
        %6685 = vmatpush1.bf16.msra.mxu0 %v6303
        %6686 = vmatprep.subr.bf16.mxu0 0
        %6687 = vmatpush2.bf16.msra.mxu0 0
        %6688 = vmatprep.subr.bf16.mxu0 0
        %6689 = vmatpush2.bf16.msra.mxu0 0
        %6690 = vmatprep.subr.bf16.mxu0 0
        %6691 = vmatpush2.bf16.msra.mxu0 0
        %6692 = vmatprep.subr.bf16.mxu0 0
        %6693 = vmatpush2.bf16.msra.mxu0 0
        %6694 = vmatprep.subr.bf16.mxu0 0
        %6695 = vmatpush2.bf16.msra.mxu0 0
        %6696 = vmatprep.subr.bf16.mxu0 0
        %6697 = vmatpush2.bf16.msra.mxu0 0
        %6698 = vmatprep.subr.bf16.mxu0 0
        %6699 = vmatpush2.bf16.msra.mxu0 0
        %6700 = vmatprep.subr.bf16.mxu0 0
        %6701 = vmatpush2.bf16.msra.mxu0 0
        %6702 = vmatprep.mubr.bf16.mxu0 0
        %6703 = vmatmul.mubr.bf16.gmra.mxu0 %v5697
        %v6704 = vpop.f32.mrf.mxu0
        %v6705 = vadd.f32 %v5848, %v6704
        %v6706 = vpop.f32.mrf.mxu0
        %v6707 = vadd.f32 %v5852, %v6706
        %v6708 = vpop.f32.mrf.mxu0
        %v6709 = vadd.f32 %v5848, %v6708
        %v6710 = vpop.f32.mrf.mxu0
        %v6711 = vadd.f32 %v5852, %v6710
        %6712 = vmatprep.mubr.bf16.mxu0 0
        %6713 = vmatmul.mubr.bf16.gmra.mxu0 %v5698
        %v6714 = vpop.f32.mrf.mxu0
        %v6715 = vadd.f32 %v5848, %v6714
        %v6716 = vpop.f32.mrf.mxu0
        %v6717 = vadd.f32 %v5852, %v6716
        %v6718 = vpop.f32.mrf.mxu0
        %v6719 = vadd.f32 %v5848, %v6718
        %v6720 = vpop.f32.mrf.mxu0
        %v6721 = vadd.f32 %v5852, %v6720
        %6722 = vmatprep.mubr.bf16.mxu0 0
        %6723 = vmatmul.mubr.bf16.gmra.mxu0 %v5699
        %v6724 = vpop.f32.mrf.mxu0
        %v6725 = vadd.f32 %v5848, %v6724
        %v6726 = vpop.f32.mrf.mxu0
        %v6727 = vadd.f32 %v5852, %v6726
        %v6728 = vpop.f32.mrf.mxu0
        %v6729 = vadd.f32 %v5848, %v6728
        %v6730 = vpop.f32.mrf.mxu0
        %v6731 = vadd.f32 %v5852, %v6730
        %6732 = vmatprep.mubr.bf16.mxu0 0
        %6733 = vmatmul.mubr.bf16.gmra.mxu0 %v5700
        %v6734 = vpop.f32.mrf.mxu0
        %v6735 = vadd.f32 %v5848, %v6734
        %v6736 = vpop.f32.mrf.mxu0
        %v6737 = vadd.f32 %v5852, %v6736
        %v6738 = vpop.f32.mrf.mxu0
        %v6739 = vadd.f32 %v5848, %v6738
        %v6740 = vpop.f32.mrf.mxu0
        %v6741 = vadd.f32 %v5852, %v6740
        %6742 = vmatprep.mubr.bf16.mxu0 0
        %6743 = vmatmul.mubr.bf16.gmra.mxu0 %v5701
        %v6744 = vpop.f32.mrf.mxu0
        %v6745 = vadd.f32 %v5848, %v6744
        %v6746 = vpop.f32.mrf.mxu0
        %v6747 = vadd.f32 %v5852, %v6746
        %v6748 = vpop.f32.mrf.mxu0
        %v6749 = vadd.f32 %v5848, %v6748
        %v6750 = vpop.f32.mrf.mxu0
        %v6751 = vadd.f32 %v5852, %v6750
        %6752 = vmatprep.mubr.bf16.mxu0 0
        %6753 = vmatmul.mubr.bf16.gmra.mxu0 %v5702
        %v6754 = vpop.f32.mrf.mxu0
        %v6755 = vadd.f32 %v5848, %v6754
        %v6756 = vpop.f32.mrf.mxu0
        %v6757 = vadd.f32 %v5852, %v6756
        %v6758 = vpop.f32.mrf.mxu0
        %v6759 = vadd.f32 %v5848, %v6758
        %v6760 = vpop.f32.mrf.mxu0
        %v6761 = vadd.f32 %v5852, %v6760
        %6762 = vmatprep.mubr.bf16.mxu0 0
        %6763 = vmatmul.mubr.bf16.gmra.mxu0 %v5703
        %v6764 = vpop.f32.mrf.mxu0
        %v6765 = vadd.f32 %v5848, %v6764
        %v6766 = vpop.f32.mrf.mxu0
        %v6767 = vadd.f32 %v5852, %v6766
        %v6768 = vpop.f32.mrf.mxu0
        %v6769 = vadd.f32 %v5848, %v6768
        %v6770 = vpop.f32.mrf.mxu0
        %v6771 = vadd.f32 %v5852, %v6770
        %6772 = vmatprep.mubr.bf16.mxu0 0
        %6773 = vmatmul.mubr.bf16.gmra.mxu0 %v5704
        %v6774 = vpop.f32.mrf.mxu0
        %v6775 = vadd.f32 %v5848, %v6774
        %v6776 = vpop.f32.mrf.mxu0
        %v6777 = vadd.f32 %v5852, %v6776
        %v6778 = vpop.f32.mrf.mxu0
        %v6779 = vadd.f32 %v5848, %v6778
        %v6780 = vpop.f32.mrf.mxu0
        %v6781 = vadd.f32 %v5852, %v6780
        %6782 = vdwg.mxu0
        %6783 = vmatprep.subr.bf16.mxu0 %v6418
        %6784 = vmatpush1.bf16.msra.mxu0 %v6417
        %6785 = vmatprep.subr.bf16.mxu0 %v6402
        %6786 = vmatpush1.bf16.msra.mxu0 %v6401
        %6787 = vmatprep.subr.bf16.mxu0 %v6386
        %6788 = vmatpush1.bf16.msra.mxu0 %v6385
        %6789 = vmatprep.subr.bf16.mxu0 %v6370
        %6790 = vmatpush1.bf16.msra.mxu0 %v6369
        %6791 = vmatprep.subr.bf16.mxu0 %v6354
        %6792 = vmatpush1.bf16.msra.mxu0 %v6353
        %6793 = vmatprep.subr.bf16.mxu0 %v6338
        %6794 = vmatpush1.bf16.msra.mxu0 %v6337
        %6795 = vmatprep.subr.bf16.mxu0 %v6322
        %6796 = vmatpush1.bf16.msra.mxu0 %v6321
        %6797 = vmatprep.subr.bf16.mxu0 %v6306
        %6798 = vmatpush1.bf16.msra.mxu0 %v6305
        %6799 = vmatprep.subr.bf16.mxu0 0
        %6800 = vmatpush2.bf16.msra.mxu0 0
        %6801 = vmatprep.subr.bf16.mxu0 0
        %6802 = vmatpush2.bf16.msra.mxu0 0
        %6803 = vmatprep.subr.bf16.mxu0 0
        %6804 = vmatpush2.bf16.msra.mxu0 0
        %6805 = vmatprep.subr.bf16.mxu0 0
        %6806 = vmatpush2.bf16.msra.mxu0 0
        %6807 = vmatprep.subr.bf16.mxu0 0
        %6808 = vmatpush2.bf16.msra.mxu0 0
        %6809 = vmatprep.subr.bf16.mxu0 0
        %6810 = vmatpush2.bf16.msra.mxu0 0
        %6811 = vmatprep.subr.bf16.mxu0 0
        %6812 = vmatpush2.bf16.msra.mxu0 0
        %6813 = vmatprep.subr.bf16.mxu0 0
        %6814 = vmatpush2.bf16.msra.mxu0 0
        %6815 = vmatprep.mubr.bf16.mxu0 0
        %6816 = vmatmul.mubr.bf16.gmra.mxu0 %v5697
        %v6817 = vpop.f32.mrf.mxu0
        %v6818 = vadd.f32 %v5856, %v6817
        %v6819 = vpop.f32.mrf.mxu0
        %v6820 = vadd.f32 %v5860, %v6819
        %v6821 = vpop.f32.mrf.mxu0
        %v6822 = vadd.f32 %v5856, %v6821
        %v6823 = vpop.f32.mrf.mxu0
        %v6824 = vadd.f32 %v5860, %v6823
        %6825 = vmatprep.mubr.bf16.mxu0 0
        %6826 = vmatmul.mubr.bf16.gmra.mxu0 %v5698
        %v6827 = vpop.f32.mrf.mxu0
        %v6828 = vadd.f32 %v5856, %v6827
        %v6829 = vpop.f32.mrf.mxu0
        %v6830 = vadd.f32 %v5860, %v6829
        %v6831 = vpop.f32.mrf.mxu0
        %v6832 = vadd.f32 %v5856, %v6831
        %v6833 = vpop.f32.mrf.mxu0
        %v6834 = vadd.f32 %v5860, %v6833
        %6835 = vmatprep.mubr.bf16.mxu0 0
        %6836 = vmatmul.mubr.bf16.gmra.mxu0 %v5699
        %v6837 = vpop.f32.mrf.mxu0
        %v6838 = vadd.f32 %v5856, %v6837
        %v6839 = vpop.f32.mrf.mxu0
        %v6840 = vadd.f32 %v5860, %v6839
        %v6841 = vpop.f32.mrf.mxu0
        %v6842 = vadd.f32 %v5856, %v6841
        %v6843 = vpop.f32.mrf.mxu0
        %v6844 = vadd.f32 %v5860, %v6843
        %6845 = vmatprep.mubr.bf16.mxu0 0
        %6846 = vmatmul.mubr.bf16.gmra.mxu0 %v5700
        %v6847 = vpop.f32.mrf.mxu0
        %v6848 = vadd.f32 %v5856, %v6847
        %v6849 = vpop.f32.mrf.mxu0
        %v6850 = vadd.f32 %v5860, %v6849
        %v6851 = vpop.f32.mrf.mxu0
        %v6852 = vadd.f32 %v5856, %v6851
        %v6853 = vpop.f32.mrf.mxu0
        %v6854 = vadd.f32 %v5860, %v6853
        %6855 = vmatprep.mubr.bf16.mxu0 0
        %6856 = vmatmul.mubr.bf16.gmra.mxu0 %v5701
        %v6857 = vpop.f32.mrf.mxu0
        %v6858 = vadd.f32 %v5856, %v6857
        %v6859 = vpop.f32.mrf.mxu0
        %v6860 = vadd.f32 %v5860, %v6859
        %v6861 = vpop.f32.mrf.mxu0
        %v6862 = vadd.f32 %v5856, %v6861
        %v6863 = vpop.f32.mrf.mxu0
        %v6864 = vadd.f32 %v5860, %v6863
        %6865 = vmatprep.mubr.bf16.mxu0 0
        %6866 = vmatmul.mubr.bf16.gmra.mxu0 %v5702
        %v6867 = vpop.f32.mrf.mxu0
        %v6868 = vadd.f32 %v5856, %v6867
        %v6869 = vpop.f32.mrf.mxu0
        %v6870 = vadd.f32 %v5860, %v6869
        %v6871 = vpop.f32.mrf.mxu0
        %v6872 = vadd.f32 %v5856, %v6871
        %v6873 = vpop.f32.mrf.mxu0
        %v6874 = vadd.f32 %v5860, %v6873
        %6875 = vmatprep.mubr.bf16.mxu0 0
        %6876 = vmatmul.mubr.bf16.gmra.mxu0 %v5703
        %v6877 = vpop.f32.mrf.mxu0
        %v6878 = vadd.f32 %v5856, %v6877
        %v6879 = vpop.f32.mrf.mxu0
        %v6880 = vadd.f32 %v5860, %v6879
        %v6881 = vpop.f32.mrf.mxu0
        %v6882 = vadd.f32 %v5856, %v6881
        %v6883 = vpop.f32.mrf.mxu0
        %v6884 = vadd.f32 %v5860, %v6883
        %6885 = vmatprep.mubr.bf16.mxu0 0
        %6886 = vmatmul.mubr.bf16.gmra.mxu0 %v5704
        %v6887 = vpop.f32.mrf.mxu0
        %v6888 = vadd.f32 %v5856, %v6887
        %v6889 = vpop.f32.mrf.mxu0
        %v6890 = vadd.f32 %v5860, %v6889
        %v6891 = vpop.f32.mrf.mxu0
        %v6892 = vadd.f32 %v5856, %v6891
        %v6893 = vpop.f32.mrf.mxu0
        %v6894 = vadd.f32 %v5860, %v6893
        %6895 = vdwg.mxu0
        %6896 = vmatprep.subr.bf16.mxu0 %v6420
        %6897 = vmatpush1.bf16.msra.mxu0 %v6419
        %6898 = vmatprep.subr.bf16.mxu0 %v6404
        %6899 = vmatpush1.bf16.msra.mxu0 %v6403
        %6900 = vmatprep.subr.bf16.mxu0 %v6388
        %6901 = vmatpush1.bf16.msra.mxu0 %v6387
        %6902 = vmatprep.subr.bf16.mxu0 %v6372
        %6903 = vmatpush1.bf16.msra.mxu0 %v6371
        %6904 = vmatprep.subr.bf16.mxu0 %v6356
        %6905 = vmatpush1.bf16.msra.mxu0 %v6355
        %6906 = vmatprep.subr.bf16.mxu0 %v6340
        %6907 = vmatpush1.bf16.msra.mxu0 %v6339
        %6908 = vmatprep.subr.bf16.mxu0 %v6324
        %6909 = vmatpush1.bf16.msra.mxu0 %v6323
        %6910 = vmatprep.subr.bf16.mxu0 %v6308
        %6911 = vmatpush1.bf16.msra.mxu0 %v6307
        %6912 = vmatprep.subr.bf16.mxu0 0
        %6913 = vmatpush2.bf16.msra.mxu0 0
        %6914 = vmatprep.subr.bf16.mxu0 0
        %6915 = vmatpush2.bf16.msra.mxu0 0
        %6916 = vmatprep.subr.bf16.mxu0 0
        %6917 = vmatpush2.bf16.msra.mxu0 0
        %6918 = vmatprep.subr.bf16.mxu0 0
        %6919 = vmatpush2.bf16.msra.mxu0 0
        %6920 = vmatprep.subr.bf16.mxu0 0
        %6921 = vmatpush2.bf16.msra.mxu0 0
        %6922 = vmatprep.subr.bf16.mxu0 0
        %6923 = vmatpush2.bf16.msra.mxu0 0
        %6924 = vmatprep.subr.bf16.mxu0 0
        %6925 = vmatpush2.bf16.msra.mxu0 0
        %6926 = vmatprep.subr.bf16.mxu0 0
        %6927 = vmatpush2.bf16.msra.mxu0 0
        %6928 = vmatprep.mubr.bf16.mxu0 0
        %6929 = vmatmul.mubr.bf16.gmra.mxu0 %v5697
        %v6930 = vpop.f32.mrf.mxu0
        %v6931 = vadd.f32 %v5864, %v6930
        %v6932 = vpop.f32.mrf.mxu0
        %v6933 = vadd.f32 %v5868, %v6932
        %v6934 = vpop.f32.mrf.mxu0
        %v6935 = vadd.f32 %v5864, %v6934
        %v6936 = vpop.f32.mrf.mxu0
        %v6937 = vadd.f32 %v5868, %v6936
        %6938 = vmatprep.mubr.bf16.mxu0 0
        %6939 = vmatmul.mubr.bf16.gmra.mxu0 %v5698
        %v6940 = vpop.f32.mrf.mxu0
        %v6941 = vadd.f32 %v5864, %v6940
        %v6942 = vpop.f32.mrf.mxu0
        %v6943 = vadd.f32 %v5868, %v6942
        %v6944 = vpop.f32.mrf.mxu0
        %v6945 = vadd.f32 %v5864, %v6944
        %v6946 = vpop.f32.mrf.mxu0
        %v6947 = vadd.f32 %v5868, %v6946
        %6948 = vmatprep.mubr.bf16.mxu0 0
        %6949 = vmatmul.mubr.bf16.gmra.mxu0 %v5699
        %v6950 = vpop.f32.mrf.mxu0
        %v6951 = vadd.f32 %v5864, %v6950
        %v6952 = vpop.f32.mrf.mxu0
        %v6953 = vadd.f32 %v5868, %v6952
        %v6954 = vpop.f32.mrf.mxu0
        %v6955 = vadd.f32 %v5864, %v6954
        %v6956 = vpop.f32.mrf.mxu0
        %v6957 = vadd.f32 %v5868, %v6956
        %6958 = vmatprep.mubr.bf16.mxu0 0
        %6959 = vmatmul.mubr.bf16.gmra.mxu0 %v5700
        %v6960 = vpop.f32.mrf.mxu0
        %v6961 = vadd.f32 %v5864, %v6960
        %v6962 = vpop.f32.mrf.mxu0
        %v6963 = vadd.f32 %v5868, %v6962
        %v6964 = vpop.f32.mrf.mxu0
        %v6965 = vadd.f32 %v5864, %v6964
        %v6966 = vpop.f32.mrf.mxu0
        %v6967 = vadd.f32 %v5868, %v6966
        %6968 = vmatprep.mubr.bf16.mxu0 0
        %6969 = vmatmul.mubr.bf16.gmra.mxu0 %v5701
        %v6970 = vpop.f32.mrf.mxu0
        %v6971 = vadd.f32 %v5864, %v6970
        %v6972 = vpop.f32.mrf.mxu0
        %v6973 = vadd.f32 %v5868, %v6972
        %v6974 = vpop.f32.mrf.mxu0
        %v6975 = vadd.f32 %v5864, %v6974
        %v6976 = vpop.f32.mrf.mxu0
        %v6977 = vadd.f32 %v5868, %v6976
        %6978 = vmatprep.mubr.bf16.mxu0 0
        %6979 = vmatmul.mubr.bf16.gmra.mxu0 %v5702
        %v6980 = vpop.f32.mrf.mxu0
        %v6981 = vadd.f32 %v5864, %v6980
        %v6982 = vpop.f32.mrf.mxu0
        %v6983 = vadd.f32 %v5868, %v6982
        %v6984 = vpop.f32.mrf.mxu0
        %v6985 = vadd.f32 %v5864, %v6984
        %v6986 = vpop.f32.mrf.mxu0
        %v6987 = vadd.f32 %v5868, %v6986
        %6988 = vmatprep.mubr.bf16.mxu0 0
        %6989 = vmatmul.mubr.bf16.gmra.mxu0 %v5703
        %v6990 = vpop.f32.mrf.mxu0
        %v6991 = vadd.f32 %v5864, %v6990
        %v6992 = vpop.f32.mrf.mxu0
        %v6993 = vadd.f32 %v5868, %v6992
        %v6994 = vpop.f32.mrf.mxu0
        %v6995 = vadd.f32 %v5864, %v6994
        %v6996 = vpop.f32.mrf.mxu0
        %v6997 = vadd.f32 %v5868, %v6996
        %6998 = vmatprep.mubr.bf16.mxu0 0
        %6999 = vmatmul.mubr.bf16.gmra.mxu0 %v5704
        %v7000 = vpop.f32.mrf.mxu0
        %v7001 = vadd.f32 %v5864, %v7000
        %v7002 = vpop.f32.mrf.mxu0
        %v7003 = vadd.f32 %v5868, %v7002
        %v7004 = vpop.f32.mrf.mxu0
        %v7005 = vadd.f32 %v5864, %v7004
        %v7006 = vpop.f32.mrf.mxu0
        %v7007 = vadd.f32 %v5868, %v7006
        %7008 = vdwg.mxu0
        %7009 = vmatprep.subr.bf16.mxu0 %v6422
        %7010 = vmatpush1.bf16.msra.mxu0 %v6421
        %7011 = vmatprep.subr.bf16.mxu0 %v6406
        %7012 = vmatpush1.bf16.msra.mxu0 %v6405
        %7013 = vmatprep.subr.bf16.mxu0 %v6390
        %7014 = vmatpush1.bf16.msra.mxu0 %v6389
        %7015 = vmatprep.subr.bf16.mxu0 %v6374
        %7016 = vmatpush1.bf16.msra.mxu0 %v6373
        %7017 = vmatprep.subr.bf16.mxu0 %v6358
        %7018 = vmatpush1.bf16.msra.mxu0 %v6357
        %7019 = vmatprep.subr.bf16.mxu0 %v6342
        %7020 = vmatpush1.bf16.msra.mxu0 %v6341
        %7021 = vmatprep.subr.bf16.mxu0 %v6326
        %7022 = vmatpush1.bf16.msra.mxu0 %v6325
        %7023 = vmatprep.subr.bf16.mxu0 %v6310
        %7024 = vmatpush1.bf16.msra.mxu0 %v6309
        %7025 = vmatprep.subr.bf16.mxu0 0
        %7026 = vmatpush2.bf16.msra.mxu0 0
        %7027 = vmatprep.subr.bf16.mxu0 0
        %7028 = vmatpush2.bf16.msra.mxu0 0
        %7029 = vmatprep.subr.bf16.mxu0 0
        %7030 = vmatpush2.bf16.msra.mxu0 0
        %7031 = vmatprep.subr.bf16.mxu0 0
        %7032 = vmatpush2.bf16.msra.mxu0 0
        %7033 = vmatprep.subr.bf16.mxu0 0
        %7034 = vmatpush2.bf16.msra.mxu0 0
        %7035 = vmatprep.subr.bf16.mxu0 0
        %7036 = vmatpush2.bf16.msra.mxu0 0
        %7037 = vmatprep.subr.bf16.mxu0 0
        %7038 = vmatpush2.bf16.msra.mxu0 0
        %7039 = vmatprep.subr.bf16.mxu0 0
        %7040 = vmatpush2.bf16.msra.mxu0 0
        %7041 = vmatprep.mubr.bf16.mxu0 0
        %7042 = vmatmul.mubr.bf16.gmra.mxu0 %v5697
        %v7043 = vpop.f32.mrf.mxu0
        %v7044 = vadd.f32 %v5872, %v7043
        %v7045 = vpop.f32.mrf.mxu0
        %v7046 = vadd.f32 %v5876, %v7045
        %v7047 = vpop.f32.mrf.mxu0
        %v7048 = vadd.f32 %v5872, %v7047
        %v7049 = vpop.f32.mrf.mxu0
        %v7050 = vadd.f32 %v5876, %v7049
        %7051 = vmatprep.mubr.bf16.mxu0 0
        %7052 = vmatmul.mubr.bf16.gmra.mxu0 %v5698
        %v7053 = vpop.f32.mrf.mxu0
        %v7054 = vadd.f32 %v5872, %v7053
        %v7055 = vpop.f32.mrf.mxu0
        %v7056 = vadd.f32 %v5876, %v7055
        %v7057 = vpop.f32.mrf.mxu0
        %v7058 = vadd.f32 %v5872, %v7057
        %v7059 = vpop.f32.mrf.mxu0
        %v7060 = vadd.f32 %v5876, %v7059
        %7061 = vmatprep.mubr.bf16.mxu0 0
        %7062 = vmatmul.mubr.bf16.gmra.mxu0 %v5699
        %v7063 = vpop.f32.mrf.mxu0
        %v7064 = vadd.f32 %v5872, %v7063
        %v7065 = vpop.f32.mrf.mxu0
        %v7066 = vadd.f32 %v5876, %v7065
        %v7067 = vpop.f32.mrf.mxu0
        %v7068 = vadd.f32 %v5872, %v7067
        %v7069 = vpop.f32.mrf.mxu0
        %v7070 = vadd.f32 %v5876, %v7069
        %7071 = vmatprep.mubr.bf16.mxu0 0
        %7072 = vmatmul.mubr.bf16.gmra.mxu0 %v5700
        %v7073 = vpop.f32.mrf.mxu0
        %v7074 = vadd.f32 %v5872, %v7073
        %v7075 = vpop.f32.mrf.mxu0
        %v7076 = vadd.f32 %v5876, %v7075
        %v7077 = vpop.f32.mrf.mxu0
        %v7078 = vadd.f32 %v5872, %v7077
        %v7079 = vpop.f32.mrf.mxu0
        %v7080 = vadd.f32 %v5876, %v7079
        %7081 = vmatprep.mubr.bf16.mxu0 0
        %7082 = vmatmul.mubr.bf16.gmra.mxu0 %v5701
        %v7083 = vpop.f32.mrf.mxu0
        %v7084 = vadd.f32 %v5872, %v7083
        %v7085 = vpop.f32.mrf.mxu0
        %v7086 = vadd.f32 %v5876, %v7085
        %v7087 = vpop.f32.mrf.mxu0
        %v7088 = vadd.f32 %v5872, %v7087
        %v7089 = vpop.f32.mrf.mxu0
        %v7090 = vadd.f32 %v5876, %v7089
        %7091 = vmatprep.mubr.bf16.mxu0 0
        %7092 = vmatmul.mubr.bf16.gmra.mxu0 %v5702
        %v7093 = vpop.f32.mrf.mxu0
        %v7094 = vadd.f32 %v5872, %v7093
        %v7095 = vpop.f32.mrf.mxu0
        %v7096 = vadd.f32 %v5876, %v7095
        %v7097 = vpop.f32.mrf.mxu0
        %v7098 = vadd.f32 %v5872, %v7097
        %v7099 = vpop.f32.mrf.mxu0
        %v7100 = vadd.f32 %v5876, %v7099
        %7101 = vmatprep.mubr.bf16.mxu0 0
        %7102 = vmatmul.mubr.bf16.gmra.mxu0 %v5703
        %v7103 = vpop.f32.mrf.mxu0
        %v7104 = vadd.f32 %v5872, %v7103
        %v7105 = vpop.f32.mrf.mxu0
        %v7106 = vadd.f32 %v5876, %v7105
        %v7107 = vpop.f32.mrf.mxu0
        %v7108 = vadd.f32 %v5872, %v7107
        %v7109 = vpop.f32.mrf.mxu0
        %v7110 = vadd.f32 %v5876, %v7109
        %7111 = vmatprep.mubr.bf16.mxu0 0
        %7112 = vmatmul.mubr.bf16.gmra.mxu0 %v5704
        %v7113 = vpop.f32.mrf.mxu0
        %v7114 = vadd.f32 %v5872, %v7113
        %v7115 = vpop.f32.mrf.mxu0
        %v7116 = vadd.f32 %v5876, %v7115
        %v7117 = vpop.f32.mrf.mxu0
        %v7118 = vadd.f32 %v5872, %v7117
        %v7119 = vpop.f32.mrf.mxu0
        %v7120 = vadd.f32 %v5876, %v7119
        %7121 = vdwg.mxu0
        %7122 = vmatprep.subr.bf16.mxu0 %v6424
        %7123 = vmatpush1.bf16.msra.mxu0 %v6423
        %7124 = vmatprep.subr.bf16.mxu0 %v6408
        %7125 = vmatpush1.bf16.msra.mxu0 %v6407
        %7126 = vmatprep.subr.bf16.mxu0 %v6392
        %7127 = vmatpush1.bf16.msra.mxu0 %v6391
        %7128 = vmatprep.subr.bf16.mxu0 %v6376
        %7129 = vmatpush1.bf16.msra.mxu0 %v6375
        %7130 = vmatprep.subr.bf16.mxu0 %v6360
        %7131 = vmatpush1.bf16.msra.mxu0 %v6359
        %7132 = vmatprep.subr.bf16.mxu0 %v6344
        %7133 = vmatpush1.bf16.msra.mxu0 %v6343
        %7134 = vmatprep.subr.bf16.mxu0 %v6328
        %7135 = vmatpush1.bf16.msra.mxu0 %v6327
        %7136 = vmatprep.subr.bf16.mxu0 %v6312
        %7137 = vmatpush1.bf16.msra.mxu0 %v6311
        %7138 = vmatprep.subr.bf16.mxu0 0
        %7139 = vmatpush2.bf16.msra.mxu0 0
        %7140 = vmatprep.subr.bf16.mxu0 0
        %7141 = vmatpush2.bf16.msra.mxu0 0
        %7142 = vmatprep.subr.bf16.mxu0 0
        %7143 = vmatpush2.bf16.msra.mxu0 0
        %7144 = vmatprep.subr.bf16.mxu0 0
        %7145 = vmatpush2.bf16.msra.mxu0 0
        %7146 = vmatprep.subr.bf16.mxu0 0
        %7147 = vmatpush2.bf16.msra.mxu0 0
        %7148 = vmatprep.subr.bf16.mxu0 0
        %7149 = vmatpush2.bf16.msra.mxu0 0
        %7150 = vmatprep.subr.bf16.mxu0 0
        %7151 = vmatpush2.bf16.msra.mxu0 0
        %7152 = vmatprep.subr.bf16.mxu0 0
        %7153 = vmatpush2.bf16.msra.mxu0 0
        %7154 = vmatprep.mubr.bf16.mxu0 0
        %7155 = vmatmul.mubr.bf16.gmra.mxu0 %v5697
        %v7156 = vpop.f32.mrf.mxu0
        %v7157 = vadd.f32 %v5880, %v7156
        %v7158 = vpop.f32.mrf.mxu0
        %v7159 = vadd.f32 %v5884, %v7158
        %v7160 = vpop.f32.mrf.mxu0
        %v7161 = vadd.f32 %v5880, %v7160
        %v7162 = vpop.f32.mrf.mxu0
        %v7163 = vadd.f32 %v5884, %v7162
        %7164 = vmatprep.mubr.bf16.mxu0 0
        %7165 = vmatmul.mubr.bf16.gmra.mxu0 %v5698
        %v7166 = vpop.f32.mrf.mxu0
        %v7167 = vadd.f32 %v5880, %v7166
        %v7168 = vpop.f32.mrf.mxu0
        %v7169 = vadd.f32 %v5884, %v7168
        %v7170 = vpop.f32.mrf.mxu0
        %v7171 = vadd.f32 %v5880, %v7170
        %v7172 = vpop.f32.mrf.mxu0
        %v7173 = vadd.f32 %v5884, %v7172
        %7174 = vmatprep.mubr.bf16.mxu0 0
        %7175 = vmatmul.mubr.bf16.gmra.mxu0 %v5699
        %v7176 = vpop.f32.mrf.mxu0
        %v7177 = vadd.f32 %v5880, %v7176
        %v7178 = vpop.f32.mrf.mxu0
        %v7179 = vadd.f32 %v5884, %v7178
        %v7180 = vpop.f32.mrf.mxu0
        %v7181 = vadd.f32 %v5880, %v7180
        %v7182 = vpop.f32.mrf.mxu0
        %v7183 = vadd.f32 %v5884, %v7182
        %7184 = vmatprep.mubr.bf16.mxu0 0
        %7185 = vmatmul.mubr.bf16.gmra.mxu0 %v5700
        %v7186 = vpop.f32.mrf.mxu0
        %v7187 = vadd.f32 %v5880, %v7186
        %v7188 = vpop.f32.mrf.mxu0
        %v7189 = vadd.f32 %v5884, %v7188
        %v7190 = vpop.f32.mrf.mxu0
        %v7191 = vadd.f32 %v5880, %v7190
        %v7192 = vpop.f32.mrf.mxu0
        %v7193 = vadd.f32 %v5884, %v7192
        %7194 = vmatprep.mubr.bf16.mxu0 0
        %7195 = vmatmul.mubr.bf16.gmra.mxu0 %v5701
        %v7196 = vpop.f32.mrf.mxu0
        %v7197 = vadd.f32 %v5880, %v7196
        %v7198 = vpop.f32.mrf.mxu0
        %v7199 = vadd.f32 %v5884, %v7198
        %v7200 = vpop.f32.mrf.mxu0
        %v7201 = vadd.f32 %v5880, %v7200
        %v7202 = vpop.f32.mrf.mxu0
        %v7203 = vadd.f32 %v5884, %v7202
        %7204 = vmatprep.mubr.bf16.mxu0 0
        %7205 = vmatmul.mubr.bf16.gmra.mxu0 %v5702
        %v7206 = vpop.f32.mrf.mxu0
        %v7207 = vadd.f32 %v5880, %v7206
        %v7208 = vpop.f32.mrf.mxu0
        %v7209 = vadd.f32 %v5884, %v7208
        %v7210 = vpop.f32.mrf.mxu0
        %v7211 = vadd.f32 %v5880, %v7210
        %v7212 = vpop.f32.mrf.mxu0
        %v7213 = vadd.f32 %v5884, %v7212
        %7214 = vmatprep.mubr.bf16.mxu0 0
        %7215 = vmatmul.mubr.bf16.gmra.mxu0 %v5703
        %v7216 = vpop.f32.mrf.mxu0
        %v7217 = vadd.f32 %v5880, %v7216
        %v7218 = vpop.f32.mrf.mxu0
        %v7219 = vadd.f32 %v5884, %v7218
        %v7220 = vpop.f32.mrf.mxu0
        %v7221 = vadd.f32 %v5880, %v7220
        %v7222 = vpop.f32.mrf.mxu0
        %v7223 = vadd.f32 %v5884, %v7222
        %7224 = vmatprep.mubr.bf16.mxu0 0
        %7225 = vmatmul.mubr.bf16.gmra.mxu0 %v5704
        %v7226 = vpop.f32.mrf.mxu0
        %v7227 = vadd.f32 %v5880, %v7226
        %v7228 = vpop.f32.mrf.mxu0
        %v7229 = vadd.f32 %v5884, %v7228
        %v7230 = vpop.f32.mrf.mxu0
        %v7231 = vadd.f32 %v5880, %v7230
        %v7232 = vpop.f32.mrf.mxu0
        %v7233 = vadd.f32 %v5884, %v7232
        %7234 = vdwg.mxu0
        %7235 = vmatprep.subr.bf16.mxu0 %v6426
        %7236 = vmatpush1.bf16.msra.mxu0 %v6425
        %7237 = vmatprep.subr.bf16.mxu0 %v6410
        %7238 = vmatpush1.bf16.msra.mxu0 %v6409
        %7239 = vmatprep.subr.bf16.mxu0 %v6394
        %7240 = vmatpush1.bf16.msra.mxu0 %v6393
        %7241 = vmatprep.subr.bf16.mxu0 %v6378
        %7242 = vmatpush1.bf16.msra.mxu0 %v6377
        %7243 = vmatprep.subr.bf16.mxu0 %v6362
        %7244 = vmatpush1.bf16.msra.mxu0 %v6361
        %7245 = vmatprep.subr.bf16.mxu0 %v6346
        %7246 = vmatpush1.bf16.msra.mxu0 %v6345
        %7247 = vmatprep.subr.bf16.mxu0 %v6330
        %7248 = vmatpush1.bf16.msra.mxu0 %v6329
        %7249 = vmatprep.subr.bf16.mxu0 %v6314
        %7250 = vmatpush1.bf16.msra.mxu0 %v6313
        %7251 = vmatprep.subr.bf16.mxu0 0
        %7252 = vmatpush2.bf16.msra.mxu0 0
        %7253 = vmatprep.subr.bf16.mxu0 0
        %7254 = vmatpush2.bf16.msra.mxu0 0
        %7255 = vmatprep.subr.bf16.mxu0 0
        %7256 = vmatpush2.bf16.msra.mxu0 0
        %7257 = vmatprep.subr.bf16.mxu0 0
        %7258 = vmatpush2.bf16.msra.mxu0 0
        %7259 = vmatprep.subr.bf16.mxu0 0
        %7260 = vmatpush2.bf16.msra.mxu0 0
        %7261 = vmatprep.subr.bf16.mxu0 0
        %7262 = vmatpush2.bf16.msra.mxu0 0
        %7263 = vmatprep.subr.bf16.mxu0 0
        %7264 = vmatpush2.bf16.msra.mxu0 0
        %7265 = vmatprep.subr.bf16.mxu0 0
        %7266 = vmatpush2.bf16.msra.mxu0 0
        %7267 = vmatprep.mubr.bf16.mxu0 0
        %7268 = vmatmul.mubr.bf16.gmra.mxu0 %v5697
        %v7269 = vpop.f32.mrf.mxu0
        %v7270 = vadd.f32 %v5888, %v7269
        %v7271 = vpop.f32.mrf.mxu0
        %v7272 = vadd.f32 %v5892, %v7271
        %v7273 = vpop.f32.mrf.mxu0
        %v7274 = vadd.f32 %v5888, %v7273
        %v7275 = vpop.f32.mrf.mxu0
        %v7276 = vadd.f32 %v5892, %v7275
        %7277 = vmatprep.mubr.bf16.mxu0 0
        %7278 = vmatmul.mubr.bf16.gmra.mxu0 %v5698
        %v7279 = vpop.f32.mrf.mxu0
        %v7280 = vadd.f32 %v5888, %v7279
        %v7281 = vpop.f32.mrf.mxu0
        %v7282 = vadd.f32 %v5892, %v7281
        %v7283 = vpop.f32.mrf.mxu0
        %v7284 = vadd.f32 %v5888, %v7283
        %v7285 = vpop.f32.mrf.mxu0
        %v7286 = vadd.f32 %v5892, %v7285
        %7287 = vmatprep.mubr.bf16.mxu0 0
        %7288 = vmatmul.mubr.bf16.gmra.mxu0 %v5699
        %v7289 = vpop.f32.mrf.mxu0
        %v7290 = vadd.f32 %v5888, %v7289
        %v7291 = vpop.f32.mrf.mxu0
        %v7292 = vadd.f32 %v5892, %v7291
        %v7293 = vpop.f32.mrf.mxu0
        %v7294 = vadd.f32 %v5888, %v7293
        %v7295 = vpop.f32.mrf.mxu0
        %v7296 = vadd.f32 %v5892, %v7295
        %7297 = vmatprep.mubr.bf16.mxu0 0
        %7298 = vmatmul.mubr.bf16.gmra.mxu0 %v5700
        %v7299 = vpop.f32.mrf.mxu0
        %v7300 = vadd.f32 %v5888, %v7299
        %v7301 = vpop.f32.mrf.mxu0
        %v7302 = vadd.f32 %v5892, %v7301
        %v7303 = vpop.f32.mrf.mxu0
        %v7304 = vadd.f32 %v5888, %v7303
        %v7305 = vpop.f32.mrf.mxu0
        %v7306 = vadd.f32 %v5892, %v7305
        %7307 = vmatprep.mubr.bf16.mxu0 0
        %7308 = vmatmul.mubr.bf16.gmra.mxu0 %v5701
        %v7309 = vpop.f32.mrf.mxu0
        %v7310 = vadd.f32 %v5888, %v7309
        %v7311 = vpop.f32.mrf.mxu0
        %v7312 = vadd.f32 %v5892, %v7311
        %v7313 = vpop.f32.mrf.mxu0
        %v7314 = vadd.f32 %v5888, %v7313
        %v7315 = vpop.f32.mrf.mxu0
        %v7316 = vadd.f32 %v5892, %v7315
        %7317 = vmatprep.mubr.bf16.mxu0 0
        %7318 = vmatmul.mubr.bf16.gmra.mxu0 %v5702
        %v7319 = vpop.f32.mrf.mxu0
        %v7320 = vadd.f32 %v5888, %v7319
        %v7321 = vpop.f32.mrf.mxu0
        %v7322 = vadd.f32 %v5892, %v7321
        %v7323 = vpop.f32.mrf.mxu0
        %v7324 = vadd.f32 %v5888, %v7323
        %v7325 = vpop.f32.mrf.mxu0
        %v7326 = vadd.f32 %v5892, %v7325
        %7327 = vmatprep.mubr.bf16.mxu0 0
        %7328 = vmatmul.mubr.bf16.gmra.mxu0 %v5703
        %v7329 = vpop.f32.mrf.mxu0
        %v7330 = vadd.f32 %v5888, %v7329
        %v7331 = vpop.f32.mrf.mxu0
        %v7332 = vadd.f32 %v5892, %v7331
        %v7333 = vpop.f32.mrf.mxu0
        %v7334 = vadd.f32 %v5888, %v7333
        %v7335 = vpop.f32.mrf.mxu0
        %v7336 = vadd.f32 %v5892, %v7335
        %7337 = vmatprep.mubr.bf16.mxu0 0
        %7338 = vmatmul.mubr.bf16.gmra.mxu0 %v5704
        %v7339 = vpop.f32.mrf.mxu0
        %v7340 = vadd.f32 %v5888, %v7339
        %v7341 = vpop.f32.mrf.mxu0
        %v7342 = vadd.f32 %v5892, %v7341
        %v7343 = vpop.f32.mrf.mxu0
        %v7344 = vadd.f32 %v5888, %v7343
        %v7345 = vpop.f32.mrf.mxu0
        %v7346 = vadd.f32 %v5892, %v7345
        %7347 = vdwg.mxu0
        %7348 = vmatprep.subr.bf16.mxu0 %v6428
        %7349 = vmatpush1.bf16.msra.mxu0 %v6427
        %7350 = vmatprep.subr.bf16.mxu0 %v6412
        %7351 = vmatpush1.bf16.msra.mxu0 %v6411
        %7352 = vmatprep.subr.bf16.mxu0 %v6396
        %7353 = vmatpush1.bf16.msra.mxu0 %v6395
        %7354 = vmatprep.subr.bf16.mxu0 %v6380
        %7355 = vmatpush1.bf16.msra.mxu0 %v6379
        %7356 = vmatprep.subr.bf16.mxu0 %v6364
        %7357 = vmatpush1.bf16.msra.mxu0 %v6363
        %7358 = vmatprep.subr.bf16.mxu0 %v6348
        %7359 = vmatpush1.bf16.msra.mxu0 %v6347
        %7360 = vmatprep.subr.bf16.mxu0 %v6332
        %7361 = vmatpush1.bf16.msra.mxu0 %v6331
        %7362 = vmatprep.subr.bf16.mxu0 %v6316
        %7363 = vmatpush1.bf16.msra.mxu0 %v6315
        %7364 = vmatprep.subr.bf16.mxu0 0
        %7365 = vmatpush2.bf16.msra.mxu0 0
        %7366 = vmatprep.subr.bf16.mxu0 0
        %7367 = vmatpush2.bf16.msra.mxu0 0
        %7368 = vmatprep.subr.bf16.mxu0 0
        %7369 = vmatpush2.bf16.msra.mxu0 0
        %7370 = vmatprep.subr.bf16.mxu0 0
        %7371 = vmatpush2.bf16.msra.mxu0 0
        %7372 = vmatprep.subr.bf16.mxu0 0
        %7373 = vmatpush2.bf16.msra.mxu0 0
        %7374 = vmatprep.subr.bf16.mxu0 0
        %7375 = vmatpush2.bf16.msra.mxu0 0
        %7376 = vmatprep.subr.bf16.mxu0 0
        %7377 = vmatpush2.bf16.msra.mxu0 0
        %7378 = vmatprep.subr.bf16.mxu0 0
        %7379 = vmatpush2.bf16.msra.mxu0 0
        %7380 = vmatprep.mubr.bf16.mxu0 0
        %7381 = vmatmul.mubr.bf16.gmra.mxu0 %v5697
        %v7382 = vpop.f32.mrf.mxu0
        %v7383 = vadd.f32 %v5896, %v7382
        %v7384 = vpop.f32.mrf.mxu0
        %v7385 = vadd.f32 %v5900, %v7384
        %v7386 = vpop.f32.mrf.mxu0
        %v7387 = vadd.f32 %v5896, %v7386
        %v7388 = vpop.f32.mrf.mxu0
        %v7389 = vadd.f32 %v5900, %v7388
        %7390 = vmatprep.mubr.bf16.mxu0 0
        %7391 = vmatmul.mubr.bf16.gmra.mxu0 %v5698
        %v7392 = vpop.f32.mrf.mxu0
        %v7393 = vadd.f32 %v5896, %v7392
        %v7394 = vpop.f32.mrf.mxu0
        %v7395 = vadd.f32 %v5900, %v7394
        %v7396 = vpop.f32.mrf.mxu0
        %v7397 = vadd.f32 %v5896, %v7396
        %v7398 = vpop.f32.mrf.mxu0
        %v7399 = vadd.f32 %v5900, %v7398
        %7400 = vmatprep.mubr.bf16.mxu0 0
        %7401 = vmatmul.mubr.bf16.gmra.mxu0 %v5699
        %v7402 = vpop.f32.mrf.mxu0
        %v7403 = vadd.f32 %v5896, %v7402
        %v7404 = vpop.f32.mrf.mxu0
        %v7405 = vadd.f32 %v5900, %v7404
        %v7406 = vpop.f32.mrf.mxu0
        %v7407 = vadd.f32 %v5896, %v7406
        %v7408 = vpop.f32.mrf.mxu0
        %v7409 = vadd.f32 %v5900, %v7408
        %7410 = vmatprep.mubr.bf16.mxu0 0
        %7411 = vmatmul.mubr.bf16.gmra.mxu0 %v5700
        %v7412 = vpop.f32.mrf.mxu0
        %v7413 = vadd.f32 %v5896, %v7412
        %v7414 = vpop.f32.mrf.mxu0
        %v7415 = vadd.f32 %v5900, %v7414
        %v7416 = vpop.f32.mrf.mxu0
        %v7417 = vadd.f32 %v5896, %v7416
        %v7418 = vpop.f32.mrf.mxu0
        %v7419 = vadd.f32 %v5900, %v7418
        %7420 = vmatprep.mubr.bf16.mxu0 0
        %7421 = vmatmul.mubr.bf16.gmra.mxu0 %v5701
        %v7422 = vpop.f32.mrf.mxu0
        %v7423 = vadd.f32 %v5896, %v7422
        %v7424 = vpop.f32.mrf.mxu0
        %v7425 = vadd.f32 %v5900, %v7424
        %v7426 = vpop.f32.mrf.mxu0
        %v7427 = vadd.f32 %v5896, %v7426
        %v7428 = vpop.f32.mrf.mxu0
        %v7429 = vadd.f32 %v5900, %v7428
        %7430 = vmatprep.mubr.bf16.mxu0 0
        %7431 = vmatmul.mubr.bf16.gmra.mxu0 %v5702
        %v7432 = vpop.f32.mrf.mxu0
        %v7433 = vadd.f32 %v5896, %v7432
        %v7434 = vpop.f32.mrf.mxu0
        %v7435 = vadd.f32 %v5900, %v7434
        %v7436 = vpop.f32.mrf.mxu0
        %v7437 = vadd.f32 %v5896, %v7436
        %v7438 = vpop.f32.mrf.mxu0
        %v7439 = vadd.f32 %v5900, %v7438
        %7440 = vmatprep.mubr.bf16.mxu0 0
        %7441 = vmatmul.mubr.bf16.gmra.mxu0 %v5703
        %v7442 = vpop.f32.mrf.mxu0
        %v7443 = vadd.f32 %v5896, %v7442
        %v7444 = vpop.f32.mrf.mxu0
        %v7445 = vadd.f32 %v5900, %v7444
        %v7446 = vpop.f32.mrf.mxu0
        %v7447 = vadd.f32 %v5896, %v7446
        %v7448 = vpop.f32.mrf.mxu0
        %v7449 = vadd.f32 %v5900, %v7448
        %7450 = vmatprep.mubr.bf16.mxu0 0
        %7451 = vmatmul.mubr.bf16.gmra.mxu0 %v5704
        %v7452 = vpop.f32.mrf.mxu0
        %v7453 = vadd.f32 %v5896, %v7452
        %v7454 = vpop.f32.mrf.mxu0
        %v7455 = vadd.f32 %v5900, %v7454
        %v7456 = vpop.f32.mrf.mxu0
        %v7457 = vadd.f32 %v5896, %v7456
        %v7458 = vpop.f32.mrf.mxu0
        %v7459 = vadd.f32 %v5900, %v7458
        %7460 = vdwg.mxu0
        %v7461 = vmax.f32 %v6592, 0.0
        %v7462 = vmax.f32 %v6594, 0.0
        %v7463 = vmax.f32 %v6705, 0.0
        %v7464 = vmax.f32 %v6707, 0.0
        %v7465 = vmax.f32 %v6818, 0.0
        %v7466 = vmax.f32 %v6820, 0.0
        %v7467 = vmax.f32 %v6931, 0.0
        %v7468 = vmax.f32 %v6933, 0.0
        %v7469 = vmax.f32 %v7044, 0.0
        %v7470 = vmax.f32 %v7046, 0.0
        %v7471 = vmax.f32 %v7157, 0.0
        %v7472 = vmax.f32 %v7159, 0.0
        %v7473 = vmax.f32 %v7270, 0.0
        %v7474 = vmax.f32 %v7272, 0.0
        %v7475 = vmax.f32 %v7383, 0.0
        %v7476 = vmax.f32 %v7385, 0.0
        %v7477 = vmax.f32 %v6596, 0.0
        %v7478 = vmax.f32 %v6598, 0.0
        %v7479 = vmax.f32 %v6709, 0.0
        %v7480 = vmax.f32 %v6711, 0.0
        %v7481 = vmax.f32 %v6822, 0.0
        %v7482 = vmax.f32 %v6824, 0.0
        %v7483 = vmax.f32 %v6935, 0.0
        %v7484 = vmax.f32 %v6937, 0.0
        %v7485 = vmax.f32 %v7048, 0.0
        %v7486 = vmax.f32 %v7050, 0.0
        %v7487 = vmax.f32 %v7161, 0.0
        %v7488 = vmax.f32 %v7163, 0.0
        %v7489 = vmax.f32 %v7274, 0.0
        %v7490 = vmax.f32 %v7276, 0.0
        %v7491 = vmax.f32 %v7387, 0.0
        %v7492 = vmax.f32 %v7389, 0.0
        %v7493 = vmax.f32 %v6602, 0.0
        %v7494 = vmax.f32 %v6604, 0.0
        %v7495 = vmax.f32 %v6715, 0.0
        %v7496 = vmax.f32 %v6717, 0.0
        %v7497 = vmax.f32 %v6828, 0.0
        %v7498 = vmax.f32 %v6830, 0.0
        %v7499 = vmax.f32 %v6941, 0.0
        %v7500 = vmax.f32 %v6943, 0.0
        %v7501 = vmax.f32 %v7054, 0.0
        %v7502 = vmax.f32 %v7056, 0.0
        %v7503 = vmax.f32 %v7167, 0.0
        %v7504 = vmax.f32 %v7169, 0.0
        %v7505 = vmax.f32 %v7280, 0.0
        %v7506 = vmax.f32 %v7282, 0.0
        %v7507 = vmax.f32 %v7393, 0.0
        %v7508 = vmax.f32 %v7395, 0.0
        %v7509 = vmax.f32 %v6606, 0.0
        %v7510 = vmax.f32 %v6608, 0.0
        %v7511 = vmax.f32 %v6719, 0.0
        %v7512 = vmax.f32 %v6721, 0.0
        %v7513 = vmax.f32 %v6832, 0.0
        %v7514 = vmax.f32 %v6834, 0.0
        %v7515 = vmax.f32 %v6945, 0.0
        %v7516 = vmax.f32 %v6947, 0.0
        %v7517 = vmax.f32 %v7058, 0.0
        %v7518 = vmax.f32 %v7060, 0.0
        %v7519 = vmax.f32 %v7171, 0.0
        %v7520 = vmax.f32 %v7173, 0.0
        %v7521 = vmax.f32 %v7284, 0.0
        %v7522 = vmax.f32 %v7286, 0.0
        %v7523 = vmax.f32 %v7397, 0.0
        %v7524 = vmax.f32 %v7399, 0.0
        %v7525 = vmax.f32 %v6612, 0.0
        %v7526 = vmax.f32 %v6614, 0.0
        %v7527 = vmax.f32 %v6725, 0.0
        %v7528 = vmax.f32 %v6727, 0.0
        %v7529 = vmax.f32 %v6838, 0.0
        %v7530 = vmax.f32 %v6840, 0.0
        %v7531 = vmax.f32 %v6951, 0.0
        %v7532 = vmax.f32 %v6953, 0.0
        %v7533 = vmax.f32 %v7064, 0.0
        %v7534 = vmax.f32 %v7066, 0.0
        %v7535 = vmax.f32 %v7177, 0.0
        %v7536 = vmax.f32 %v7179, 0.0
        %v7537 = vmax.f32 %v7290, 0.0
        %v7538 = vmax.f32 %v7292, 0.0
        %v7539 = vmax.f32 %v7403, 0.0
        %v7540 = vmax.f32 %v7405, 0.0
        %v7541 = vmax.f32 %v6616, 0.0
        %v7542 = vmax.f32 %v6618, 0.0
        %v7543 = vmax.f32 %v6729, 0.0
        %v7544 = vmax.f32 %v6731, 0.0
        %v7545 = vmax.f32 %v6842, 0.0
        %v7546 = vmax.f32 %v6844, 0.0
        %v7547 = vmax.f32 %v6955, 0.0
        %v7548 = vmax.f32 %v6957, 0.0
        %v7549 = vmax.f32 %v7068, 0.0
        %v7550 = vmax.f32 %v7070, 0.0
        %v7551 = vmax.f32 %v7181, 0.0
        %v7552 = vmax.f32 %v7183, 0.0
        %v7553 = vmax.f32 %v7294, 0.0
        %v7554 = vmax.f32 %v7296, 0.0
        %v7555 = vmax.f32 %v7407, 0.0
        %v7556 = vmax.f32 %v7409, 0.0
        %v7557 = vmax.f32 %v6622, 0.0
        %v7558 = vmax.f32 %v6624, 0.0
        %v7559 = vmax.f32 %v6735, 0.0
        %v7560 = vmax.f32 %v6737, 0.0
        %v7561 = vmax.f32 %v6848, 0.0
        %v7562 = vmax.f32 %v6850, 0.0
        %v7563 = vmax.f32 %v6961, 0.0
        %v7564 = vmax.f32 %v6963, 0.0
        %v7565 = vmax.f32 %v7074, 0.0
        %v7566 = vmax.f32 %v7076, 0.0
        %v7567 = vmax.f32 %v7187, 0.0
        %v7568 = vmax.f32 %v7189, 0.0
        %v7569 = vmax.f32 %v7300, 0.0
        %v7570 = vmax.f32 %v7302, 0.0
        %v7571 = vmax.f32 %v7413, 0.0
        %v7572 = vmax.f32 %v7415, 0.0
        %v7573 = vmax.f32 %v6626, 0.0
        %v7574 = vmax.f32 %v6628, 0.0
        %v7575 = vmax.f32 %v6739, 0.0
        %v7576 = vmax.f32 %v6741, 0.0
        %v7577 = vmax.f32 %v6852, 0.0
        %v7578 = vmax.f32 %v6854, 0.0
        %v7579 = vmax.f32 %v6965, 0.0
        %v7580 = vmax.f32 %v6967, 0.0
        %v7581 = vmax.f32 %v7078, 0.0
        %v7582 = vmax.f32 %v7080, 0.0
        %v7583 = vmax.f32 %v7191, 0.0
        %v7584 = vmax.f32 %v7193, 0.0
        %v7585 = vmax.f32 %v7304, 0.0
        %v7586 = vmax.f32 %v7306, 0.0
        %v7587 = vmax.f32 %v7417, 0.0
        %v7588 = vmax.f32 %v7419, 0.0
        %v7589 = vmax.f32 %v6632, 0.0
        %v7590 = vmax.f32 %v6634, 0.0
        %v7591 = vmax.f32 %v6745, 0.0
        %v7592 = vmax.f32 %v6747, 0.0
        %v7593 = vmax.f32 %v6858, 0.0
        %v7594 = vmax.f32 %v6860, 0.0
        %v7595 = vmax.f32 %v6971, 0.0
        %v7596 = vmax.f32 %v6973, 0.0
        %v7597 = vmax.f32 %v7084, 0.0
        %v7598 = vmax.f32 %v7086, 0.0
        %v7599 = vmax.f32 %v7197, 0.0
        %v7600 = vmax.f32 %v7199, 0.0
        %v7601 = vmax.f32 %v7310, 0.0
        %v7602 = vmax.f32 %v7312, 0.0
        %v7603 = vmax.f32 %v7423, 0.0
        %v7604 = vmax.f32 %v7425, 0.0
        %v7605 = vmax.f32 %v6636, 0.0
        %v7606 = vmax.f32 %v6638, 0.0
        %v7607 = vmax.f32 %v6749, 0.0
        %v7608 = vmax.f32 %v6751, 0.0
        %v7609 = vmax.f32 %v6862, 0.0
        %v7610 = vmax.f32 %v6864, 0.0
        %v7611 = vmax.f32 %v6975, 0.0
        %v7612 = vmax.f32 %v6977, 0.0
        %v7613 = vmax.f32 %v7088, 0.0
        %v7614 = vmax.f32 %v7090, 0.0
        %v7615 = vmax.f32 %v7201, 0.0
        %v7616 = vmax.f32 %v7203, 0.0
        %v7617 = vmax.f32 %v7314, 0.0
        %v7618 = vmax.f32 %v7316, 0.0
        %v7619 = vmax.f32 %v7427, 0.0
        %v7620 = vmax.f32 %v7429, 0.0
        %v7621 = vmax.f32 %v6642, 0.0
        %v7622 = vmax.f32 %v6644, 0.0
        %v7623 = vmax.f32 %v6755, 0.0
        %v7624 = vmax.f32 %v6757, 0.0
        %v7625 = vmax.f32 %v6868, 0.0
        %v7626 = vmax.f32 %v6870, 0.0
        %v7627 = vmax.f32 %v6981, 0.0
        %v7628 = vmax.f32 %v6983, 0.0
        %v7629 = vmax.f32 %v7094, 0.0
        %v7630 = vmax.f32 %v7096, 0.0
        %v7631 = vmax.f32 %v7207, 0.0
        %v7632 = vmax.f32 %v7209, 0.0
        %v7633 = vmax.f32 %v7320, 0.0
        %v7634 = vmax.f32 %v7322, 0.0
        %v7635 = vmax.f32 %v7433, 0.0
        %v7636 = vmax.f32 %v7435, 0.0
        %v7637 = vmax.f32 %v6646, 0.0
        %v7638 = vmax.f32 %v6648, 0.0
        %v7639 = vmax.f32 %v6759, 0.0
        %v7640 = vmax.f32 %v6761, 0.0
        %v7641 = vmax.f32 %v6872, 0.0
        %v7642 = vmax.f32 %v6874, 0.0
        %v7643 = vmax.f32 %v6985, 0.0
        %v7644 = vmax.f32 %v6987, 0.0
        %v7645 = vmax.f32 %v7098, 0.0
        %v7646 = vmax.f32 %v7100, 0.0
        %v7647 = vmax.f32 %v7211, 0.0
        %v7648 = vmax.f32 %v7213, 0.0
        %v7649 = vmax.f32 %v7324, 0.0
        %v7650 = vmax.f32 %v7326, 0.0
        %v7651 = vmax.f32 %v7437, 0.0
        %v7652 = vmax.f32 %v7439, 0.0
        %v7653 = vmax.f32 %v6652, 0.0
        %v7654 = vmax.f32 %v6654, 0.0
        %v7655 = vmax.f32 %v6765, 0.0
        %v7656 = vmax.f32 %v6767, 0.0
        %v7657 = vmax.f32 %v6878, 0.0
        %v7658 = vmax.f32 %v6880, 0.0
        %v7659 = vmax.f32 %v6991, 0.0
        %v7660 = vmax.f32 %v6993, 0.0
        %v7661 = vmax.f32 %v7104, 0.0
        %v7662 = vmax.f32 %v7106, 0.0
        %v7663 = vmax.f32 %v7217, 0.0
        %v7664 = vmax.f32 %v7219, 0.0
        %v7665 = vmax.f32 %v7330, 0.0
        %v7666 = vmax.f32 %v7332, 0.0
        %v7667 = vmax.f32 %v7443, 0.0
        %v7668 = vmax.f32 %v7445, 0.0
        %v7669 = vmax.f32 %v6656, 0.0
        %v7670 = vmax.f32 %v6658, 0.0
        %v7671 = vmax.f32 %v6769, 0.0
        %v7672 = vmax.f32 %v6771, 0.0
        %v7673 = vmax.f32 %v6882, 0.0
        %v7674 = vmax.f32 %v6884, 0.0
        %v7675 = vmax.f32 %v6995, 0.0
        %v7676 = vmax.f32 %v6997, 0.0
        %v7677 = vmax.f32 %v7108, 0.0
        %v7678 = vmax.f32 %v7110, 0.0
        %v7679 = vmax.f32 %v7221, 0.0
        %v7680 = vmax.f32 %v7223, 0.0
        %v7681 = vmax.f32 %v7334, 0.0
        %v7682 = vmax.f32 %v7336, 0.0
        %v7683 = vmax.f32 %v7447, 0.0
        %v7684 = vmax.f32 %v7449, 0.0
        %v7685 = vmax.f32 %v6662, 0.0
        %v7686 = vmax.f32 %v6664, 0.0
        %v7687 = vmax.f32 %v6775, 0.0
        %v7688 = vmax.f32 %v6777, 0.0
        %v7689 = vmax.f32 %v6888, 0.0
        %v7690 = vmax.f32 %v6890, 0.0
        %v7691 = vmax.f32 %v7001, 0.0
        %v7692 = vmax.f32 %v7003, 0.0
        %v7693 = vmax.f32 %v7114, 0.0
        %v7694 = vmax.f32 %v7116, 0.0
        %v7695 = vmax.f32 %v7227, 0.0
        %v7696 = vmax.f32 %v7229, 0.0
        %v7697 = vmax.f32 %v7340, 0.0
        %v7698 = vmax.f32 %v7342, 0.0
        %v7699 = vmax.f32 %v7453, 0.0
        %v7700 = vmax.f32 %v7455, 0.0
        %v7701 = vmax.f32 %v6666, 0.0
        %v7702 = vmax.f32 %v6668, 0.0
        %v7703 = vmax.f32 %v6779, 0.0
        %v7704 = vmax.f32 %v6781, 0.0
        %v7705 = vmax.f32 %v6892, 0.0
        %v7706 = vmax.f32 %v6894, 0.0
        %v7707 = vmax.f32 %v7005, 0.0
        %v7708 = vmax.f32 %v7007, 0.0
        %v7709 = vmax.f32 %v7118, 0.0
        %v7710 = vmax.f32 %v7120, 0.0
        %v7711 = vmax.f32 %v7231, 0.0
        %v7712 = vmax.f32 %v7233, 0.0
        %v7713 = vmax.f32 %v7344, 0.0
        %v7714 = vmax.f32 %v7346, 0.0
        %v7715 = vmax.f32 %v7457, 0.0
        %v7716 = vmax.f32 %v7459, 0.0
        %v7717 = vpack.c.bf16 %v7477, %v7461
        %v7718 = vpack.c.bf16 %v7478, %v7462
        %v7719 = vpack.c.bf16 %v7479, %v7463
        %v7720 = vpack.c.bf16 %v7480, %v7464
        %v7721 = vpack.c.bf16 %v7481, %v7465
        %v7722 = vpack.c.bf16 %v7482, %v7466
        %v7723 = vpack.c.bf16 %v7483, %v7467
        %v7724 = vpack.c.bf16 %v7484, %v7468
        %v7725 = vpack.c.bf16 %v7485, %v7469
        %v7726 = vpack.c.bf16 %v7486, %v7470
        %v7727 = vpack.c.bf16 %v7487, %v7471
        %v7728 = vpack.c.bf16 %v7488, %v7472
        %v7729 = vpack.c.bf16 %v7489, %v7473
        %v7730 = vpack.c.bf16 %v7490, %v7474
        %v7731 = vpack.c.bf16 %v7491, %v7475
        %v7732 = vpack.c.bf16 %v7492, %v7476
        %v7733 = vpack.c.bf16 %v7509, %v7493
        %v7734 = vpack.c.bf16 %v7510, %v7494
        %v7735 = vpack.c.bf16 %v7511, %v7495
        %v7736 = vpack.c.bf16 %v7512, %v7496
        %v7737 = vpack.c.bf16 %v7513, %v7497
        %v7738 = vpack.c.bf16 %v7514, %v7498
        %v7739 = vpack.c.bf16 %v7515, %v7499
        %v7740 = vpack.c.bf16 %v7516, %v7500
        %v7741 = vpack.c.bf16 %v7517, %v7501
        %v7742 = vpack.c.bf16 %v7518, %v7502
        %v7743 = vpack.c.bf16 %v7519, %v7503
        %v7744 = vpack.c.bf16 %v7520, %v7504
        %v7745 = vpack.c.bf16 %v7521, %v7505
        %v7746 = vpack.c.bf16 %v7522, %v7506
        %v7747 = vpack.c.bf16 %v7523, %v7507
        %v7748 = vpack.c.bf16 %v7524, %v7508
        %v7749 = vpack.c.bf16 %v7541, %v7525
        %v7750 = vpack.c.bf16 %v7542, %v7526
        %v7751 = vpack.c.bf16 %v7543, %v7527
        %v7752 = vpack.c.bf16 %v7544, %v7528
        %v7753 = vpack.c.bf16 %v7545, %v7529
        %v7754 = vpack.c.bf16 %v7546, %v7530
        %v7755 = vpack.c.bf16 %v7547, %v7531
        %v7756 = vpack.c.bf16 %v7548, %v7532
        %v7757 = vpack.c.bf16 %v7549, %v7533
        %v7758 = vpack.c.bf16 %v7550, %v7534
        %v7759 = vpack.c.bf16 %v7551, %v7535
        %v7760 = vpack.c.bf16 %v7552, %v7536
        %v7761 = vpack.c.bf16 %v7553, %v7537
        %v7762 = vpack.c.bf16 %v7554, %v7538
        %v7763 = vpack.c.bf16 %v7555, %v7539
        %v7764 = vpack.c.bf16 %v7556, %v7540
        %v7765 = vpack.c.bf16 %v7573, %v7557
        %v7766 = vpack.c.bf16 %v7574, %v7558
        %v7767 = vpack.c.bf16 %v7575, %v7559
        %v7768 = vpack.c.bf16 %v7576, %v7560
        %v7769 = vpack.c.bf16 %v7577, %v7561
        %v7770 = vpack.c.bf16 %v7578, %v7562
        %v7771 = vpack.c.bf16 %v7579, %v7563
        %v7772 = vpack.c.bf16 %v7580, %v7564
        %v7773 = vpack.c.bf16 %v7581, %v7565
        %v7774 = vpack.c.bf16 %v7582, %v7566
        %v7775 = vpack.c.bf16 %v7583, %v7567
        %v7776 = vpack.c.bf16 %v7584, %v7568
        %v7777 = vpack.c.bf16 %v7585, %v7569
        %v7778 = vpack.c.bf16 %v7586, %v7570
        %v7779 = vpack.c.bf16 %v7587, %v7571
        %v7780 = vpack.c.bf16 %v7588, %v7572
        %v7781 = vpack.c.bf16 %v7605, %v7589
        %v7782 = vpack.c.bf16 %v7606, %v7590
        %v7783 = vpack.c.bf16 %v7607, %v7591
        %v7784 = vpack.c.bf16 %v7608, %v7592
        %v7785 = vpack.c.bf16 %v7609, %v7593
        %v7786 = vpack.c.bf16 %v7610, %v7594
        %v7787 = vpack.c.bf16 %v7611, %v7595
        %v7788 = vpack.c.bf16 %v7612, %v7596
        %v7789 = vpack.c.bf16 %v7613, %v7597
        %v7790 = vpack.c.bf16 %v7614, %v7598
        %v7791 = vpack.c.bf16 %v7615, %v7599
        %v7792 = vpack.c.bf16 %v7616, %v7600
        %v7793 = vpack.c.bf16 %v7617, %v7601
        %v7794 = vpack.c.bf16 %v7618, %v7602
        %v7795 = vpack.c.bf16 %v7619, %v7603
        %v7796 = vpack.c.bf16 %v7620, %v7604
        %v7797 = vpack.c.bf16 %v7637, %v7621
        %v7798 = vpack.c.bf16 %v7638, %v7622
        %v7799 = vpack.c.bf16 %v7639, %v7623
        %v7800 = vpack.c.bf16 %v7640, %v7624
        %v7801 = vpack.c.bf16 %v7641, %v7625
        %v7802 = vpack.c.bf16 %v7642, %v7626
        %v7803 = vpack.c.bf16 %v7643, %v7627
        %v7804 = vpack.c.bf16 %v7644, %v7628
        %v7805 = vpack.c.bf16 %v7645, %v7629
        %v7806 = vpack.c.bf16 %v7646, %v7630
        %v7807 = vpack.c.bf16 %v7647, %v7631
        %v7808 = vpack.c.bf16 %v7648, %v7632
        %v7809 = vpack.c.bf16 %v7649, %v7633
        %v7810 = vpack.c.bf16 %v7650, %v7634
        %v7811 = vpack.c.bf16 %v7651, %v7635
        %v7812 = vpack.c.bf16 %v7652, %v7636
        %v7813 = vpack.c.bf16 %v7669, %v7653
        %v7814 = vpack.c.bf16 %v7670, %v7654
        %v7815 = vpack.c.bf16 %v7671, %v7655
        %v7816 = vpack.c.bf16 %v7672, %v7656
        %v7817 = vpack.c.bf16 %v7673, %v7657
        %v7818 = vpack.c.bf16 %v7674, %v7658
        %v7819 = vpack.c.bf16 %v7675, %v7659
        %v7820 = vpack.c.bf16 %v7676, %v7660
        %v7821 = vpack.c.bf16 %v7677, %v7661
        %v7822 = vpack.c.bf16 %v7678, %v7662
        %v7823 = vpack.c.bf16 %v7679, %v7663
        %v7824 = vpack.c.bf16 %v7680, %v7664
        %v7825 = vpack.c.bf16 %v7681, %v7665
        %v7826 = vpack.c.bf16 %v7682, %v7666
        %v7827 = vpack.c.bf16 %v7683, %v7667
        %v7828 = vpack.c.bf16 %v7684, %v7668
        %v7829 = vpack.c.bf16 %v7701, %v7685
        %v7830 = vpack.c.bf16 %v7702, %v7686
        %v7831 = vpack.c.bf16 %v7703, %v7687
        %v7832 = vpack.c.bf16 %v7704, %v7688
        %v7833 = vpack.c.bf16 %v7705, %v7689
        %v7834 = vpack.c.bf16 %v7706, %v7690
        %v7835 = vpack.c.bf16 %v7707, %v7691
        %v7836 = vpack.c.bf16 %v7708, %v7692
        %v7837 = vpack.c.bf16 %v7709, %v7693
        %v7838 = vpack.c.bf16 %v7710, %v7694
        %v7839 = vpack.c.bf16 %v7711, %v7695
        %v7840 = vpack.c.bf16 %v7712, %v7696
        %v7841 = vpack.c.bf16 %v7713, %v7697
        %v7842 = vpack.c.bf16 %v7714, %v7698
        %v7843 = vpack.c.bf16 %v7715, %v7699
        %v7844 = vpack.c.bf16 %v7716, %v7700
        %v7845 = vld [vmem:[#allocation17] sm:$0xf]
        %v7846 = vld [vmem:[#allocation17 + $0x4] sm:$0xf]
        %v7847 = vld [vmem:[#allocation17 + $0x8] sm:$0xf]
        %v7848 = vld [vmem:[#allocation17 + $0xc] sm:$0xf]
        %v7849 = vld [vmem:[#allocation17 + $0x10] sm:$0xf]
        %v7850 = vld [vmem:[#allocation17 + $0x14] sm:$0xf]
        %v7851 = vld [vmem:[#allocation17 + $0x18] sm:$0xf]
        %v7852 = vld [vmem:[#allocation17 + $0x1c] sm:$0xf]
        %v7853 = vld [vmem:[#allocation17 + $0x20] sm:$0xf]
        %v7854 = vld [vmem:[#allocation17 + $0x24] sm:$0xf]
        %v7855 = vld [vmem:[#allocation17 + $0x28] sm:$0xf]
        %v7856 = vld [vmem:[#allocation17 + $0x2c] sm:$0xf]
        %v7857 = vld [vmem:[#allocation17 + $0x30] sm:$0xf]
        %v7858 = vld [vmem:[#allocation17 + $0x34] sm:$0xf]
        %v7859 = vld [vmem:[#allocation17 + $0x38] sm:$0xf]
        %v7860 = vld [vmem:[#allocation17 + $0x3c] sm:$0xf]
        %v7861 = vld [vmem:[#allocation17 + $0x40] sm:$0xf]
        %v7862 = vld [vmem:[#allocation17 + $0x44] sm:$0xf]
        %v7863 = vld [vmem:[#allocation17 + $0x48] sm:$0xf]
        %v7864 = vld [vmem:[#allocation17 + $0x4c] sm:$0xf]
        %v7865 = vld [vmem:[#allocation17 + $0x50] sm:$0xf]
        %v7866 = vld [vmem:[#allocation17 + $0x54] sm:$0xf]
        %v7867 = vld [vmem:[#allocation17 + $0x58] sm:$0xf]
        %v7868 = vld [vmem:[#allocation17 + $0x5c] sm:$0xf]
        %v7869 = vld [vmem:[#allocation17 + $0x60] sm:$0xf]
        %v7870 = vld [vmem:[#allocation17 + $0x64] sm:$0xf]
        %v7871 = vld [vmem:[#allocation17 + $0x68] sm:$0xf]
        %v7872 = vld [vmem:[#allocation17 + $0x6c] sm:$0xf]
        %v7873 = vld [vmem:[#allocation17 + $0x70] sm:$0xf]
        %v7874 = vld [vmem:[#allocation17 + $0x74] sm:$0xf]
        %v7875 = vld [vmem:[#allocation17 + $0x78] sm:$0xf]
        %v7876 = vld [vmem:[#allocation17 + $0x7c] sm:$0xf]
        %v7877 = vld [vmem:[#allocation17 + $0x80] sm:$0xf]
        %v7878 = vld [vmem:[#allocation17 + $0x84] sm:$0xf]
        %v7879 = vld [vmem:[#allocation17 + $0x88] sm:$0xf]
        %v7880 = vld [vmem:[#allocation17 + $0x8c] sm:$0xf]
        %v7881 = vld [vmem:[#allocation17 + $0x90] sm:$0xf]
        %v7882 = vld [vmem:[#allocation17 + $0x94] sm:$0xf]
        %v7883 = vld [vmem:[#allocation17 + $0x98] sm:$0xf]
        %v7884 = vld [vmem:[#allocation17 + $0x9c] sm:$0xf]
        %v7885 = vld [vmem:[#allocation17 + $0xa0] sm:$0xf]
        %v7886 = vld [vmem:[#allocation17 + $0xa4] sm:$0xf]
        %v7887 = vld [vmem:[#allocation17 + $0xa8] sm:$0xf]
        %v7888 = vld [vmem:[#allocation17 + $0xac] sm:$0xf]
        %v7889 = vld [vmem:[#allocation17 + $0xb0] sm:$0xf]
        %v7890 = vld [vmem:[#allocation17 + $0xb4] sm:$0xf]
        %v7891 = vld [vmem:[#allocation17 + $0xb8] sm:$0xf]
        %v7892 = vld [vmem:[#allocation17 + $0xbc] sm:$0xf]
        %v7893 = vld [vmem:[#allocation17 + $0xc0] sm:$0xf]
        %v7894 = vld [vmem:[#allocation17 + $0xc4] sm:$0xf]
        %v7895 = vld [vmem:[#allocation17 + $0xc8] sm:$0xf]
        %v7896 = vld [vmem:[#allocation17 + $0xcc] sm:$0xf]
        %v7897 = vld [vmem:[#allocation17 + $0xd0] sm:$0xf]
        %v7898 = vld [vmem:[#allocation17 + $0xd4] sm:$0xf]
        %v7899 = vld [vmem:[#allocation17 + $0xd8] sm:$0xf]
        %v7900 = vld [vmem:[#allocation17 + $0xdc] sm:$0xf]
        %v7901 = vld [vmem:[#allocation17 + $0xe0] sm:$0xf]
        %v7902 = vld [vmem:[#allocation17 + $0xe4] sm:$0xf]
        %v7903 = vld [vmem:[#allocation17 + $0xe8] sm:$0xf]
        %v7904 = vld [vmem:[#allocation17 + $0xec] sm:$0xf]
        %v7905 = vld [vmem:[#allocation17 + $0xf0] sm:$0xf]
        %v7906 = vld [vmem:[#allocation17 + $0xf4] sm:$0xf]
        %v7907 = vld [vmem:[#allocation17 + $0xf8] sm:$0xf]
        %v7908 = vld [vmem:[#allocation17 + $0xfc] sm:$0xf]
        %v7909 = vld [vmem:[#allocation17 + $0x100] sm:$0xf]
        %v7910 = vld [vmem:[#allocation17 + $0x104] sm:$0xf]
        %v7911 = vld [vmem:[#allocation17 + $0x108] sm:$0xf]
        %v7912 = vld [vmem:[#allocation17 + $0x10c] sm:$0xf]
        %v7913 = vld [vmem:[#allocation17 + $0x110] sm:$0xf]
        %v7914 = vld [vmem:[#allocation17 + $0x114] sm:$0xf]
        %v7915 = vld [vmem:[#allocation17 + $0x118] sm:$0xf]
        %v7916 = vld [vmem:[#allocation17 + $0x11c] sm:$0xf]
        %v7917 = vld [vmem:[#allocation17 + $0x120] sm:$0xf]
        %v7918 = vld [vmem:[#allocation17 + $0x124] sm:$0xf]
        %v7919 = vld [vmem:[#allocation17 + $0x128] sm:$0xf]
        %v7920 = vld [vmem:[#allocation17 + $0x12c] sm:$0xf]
        %v7921 = vld [vmem:[#allocation17 + $0x130] sm:$0xf]
        %v7922 = vld [vmem:[#allocation17 + $0x134] sm:$0xf]
        %v7923 = vld [vmem:[#allocation17 + $0x138] sm:$0xf]
        %v7924 = vld [vmem:[#allocation17 + $0x13c] sm:$0xf]
        %v7925 = vld [vmem:[#allocation17 + $0x140] sm:$0xf]
        %v7926 = vld [vmem:[#allocation17 + $0x144] sm:$0xf]
        %v7927 = vld [vmem:[#allocation17 + $0x148] sm:$0xf]
        %v7928 = vld [vmem:[#allocation17 + $0x14c] sm:$0xf]
        %v7929 = vld [vmem:[#allocation17 + $0x150] sm:$0xf]
        %v7930 = vld [vmem:[#allocation17 + $0x154] sm:$0xf]
        %v7931 = vld [vmem:[#allocation17 + $0x158] sm:$0xf]
        %v7932 = vld [vmem:[#allocation17 + $0x15c] sm:$0xf]
        %v7933 = vld [vmem:[#allocation17 + $0x160] sm:$0xf]
        %v7934 = vld [vmem:[#allocation17 + $0x164] sm:$0xf]
        %v7935 = vld [vmem:[#allocation17 + $0x168] sm:$0xf]
        %v7936 = vld [vmem:[#allocation17 + $0x16c] sm:$0xf]
        %v7937 = vld [vmem:[#allocation17 + $0x170] sm:$0xf]
        %v7938 = vld [vmem:[#allocation17 + $0x174] sm:$0xf]
        %v7939 = vld [vmem:[#allocation17 + $0x178] sm:$0xf]
        %v7940 = vld [vmem:[#allocation17 + $0x17c] sm:$0xf]
        %v7941 = vld [vmem:[#allocation17 + $0x180] sm:$0xf]
        %v7942 = vld [vmem:[#allocation17 + $0x184] sm:$0xf]
        %v7943 = vld [vmem:[#allocation17 + $0x188] sm:$0xf]
        %v7944 = vld [vmem:[#allocation17 + $0x18c] sm:$0xf]
        %v7945 = vld [vmem:[#allocation17 + $0x190] sm:$0xf]
        %v7946 = vld [vmem:[#allocation17 + $0x194] sm:$0xf]
        %v7947 = vld [vmem:[#allocation17 + $0x198] sm:$0xf]
        %v7948 = vld [vmem:[#allocation17 + $0x19c] sm:$0xf]
        %v7949 = vld [vmem:[#allocation17 + $0x1a0] sm:$0xf]
        %v7950 = vld [vmem:[#allocation17 + $0x1a4] sm:$0xf]
        %v7951 = vld [vmem:[#allocation17 + $0x1a8] sm:$0xf]
        %v7952 = vld [vmem:[#allocation17 + $0x1ac] sm:$0xf]
        %v7953 = vld [vmem:[#allocation17 + $0x1b0] sm:$0xf]
        %v7954 = vld [vmem:[#allocation17 + $0x1b4] sm:$0xf]
        %v7955 = vld [vmem:[#allocation17 + $0x1b8] sm:$0xf]
        %v7956 = vld [vmem:[#allocation17 + $0x1bc] sm:$0xf]
        %v7957 = vld [vmem:[#allocation17 + $0x1c0] sm:$0xf]
        %v7958 = vld [vmem:[#allocation17 + $0x1c4] sm:$0xf]
        %v7959 = vld [vmem:[#allocation17 + $0x1c8] sm:$0xf]
        %v7960 = vld [vmem:[#allocation17 + $0x1cc] sm:$0xf]
        %v7961 = vld [vmem:[#allocation17 + $0x1d0] sm:$0xf]
        %v7962 = vld [vmem:[#allocation17 + $0x1d4] sm:$0xf]
        %v7963 = vld [vmem:[#allocation17 + $0x1d8] sm:$0xf]
        %v7964 = vld [vmem:[#allocation17 + $0x1dc] sm:$0xf]
        %v7965 = vld [vmem:[#allocation17 + $0x1e0] sm:$0xf]
        %v7966 = vld [vmem:[#allocation17 + $0x1e4] sm:$0xf]
        %v7967 = vld [vmem:[#allocation17 + $0x1e8] sm:$0xf]
        %v7968 = vld [vmem:[#allocation17 + $0x1ec] sm:$0xf]
        %v7969 = vld [vmem:[#allocation17 + $0x1f0] sm:$0xf]
        %v7970 = vld [vmem:[#allocation17 + $0x1f4] sm:$0xf]
        %v7971 = vld [vmem:[#allocation17 + $0x1f8] sm:$0xf]
        %v7972 = vld [vmem:[#allocation17 + $0x1fc] sm:$0xf]
        %v7973 = vld [vmem:[#allocation17 + $0x200] sm:$0xf]
        %v7974 = vld [vmem:[#allocation17 + $0x204] sm:$0xf]
        %v7975 = vld [vmem:[#allocation17 + $0x208] sm:$0xf]
        %v7976 = vld [vmem:[#allocation17 + $0x20c] sm:$0xf]
        %v7977 = vld [vmem:[#allocation17 + $0x210] sm:$0xf]
        %v7978 = vld [vmem:[#allocation17 + $0x214] sm:$0xf]
        %v7979 = vld [vmem:[#allocation17 + $0x218] sm:$0xf]
        %v7980 = vld [vmem:[#allocation17 + $0x21c] sm:$0xf]
        %v7981 = vld [vmem:[#allocation17 + $0x220] sm:$0xf]
        %v7982 = vld [vmem:[#allocation17 + $0x224] sm:$0xf]
        %v7983 = vld [vmem:[#allocation17 + $0x228] sm:$0xf]
        %v7984 = vld [vmem:[#allocation17 + $0x22c] sm:$0xf]
        %v7985 = vld [vmem:[#allocation17 + $0x230] sm:$0xf]
        %v7986 = vld [vmem:[#allocation17 + $0x234] sm:$0xf]
        %v7987 = vld [vmem:[#allocation17 + $0x238] sm:$0xf]
        %v7988 = vld [vmem:[#allocation17 + $0x23c] sm:$0xf]
        %v7989 = vld [vmem:[#allocation17 + $0x240] sm:$0xf]
        %v7990 = vld [vmem:[#allocation17 + $0x244] sm:$0xf]
        %v7991 = vld [vmem:[#allocation17 + $0x248] sm:$0xf]
        %v7992 = vld [vmem:[#allocation17 + $0x24c] sm:$0xf]
        %v7993 = vld [vmem:[#allocation17 + $0x250] sm:$0xf]
        %v7994 = vld [vmem:[#allocation17 + $0x254] sm:$0xf]
        %v7995 = vld [vmem:[#allocation17 + $0x258] sm:$0xf]
        %v7996 = vld [vmem:[#allocation17 + $0x25c] sm:$0xf]
        %v7997 = vld [vmem:[#allocation17 + $0x260] sm:$0xf]
        %v7998 = vld [vmem:[#allocation17 + $0x264] sm:$0xf]
        %v7999 = vld [vmem:[#allocation17 + $0x268] sm:$0xf]
        %v8000 = vld [vmem:[#allocation17 + $0x26c] sm:$0xf]
        %v8001 = vld [vmem:[#allocation17 + $0x270] sm:$0xf]
        %v8002 = vld [vmem:[#allocation17 + $0x274] sm:$0xf]
        %v8003 = vld [vmem:[#allocation17 + $0x278] sm:$0xf]
        %v8004 = vld [vmem:[#allocation17 + $0x27c] sm:$0xf]
        %v8005 = vld [vmem:[#allocation17 + $0x280] sm:$0xf]
        %v8006 = vld [vmem:[#allocation17 + $0x284] sm:$0xf]
        %v8007 = vld [vmem:[#allocation17 + $0x288] sm:$0xf]
        %v8008 = vld [vmem:[#allocation17 + $0x28c] sm:$0xf]
        %v8009 = vld [vmem:[#allocation17 + $0x290] sm:$0xf]
        %v8010 = vld [vmem:[#allocation17 + $0x294] sm:$0xf]
        %v8011 = vld [vmem:[#allocation17 + $0x298] sm:$0xf]
        %v8012 = vld [vmem:[#allocation17 + $0x29c] sm:$0xf]
        %v8013 = vld [vmem:[#allocation17 + $0x2a0] sm:$0xf]
        %v8014 = vld [vmem:[#allocation17 + $0x2a4] sm:$0xf]
        %v8015 = vld [vmem:[#allocation17 + $0x2a8] sm:$0xf]
        %v8016 = vld [vmem:[#allocation17 + $0x2ac] sm:$0xf]
        %v8017 = vld [vmem:[#allocation17 + $0x2b0] sm:$0xf]
        %v8018 = vld [vmem:[#allocation17 + $0x2b4] sm:$0xf]
        %v8019 = vld [vmem:[#allocation17 + $0x2b8] sm:$0xf]
        %v8020 = vld [vmem:[#allocation17 + $0x2bc] sm:$0xf]
        %v8021 = vld [vmem:[#allocation17 + $0x2c0] sm:$0xf]
        %v8022 = vld [vmem:[#allocation17 + $0x2c4] sm:$0xf]
        %v8023 = vld [vmem:[#allocation17 + $0x2c8] sm:$0xf]
        %v8024 = vld [vmem:[#allocation17 + $0x2cc] sm:$0xf]
        %v8025 = vld [vmem:[#allocation17 + $0x2d0] sm:$0xf]
        %v8026 = vld [vmem:[#allocation17 + $0x2d4] sm:$0xf]
        %v8027 = vld [vmem:[#allocation17 + $0x2d8] sm:$0xf]
        %v8028 = vld [vmem:[#allocation17 + $0x2dc] sm:$0xf]
        %v8029 = vld [vmem:[#allocation17 + $0x2e0] sm:$0xf]
        %v8030 = vld [vmem:[#allocation17 + $0x2e4] sm:$0xf]
        %v8031 = vld [vmem:[#allocation17 + $0x2e8] sm:$0xf]
        %v8032 = vld [vmem:[#allocation17 + $0x2ec] sm:$0xf]
        %v8033 = vld [vmem:[#allocation17 + $0x2f0] sm:$0xf]
        %v8034 = vld [vmem:[#allocation17 + $0x2f4] sm:$0xf]
        %v8035 = vld [vmem:[#allocation17 + $0x2f8] sm:$0xf]
        %v8036 = vld [vmem:[#allocation17 + $0x2fc] sm:$0xf]
        %v8037 = vld [vmem:[#allocation17 + $0x300] sm:$0xf]
        %v8038 = vld [vmem:[#allocation17 + $0x304] sm:$0xf]
        %v8039 = vld [vmem:[#allocation17 + $0x308] sm:$0xf]
        %v8040 = vld [vmem:[#allocation17 + $0x30c] sm:$0xf]
        %v8041 = vld [vmem:[#allocation17 + $0x310] sm:$0xf]
        %v8042 = vld [vmem:[#allocation17 + $0x314] sm:$0xf]
        %v8043 = vld [vmem:[#allocation17 + $0x318] sm:$0xf]
        %v8044 = vld [vmem:[#allocation17 + $0x31c] sm:$0xf]
        %v8045 = vld [vmem:[#allocation17 + $0x320] sm:$0xf]
        %v8046 = vld [vmem:[#allocation17 + $0x324] sm:$0xf]
        %v8047 = vld [vmem:[#allocation17 + $0x328] sm:$0xf]
        %v8048 = vld [vmem:[#allocation17 + $0x32c] sm:$0xf]
        %v8049 = vld [vmem:[#allocation17 + $0x330] sm:$0xf]
        %v8050 = vld [vmem:[#allocation17 + $0x334] sm:$0xf]
        %v8051 = vld [vmem:[#allocation17 + $0x338] sm:$0xf]
        %v8052 = vld [vmem:[#allocation17 + $0x33c] sm:$0xf]
        %v8053 = vld [vmem:[#allocation17 + $0x340] sm:$0xf]
        %v8054 = vld [vmem:[#allocation17 + $0x344] sm:$0xf]
        %v8055 = vld [vmem:[#allocation17 + $0x348] sm:$0xf]
        %v8056 = vld [vmem:[#allocation17 + $0x34c] sm:$0xf]
        %v8057 = vld [vmem:[#allocation17 + $0x350] sm:$0xf]
        %v8058 = vld [vmem:[#allocation17 + $0x354] sm:$0xf]
        %v8059 = vld [vmem:[#allocation17 + $0x358] sm:$0xf]
        %v8060 = vld [vmem:[#allocation17 + $0x35c] sm:$0xf]
        %v8061 = vld [vmem:[#allocation17 + $0x360] sm:$0xf]
        %v8062 = vld [vmem:[#allocation17 + $0x364] sm:$0xf]
        %v8063 = vld [vmem:[#allocation17 + $0x368] sm:$0xf]
        %v8064 = vld [vmem:[#allocation17 + $0x36c] sm:$0xf]
        %v8065 = vld [vmem:[#allocation17 + $0x370] sm:$0xf]
        %v8066 = vld [vmem:[#allocation17 + $0x374] sm:$0xf]
        %v8067 = vld [vmem:[#allocation17 + $0x378] sm:$0xf]
        %v8068 = vld [vmem:[#allocation17 + $0x37c] sm:$0xf]
        %v8069 = vld [vmem:[#allocation17 + $0x380] sm:$0xf]
        %v8070 = vld [vmem:[#allocation17 + $0x384] sm:$0xf]
        %v8071 = vld [vmem:[#allocation17 + $0x388] sm:$0xf]
        %v8072 = vld [vmem:[#allocation17 + $0x38c] sm:$0xf]
        %v8073 = vld [vmem:[#allocation17 + $0x390] sm:$0xf]
        %v8074 = vld [vmem:[#allocation17 + $0x394] sm:$0xf]
        %v8075 = vld [vmem:[#allocation17 + $0x398] sm:$0xf]
        %v8076 = vld [vmem:[#allocation17 + $0x39c] sm:$0xf]
        %v8077 = vld [vmem:[#allocation17 + $0x3a0] sm:$0xf]
        %v8078 = vld [vmem:[#allocation17 + $0x3a4] sm:$0xf]
        %v8079 = vld [vmem:[#allocation17 + $0x3a8] sm:$0xf]
        %v8080 = vld [vmem:[#allocation17 + $0x3ac] sm:$0xf]
        %v8081 = vld [vmem:[#allocation17 + $0x3b0] sm:$0xf]
        %v8082 = vld [vmem:[#allocation17 + $0x3b4] sm:$0xf]
        %v8083 = vld [vmem:[#allocation17 + $0x3b8] sm:$0xf]
        %v8084 = vld [vmem:[#allocation17 + $0x3bc] sm:$0xf]
        %v8085 = vld [vmem:[#allocation17 + $0x3c0] sm:$0xf]
        %v8086 = vld [vmem:[#allocation17 + $0x3c4] sm:$0xf]
        %v8087 = vld [vmem:[#allocation17 + $0x3c8] sm:$0xf]
        %v8088 = vld [vmem:[#allocation17 + $0x3cc] sm:$0xf]
        %v8089 = vld [vmem:[#allocation17 + $0x3d0] sm:$0xf]
        %v8090 = vld [vmem:[#allocation17 + $0x3d4] sm:$0xf]
        %v8091 = vld [vmem:[#allocation17 + $0x3d8] sm:$0xf]
        %v8092 = vld [vmem:[#allocation17 + $0x3dc] sm:$0xf]
        %v8093 = vld [vmem:[#allocation17 + $0x3e0] sm:$0xf]
        %v8094 = vld [vmem:[#allocation17 + $0x3e4] sm:$0xf]
        %v8095 = vld [vmem:[#allocation17 + $0x3e8] sm:$0xf]
        %v8096 = vld [vmem:[#allocation17 + $0x3ec] sm:$0xf]
        %v8097 = vld [vmem:[#allocation17 + $0x3f0] sm:$0xf]
        %v8098 = vld [vmem:[#allocation17 + $0x3f4] sm:$0xf]
        %v8099 = vld [vmem:[#allocation17 + $0x3f8] sm:$0xf]
        %v8100 = vld [vmem:[#allocation17 + $0x3fc] sm:$0xf]
        %v8101 = vld [vmem:[%s13] sm:$0x1]
        %v8103 = vlaneseq
        %v8104 = vshrl.u32 %v8103, 7
        %v8105 = vsub.s32 0, %v8104
        %v8106 = vrot.slane %v8101, %v8105
        %v8364 = vunpack.c.l.b16 %v7845
        %v8365 = vunpack.c.l.b16 %v7846
        %v8366 = vunpack.c.l.b16 %v7847
        %v8367 = vunpack.c.l.b16 %v7848
        %v8368 = vunpack.c.l.b16 %v7849
        %v8369 = vunpack.c.l.b16 %v7850
        %v8370 = vunpack.c.l.b16 %v7851
        %v8371 = vunpack.c.l.b16 %v7852
        %v8372 = vunpack.c.l.b16 %v7853
        %v8373 = vunpack.c.l.b16 %v7854
        %v8374 = vunpack.c.l.b16 %v7855
        %v8375 = vunpack.c.l.b16 %v7856
        %v8376 = vunpack.c.l.b16 %v7857
        %v8377 = vunpack.c.l.b16 %v7858
        %v8378 = vunpack.c.l.b16 %v7859
        %v8379 = vunpack.c.l.b16 %v7860
        %v8380 = vunpack.c.l.b16 %v7861
        %v8381 = vunpack.c.l.b16 %v7862
        %v8382 = vunpack.c.l.b16 %v7863
        %v8383 = vunpack.c.l.b16 %v7864
        %v8384 = vunpack.c.l.b16 %v7865
        %v8385 = vunpack.c.l.b16 %v7866
        %v8386 = vunpack.c.l.b16 %v7867
        %v8387 = vunpack.c.l.b16 %v7868
        %v8388 = vunpack.c.l.b16 %v7869
        %v8389 = vunpack.c.l.b16 %v7870
        %v8390 = vunpack.c.l.b16 %v7871
        %v8391 = vunpack.c.l.b16 %v7872
        %v8392 = vunpack.c.l.b16 %v7873
        %v8393 = vunpack.c.l.b16 %v7874
        %v8394 = vunpack.c.l.b16 %v7875
        %v8395 = vunpack.c.l.b16 %v7876
        %v8396 = vunpack.c.l.b16 %v7877
        %v8397 = vunpack.c.l.b16 %v7878
        %v8398 = vunpack.c.l.b16 %v7879
        %v8399 = vunpack.c.l.b16 %v7880
        %v8400 = vunpack.c.l.b16 %v7881
        %v8401 = vunpack.c.l.b16 %v7882
        %v8402 = vunpack.c.l.b16 %v7883
        %v8403 = vunpack.c.l.b16 %v7884
        %v8404 = vunpack.c.l.b16 %v7885
        %v8405 = vunpack.c.l.b16 %v7886
        %v8406 = vunpack.c.l.b16 %v7887
        %v8407 = vunpack.c.l.b16 %v7888
        %v8408 = vunpack.c.l.b16 %v7889
        %v8409 = vunpack.c.l.b16 %v7890
        %v8410 = vunpack.c.l.b16 %v7891
        %v8411 = vunpack.c.l.b16 %v7892
        %v8412 = vunpack.c.l.b16 %v7893
        %v8413 = vunpack.c.l.b16 %v7894
        %v8414 = vunpack.c.l.b16 %v7895
        %v8415 = vunpack.c.l.b16 %v7896
        %v8416 = vunpack.c.l.b16 %v7897
        %v8417 = vunpack.c.l.b16 %v7898
        %v8418 = vunpack.c.l.b16 %v7899
        %v8419 = vunpack.c.l.b16 %v7900
        %v8420 = vunpack.c.l.b16 %v7901
        %v8421 = vunpack.c.l.b16 %v7902
        %v8422 = vunpack.c.l.b16 %v7903
        %v8423 = vunpack.c.l.b16 %v7904
        %v8424 = vunpack.c.l.b16 %v7905
        %v8425 = vunpack.c.l.b16 %v7906
        %v8426 = vunpack.c.l.b16 %v7907
        %v8427 = vunpack.c.l.b16 %v7908
        %v8428 = vunpack.c.l.b16 %v7909
        %v8429 = vunpack.c.l.b16 %v7910
        %v8430 = vunpack.c.l.b16 %v7911
        %v8431 = vunpack.c.l.b16 %v7912
        %v8432 = vunpack.c.l.b16 %v7913
        %v8433 = vunpack.c.l.b16 %v7914
        %v8434 = vunpack.c.l.b16 %v7915
        %v8435 = vunpack.c.l.b16 %v7916
        %v8436 = vunpack.c.l.b16 %v7917
        %v8437 = vunpack.c.l.b16 %v7918
        %v8438 = vunpack.c.l.b16 %v7919
        %v8439 = vunpack.c.l.b16 %v7920
        %v8440 = vunpack.c.l.b16 %v7921
        %v8441 = vunpack.c.l.b16 %v7922
        %v8442 = vunpack.c.l.b16 %v7923
        %v8443 = vunpack.c.l.b16 %v7924
        %v8444 = vunpack.c.l.b16 %v7925
        %v8445 = vunpack.c.l.b16 %v7926
        %v8446 = vunpack.c.l.b16 %v7927
        %v8447 = vunpack.c.l.b16 %v7928
        %v8448 = vunpack.c.l.b16 %v7929
        %v8449 = vunpack.c.l.b16 %v7930
        %v8450 = vunpack.c.l.b16 %v7931
        %v8451 = vunpack.c.l.b16 %v7932
        %v8452 = vunpack.c.l.b16 %v7933
        %v8453 = vunpack.c.l.b16 %v7934
        %v8454 = vunpack.c.l.b16 %v7935
        %v8455 = vunpack.c.l.b16 %v7936
        %v8456 = vunpack.c.l.b16 %v7937
        %v8457 = vunpack.c.l.b16 %v7938
        %v8458 = vunpack.c.l.b16 %v7939
        %v8459 = vunpack.c.l.b16 %v7940
        %v8460 = vunpack.c.l.b16 %v7941
        %v8461 = vunpack.c.l.b16 %v7942
        %v8462 = vunpack.c.l.b16 %v7943
        %v8463 = vunpack.c.l.b16 %v7944
        %v8464 = vunpack.c.l.b16 %v7945
        %v8465 = vunpack.c.l.b16 %v7946
        %v8466 = vunpack.c.l.b16 %v7947
        %v8467 = vunpack.c.l.b16 %v7948
        %v8468 = vunpack.c.l.b16 %v7949
        %v8469 = vunpack.c.l.b16 %v7950
        %v8470 = vunpack.c.l.b16 %v7951
        %v8471 = vunpack.c.l.b16 %v7952
        %v8472 = vunpack.c.l.b16 %v7953
        %v8473 = vunpack.c.l.b16 %v7954
        %v8474 = vunpack.c.l.b16 %v7955
        %v8475 = vunpack.c.l.b16 %v7956
        %v8476 = vunpack.c.l.b16 %v7957
        %v8477 = vunpack.c.l.b16 %v7958
        %v8478 = vunpack.c.l.b16 %v7959
        %v8479 = vunpack.c.l.b16 %v7960
        %v8480 = vunpack.c.l.b16 %v7961
        %v8481 = vunpack.c.l.b16 %v7962
        %v8482 = vunpack.c.l.b16 %v7963
        %v8483 = vunpack.c.l.b16 %v7964
        %v8484 = vunpack.c.l.b16 %v7965
        %v8485 = vunpack.c.l.b16 %v7966
        %v8486 = vunpack.c.l.b16 %v7967
        %v8487 = vunpack.c.l.b16 %v7968
        %v8488 = vunpack.c.l.b16 %v7969
        %v8489 = vunpack.c.l.b16 %v7970
        %v8490 = vunpack.c.l.b16 %v7971
        %v8491 = vunpack.c.l.b16 %v7972
        %v8492 = vunpack.c.l.b16 %v7973
        %v8493 = vunpack.c.l.b16 %v7974
        %v8494 = vunpack.c.l.b16 %v7975
        %v8495 = vunpack.c.l.b16 %v7976
        %v8496 = vunpack.c.l.b16 %v7977
        %v8497 = vunpack.c.l.b16 %v7978
        %v8498 = vunpack.c.l.b16 %v7979
        %v8499 = vunpack.c.l.b16 %v7980
        %v8500 = vunpack.c.l.b16 %v7981
        %v8501 = vunpack.c.l.b16 %v7982
        %v8502 = vunpack.c.l.b16 %v7983
        %v8503 = vunpack.c.l.b16 %v7984
        %v8504 = vunpack.c.l.b16 %v7985
        %v8505 = vunpack.c.l.b16 %v7986
        %v8506 = vunpack.c.l.b16 %v7987
        %v8507 = vunpack.c.l.b16 %v7988
        %v8508 = vunpack.c.l.b16 %v7989
        %v8509 = vunpack.c.l.b16 %v7990
        %v8510 = vunpack.c.l.b16 %v7991
        %v8511 = vunpack.c.l.b16 %v7992
        %v8512 = vunpack.c.l.b16 %v7993
        %v8513 = vunpack.c.l.b16 %v7994
        %v8514 = vunpack.c.l.b16 %v7995
        %v8515 = vunpack.c.l.b16 %v7996
        %v8516 = vunpack.c.l.b16 %v7997
        %v8517 = vunpack.c.l.b16 %v7998
        %v8518 = vunpack.c.l.b16 %v7999
        %v8519 = vunpack.c.l.b16 %v8000
        %v8520 = vunpack.c.l.b16 %v8001
        %v8521 = vunpack.c.l.b16 %v8002
        %v8522 = vunpack.c.l.b16 %v8003
        %v8523 = vunpack.c.l.b16 %v8004
        %v8524 = vunpack.c.l.b16 %v8005
        %v8525 = vunpack.c.l.b16 %v8006
        %v8526 = vunpack.c.l.b16 %v8007
        %v8527 = vunpack.c.l.b16 %v8008
        %v8528 = vunpack.c.l.b16 %v8009
        %v8529 = vunpack.c.l.b16 %v8010
        %v8530 = vunpack.c.l.b16 %v8011
        %v8531 = vunpack.c.l.b16 %v8012
        %v8532 = vunpack.c.l.b16 %v8013
        %v8533 = vunpack.c.l.b16 %v8014
        %v8534 = vunpack.c.l.b16 %v8015
        %v8535 = vunpack.c.l.b16 %v8016
        %v8536 = vunpack.c.l.b16 %v8017
        %v8537 = vunpack.c.l.b16 %v8018
        %v8538 = vunpack.c.l.b16 %v8019
        %v8539 = vunpack.c.l.b16 %v8020
        %v8540 = vunpack.c.l.b16 %v8021
        %v8541 = vunpack.c.l.b16 %v8022
        %v8542 = vunpack.c.l.b16 %v8023
        %v8543 = vunpack.c.l.b16 %v8024
        %v8544 = vunpack.c.l.b16 %v8025
        %v8545 = vunpack.c.l.b16 %v8026
        %v8546 = vunpack.c.l.b16 %v8027
        %v8547 = vunpack.c.l.b16 %v8028
        %v8548 = vunpack.c.l.b16 %v8029
        %v8549 = vunpack.c.l.b16 %v8030
        %v8550 = vunpack.c.l.b16 %v8031
        %v8551 = vunpack.c.l.b16 %v8032
        %v8552 = vunpack.c.l.b16 %v8033
        %v8553 = vunpack.c.l.b16 %v8034
        %v8554 = vunpack.c.l.b16 %v8035
        %v8555 = vunpack.c.l.b16 %v8036
        %v8556 = vunpack.c.l.b16 %v8037
        %v8557 = vunpack.c.l.b16 %v8038
        %v8558 = vunpack.c.l.b16 %v8039
        %v8559 = vunpack.c.l.b16 %v8040
        %v8560 = vunpack.c.l.b16 %v8041
        %v8561 = vunpack.c.l.b16 %v8042
        %v8562 = vunpack.c.l.b16 %v8043
        %v8563 = vunpack.c.l.b16 %v8044
        %v8564 = vunpack.c.l.b16 %v8045
        %v8565 = vunpack.c.l.b16 %v8046
        %v8566 = vunpack.c.l.b16 %v8047
        %v8567 = vunpack.c.l.b16 %v8048
        %v8568 = vunpack.c.l.b16 %v8049
        %v8569 = vunpack.c.l.b16 %v8050
        %v8570 = vunpack.c.l.b16 %v8051
        %v8571 = vunpack.c.l.b16 %v8052
        %v8572 = vunpack.c.l.b16 %v8053
        %v8573 = vunpack.c.l.b16 %v8054
        %v8574 = vunpack.c.l.b16 %v8055
        %v8575 = vunpack.c.l.b16 %v8056
        %v8576 = vunpack.c.l.b16 %v8057
        %v8577 = vunpack.c.l.b16 %v8058
        %v8578 = vunpack.c.l.b16 %v8059
        %v8579 = vunpack.c.l.b16 %v8060
        %v8580 = vunpack.c.l.b16 %v8061
        %v8581 = vunpack.c.l.b16 %v8062
        %v8582 = vunpack.c.l.b16 %v8063
        %v8583 = vunpack.c.l.b16 %v8064
        %v8584 = vunpack.c.l.b16 %v8065
        %v8585 = vunpack.c.l.b16 %v8066
        %v8586 = vunpack.c.l.b16 %v8067
        %v8587 = vunpack.c.l.b16 %v8068
        %v8588 = vunpack.c.l.b16 %v8069
        %v8589 = vunpack.c.l.b16 %v8070
        %v8590 = vunpack.c.l.b16 %v8071
        %v8591 = vunpack.c.l.b16 %v8072
        %v8592 = vunpack.c.l.b16 %v8073
        %v8593 = vunpack.c.l.b16 %v8074
        %v8594 = vunpack.c.l.b16 %v8075
        %v8595 = vunpack.c.l.b16 %v8076
        %v8596 = vunpack.c.l.b16 %v8077
        %v8597 = vunpack.c.l.b16 %v8078
        %v8598 = vunpack.c.l.b16 %v8079
        %v8599 = vunpack.c.l.b16 %v8080
        %v8600 = vunpack.c.l.b16 %v8081
        %v8601 = vunpack.c.l.b16 %v8082
        %v8602 = vunpack.c.l.b16 %v8083
        %v8603 = vunpack.c.l.b16 %v8084
        %v8604 = vunpack.c.l.b16 %v8085
        %v8605 = vunpack.c.l.b16 %v8086
        %v8606 = vunpack.c.l.b16 %v8087
        %v8607 = vunpack.c.l.b16 %v8088
        %v8608 = vunpack.c.l.b16 %v8089
        %v8609 = vunpack.c.l.b16 %v8090
        %v8610 = vunpack.c.l.b16 %v8091
        %v8611 = vunpack.c.l.b16 %v8092
        %v8612 = vunpack.c.l.b16 %v8093
        %v8613 = vunpack.c.l.b16 %v8094
        %v8614 = vunpack.c.l.b16 %v8095
        %v8615 = vunpack.c.l.b16 %v8096
        %v8616 = vunpack.c.l.b16 %v8097
        %v8617 = vunpack.c.l.b16 %v8098
        %v8618 = vunpack.c.l.b16 %v8099
        %v8619 = vunpack.c.l.b16 %v8100
        %v8620 = vpack.c.b16 %v8365, %v8364
        %v8621 = vpack.c.b16 %v8367, %v8366
        %v8622 = vpack.c.b16 %v8369, %v8368
        %v8623 = vpack.c.b16 %v8371, %v8370
        %v8624 = vpack.c.b16 %v8373, %v8372
        %v8625 = vpack.c.b16 %v8375, %v8374
        %v8626 = vpack.c.b16 %v8377, %v8376
        %v8627 = vpack.c.b16 %v8379, %v8378
        %v8628 = vpack.c.b16 %v8381, %v8380
        %v8629 = vpack.c.b16 %v8383, %v8382
        %v8630 = vpack.c.b16 %v8385, %v8384
        %v8631 = vpack.c.b16 %v8387, %v8386
        %v8632 = vpack.c.b16 %v8389, %v8388
        %v8633 = vpack.c.b16 %v8391, %v8390
        %v8634 = vpack.c.b16 %v8393, %v8392
        %v8635 = vpack.c.b16 %v8395, %v8394
        %v8636 = vpack.c.b16 %v8397, %v8396
        %v8637 = vpack.c.b16 %v8399, %v8398
        %v8638 = vpack.c.b16 %v8401, %v8400
        %v8639 = vpack.c.b16 %v8403, %v8402
        %v8640 = vpack.c.b16 %v8405, %v8404
        %v8641 = vpack.c.b16 %v8407, %v8406
        %v8642 = vpack.c.b16 %v8409, %v8408
        %v8643 = vpack.c.b16 %v8411, %v8410
        %v8644 = vpack.c.b16 %v8413, %v8412
        %v8645 = vpack.c.b16 %v8415, %v8414
        %v8646 = vpack.c.b16 %v8417, %v8416
        %v8647 = vpack.c.b16 %v8419, %v8418
        %v8648 = vpack.c.b16 %v8421, %v8420
        %v8649 = vpack.c.b16 %v8423, %v8422
        %v8650 = vpack.c.b16 %v8425, %v8424
        %v8651 = vpack.c.b16 %v8427, %v8426
        %v8652 = vpack.c.b16 %v8429, %v8428
        %v8653 = vpack.c.b16 %v8431, %v8430
        %v8654 = vpack.c.b16 %v8433, %v8432
        %v8655 = vpack.c.b16 %v8435, %v8434
        %v8656 = vpack.c.b16 %v8437, %v8436
        %v8657 = vpack.c.b16 %v8439, %v8438
        %v8658 = vpack.c.b16 %v8441, %v8440
        %v8659 = vpack.c.b16 %v8443, %v8442
        %v8660 = vpack.c.b16 %v8445, %v8444
        %v8661 = vpack.c.b16 %v8447, %v8446
        %v8662 = vpack.c.b16 %v8449, %v8448
        %v8663 = vpack.c.b16 %v8451, %v8450
        %v8664 = vpack.c.b16 %v8453, %v8452
        %v8665 = vpack.c.b16 %v8455, %v8454
        %v8666 = vpack.c.b16 %v8457, %v8456
        %v8667 = vpack.c.b16 %v8459, %v8458
        %v8668 = vpack.c.b16 %v8461, %v8460
        %v8669 = vpack.c.b16 %v8463, %v8462
        %v8670 = vpack.c.b16 %v8465, %v8464
        %v8671 = vpack.c.b16 %v8467, %v8466
        %v8672 = vpack.c.b16 %v8469, %v8468
        %v8673 = vpack.c.b16 %v8471, %v8470
        %v8674 = vpack.c.b16 %v8473, %v8472
        %v8675 = vpack.c.b16 %v8475, %v8474
        %v8676 = vpack.c.b16 %v8477, %v8476
        %v8677 = vpack.c.b16 %v8479, %v8478
        %v8678 = vpack.c.b16 %v8481, %v8480
        %v8679 = vpack.c.b16 %v8483, %v8482
        %v8680 = vpack.c.b16 %v8485, %v8484
        %v8681 = vpack.c.b16 %v8487, %v8486
        %v8682 = vpack.c.b16 %v8489, %v8488
        %v8683 = vpack.c.b16 %v8491, %v8490
        %v8684 = vpack.c.b16 %v8493, %v8492
        %v8685 = vpack.c.b16 %v8495, %v8494
        %v8686 = vpack.c.b16 %v8497, %v8496
        %v8687 = vpack.c.b16 %v8499, %v8498
        %v8688 = vpack.c.b16 %v8501, %v8500
        %v8689 = vpack.c.b16 %v8503, %v8502
        %v8690 = vpack.c.b16 %v8505, %v8504
        %v8691 = vpack.c.b16 %v8507, %v8506
        %v8692 = vpack.c.b16 %v8509, %v8508
        %v8693 = vpack.c.b16 %v8511, %v8510
        %v8694 = vpack.c.b16 %v8513, %v8512
        %v8695 = vpack.c.b16 %v8515, %v8514
        %v8696 = vpack.c.b16 %v8517, %v8516
        %v8697 = vpack.c.b16 %v8519, %v8518
        %v8698 = vpack.c.b16 %v8521, %v8520
        %v8699 = vpack.c.b16 %v8523, %v8522
        %v8700 = vpack.c.b16 %v8525, %v8524
        %v8701 = vpack.c.b16 %v8527, %v8526
        %v8702 = vpack.c.b16 %v8529, %v8528
        %v8703 = vpack.c.b16 %v8531, %v8530
        %v8704 = vpack.c.b16 %v8533, %v8532
        %v8705 = vpack.c.b16 %v8535, %v8534
        %v8706 = vpack.c.b16 %v8537, %v8536
        %v8707 = vpack.c.b16 %v8539, %v8538
        %v8708 = vpack.c.b16 %v8541, %v8540
        %v8709 = vpack.c.b16 %v8543, %v8542
        %v8710 = vpack.c.b16 %v8545, %v8544
        %v8711 = vpack.c.b16 %v8547, %v8546
        %v8712 = vpack.c.b16 %v8549, %v8548
        %v8713 = vpack.c.b16 %v8551, %v8550
        %v8714 = vpack.c.b16 %v8553, %v8552
        %v8715 = vpack.c.b16 %v8555, %v8554
        %v8716 = vpack.c.b16 %v8557, %v8556
        %v8717 = vpack.c.b16 %v8559, %v8558
        %v8718 = vpack.c.b16 %v8561, %v8560
        %v8719 = vpack.c.b16 %v8563, %v8562
        %v8720 = vpack.c.b16 %v8565, %v8564
        %v8721 = vpack.c.b16 %v8567, %v8566
        %v8722 = vpack.c.b16 %v8569, %v8568
        %v8723 = vpack.c.b16 %v8571, %v8570
        %v8724 = vpack.c.b16 %v8573, %v8572
        %v8725 = vpack.c.b16 %v8575, %v8574
        %v8726 = vpack.c.b16 %v8577, %v8576
        %v8727 = vpack.c.b16 %v8579, %v8578
        %v8728 = vpack.c.b16 %v8581, %v8580
        %v8729 = vpack.c.b16 %v8583, %v8582
        %v8730 = vpack.c.b16 %v8585, %v8584
        %v8731 = vpack.c.b16 %v8587, %v8586
        %v8732 = vpack.c.b16 %v8589, %v8588
        %v8733 = vpack.c.b16 %v8591, %v8590
        %v8734 = vpack.c.b16 %v8593, %v8592
        %v8735 = vpack.c.b16 %v8595, %v8594
        %v8736 = vpack.c.b16 %v8597, %v8596
        %v8737 = vpack.c.b16 %v8599, %v8598
        %v8738 = vpack.c.b16 %v8601, %v8600
        %v8739 = vpack.c.b16 %v8603, %v8602
        %v8740 = vpack.c.b16 %v8605, %v8604
        %v8741 = vpack.c.b16 %v8607, %v8606
        %v8742 = vpack.c.b16 %v8609, %v8608
        %v8743 = vpack.c.b16 %v8611, %v8610
        %v8744 = vpack.c.b16 %v8613, %v8612
        %v8745 = vpack.c.b16 %v8615, %v8614
        %v8746 = vpack.c.b16 %v8617, %v8616
        %v8747 = vpack.c.b16 %v8619, %v8618
        %8876 = vmatprep.subr.bf16.mxu0 0
        %8877 = vmatpush1.bf16.msra.mxu0 %v8627
        %8878 = vmatprep.subr.bf16.mxu0 0
        %8879 = vmatpush1.bf16.msra.mxu0 %v8626
        %8880 = vmatprep.subr.bf16.mxu0 0
        %8881 = vmatpush1.bf16.msra.mxu0 %v8625
        %8882 = vmatprep.subr.bf16.mxu0 0
        %8883 = vmatpush1.bf16.msra.mxu0 %v8624
        %8884 = vmatprep.subr.bf16.mxu0 0
        %8885 = vmatpush1.bf16.msra.mxu0 %v8623
        %8886 = vmatprep.subr.bf16.mxu0 0
        %8887 = vmatpush1.bf16.msra.mxu0 %v8622
        %8888 = vmatprep.subr.bf16.mxu0 0
        %8889 = vmatpush1.bf16.msra.mxu0 %v8621
        %8890 = vmatprep.subr.bf16.mxu0 0
        %8891 = vmatpush1.bf16.msra.mxu0 %v8620
        %8892 = vmatprep.subr.bf16.mxu0 0
        %8893 = vmatpush2.bf16.msra.mxu0 %v8635
        %8894 = vmatprep.subr.bf16.mxu0 0
        %8895 = vmatpush2.bf16.msra.mxu0 %v8634
        %8896 = vmatprep.subr.bf16.mxu0 0
        %8897 = vmatpush2.bf16.msra.mxu0 %v8633
        %8898 = vmatprep.subr.bf16.mxu0 0
        %8899 = vmatpush2.bf16.msra.mxu0 %v8632
        %8900 = vmatprep.subr.bf16.mxu0 0
        %8901 = vmatpush2.bf16.msra.mxu0 %v8631
        %8902 = vmatprep.subr.bf16.mxu0 0
        %8903 = vmatpush2.bf16.msra.mxu0 %v8630
        %8904 = vmatprep.subr.bf16.mxu0 0
        %8905 = vmatpush2.bf16.msra.mxu0 %v8629
        %8906 = vmatprep.subr.bf16.mxu0 0
        %8907 = vmatpush2.bf16.msra.mxu0 %v8628
        %8908 = vmatprep.mubr.bf16.mxu0 %v7718
        %8909 = vmatmul.mubr.bf16.gmra.mxu0 %v7717
        %v8910 = vpop.f32.mrf.mxu0
        %v8911 = vadd.f32 %v8106, %v8910
        %v8912 = vpop.f32.mrf.mxu0
        %v8913 = vpop.f32.mrf.mxu0
        %v8914 = vadd.f32 %v8106, %v8913
        %v8915 = vpop.f32.mrf.mxu0
        %8916 = vmatprep.mubr.bf16.mxu0 %v7734
        %8917 = vmatmul.mubr.bf16.gmra.mxu0 %v7733
        %v8918 = vpop.f32.mrf.mxu0
        %v8919 = vadd.f32 %v8106, %v8918
        %v8920 = vpop.f32.mrf.mxu0
        %v8921 = vpop.f32.mrf.mxu0
        %v8922 = vadd.f32 %v8106, %v8921
        %v8923 = vpop.f32.mrf.mxu0
        %8924 = vmatprep.mubr.bf16.mxu0 %v7750
        %8925 = vmatmul.mubr.bf16.gmra.mxu0 %v7749
        %v8926 = vpop.f32.mrf.mxu0
        %v8927 = vadd.f32 %v8106, %v8926
        %v8928 = vpop.f32.mrf.mxu0
        %v8929 = vpop.f32.mrf.mxu0
        %v8930 = vadd.f32 %v8106, %v8929
        %v8931 = vpop.f32.mrf.mxu0
        %8932 = vmatprep.mubr.bf16.mxu0 %v7766
        %8933 = vmatmul.mubr.bf16.gmra.mxu0 %v7765
        %v8934 = vpop.f32.mrf.mxu0
        %v8935 = vadd.f32 %v8106, %v8934
        %v8936 = vpop.f32.mrf.mxu0
        %v8937 = vpop.f32.mrf.mxu0
        %v8938 = vadd.f32 %v8106, %v8937
        %v8939 = vpop.f32.mrf.mxu0
        %8940 = vmatprep.mubr.bf16.mxu0 %v7782
        %8941 = vmatmul.mubr.bf16.gmra.mxu0 %v7781
        %v8942 = vpop.f32.mrf.mxu0
        %v8943 = vadd.f32 %v8106, %v8942
        %v8944 = vpop.f32.mrf.mxu0
        %v8945 = vpop.f32.mrf.mxu0
        %v8946 = vadd.f32 %v8106, %v8945
        %v8947 = vpop.f32.mrf.mxu0
        %8948 = vmatprep.mubr.bf16.mxu0 %v7798
        %8949 = vmatmul.mubr.bf16.gmra.mxu0 %v7797
        %v8950 = vpop.f32.mrf.mxu0
        %v8951 = vadd.f32 %v8106, %v8950
        %v8952 = vpop.f32.mrf.mxu0
        %v8953 = vpop.f32.mrf.mxu0
        %v8954 = vadd.f32 %v8106, %v8953
        %v8955 = vpop.f32.mrf.mxu0
        %8956 = vmatprep.mubr.bf16.mxu0 %v7814
        %8957 = vmatmul.mubr.bf16.gmra.mxu0 %v7813
        %v8958 = vpop.f32.mrf.mxu0
        %v8959 = vadd.f32 %v8106, %v8958
        %v8960 = vpop.f32.mrf.mxu0
        %v8961 = vpop.f32.mrf.mxu0
        %v8962 = vadd.f32 %v8106, %v8961
        %v8963 = vpop.f32.mrf.mxu0
        %8964 = vmatprep.mubr.bf16.mxu0 %v7830
        %8965 = vmatmul.mubr.bf16.gmra.mxu0 %v7829
        %v8966 = vpop.f32.mrf.mxu0
        %v8967 = vadd.f32 %v8106, %v8966
        %v8968 = vpop.f32.mrf.mxu0
        %v8969 = vpop.f32.mrf.mxu0
        %v8970 = vadd.f32 %v8106, %v8969
        %v8971 = vpop.f32.mrf.mxu0
        %8972 = vdwg.mxu0
        %8973 = vmatprep.subr.bf16.mxu0 0
        %8974 = vmatpush1.bf16.msra.mxu0 %v8643
        %8975 = vmatprep.subr.bf16.mxu0 0
        %8976 = vmatpush1.bf16.msra.mxu0 %v8642
        %8977 = vmatprep.subr.bf16.mxu0 0
        %8978 = vmatpush1.bf16.msra.mxu0 %v8641
        %8979 = vmatprep.subr.bf16.mxu0 0
        %8980 = vmatpush1.bf16.msra.mxu0 %v8640
        %8981 = vmatprep.subr.bf16.mxu0 0
        %8982 = vmatpush1.bf16.msra.mxu0 %v8639
        %8983 = vmatprep.subr.bf16.mxu0 0
        %8984 = vmatpush1.bf16.msra.mxu0 %v8638
        %8985 = vmatprep.subr.bf16.mxu0 0
        %8986 = vmatpush1.bf16.msra.mxu0 %v8637
        %8987 = vmatprep.subr.bf16.mxu0 0
        %8988 = vmatpush1.bf16.msra.mxu0 %v8636
        %8989 = vmatprep.subr.bf16.mxu0 0
        %8990 = vmatpush2.bf16.msra.mxu0 %v8651
        %8991 = vmatprep.subr.bf16.mxu0 0
        %8992 = vmatpush2.bf16.msra.mxu0 %v8650
        %8993 = vmatprep.subr.bf16.mxu0 0
        %8994 = vmatpush2.bf16.msra.mxu0 %v8649
        %8995 = vmatprep.subr.bf16.mxu0 0
        %8996 = vmatpush2.bf16.msra.mxu0 %v8648
        %8997 = vmatprep.subr.bf16.mxu0 0
        %8998 = vmatpush2.bf16.msra.mxu0 %v8647
        %8999 = vmatprep.subr.bf16.mxu0 0
        %9000 = vmatpush2.bf16.msra.mxu0 %v8646
        %9001 = vmatprep.subr.bf16.mxu0 0
        %9002 = vmatpush2.bf16.msra.mxu0 %v8645
        %9003 = vmatprep.subr.bf16.mxu0 0
        %9004 = vmatpush2.bf16.msra.mxu0 %v8644
        %9005 = vmatprep.mubr.bf16.mxu0 %v7720
        %9006 = vmatmul.mubr.bf16.gmra.mxu0 %v7719
        %v9007 = vpop.f32.mrf.mxu0
        %v9008 = vadd.f32 %v8911, %v9007
        %v9009 = vpop.f32.mrf.mxu0
        %v9010 = vpop.f32.mrf.mxu0
        %v9011 = vadd.f32 %v8914, %v9010
        %v9012 = vpop.f32.mrf.mxu0
        %9013 = vmatprep.mubr.bf16.mxu0 %v7736
        %9014 = vmatmul.mubr.bf16.gmra.mxu0 %v7735
        %v9015 = vpop.f32.mrf.mxu0
        %v9016 = vadd.f32 %v8919, %v9015
        %v9017 = vpop.f32.mrf.mxu0
        %v9018 = vpop.f32.mrf.mxu0
        %v9019 = vadd.f32 %v8922, %v9018
        %v9020 = vpop.f32.mrf.mxu0
        %9021 = vmatprep.mubr.bf16.mxu0 %v7752
        %9022 = vmatmul.mubr.bf16.gmra.mxu0 %v7751
        %v9023 = vpop.f32.mrf.mxu0
        %v9024 = vadd.f32 %v8927, %v9023
        %v9025 = vpop.f32.mrf.mxu0
        %v9026 = vpop.f32.mrf.mxu0
        %v9027 = vadd.f32 %v8930, %v9026
        %v9028 = vpop.f32.mrf.mxu0
        %9029 = vmatprep.mubr.bf16.mxu0 %v7768
        %9030 = vmatmul.mubr.bf16.gmra.mxu0 %v7767
        %v9031 = vpop.f32.mrf.mxu0
        %v9032 = vadd.f32 %v8935, %v9031
        %v9033 = vpop.f32.mrf.mxu0
        %v9034 = vpop.f32.mrf.mxu0
        %v9035 = vadd.f32 %v8938, %v9034
        %v9036 = vpop.f32.mrf.mxu0
        %9037 = vmatprep.mubr.bf16.mxu0 %v7784
        %9038 = vmatmul.mubr.bf16.gmra.mxu0 %v7783
        %v9039 = vpop.f32.mrf.mxu0
        %v9040 = vadd.f32 %v8943, %v9039
        %v9041 = vpop.f32.mrf.mxu0
        %v9042 = vpop.f32.mrf.mxu0
        %v9043 = vadd.f32 %v8946, %v9042
        %v9044 = vpop.f32.mrf.mxu0
        %9045 = vmatprep.mubr.bf16.mxu0 %v7800
        %9046 = vmatmul.mubr.bf16.gmra.mxu0 %v7799
        %v9047 = vpop.f32.mrf.mxu0
        %v9048 = vadd.f32 %v8951, %v9047
        %v9049 = vpop.f32.mrf.mxu0
        %v9050 = vpop.f32.mrf.mxu0
        %v9051 = vadd.f32 %v8954, %v9050
        %v9052 = vpop.f32.mrf.mxu0
        %9053 = vmatprep.mubr.bf16.mxu0 %v7816
        %9054 = vmatmul.mubr.bf16.gmra.mxu0 %v7815
        %v9055 = vpop.f32.mrf.mxu0
        %v9056 = vadd.f32 %v8959, %v9055
        %v9057 = vpop.f32.mrf.mxu0
        %v9058 = vpop.f32.mrf.mxu0
        %v9059 = vadd.f32 %v8962, %v9058
        %v9060 = vpop.f32.mrf.mxu0
        %9061 = vmatprep.mubr.bf16.mxu0 %v7832
        %9062 = vmatmul.mubr.bf16.gmra.mxu0 %v7831
        %v9063 = vpop.f32.mrf.mxu0
        %v9064 = vadd.f32 %v8967, %v9063
        %v9065 = vpop.f32.mrf.mxu0
        %v9066 = vpop.f32.mrf.mxu0
        %v9067 = vadd.f32 %v8970, %v9066
        %v9068 = vpop.f32.mrf.mxu0
        %9069 = vdwg.mxu0
        %9070 = vmatprep.subr.bf16.mxu0 0
        %9071 = vmatpush1.bf16.msra.mxu0 %v8659
        %9072 = vmatprep.subr.bf16.mxu0 0
        %9073 = vmatpush1.bf16.msra.mxu0 %v8658
        %9074 = vmatprep.subr.bf16.mxu0 0
        %9075 = vmatpush1.bf16.msra.mxu0 %v8657
        %9076 = vmatprep.subr.bf16.mxu0 0
        %9077 = vmatpush1.bf16.msra.mxu0 %v8656
        %9078 = vmatprep.subr.bf16.mxu0 0
        %9079 = vmatpush1.bf16.msra.mxu0 %v8655
        %9080 = vmatprep.subr.bf16.mxu0 0
        %9081 = vmatpush1.bf16.msra.mxu0 %v8654
        %9082 = vmatprep.subr.bf16.mxu0 0
        %9083 = vmatpush1.bf16.msra.mxu0 %v8653
        %9084 = vmatprep.subr.bf16.mxu0 0
        %9085 = vmatpush1.bf16.msra.mxu0 %v8652
        %9086 = vmatprep.subr.bf16.mxu0 0
        %9087 = vmatpush2.bf16.msra.mxu0 %v8667
        %9088 = vmatprep.subr.bf16.mxu0 0
        %9089 = vmatpush2.bf16.msra.mxu0 %v8666
        %9090 = vmatprep.subr.bf16.mxu0 0
        %9091 = vmatpush2.bf16.msra.mxu0 %v8665
        %9092 = vmatprep.subr.bf16.mxu0 0
        %9093 = vmatpush2.bf16.msra.mxu0 %v8664
        %9094 = vmatprep.subr.bf16.mxu0 0
        %9095 = vmatpush2.bf16.msra.mxu0 %v8663
        %9096 = vmatprep.subr.bf16.mxu0 0
        %9097 = vmatpush2.bf16.msra.mxu0 %v8662
        %9098 = vmatprep.subr.bf16.mxu0 0
        %9099 = vmatpush2.bf16.msra.mxu0 %v8661
        %9100 = vmatprep.subr.bf16.mxu0 0
        %9101 = vmatpush2.bf16.msra.mxu0 %v8660
        %9102 = vmatprep.mubr.bf16.mxu0 %v7722
        %9103 = vmatmul.mubr.bf16.gmra.mxu0 %v7721
        %v9104 = vpop.f32.mrf.mxu0
        %v9105 = vadd.f32 %v9008, %v9104
        %v9106 = vpop.f32.mrf.mxu0
        %v9107 = vpop.f32.mrf.mxu0
        %v9108 = vadd.f32 %v9011, %v9107
        %v9109 = vpop.f32.mrf.mxu0
        %9110 = vmatprep.mubr.bf16.mxu0 %v7738
        %9111 = vmatmul.mubr.bf16.gmra.mxu0 %v7737
        %v9112 = vpop.f32.mrf.mxu0
        %v9113 = vadd.f32 %v9016, %v9112
        %v9114 = vpop.f32.mrf.mxu0
        %v9115 = vpop.f32.mrf.mxu0
        %v9116 = vadd.f32 %v9019, %v9115
        %v9117 = vpop.f32.mrf.mxu0
        %9118 = vmatprep.mubr.bf16.mxu0 %v7754
        %9119 = vmatmul.mubr.bf16.gmra.mxu0 %v7753
        %v9120 = vpop.f32.mrf.mxu0
        %v9121 = vadd.f32 %v9024, %v9120
        %v9122 = vpop.f32.mrf.mxu0
        %v9123 = vpop.f32.mrf.mxu0
        %v9124 = vadd.f32 %v9027, %v9123
        %v9125 = vpop.f32.mrf.mxu0
        %9126 = vmatprep.mubr.bf16.mxu0 %v7770
        %9127 = vmatmul.mubr.bf16.gmra.mxu0 %v7769
        %v9128 = vpop.f32.mrf.mxu0
        %v9129 = vadd.f32 %v9032, %v9128
        %v9130 = vpop.f32.mrf.mxu0
        %v9131 = vpop.f32.mrf.mxu0
        %v9132 = vadd.f32 %v9035, %v9131
        %v9133 = vpop.f32.mrf.mxu0
        %9134 = vmatprep.mubr.bf16.mxu0 %v7786
        %9135 = vmatmul.mubr.bf16.gmra.mxu0 %v7785
        %v9136 = vpop.f32.mrf.mxu0
        %v9137 = vadd.f32 %v9040, %v9136
        %v9138 = vpop.f32.mrf.mxu0
        %v9139 = vpop.f32.mrf.mxu0
        %v9140 = vadd.f32 %v9043, %v9139
        %v9141 = vpop.f32.mrf.mxu0
        %9142 = vmatprep.mubr.bf16.mxu0 %v7802
        %9143 = vmatmul.mubr.bf16.gmra.mxu0 %v7801
        %v9144 = vpop.f32.mrf.mxu0
        %v9145 = vadd.f32 %v9048, %v9144
        %v9146 = vpop.f32.mrf.mxu0
        %v9147 = vpop.f32.mrf.mxu0
        %v9148 = vadd.f32 %v9051, %v9147
        %v9149 = vpop.f32.mrf.mxu0
        %9150 = vmatprep.mubr.bf16.mxu0 %v7818
        %9151 = vmatmul.mubr.bf16.gmra.mxu0 %v7817
        %v9152 = vpop.f32.mrf.mxu0
        %v9153 = vadd.f32 %v9056, %v9152
        %v9154 = vpop.f32.mrf.mxu0
        %v9155 = vpop.f32.mrf.mxu0
        %v9156 = vadd.f32 %v9059, %v9155
        %v9157 = vpop.f32.mrf.mxu0
        %9158 = vmatprep.mubr.bf16.mxu0 %v7834
        %9159 = vmatmul.mubr.bf16.gmra.mxu0 %v7833
        %v9160 = vpop.f32.mrf.mxu0
        %v9161 = vadd.f32 %v9064, %v9160
        %v9162 = vpop.f32.mrf.mxu0
        %v9163 = vpop.f32.mrf.mxu0
        %v9164 = vadd.f32 %v9067, %v9163
        %v9165 = vpop.f32.mrf.mxu0
        %9166 = vdwg.mxu0
        %9167 = vmatprep.subr.bf16.mxu0 0
        %9168 = vmatpush1.bf16.msra.mxu0 %v8675
        %9169 = vmatprep.subr.bf16.mxu0 0
        %9170 = vmatpush1.bf16.msra.mxu0 %v8674
        %9171 = vmatprep.subr.bf16.mxu0 0
        %9172 = vmatpush1.bf16.msra.mxu0 %v8673
        %9173 = vmatprep.subr.bf16.mxu0 0
        %9174 = vmatpush1.bf16.msra.mxu0 %v8672
        %9175 = vmatprep.subr.bf16.mxu0 0
        %9176 = vmatpush1.bf16.msra.mxu0 %v8671
        %9177 = vmatprep.subr.bf16.mxu0 0
        %9178 = vmatpush1.bf16.msra.mxu0 %v8670
        %9179 = vmatprep.subr.bf16.mxu0 0
        %9180 = vmatpush1.bf16.msra.mxu0 %v8669
        %9181 = vmatprep.subr.bf16.mxu0 0
        %9182 = vmatpush1.bf16.msra.mxu0 %v8668
        %9183 = vmatprep.subr.bf16.mxu0 0
        %9184 = vmatpush2.bf16.msra.mxu0 %v8683
        %9185 = vmatprep.subr.bf16.mxu0 0
        %9186 = vmatpush2.bf16.msra.mxu0 %v8682
        %9187 = vmatprep.subr.bf16.mxu0 0
        %9188 = vmatpush2.bf16.msra.mxu0 %v8681
        %9189 = vmatprep.subr.bf16.mxu0 0
        %9190 = vmatpush2.bf16.msra.mxu0 %v8680
        %9191 = vmatprep.subr.bf16.mxu0 0
        %9192 = vmatpush2.bf16.msra.mxu0 %v8679
        %9193 = vmatprep.subr.bf16.mxu0 0
        %9194 = vmatpush2.bf16.msra.mxu0 %v8678
        %9195 = vmatprep.subr.bf16.mxu0 0
        %9196 = vmatpush2.bf16.msra.mxu0 %v8677
        %9197 = vmatprep.subr.bf16.mxu0 0
        %9198 = vmatpush2.bf16.msra.mxu0 %v8676
        %9199 = vmatprep.mubr.bf16.mxu0 %v7724
        %9200 = vmatmul.mubr.bf16.gmra.mxu0 %v7723
        %v9201 = vpop.f32.mrf.mxu0
        %v9202 = vadd.f32 %v9105, %v9201
        %v9203 = vpop.f32.mrf.mxu0
        %v9204 = vpop.f32.mrf.mxu0
        %v9205 = vadd.f32 %v9108, %v9204
        %v9206 = vpop.f32.mrf.mxu0
        %9207 = vmatprep.mubr.bf16.mxu0 %v7740
        %9208 = vmatmul.mubr.bf16.gmra.mxu0 %v7739
        %v9209 = vpop.f32.mrf.mxu0
        %v9210 = vadd.f32 %v9113, %v9209
        %v9211 = vpop.f32.mrf.mxu0
        %v9212 = vpop.f32.mrf.mxu0
        %v9213 = vadd.f32 %v9116, %v9212
        %v9214 = vpop.f32.mrf.mxu0
        %9215 = vmatprep.mubr.bf16.mxu0 %v7756
        %9216 = vmatmul.mubr.bf16.gmra.mxu0 %v7755
        %v9217 = vpop.f32.mrf.mxu0
        %v9218 = vadd.f32 %v9121, %v9217
        %v9219 = vpop.f32.mrf.mxu0
        %v9220 = vpop.f32.mrf.mxu0
        %v9221 = vadd.f32 %v9124, %v9220
        %v9222 = vpop.f32.mrf.mxu0
        %9223 = vmatprep.mubr.bf16.mxu0 %v7772
        %9224 = vmatmul.mubr.bf16.gmra.mxu0 %v7771
        %v9225 = vpop.f32.mrf.mxu0
        %v9226 = vadd.f32 %v9129, %v9225
        %v9227 = vpop.f32.mrf.mxu0
        %v9228 = vpop.f32.mrf.mxu0
        %v9229 = vadd.f32 %v9132, %v9228
        %v9230 = vpop.f32.mrf.mxu0
        %9231 = vmatprep.mubr.bf16.mxu0 %v7788
        %9232 = vmatmul.mubr.bf16.gmra.mxu0 %v7787
        %v9233 = vpop.f32.mrf.mxu0
        %v9234 = vadd.f32 %v9137, %v9233
        %v9235 = vpop.f32.mrf.mxu0
        %v9236 = vpop.f32.mrf.mxu0
        %v9237 = vadd.f32 %v9140, %v9236
        %v9238 = vpop.f32.mrf.mxu0
        %9239 = vmatprep.mubr.bf16.mxu0 %v7804
        %9240 = vmatmul.mubr.bf16.gmra.mxu0 %v7803
        %v9241 = vpop.f32.mrf.mxu0
        %v9242 = vadd.f32 %v9145, %v9241
        %v9243 = vpop.f32.mrf.mxu0
        %v9244 = vpop.f32.mrf.mxu0
        %v9245 = vadd.f32 %v9148, %v9244
        %v9246 = vpop.f32.mrf.mxu0
        %9247 = vmatprep.mubr.bf16.mxu0 %v7820
        %9248 = vmatmul.mubr.bf16.gmra.mxu0 %v7819
        %v9249 = vpop.f32.mrf.mxu0
        %v9250 = vadd.f32 %v9153, %v9249
        %v9251 = vpop.f32.mrf.mxu0
        %v9252 = vpop.f32.mrf.mxu0
        %v9253 = vadd.f32 %v9156, %v9252
        %v9254 = vpop.f32.mrf.mxu0
        %9255 = vmatprep.mubr.bf16.mxu0 %v7836
        %9256 = vmatmul.mubr.bf16.gmra.mxu0 %v7835
        %v9257 = vpop.f32.mrf.mxu0
        %v9258 = vadd.f32 %v9161, %v9257
        %v9259 = vpop.f32.mrf.mxu0
        %v9260 = vpop.f32.mrf.mxu0
        %v9261 = vadd.f32 %v9164, %v9260
        %v9262 = vpop.f32.mrf.mxu0
        %9263 = vdwg.mxu0
        %9264 = vmatprep.subr.bf16.mxu0 0
        %9265 = vmatpush1.bf16.msra.mxu0 %v8691
        %9266 = vmatprep.subr.bf16.mxu0 0
        %9267 = vmatpush1.bf16.msra.mxu0 %v8690
        %9268 = vmatprep.subr.bf16.mxu0 0
        %9269 = vmatpush1.bf16.msra.mxu0 %v8689
        %9270 = vmatprep.subr.bf16.mxu0 0
        %9271 = vmatpush1.bf16.msra.mxu0 %v8688
        %9272 = vmatprep.subr.bf16.mxu0 0
        %9273 = vmatpush1.bf16.msra.mxu0 %v8687
        %9274 = vmatprep.subr.bf16.mxu0 0
        %9275 = vmatpush1.bf16.msra.mxu0 %v8686
        %9276 = vmatprep.subr.bf16.mxu0 0
        %9277 = vmatpush1.bf16.msra.mxu0 %v8685
        %9278 = vmatprep.subr.bf16.mxu0 0
        %9279 = vmatpush1.bf16.msra.mxu0 %v8684
        %9280 = vmatprep.subr.bf16.mxu0 0
        %9281 = vmatpush2.bf16.msra.mxu0 %v8699
        %9282 = vmatprep.subr.bf16.mxu0 0
        %9283 = vmatpush2.bf16.msra.mxu0 %v8698
        %9284 = vmatprep.subr.bf16.mxu0 0
        %9285 = vmatpush2.bf16.msra.mxu0 %v8697
        %9286 = vmatprep.subr.bf16.mxu0 0
        %9287 = vmatpush2.bf16.msra.mxu0 %v8696
        %9288 = vmatprep.subr.bf16.mxu0 0
        %9289 = vmatpush2.bf16.msra.mxu0 %v8695
        %9290 = vmatprep.subr.bf16.mxu0 0
        %9291 = vmatpush2.bf16.msra.mxu0 %v8694
        %9292 = vmatprep.subr.bf16.mxu0 0
        %9293 = vmatpush2.bf16.msra.mxu0 %v8693
        %9294 = vmatprep.subr.bf16.mxu0 0
        %9295 = vmatpush2.bf16.msra.mxu0 %v8692
        %9296 = vmatprep.mubr.bf16.mxu0 %v7726
        %9297 = vmatmul.mubr.bf16.gmra.mxu0 %v7725
        %v9298 = vpop.f32.mrf.mxu0
        %v9299 = vadd.f32 %v9202, %v9298
        %v9300 = vpop.f32.mrf.mxu0
        %v9301 = vpop.f32.mrf.mxu0
        %v9302 = vadd.f32 %v9205, %v9301
        %v9303 = vpop.f32.mrf.mxu0
        %9304 = vmatprep.mubr.bf16.mxu0 %v7742
        %9305 = vmatmul.mubr.bf16.gmra.mxu0 %v7741
        %v9306 = vpop.f32.mrf.mxu0
        %v9307 = vadd.f32 %v9210, %v9306
        %v9308 = vpop.f32.mrf.mxu0
        %v9309 = vpop.f32.mrf.mxu0
        %v9310 = vadd.f32 %v9213, %v9309
        %v9311 = vpop.f32.mrf.mxu0
        %9312 = vmatprep.mubr.bf16.mxu0 %v7758
        %9313 = vmatmul.mubr.bf16.gmra.mxu0 %v7757
        %v9314 = vpop.f32.mrf.mxu0
        %v9315 = vadd.f32 %v9218, %v9314
        %v9316 = vpop.f32.mrf.mxu0
        %v9317 = vpop.f32.mrf.mxu0
        %v9318 = vadd.f32 %v9221, %v9317
        %v9319 = vpop.f32.mrf.mxu0
        %9320 = vmatprep.mubr.bf16.mxu0 %v7774
        %9321 = vmatmul.mubr.bf16.gmra.mxu0 %v7773
        %v9322 = vpop.f32.mrf.mxu0
        %v9323 = vadd.f32 %v9226, %v9322
        %v9324 = vpop.f32.mrf.mxu0
        %v9325 = vpop.f32.mrf.mxu0
        %v9326 = vadd.f32 %v9229, %v9325
        %v9327 = vpop.f32.mrf.mxu0
        %9328 = vmatprep.mubr.bf16.mxu0 %v7790
        %9329 = vmatmul.mubr.bf16.gmra.mxu0 %v7789
        %v9330 = vpop.f32.mrf.mxu0
        %v9331 = vadd.f32 %v9234, %v9330
        %v9332 = vpop.f32.mrf.mxu0
        %v9333 = vpop.f32.mrf.mxu0
        %v9334 = vadd.f32 %v9237, %v9333
        %v9335 = vpop.f32.mrf.mxu0
        %9336 = vmatprep.mubr.bf16.mxu0 %v7806
        %9337 = vmatmul.mubr.bf16.gmra.mxu0 %v7805
        %v9338 = vpop.f32.mrf.mxu0
        %v9339 = vadd.f32 %v9242, %v9338
        %v9340 = vpop.f32.mrf.mxu0
        %v9341 = vpop.f32.mrf.mxu0
        %v9342 = vadd.f32 %v9245, %v9341
        %v9343 = vpop.f32.mrf.mxu0
        %9344 = vmatprep.mubr.bf16.mxu0 %v7822
        %9345 = vmatmul.mubr.bf16.gmra.mxu0 %v7821
        %v9346 = vpop.f32.mrf.mxu0
        %v9347 = vadd.f32 %v9250, %v9346
        %v9348 = vpop.f32.mrf.mxu0
        %v9349 = vpop.f32.mrf.mxu0
        %v9350 = vadd.f32 %v9253, %v9349
        %v9351 = vpop.f32.mrf.mxu0
        %9352 = vmatprep.mubr.bf16.mxu0 %v7838
        %9353 = vmatmul.mubr.bf16.gmra.mxu0 %v7837
        %v9354 = vpop.f32.mrf.mxu0
        %v9355 = vadd.f32 %v9258, %v9354
        %v9356 = vpop.f32.mrf.mxu0
        %v9357 = vpop.f32.mrf.mxu0
        %v9358 = vadd.f32 %v9261, %v9357
        %v9359 = vpop.f32.mrf.mxu0
        %9360 = vdwg.mxu0
        %9361 = vmatprep.subr.bf16.mxu0 0
        %9362 = vmatpush1.bf16.msra.mxu0 %v8707
        %9363 = vmatprep.subr.bf16.mxu0 0
        %9364 = vmatpush1.bf16.msra.mxu0 %v8706
        %9365 = vmatprep.subr.bf16.mxu0 0
        %9366 = vmatpush1.bf16.msra.mxu0 %v8705
        %9367 = vmatprep.subr.bf16.mxu0 0
        %9368 = vmatpush1.bf16.msra.mxu0 %v8704
        %9369 = vmatprep.subr.bf16.mxu0 0
        %9370 = vmatpush1.bf16.msra.mxu0 %v8703
        %9371 = vmatprep.subr.bf16.mxu0 0
        %9372 = vmatpush1.bf16.msra.mxu0 %v8702
        %9373 = vmatprep.subr.bf16.mxu0 0
        %9374 = vmatpush1.bf16.msra.mxu0 %v8701
        %9375 = vmatprep.subr.bf16.mxu0 0
        %9376 = vmatpush1.bf16.msra.mxu0 %v8700
        %9377 = vmatprep.subr.bf16.mxu0 0
        %9378 = vmatpush2.bf16.msra.mxu0 %v8715
        %9379 = vmatprep.subr.bf16.mxu0 0
        %9380 = vmatpush2.bf16.msra.mxu0 %v8714
        %9381 = vmatprep.subr.bf16.mxu0 0
        %9382 = vmatpush2.bf16.msra.mxu0 %v8713
        %9383 = vmatprep.subr.bf16.mxu0 0
        %9384 = vmatpush2.bf16.msra.mxu0 %v8712
        %9385 = vmatprep.subr.bf16.mxu0 0
        %9386 = vmatpush2.bf16.msra.mxu0 %v8711
        %9387 = vmatprep.subr.bf16.mxu0 0
        %9388 = vmatpush2.bf16.msra.mxu0 %v8710
        %9389 = vmatprep.subr.bf16.mxu0 0
        %9390 = vmatpush2.bf16.msra.mxu0 %v8709
        %9391 = vmatprep.subr.bf16.mxu0 0
        %9392 = vmatpush2.bf16.msra.mxu0 %v8708
        %9393 = vmatprep.mubr.bf16.mxu0 %v7728
        %9394 = vmatmul.mubr.bf16.gmra.mxu0 %v7727
        %v9395 = vpop.f32.mrf.mxu0
        %v9396 = vadd.f32 %v9299, %v9395
        %v9397 = vpop.f32.mrf.mxu0
        %v9398 = vpop.f32.mrf.mxu0
        %v9399 = vadd.f32 %v9302, %v9398
        %v9400 = vpop.f32.mrf.mxu0
        %9401 = vmatprep.mubr.bf16.mxu0 %v7744
        %9402 = vmatmul.mubr.bf16.gmra.mxu0 %v7743
        %v9403 = vpop.f32.mrf.mxu0
        %v9404 = vadd.f32 %v9307, %v9403
        %v9405 = vpop.f32.mrf.mxu0
        %v9406 = vpop.f32.mrf.mxu0
        %v9407 = vadd.f32 %v9310, %v9406
        %v9408 = vpop.f32.mrf.mxu0
        %9409 = vmatprep.mubr.bf16.mxu0 %v7760
        %9410 = vmatmul.mubr.bf16.gmra.mxu0 %v7759
        %v9411 = vpop.f32.mrf.mxu0
        %v9412 = vadd.f32 %v9315, %v9411
        %v9413 = vpop.f32.mrf.mxu0
        %v9414 = vpop.f32.mrf.mxu0
        %v9415 = vadd.f32 %v9318, %v9414
        %v9416 = vpop.f32.mrf.mxu0
        %9417 = vmatprep.mubr.bf16.mxu0 %v7776
        %9418 = vmatmul.mubr.bf16.gmra.mxu0 %v7775
        %v9419 = vpop.f32.mrf.mxu0
        %v9420 = vadd.f32 %v9323, %v9419
        %v9421 = vpop.f32.mrf.mxu0
        %v9422 = vpop.f32.mrf.mxu0
        %v9423 = vadd.f32 %v9326, %v9422
        %v9424 = vpop.f32.mrf.mxu0
        %9425 = vmatprep.mubr.bf16.mxu0 %v7792
        %9426 = vmatmul.mubr.bf16.gmra.mxu0 %v7791
        %v9427 = vpop.f32.mrf.mxu0
        %v9428 = vadd.f32 %v9331, %v9427
        %v9429 = vpop.f32.mrf.mxu0
        %v9430 = vpop.f32.mrf.mxu0
        %v9431 = vadd.f32 %v9334, %v9430
        %v9432 = vpop.f32.mrf.mxu0
        %9433 = vmatprep.mubr.bf16.mxu0 %v7808
        %9434 = vmatmul.mubr.bf16.gmra.mxu0 %v7807
        %v9435 = vpop.f32.mrf.mxu0
        %v9436 = vadd.f32 %v9339, %v9435
        %v9437 = vpop.f32.mrf.mxu0
        %v9438 = vpop.f32.mrf.mxu0
        %v9439 = vadd.f32 %v9342, %v9438
        %v9440 = vpop.f32.mrf.mxu0
        %9441 = vmatprep.mubr.bf16.mxu0 %v7824
        %9442 = vmatmul.mubr.bf16.gmra.mxu0 %v7823
        %v9443 = vpop.f32.mrf.mxu0
        %v9444 = vadd.f32 %v9347, %v9443
        %v9445 = vpop.f32.mrf.mxu0
        %v9446 = vpop.f32.mrf.mxu0
        %v9447 = vadd.f32 %v9350, %v9446
        %v9448 = vpop.f32.mrf.mxu0
        %9449 = vmatprep.mubr.bf16.mxu0 %v7840
        %9450 = vmatmul.mubr.bf16.gmra.mxu0 %v7839
        %v9451 = vpop.f32.mrf.mxu0
        %v9452 = vadd.f32 %v9355, %v9451
        %v9453 = vpop.f32.mrf.mxu0
        %v9454 = vpop.f32.mrf.mxu0
        %v9455 = vadd.f32 %v9358, %v9454
        %v9456 = vpop.f32.mrf.mxu0
        %9457 = vdwg.mxu0
        %9458 = vmatprep.subr.bf16.mxu0 0
        %9459 = vmatpush1.bf16.msra.mxu0 %v8723
        %9460 = vmatprep.subr.bf16.mxu0 0
        %9461 = vmatpush1.bf16.msra.mxu0 %v8722
        %9462 = vmatprep.subr.bf16.mxu0 0
        %9463 = vmatpush1.bf16.msra.mxu0 %v8721
        %9464 = vmatprep.subr.bf16.mxu0 0
        %9465 = vmatpush1.bf16.msra.mxu0 %v8720
        %9466 = vmatprep.subr.bf16.mxu0 0
        %9467 = vmatpush1.bf16.msra.mxu0 %v8719
        %9468 = vmatprep.subr.bf16.mxu0 0
        %9469 = vmatpush1.bf16.msra.mxu0 %v8718
        %9470 = vmatprep.subr.bf16.mxu0 0
        %9471 = vmatpush1.bf16.msra.mxu0 %v8717
        %9472 = vmatprep.subr.bf16.mxu0 0
        %9473 = vmatpush1.bf16.msra.mxu0 %v8716
        %9474 = vmatprep.subr.bf16.mxu0 0
        %9475 = vmatpush2.bf16.msra.mxu0 %v8731
        %9476 = vmatprep.subr.bf16.mxu0 0
        %9477 = vmatpush2.bf16.msra.mxu0 %v8730
        %9478 = vmatprep.subr.bf16.mxu0 0
        %9479 = vmatpush2.bf16.msra.mxu0 %v8729
        %9480 = vmatprep.subr.bf16.mxu0 0
        %9481 = vmatpush2.bf16.msra.mxu0 %v8728
        %9482 = vmatprep.subr.bf16.mxu0 0
        %9483 = vmatpush2.bf16.msra.mxu0 %v8727
        %9484 = vmatprep.subr.bf16.mxu0 0
        %9485 = vmatpush2.bf16.msra.mxu0 %v8726
        %9486 = vmatprep.subr.bf16.mxu0 0
        %9487 = vmatpush2.bf16.msra.mxu0 %v8725
        %9488 = vmatprep.subr.bf16.mxu0 0
        %9489 = vmatpush2.bf16.msra.mxu0 %v8724
        %9490 = vmatprep.mubr.bf16.mxu0 %v7730
        %9491 = vmatmul.mubr.bf16.gmra.mxu0 %v7729
        %v9492 = vpop.f32.mrf.mxu0
        %v9493 = vadd.f32 %v9396, %v9492
        %v9494 = vpop.f32.mrf.mxu0
        %v9495 = vpop.f32.mrf.mxu0
        %v9496 = vadd.f32 %v9399, %v9495
        %v9497 = vpop.f32.mrf.mxu0
        %9498 = vmatprep.mubr.bf16.mxu0 %v7746
        %9499 = vmatmul.mubr.bf16.gmra.mxu0 %v7745
        %v9500 = vpop.f32.mrf.mxu0
        %v9501 = vadd.f32 %v9404, %v9500
        %v9502 = vpop.f32.mrf.mxu0
        %v9503 = vpop.f32.mrf.mxu0
        %v9504 = vadd.f32 %v9407, %v9503
        %v9505 = vpop.f32.mrf.mxu0
        %9506 = vmatprep.mubr.bf16.mxu0 %v7762
        %9507 = vmatmul.mubr.bf16.gmra.mxu0 %v7761
        %v9508 = vpop.f32.mrf.mxu0
        %v9509 = vadd.f32 %v9412, %v9508
        %v9510 = vpop.f32.mrf.mxu0
        %v9511 = vpop.f32.mrf.mxu0
        %v9512 = vadd.f32 %v9415, %v9511
        %v9513 = vpop.f32.mrf.mxu0
        %9514 = vmatprep.mubr.bf16.mxu0 %v7778
        %9515 = vmatmul.mubr.bf16.gmra.mxu0 %v7777
        %v9516 = vpop.f32.mrf.mxu0
        %v9517 = vadd.f32 %v9420, %v9516
        %v9518 = vpop.f32.mrf.mxu0
        %v9519 = vpop.f32.mrf.mxu0
        %v9520 = vadd.f32 %v9423, %v9519
        %v9521 = vpop.f32.mrf.mxu0
        %9522 = vmatprep.mubr.bf16.mxu0 %v7794
        %9523 = vmatmul.mubr.bf16.gmra.mxu0 %v7793
        %v9524 = vpop.f32.mrf.mxu0
        %v9525 = vadd.f32 %v9428, %v9524
        %v9526 = vpop.f32.mrf.mxu0
        %v9527 = vpop.f32.mrf.mxu0
        %v9528 = vadd.f32 %v9431, %v9527
        %v9529 = vpop.f32.mrf.mxu0
        %9530 = vmatprep.mubr.bf16.mxu0 %v7810
        %9531 = vmatmul.mubr.bf16.gmra.mxu0 %v7809
        %v9532 = vpop.f32.mrf.mxu0
        %v9533 = vadd.f32 %v9436, %v9532
        %v9534 = vpop.f32.mrf.mxu0
        %v9535 = vpop.f32.mrf.mxu0
        %v9536 = vadd.f32 %v9439, %v9535
        %v9537 = vpop.f32.mrf.mxu0
        %9538 = vmatprep.mubr.bf16.mxu0 %v7826
        %9539 = vmatmul.mubr.bf16.gmra.mxu0 %v7825
        %v9540 = vpop.f32.mrf.mxu0
        %v9541 = vadd.f32 %v9444, %v9540
        %v9542 = vpop.f32.mrf.mxu0
        %v9543 = vpop.f32.mrf.mxu0
        %v9544 = vadd.f32 %v9447, %v9543
        %v9545 = vpop.f32.mrf.mxu0
        %9546 = vmatprep.mubr.bf16.mxu0 %v7842
        %9547 = vmatmul.mubr.bf16.gmra.mxu0 %v7841
        %v9548 = vpop.f32.mrf.mxu0
        %v9549 = vadd.f32 %v9452, %v9548
        %v9550 = vpop.f32.mrf.mxu0
        %v9551 = vpop.f32.mrf.mxu0
        %v9552 = vadd.f32 %v9455, %v9551
        %v9553 = vpop.f32.mrf.mxu0
        %9554 = vdwg.mxu0
        %9555 = vmatprep.subr.bf16.mxu0 0
        %9556 = vmatpush1.bf16.msra.mxu0 %v8739
        %9557 = vmatprep.subr.bf16.mxu0 0
        %9558 = vmatpush1.bf16.msra.mxu0 %v8738
        %9559 = vmatprep.subr.bf16.mxu0 0
        %9560 = vmatpush1.bf16.msra.mxu0 %v8737
        %9561 = vmatprep.subr.bf16.mxu0 0
        %9562 = vmatpush1.bf16.msra.mxu0 %v8736
        %9563 = vmatprep.subr.bf16.mxu0 0
        %9564 = vmatpush1.bf16.msra.mxu0 %v8735
        %9565 = vmatprep.subr.bf16.mxu0 0
        %9566 = vmatpush1.bf16.msra.mxu0 %v8734
        %9567 = vmatprep.subr.bf16.mxu0 0
        %9568 = vmatpush1.bf16.msra.mxu0 %v8733
        %9569 = vmatprep.subr.bf16.mxu0 0
        %9570 = vmatpush1.bf16.msra.mxu0 %v8732
        %9571 = vmatprep.subr.bf16.mxu0 0
        %9572 = vmatpush2.bf16.msra.mxu0 %v8747
        %9573 = vmatprep.subr.bf16.mxu0 0
        %9574 = vmatpush2.bf16.msra.mxu0 %v8746
        %9575 = vmatprep.subr.bf16.mxu0 0
        %9576 = vmatpush2.bf16.msra.mxu0 %v8745
        %9577 = vmatprep.subr.bf16.mxu0 0
        %9578 = vmatpush2.bf16.msra.mxu0 %v8744
        %9579 = vmatprep.subr.bf16.mxu0 0
        %9580 = vmatpush2.bf16.msra.mxu0 %v8743
        %9581 = vmatprep.subr.bf16.mxu0 0
        %9582 = vmatpush2.bf16.msra.mxu0 %v8742
        %9583 = vmatprep.subr.bf16.mxu0 0
        %9584 = vmatpush2.bf16.msra.mxu0 %v8741
        %9585 = vmatprep.subr.bf16.mxu0 0
        %9586 = vmatpush2.bf16.msra.mxu0 %v8740
        %9587 = vmatprep.mubr.bf16.mxu0 %v7732
        %9588 = vmatmul.mubr.bf16.gmra.mxu0 %v7731
        %v9589 = vpop.f32.mrf.mxu0
        %v9590 = vadd.f32 %v9493, %v9589
        %v9591 = vpop.f32.mrf.mxu0
        %v9592 = vpop.f32.mrf.mxu0
        %v9593 = vadd.f32 %v9496, %v9592
        %v9594 = vpop.f32.mrf.mxu0
        %9595 = vmatprep.mubr.bf16.mxu0 %v7748
        %9596 = vmatmul.mubr.bf16.gmra.mxu0 %v7747
        %v9597 = vpop.f32.mrf.mxu0
        %v9598 = vadd.f32 %v9501, %v9597
        %v9599 = vpop.f32.mrf.mxu0
        %v9600 = vpop.f32.mrf.mxu0
        %v9601 = vadd.f32 %v9504, %v9600
        %v9602 = vpop.f32.mrf.mxu0
        %9603 = vmatprep.mubr.bf16.mxu0 %v7764
        %9604 = vmatmul.mubr.bf16.gmra.mxu0 %v7763
        %v9605 = vpop.f32.mrf.mxu0
        %v9606 = vadd.f32 %v9509, %v9605
        %v9607 = vpop.f32.mrf.mxu0
        %v9608 = vpop.f32.mrf.mxu0
        %v9609 = vadd.f32 %v9512, %v9608
        %v9610 = vpop.f32.mrf.mxu0
        %9611 = vmatprep.mubr.bf16.mxu0 %v7780
        %9612 = vmatmul.mubr.bf16.gmra.mxu0 %v7779
        %v9613 = vpop.f32.mrf.mxu0
        %v9614 = vadd.f32 %v9517, %v9613
        %v9615 = vpop.f32.mrf.mxu0
        %v9616 = vpop.f32.mrf.mxu0
        %v9617 = vadd.f32 %v9520, %v9616
        %v9618 = vpop.f32.mrf.mxu0
        %9619 = vmatprep.mubr.bf16.mxu0 %v7796
        %9620 = vmatmul.mubr.bf16.gmra.mxu0 %v7795
        %v9621 = vpop.f32.mrf.mxu0
        %v9622 = vadd.f32 %v9525, %v9621
        %v9623 = vpop.f32.mrf.mxu0
        %v9624 = vpop.f32.mrf.mxu0
        %v9625 = vadd.f32 %v9528, %v9624
        %v9626 = vpop.f32.mrf.mxu0
        %9627 = vmatprep.mubr.bf16.mxu0 %v7812
        %9628 = vmatmul.mubr.bf16.gmra.mxu0 %v7811
        %v9629 = vpop.f32.mrf.mxu0
        %v9630 = vadd.f32 %v9533, %v9629
        %v9631 = vpop.f32.mrf.mxu0
        %v9632 = vpop.f32.mrf.mxu0
        %v9633 = vadd.f32 %v9536, %v9632
        %v9634 = vpop.f32.mrf.mxu0
        %9635 = vmatprep.mubr.bf16.mxu0 %v7828
        %9636 = vmatmul.mubr.bf16.gmra.mxu0 %v7827
        %v9637 = vpop.f32.mrf.mxu0
        %v9638 = vadd.f32 %v9541, %v9637
        %v9639 = vpop.f32.mrf.mxu0
        %v9640 = vpop.f32.mrf.mxu0
        %v9641 = vadd.f32 %v9544, %v9640
        %v9642 = vpop.f32.mrf.mxu0
        %9643 = vmatprep.mubr.bf16.mxu0 %v7844
        %9644 = vmatmul.mubr.bf16.gmra.mxu0 %v7843
        %v9645 = vpop.f32.mrf.mxu0
        %v9646 = vadd.f32 %v9549, %v9645
        %v9647 = vpop.f32.mrf.mxu0
        %v9648 = vpop.f32.mrf.mxu0
        %v9649 = vadd.f32 %v9552, %v9648
        %v9650 = vpop.f32.mrf.mxu0
        %9651 = vdwg.mxu0
        %v9652 = vadd.f32 %v5681, %v9590
        %v9653 = vadd.f32 %v5682, %v9593
        %v9654 = vadd.f32 %v5683, %v9598
        %v9655 = vadd.f32 %v5684, %v9601
        %v9656 = vadd.f32 %v5685, %v9606
        %v9657 = vadd.f32 %v5686, %v9609
        %v9658 = vadd.f32 %v5687, %v9614
        %v9659 = vadd.f32 %v5688, %v9617
        %v9660 = vadd.f32 %v5689, %v9622
        %v9661 = vadd.f32 %v5690, %v9625
        %v9662 = vadd.f32 %v5691, %v9630
        %v9663 = vadd.f32 %v5692, %v9633
        %v9664 = vadd.f32 %v5693, %v9638
        %v9665 = vadd.f32 %v5694, %v9641
        %v9666 = vadd.f32 %v5695, %v9646
        %v9667 = vadd.f32 %v5696, %v9649
        %v9668 = vld [vmem:[%s14] sm:$0x1]
        %v9669 = vld [vmem:[%s15] sm:$0x1]
        %9670 = vadd.xlane.f32.xlu0 %v9652
        %v9671 = vpop.xlane.xlu0 %9670
        %9672 = vadd.xlane.f32.xlu0 %v9653
        %v9673 = vpop.xlane.xlu0 %9672
        %9674 = vadd.xlane.f32.xlu0 %v9654
        %v9675 = vpop.xlane.xlu0 %9674
        %9676 = vadd.xlane.f32.xlu0 %v9655
        %v9677 = vpop.xlane.xlu0 %9676
        %9678 = vadd.xlane.f32.xlu0 %v9656
        %v9679 = vpop.xlane.xlu0 %9678
        %9680 = vadd.xlane.f32.xlu0 %v9657
        %v9681 = vpop.xlane.xlu0 %9680
        %9682 = vadd.xlane.f32.xlu0 %v9658
        %v9683 = vpop.xlane.xlu0 %9682
        %9684 = vadd.xlane.f32.xlu0 %v9659
        %v9685 = vpop.xlane.xlu0 %9684
        %9686 = vadd.xlane.f32.xlu0 %v9660
        %v9687 = vpop.xlane.xlu0 %9686
        %9688 = vadd.xlane.f32.xlu0 %v9661
        %v9689 = vpop.xlane.xlu0 %9688
        %9690 = vadd.xlane.f32.xlu0 %v9662
        %v9691 = vpop.xlane.xlu0 %9690
        %9692 = vadd.xlane.f32.xlu0 %v9663
        %v9693 = vpop.xlane.xlu0 %9692
        %9694 = vadd.xlane.f32.xlu0 %v9664
        %v9695 = vpop.xlane.xlu0 %9694
        %9696 = vadd.xlane.f32.xlu0 %v9665
        %v9697 = vpop.xlane.xlu0 %9696
        %9698 = vadd.xlane.f32.xlu0 %v9666
        %v9699 = vpop.xlane.xlu0 %9698
        %9700 = vadd.xlane.f32.xlu0 %v9667
        %v9701 = vpop.xlane.xlu0 %9700
        %v9702 = vmul.f32 %v9671, %v5508
        %v9703 = vmul.f32 %v9673, %v5508
        %v9704 = vmul.f32 %v9675, %v5508
        %v9705 = vmul.f32 %v9677, %v5508
        %v9706 = vmul.f32 %v9679, %v5508
        %v9707 = vmul.f32 %v9681, %v5508
        %v9708 = vmul.f32 %v9683, %v5508
        %v9709 = vmul.f32 %v9685, %v5508
        %v9710 = vmul.f32 %v9687, %v5508
        %v9711 = vmul.f32 %v9689, %v5508
        %v9712 = vmul.f32 %v9691, %v5508
        %v9713 = vmul.f32 %v9693, %v5508
        %v9714 = vmul.f32 %v9695, %v5508
        %v9715 = vmul.f32 %v9697, %v5508
        %v9716 = vmul.f32 %v9699, %v5508
        %v9717 = vmul.f32 %v9701, %v5508
        %v9718 = vsub.f32 %v9652, %v9702
        %v9719 = vsub.f32 %v9653, %v9703
        %v9720 = vsub.f32 %v9654, %v9704
        %v9721 = vsub.f32 %v9655, %v9705
        %v9722 = vsub.f32 %v9656, %v9706
        %v9723 = vsub.f32 %v9657, %v9707
        %v9724 = vsub.f32 %v9658, %v9708
        %v9725 = vsub.f32 %v9659, %v9709
        %v9726 = vsub.f32 %v9660, %v9710
        %v9727 = vsub.f32 %v9661, %v9711
        %v9728 = vsub.f32 %v9662, %v9712
        %v9729 = vsub.f32 %v9663, %v9713
        %v9730 = vsub.f32 %v9664, %v9714
        %v9731 = vsub.f32 %v9665, %v9715
        %v9732 = vsub.f32 %v9666, %v9716
        %v9733 = vsub.f32 %v9667, %v9717
        %v9734 = vmul.f32 %v9718, %v9718
        %v9735 = vmul.f32 %v9719, %v9719
        %v9736 = vmul.f32 %v9720, %v9720
        %v9737 = vmul.f32 %v9721, %v9721
        %v9738 = vmul.f32 %v9722, %v9722
        %v9739 = vmul.f32 %v9723, %v9723
        %v9740 = vmul.f32 %v9724, %v9724
        %v9741 = vmul.f32 %v9725, %v9725
        %v9742 = vmul.f32 %v9726, %v9726
        %v9743 = vmul.f32 %v9727, %v9727
        %v9744 = vmul.f32 %v9728, %v9728
        %v9745 = vmul.f32 %v9729, %v9729
        %v9746 = vmul.f32 %v9730, %v9730
        %v9747 = vmul.f32 %v9731, %v9731
        %v9748 = vmul.f32 %v9732, %v9732
        %v9749 = vmul.f32 %v9733, %v9733
        %9750 = vadd.xlane.f32.xlu0 %v9734
        %v9751 = vpop.xlane.xlu0 %9750
        %9752 = vadd.xlane.f32.xlu0 %v9735
        %v9753 = vpop.xlane.xlu0 %9752
        %9754 = vadd.xlane.f32.xlu0 %v9736
        %v9755 = vpop.xlane.xlu0 %9754
        %9756 = vadd.xlane.f32.xlu0 %v9737
        %v9757 = vpop.xlane.xlu0 %9756
        %9758 = vadd.xlane.f32.xlu0 %v9738
        %v9759 = vpop.xlane.xlu0 %9758
        %9760 = vadd.xlane.f32.xlu0 %v9739
        %v9761 = vpop.xlane.xlu0 %9760
        %9762 = vadd.xlane.f32.xlu0 %v9740
        %v9763 = vpop.xlane.xlu0 %9762
        %9764 = vadd.xlane.f32.xlu0 %v9741
        %v9765 = vpop.xlane.xlu0 %9764
        %9766 = vadd.xlane.f32.xlu0 %v9742
        %v9767 = vpop.xlane.xlu0 %9766
        %9768 = vadd.xlane.f32.xlu0 %v9743
        %v9769 = vpop.xlane.xlu0 %9768
        %9770 = vadd.xlane.f32.xlu0 %v9744
        %v9771 = vpop.xlane.xlu0 %9770
        %9772 = vadd.xlane.f32.xlu0 %v9745
        %v9773 = vpop.xlane.xlu0 %9772
        %9774 = vadd.xlane.f32.xlu0 %v9746
        %v9775 = vpop.xlane.xlu0 %9774
        %9776 = vadd.xlane.f32.xlu0 %v9747
        %v9777 = vpop.xlane.xlu0 %9776
        %9778 = vadd.xlane.f32.xlu0 %v9748
        %v9779 = vpop.xlane.xlu0 %9778
        %9780 = vadd.xlane.f32.xlu0 %v9749
        %v9781 = vpop.xlane.xlu0 %9780
        %v9782 = vmul.f32 %v9751, %v5508
        %v9783 = vmul.f32 %v9753, %v5508
        %v9784 = vmul.f32 %v9755, %v5508
        %v9785 = vmul.f32 %v9757, %v5508
        %v9786 = vmul.f32 %v9759, %v5508
        %v9787 = vmul.f32 %v9761, %v5508
        %v9788 = vmul.f32 %v9763, %v5508
        %v9789 = vmul.f32 %v9765, %v5508
        %v9790 = vmul.f32 %v9767, %v5508
        %v9791 = vmul.f32 %v9769, %v5508
        %v9792 = vmul.f32 %v9771, %v5508
        %v9793 = vmul.f32 %v9773, %v5508
        %v9794 = vmul.f32 %v9775, %v5508
        %v9795 = vmul.f32 %v9777, %v5508
        %v9796 = vmul.f32 %v9779, %v5508
        %v9797 = vmul.f32 %v9781, %v5508
        %v9798 = vadd.f32 %v9782, 1e-05
        %v9799 = vadd.f32 %v9783, 1e-05
        %v9800 = vadd.f32 %v9784, 1e-05
        %v9801 = vadd.f32 %v9785, 1e-05
        %v9802 = vadd.f32 %v9786, 1e-05
        %v9803 = vadd.f32 %v9787, 1e-05
        %v9804 = vadd.f32 %v9788, 1e-05
        %v9805 = vadd.f32 %v9789, 1e-05
        %v9806 = vadd.f32 %v9790, 1e-05
        %v9807 = vadd.f32 %v9791, 1e-05
        %v9808 = vadd.f32 %v9792, 1e-05
        %v9809 = vadd.f32 %v9793, 1e-05
        %v9810 = vadd.f32 %v9794, 1e-05
        %v9811 = vadd.f32 %v9795, 1e-05
        %v9812 = vadd.f32 %v9796, 1e-05
        %v9813 = vadd.f32 %v9797, 1e-05
        %v9814 = vrsqrt.pop %v9798
        %v9815 = vrsqrt.pop %v9799
        %v9816 = vrsqrt.pop %v9800
        %v9817 = vrsqrt.pop %v9801
        %v9818 = vrsqrt.pop %v9802
        %v9819 = vrsqrt.pop %v9803
        %v9820 = vrsqrt.pop %v9804
        %v9821 = vrsqrt.pop %v9805
        %v9822 = vrsqrt.pop %v9806
        %v9823 = vrsqrt.pop %v9807
        %v9824 = vrsqrt.pop %v9808
        %v9825 = vrsqrt.pop %v9809
        %v9826 = vrsqrt.pop %v9810
        %v9827 = vrsqrt.pop %v9811
        %v9828 = vrsqrt.pop %v9812
        %v9829 = vrsqrt.pop %v9813
        %v9830 = vmul.f32 %v9718, %v9814
        %v9831 = vmul.f32 %v9719, %v9815
        %v9832 = vmul.f32 %v9720, %v9816
        %v9833 = vmul.f32 %v9721, %v9817
        %v9834 = vmul.f32 %v9722, %v9818
        %v9835 = vmul.f32 %v9723, %v9819
        %v9836 = vmul.f32 %v9724, %v9820
        %v9837 = vmul.f32 %v9725, %v9821
        %v9838 = vmul.f32 %v9726, %v9822
        %v9839 = vmul.f32 %v9727, %v9823
        %v9840 = vmul.f32 %v9728, %v9824
        %v9841 = vmul.f32 %v9729, %v9825
        %v9842 = vmul.f32 %v9730, %v9826
        %v9843 = vmul.f32 %v9731, %v9827
        %v9844 = vmul.f32 %v9732, %v9828
        %v9845 = vmul.f32 %v9733, %v9829
        %v9847 = vlaneseq
        %v9848 = vshrl.u32 %v9847, 7
        %v9849 = vsub.s32 0, %v9848
        %v9850 = vrot.slane %v9668, %v9849
        %v9852 = vmul.f32 %v9830, %v9850
        %v9853 = vmul.f32 %v9831, %v9850
        %v9854 = vmul.f32 %v9832, %v9850
        %v9855 = vmul.f32 %v9833, %v9850
        %v9856 = vmul.f32 %v9834, %v9850
        %v9857 = vmul.f32 %v9835, %v9850
        %v9858 = vmul.f32 %v9836, %v9850
        %v9859 = vmul.f32 %v9837, %v9850
        %v9860 = vmul.f32 %v9838, %v9850
        %v9861 = vmul.f32 %v9839, %v9850
        %v9862 = vmul.f32 %v9840, %v9850
        %v9863 = vmul.f32 %v9841, %v9850
        %v9864 = vmul.f32 %v9842, %v9850
        %v9865 = vmul.f32 %v9843, %v9850
        %v9866 = vmul.f32 %v9844, %v9850
        %v9867 = vmul.f32 %v9845, %v9850
        %v9869 = vlaneseq
        %v9870 = vshrl.u32 %v9869, 7
        %v9871 = vsub.s32 0, %v9870
        %v9872 = vrot.slane %v9669, %v9871
        %v9874 = vadd.f32 %v9852, %v9872
        %v9875 = vadd.f32 %v9853, %v9872
        %v9876 = vadd.f32 %v9854, %v9872
        %v9877 = vadd.f32 %v9855, %v9872
        %v9878 = vadd.f32 %v9856, %v9872
        %v9879 = vadd.f32 %v9857, %v9872
        %v9880 = vadd.f32 %v9858, %v9872
        %v9881 = vadd.f32 %v9859, %v9872
        %v9882 = vadd.f32 %v9860, %v9872
        %v9883 = vadd.f32 %v9861, %v9872
        %v9884 = vadd.f32 %v9862, %v9872
        %v9885 = vadd.f32 %v9863, %v9872
        %v9886 = vadd.f32 %v9864, %v9872
        %v9887 = vadd.f32 %v9865, %v9872
        %v9888 = vadd.f32 %v9866, %v9872
        %v9889 = vadd.f32 %v9867, %v9872
        %v9890 = vpack.c.bf16 %v9875, %v9874
        %v9891 = vpack.c.bf16 %v9877, %v9876
        %v9892 = vpack.c.bf16 %v9879, %v9878
        %v9893 = vpack.c.bf16 %v9881, %v9880
        %v9894 = vpack.c.bf16 %v9883, %v9882
        %v9895 = vpack.c.bf16 %v9885, %v9884
        %v9896 = vpack.c.bf16 %v9887, %v9886
        %v9897 = vpack.c.bf16 %v9889, %v9888
        %v9898 = vld [vmem:[#allocation19] sm:$0xf]
        %v9899 = vld [vmem:[#allocation19 + $0x4] sm:$0xf]
        %v9900 = vld [vmem:[#allocation19 + $0x8] sm:$0xf]
        %v9901 = vld [vmem:[#allocation19 + $0xc] sm:$0xf]
        %v9902 = vld [vmem:[#allocation19 + $0x10] sm:$0xf]
        %v9903 = vld [vmem:[#allocation19 + $0x14] sm:$0xf]
        %v9904 = vld [vmem:[#allocation19 + $0x18] sm:$0xf]
        %v9905 = vld [vmem:[#allocation19 + $0x1c] sm:$0xf]
        %v9906 = vld [vmem:[#allocation19 + $0x20] sm:$0xf]
        %v9907 = vld [vmem:[#allocation19 + $0x24] sm:$0xf]
        %v9908 = vld [vmem:[#allocation19 + $0x28] sm:$0xf]
        %v9909 = vld [vmem:[#allocation19 + $0x2c] sm:$0xf]
        %v9910 = vld [vmem:[#allocation19 + $0x30] sm:$0xf]
        %v9911 = vld [vmem:[#allocation19 + $0x34] sm:$0xf]
        %v9912 = vld [vmem:[#allocation19 + $0x38] sm:$0xf]
        %v9913 = vld [vmem:[#allocation19 + $0x3c] sm:$0xf]
        %v9914 = vld [vmem:[%s17] sm:$0x1]
        %v9916 = vlaneseq
        %v9917 = vshrl.u32 %v9916, 7
        %v9918 = vsub.s32 0, %v9917
        %v9919 = vrot.slane %v9914, %v9918
        %v9937 = vunpack.c.l.b16 %v9898
        %v9938 = vunpack.c.l.b16 %v9899
        %v9939 = vunpack.c.l.b16 %v9900
        %v9940 = vunpack.c.l.b16 %v9901
        %v9941 = vunpack.c.l.b16 %v9902
        %v9942 = vunpack.c.l.b16 %v9903
        %v9943 = vunpack.c.l.b16 %v9904
        %v9944 = vunpack.c.l.b16 %v9905
        %v9945 = vunpack.c.l.b16 %v9906
        %v9946 = vunpack.c.l.b16 %v9907
        %v9947 = vunpack.c.l.b16 %v9908
        %v9948 = vunpack.c.l.b16 %v9909
        %v9949 = vunpack.c.l.b16 %v9910
        %v9950 = vunpack.c.l.b16 %v9911
        %v9951 = vunpack.c.l.b16 %v9912
        %v9952 = vunpack.c.l.b16 %v9913
        %v9953 = vpack.c.b16 %v9938, %v9937
        %v9954 = vpack.c.b16 %v9940, %v9939
        %v9955 = vpack.c.b16 %v9942, %v9941
        %v9956 = vpack.c.b16 %v9944, %v9943
        %v9957 = vpack.c.b16 %v9946, %v9945
        %v9958 = vpack.c.b16 %v9948, %v9947
        %v9959 = vpack.c.b16 %v9950, %v9949
        %v9960 = vpack.c.b16 %v9952, %v9951
        %9969 = vmatprep.subr.bf16.mxu0 0
        %9970 = vmatpush1.bf16.msra.mxu0 %v9960
        %9971 = vmatprep.subr.bf16.mxu0 0
        %9972 = vmatpush1.bf16.msra.mxu0 %v9959
        %9973 = vmatprep.subr.bf16.mxu0 0
        %9974 = vmatpush1.bf16.msra.mxu0 %v9958
        %9975 = vmatprep.subr.bf16.mxu0 0
        %9976 = vmatpush1.bf16.msra.mxu0 %v9957
        %9977 = vmatprep.subr.bf16.mxu0 0
        %9978 = vmatpush1.bf16.msra.mxu0 %v9956
        %9979 = vmatprep.subr.bf16.mxu0 0
        %9980 = vmatpush1.bf16.msra.mxu0 %v9955
        %9981 = vmatprep.subr.bf16.mxu0 0
        %9982 = vmatpush1.bf16.msra.mxu0 %v9954
        %9983 = vmatprep.subr.bf16.mxu0 0
        %9984 = vmatpush1.bf16.msra.mxu0 %v9953
        %9985 = vmatprep.subr.bf16.mxu0 0
        %9986 = vmatpush2.bf16.msra.mxu0 0
        %9987 = vmatprep.subr.bf16.mxu0 0
        %9988 = vmatpush2.bf16.msra.mxu0 0
        %9989 = vmatprep.subr.bf16.mxu0 0
        %9990 = vmatpush2.bf16.msra.mxu0 0
        %9991 = vmatprep.subr.bf16.mxu0 0
        %9992 = vmatpush2.bf16.msra.mxu0 0
        %9993 = vmatprep.subr.bf16.mxu0 0
        %9994 = vmatpush2.bf16.msra.mxu0 0
        %9995 = vmatprep.subr.bf16.mxu0 0
        %9996 = vmatpush2.bf16.msra.mxu0 0
        %9997 = vmatprep.subr.bf16.mxu0 0
        %9998 = vmatpush2.bf16.msra.mxu0 0
        %9999 = vmatprep.subr.bf16.mxu0 0
        %10000 = vmatpush2.bf16.msra.mxu0 0
        %10001 = vmatprep.mubr.bf16.mxu0 0
        %10002 = vmatmul.mubr.bf16.gmra.mxu0 %v9890
        %v10003 = vpop.f32.mrf.mxu0
        %v10004 = vadd.f32 %v9919, %v10003
        %v10005 = vpop.f32.mrf.mxu0
        %v10006 = vpop.f32.mrf.mxu0
        %v10007 = vadd.f32 %v9919, %v10006
        %v10008 = vpop.f32.mrf.mxu0
        %10009 = vmatprep.mubr.bf16.mxu0 0
        %10010 = vmatmul.mubr.bf16.gmra.mxu0 %v9891
        %v10011 = vpop.f32.mrf.mxu0
        %v10012 = vadd.f32 %v9919, %v10011
        %v10013 = vpop.f32.mrf.mxu0
        %v10014 = vpop.f32.mrf.mxu0
        %v10015 = vadd.f32 %v9919, %v10014
        %v10016 = vpop.f32.mrf.mxu0
        %10017 = vmatprep.mubr.bf16.mxu0 0
        %10018 = vmatmul.mubr.bf16.gmra.mxu0 %v9892
        %v10019 = vpop.f32.mrf.mxu0
        %v10020 = vadd.f32 %v9919, %v10019
        %v10021 = vpop.f32.mrf.mxu0
        %v10022 = vpop.f32.mrf.mxu0
        %v10023 = vadd.f32 %v9919, %v10022
        %v10024 = vpop.f32.mrf.mxu0
        %10025 = vmatprep.mubr.bf16.mxu0 0
        %10026 = vmatmul.mubr.bf16.gmra.mxu0 %v9893
        %v10027 = vpop.f32.mrf.mxu0
        %v10028 = vadd.f32 %v9919, %v10027
        %v10029 = vpop.f32.mrf.mxu0
        %v10030 = vpop.f32.mrf.mxu0
        %v10031 = vadd.f32 %v9919, %v10030
        %v10032 = vpop.f32.mrf.mxu0
        %10033 = vmatprep.mubr.bf16.mxu0 0
        %10034 = vmatmul.mubr.bf16.gmra.mxu0 %v9894
        %v10035 = vpop.f32.mrf.mxu0
        %v10036 = vadd.f32 %v9919, %v10035
        %v10037 = vpop.f32.mrf.mxu0
        %v10038 = vpop.f32.mrf.mxu0
        %v10039 = vadd.f32 %v9919, %v10038
        %v10040 = vpop.f32.mrf.mxu0
        %10041 = vmatprep.mubr.bf16.mxu0 0
        %10042 = vmatmul.mubr.bf16.gmra.mxu0 %v9895
        %v10043 = vpop.f32.mrf.mxu0
        %v10044 = vadd.f32 %v9919, %v10043
        %v10045 = vpop.f32.mrf.mxu0
        %v10046 = vpop.f32.mrf.mxu0
        %v10047 = vadd.f32 %v9919, %v10046
        %v10048 = vpop.f32.mrf.mxu0
        %10049 = vmatprep.mubr.bf16.mxu0 0
        %10050 = vmatmul.mubr.bf16.gmra.mxu0 %v9896
        %v10051 = vpop.f32.mrf.mxu0
        %v10052 = vadd.f32 %v9919, %v10051
        %v10053 = vpop.f32.mrf.mxu0
        %v10054 = vpop.f32.mrf.mxu0
        %v10055 = vadd.f32 %v9919, %v10054
        %v10056 = vpop.f32.mrf.mxu0
        %10057 = vmatprep.mubr.bf16.mxu0 0
        %10058 = vmatmul.mubr.bf16.gmra.mxu0 %v9897
        %v10059 = vpop.f32.mrf.mxu0
        %v10060 = vadd.f32 %v9919, %v10059
        %v10061 = vpop.f32.mrf.mxu0
        %v10062 = vpop.f32.mrf.mxu0
        %v10063 = vadd.f32 %v9919, %v10062
        %v10064 = vpop.f32.mrf.mxu0
        %10065 = vdwg.mxu0
        %v10066 = vpack.c.bf16 %v10007, %v10004
        %v10067 = vpack.c.bf16 %v10015, %v10012
        %v10068 = vpack.c.bf16 %v10023, %v10020
        %v10069 = vpack.c.bf16 %v10031, %v10028
        %v10070 = vpack.c.bf16 %v10039, %v10036
        %v10071 = vpack.c.bf16 %v10047, %v10044
        %v10072 = vpack.c.bf16 %v10055, %v10052
        %v10073 = vpack.c.bf16 %v10063, %v10060
        %v10082 = vunpack.c.l.b16 %v10066
        %v10083 = vunpack.c.h.b16 %v10066
        %v10084 = vunpack.c.l.b16 %v10067
        %v10085 = vunpack.c.h.b16 %v10067
        %v10086 = vunpack.c.l.b16 %v10068
        %v10087 = vunpack.c.h.b16 %v10068
        %v10088 = vunpack.c.l.b16 %v10069
        %v10089 = vunpack.c.h.b16 %v10069
        %v10090 = vunpack.c.l.b16 %v10070
        %v10091 = vunpack.c.h.b16 %v10070
        %v10092 = vunpack.c.l.b16 %v10071
        %v10093 = vunpack.c.h.b16 %v10071
        %v10094 = vunpack.c.l.b16 %v10072
        %v10095 = vunpack.c.h.b16 %v10072
        %v10096 = vunpack.c.l.b16 %v10073
        %v10097 = vunpack.c.h.b16 %v10073
        %v10098 = vpack.c.b16 %v10082, %v10082
        %v10099 = vpack.c.b16 %v10083, %v10083
        %v10100 = vpack.c.b16 %v10084, %v10084
        %v10101 = vpack.c.b16 %v10085, %v10085
        %v10102 = vpack.c.b16 %v10086, %v10086
        %v10103 = vpack.c.b16 %v10087, %v10087
        %v10104 = vpack.c.b16 %v10088, %v10088
        %v10105 = vpack.c.b16 %v10089, %v10089
        %v10106 = vpack.c.b16 %v10090, %v10090
        %v10107 = vpack.c.b16 %v10091, %v10091
        %v10108 = vpack.c.b16 %v10092, %v10092
        %v10109 = vpack.c.b16 %v10093, %v10093
        %v10110 = vpack.c.b16 %v10094, %v10094
        %v10111 = vpack.c.b16 %v10095, %v10095
        %v10112 = vpack.c.b16 %v10096, %v10096
        %v10113 = vpack.c.b16 %v10097, %v10097
        %10130 = vst [vmem:[%s732] sm:$0xf] %v10098
        %10131 = vst [vmem:[%s732 + $0x4] sm:$0xf] %v10099
        %10132 = vst [vmem:[%s732 + $0x8] sm:$0xf] %v10100
        %10133 = vst [vmem:[%s732 + $0xc] sm:$0xf] %v10101
        %10134 = vst [vmem:[%s732 + $0x10] sm:$0xf] %v10102
        %10135 = vst [vmem:[%s732 + $0x14] sm:$0xf] %v10103
        %10136 = vst [vmem:[%s732 + $0x18] sm:$0xf] %v10104
        %10137 = vst [vmem:[%s732 + $0x1c] sm:$0xf] %v10105
        %10138 = vst [vmem:[%s732 + $0x20] sm:$0xf] %v10106
        %10139 = vst [vmem:[%s732 + $0x24] sm:$0xf] %v10107
        %10140 = vst [vmem:[%s732 + $0x28] sm:$0xf] %v10108
        %10141 = vst [vmem:[%s732 + $0x2c] sm:$0xf] %v10109
        %10142 = vst [vmem:[%s732 + $0x30] sm:$0xf] %v10110
        %10143 = vst [vmem:[%s732 + $0x34] sm:$0xf] %v10111
        %10144 = vst [vmem:[%s732 + $0x38] sm:$0xf] %v10112
        %10145 = vst [vmem:[%s732 + $0x3c] sm:$0xf] %v10113
        %s10146 = sand.u32 %s431, 1
        %s10147 = scalar_lea.sflag [#allocation4], %s10146
        %s10148 = sand.u32 %s431, 1
        %s10149 = smul.addr %s10148, 64
        %s10150 = scalar_lea.vmem [#allocation20], %s10149
        // Predicated region
        $region137: #{tpu_custom_call.1} parent=91 // pred_check
          %p10151 = pneg %p441
        $region138: #{tpu_custom_call.1} parent=91 // pred_check_branch
          %10153 = sbr.rel (%p10151) target = $region140
        $region139: #{tpu_custom_call.1} parent=91 // pred_region
          %s10154 = smul.u32 16, %s40
          %s10156 = ssub.s32 1024, 1024
          %10157 = vsyncadd %s10147, %s10156
          %s10158 = smul.addr %s10154, 64
          %s10159 = scalar_lea.hbm %s18, %s10158
          %s10160 = sshll.u32 %s10150, 4
          %s10161 = int_to_ptr.vmem [resolvable:$true] %s10160
          %10166 = dma.vmem_to_hbm [thread:$0]  %s10161, 1024, %s10159, %s10147, 64, 64, 4
        $region140: #{tpu_custom_call.1} parent=91 // pred_fallthru
          _
      $region92: #{tpu_custom_call.1} parent=5 // pred_fallthru
        _
      %p10167 = scmp.le.s32.totalorder 2, %s35
      // Predicated region
      $region141: #{tpu_custom_call.1} parent=5 // pred_check
        %p10168 = pneg %p10167
      $region142: #{tpu_custom_call.1} parent=5 // pred_check_branch
        %10170 = sbr.rel (%p10168) target = $region144
      $region143: #{tpu_custom_call.1} parent=5 // pred_region
        %s10171 = ssub.s32 %s35, 2
        // Predicated region
        $region145: #{tpu_custom_call.1} parent=143 // pred_check
          %p10172 = pneg %p447
        $region146: #{tpu_custom_call.1} parent=143 // pred_check_branch
          %10174 = sbr.rel (%p10172) target = $region148
        $region147: #{tpu_custom_call.1} parent=143 // pred_region
          %s10175 = sand.u32 %s432, 1
          %s10176 = scalar_lea.sflag [#allocation4], %s10175
          %s10177 = sand.u32 %s432, 1
          %s10178 = smul.addr %s10177, 64
          %s10179 = scalar_lea.vmem [#allocation20], %s10178
          %10180 = dma.done %s10176, 1024
        $region148: #{tpu_custom_call.1} parent=143 // pred_fallthru
          _
      $region144: #{tpu_custom_call.1} parent=5 // pred_fallthru
        _
    $region6: #{tpu_custom_call.1} parent=1 // loop_footer
      %s39 = sadd.s32 1, %s35
    $region7: #{tpu_custom_call.1} parent=1 // loop_footer_branch
      %34 = sbr.rel target = $region3
    $region8: #{tpu_custom_call.1} parent=1 // loop_exit
      _
    %10181 = vsyncpa [#allocation3], 1
    %s10182 = scalar_lea.sflag [#allocation3], 1
    %10183 = vsyncpa %s10182, 1
    %10184 = vsyncpa [#allocation6], 1
    %10185 = vsyncpa [#allocation9], 1
    %10186 = vsyncpa [#allocation12], 1
    %10187 = vsyncpa [#allocation15], 1
    %10188 = vsyncpa [#allocation18], 1
    %10189 = vsyncpa [#allocation4], 1
    %s10190 = scalar_lea.sflag [#allocation4], 1
    %10191 = vsyncpa %s10190, 1

</llo_original>
